<compile_context>
chip_gen: v7x
topology: tpu7x:2x2x1
jax: 0.10.0
libtpu: 0.0.40
codegen_flags: <defaults>
</compile_context>

<pallas_src>
import functools
import numpy as np
import jax
import jax.numpy as jnp
from jax.experimental import pallas as pl
from jax.experimental.pallas import tpu as pltpu

PRELU_ALPHA = 0.25       # nn.PReLU() default init
                         # TODO(synk): PReLU alpha is learnable in torch; forward parity
                         # holds only for checkpoints at the default value.
EPS = 1e-10              # VMR_GAE eps
POISSON_EPS = 1e-8       # torch.nn.PoissonNLLLoss default eps
LOG_2PI = float(np.log(2.0 * np.pi))


# ----------------------------- small helpers --------------------------------

def _mm(a, b):
    """MXU matmul with bf16 operands and f32 accumulation (weights pre-cast to bf16)."""
    return jnp.dot(a.astype(jnp.bfloat16), b.astype(jnp.bfloat16),
                   preferred_element_type=jnp.float32)


def _prelu(y):
    return jnp.where(y > 0, y, PRELU_ALPHA * y)


_W_KEYS = (
    "phi_xd_w", "phi_xd_b",
    "enc_wa", "enc_wb", "enc_b",
    "encms_w", "encms_b",
    "sup_w", "sup_b", "supms_w", "supms_b",
    "prior_w", "prior_b", "priorms_w", "priorms_b",
    "pex_w", "pex_b",
    "z1a_w", "z1b_w", "z1_b", "z2_w", "z2_b",
    "dec_w1a", "dec_w1b", "dec_b1", "dec_w2", "dec_b2", "dec_w3", "dec_b3",
)


# ----------------------------- fused Pallas kernel ---------------------------

def fused_timestep_kernel(*refs, n_layers, h_dim, e_dim, z_dim, scale, mean):
    """One full VMR_GAE timestep: phi_x/phi_d, both GCN encoders, prior,
    reparameterized samples, phi_z heads, pairwise decoder + masked Poisson NLL,
    both KLDs and the whole graph-GRU stack.  Invoked once per grid step t."""
    n_w = len(_W_KEYS)
    n_gru = 7 + 6 * (n_layers - 1)

    (x_ref, a_ref, as_ref, epsx_ref, epsd_ref, truth_ref, mask_ref) = refs[:7]
    (phi_xd_w, phi_xd_b,
     enc_wa, enc_wb, enc_b,
     encms_w, encms_b,
     sup_w, sup_b, supms_w, supms_b,
     prior_w, prior_b, priorms_w, priorms_b,
     pex_w, pex_b,
     z1a_w, z1b_w, z1_b, z2_w, z2_b,
     dec_w1a, dec_w1b, dec_b1, dec_w2, dec_b2, dec_w3, dec_b3) = refs[7:7 + n_w]
    gru_refs = refs[7 + n_w:7 + n_w + n_gru]
    (encm_o, priorm_o, encdm_o, zin_o, zout_o, dec_o, h_o,
     kld1_o, kld2_o, pis_o) = refs[7 + n_w + n_gru:7 + n_w + n_gru + 10]
    h_scr = refs[-1]

    t = pl.program_id(0)
    T = pl.num_programs(0)
    N = mask_ref.shape[0]

    # ---- init resident state / loss accumulators once (they persist across T) ----
    @pl.when(t == 0)
    def _():
        h_scr[...] = jnp.zeros_like(h_scr)
        kld1_o[...] = jnp.zeros_like(kld1_o)
        kld2_o[...] = jnp.zeros_like(kld2_o)
        pis_o[...] = jnp.zeros_like(pis_o)

    A = a_ref[0]           # (N, N) bf16 (pre-cast in glue)
    As = as_ref[0]         # (N, N) bf16
    x_t = x_ref[0]         # (N, x_dim) f32
    eps_x = epsx_ref[0]    # (N, e_dim)
    eps_d = epsd_ref[0]    # (N, e_dim)
    truth = truth_ref[0]   # (N, N)
    mask = mask_ref[...]   # (N, N)
    h_last = h_scr[n_layers - 1]

    def prop(adj, xw, b):
        # GCNConv propagation: A_hat @ (X W) + b   (f32 accumulation)
        return jnp.dot(adj, xw.astype(jnp.bfloat16),
                       preferred_element_type=jnp.float32) + b

    # ---- phi_x | phi_d (packed along the lane axis; x does not depend on h) ----
    pxd = jnp.maximum(_mm(x_t, phi_xd_w[...]) + phi_xd_b[...], 0.0)
    px = pxd[:, :h_dim]
    pd = pxd[:, h_dim:]

    # ---- TVGE encoder (enc weight split so no in-kernel concat; mean|std packed) ----
    xw = _mm(px, enc_wa[...]) + _mm(h_last, enc_wb[...])
    enc_t = jnp.maximum(prop(A, xw, enc_b[...]), 0.0)
    ms = prop(A, _mm(enc_t, encms_w[...]), encms_b[...])        # (N, 2e)
    enc_mean = ms[:, :e_dim]
    enc_std = jax.nn.softplus(ms[:, e_dim:])

    # ---- AVDE (supplement) encoder (mean|std packed) ----
    enc_d_t = jnp.maximum(prop(As, _mm(pd, sup_w[...]), sup_b[...]), 0.0)
    dms = prop(As, _mm(enc_d_t, supms_w[...]), supms_b[...])    # (N, 2e)
    enc_d_mean = dms[:, :e_dim]
    enc_d_std = jax.nn.softplus(dms[:, e_dim:])

    # ---- prior (mean|std packed) ----
    prior_t = jnp.maximum(_mm(h_last, prior_w[...]) + prior_b[...], 0.0)
    pms = _mm(prior_t, priorms_w[...]) + priorms_b[...]         # (N, 2e)
    prior_mean = pms[:, :e_dim]
    prior_std = jax.nn.softplus(pms[:, e_dim:])

    # ---- reparameterized samples (noise pre-drawn outside) & phi heads ----
    e_x = eps_x * enc_std + enc_mean
    e_d = eps_d * enc_d_std + enc_d_mean
    phi_e_x = jnp.maximum(_mm(e_x, pex_w[...]) + pex_b[...], 0.0)

    # phi_z_in / phi_z_out packed: one [2e->256] matmul + one block-diag [256->128]
    hz = _prelu(_mm(e_x, z1a_w[...]) + _mm(e_d, z1b_w[...]) + z1_b[...])
    zcat = _prelu(_mm(hz, z2_w[...]) + z2_b[...])               # (N, 128) = [zin | zout]
    zin = zcat[:, :z_dim]
    zout = zcat[:, z_dim:]

    # ---- fused KL divergences (f32), accumulated into resident output blocks ----
    def kld(m1, s1, m2, s2):
        s1e = s1 + EPS
        s2e = s2 + EPS
        d = m1 - m2
        k = 2.0 * jnp.log(s2e / s1e) + (s1e * s1e + d * d) / (s2e * s2e) - 1.0
        # 0.5/N * mean_over_nodes(sum_over_feat) == 0.5/N^2 * sum_all
        return (0.5 / float(N * N)) * jnp.sum(k, keepdims=True)

    kld1_o[...] += kld(enc_mean, enc_std, prior_mean, prior_std)
    kld2_o[...] += 0.2 * kld(enc_d_mean, enc_d_std, prior_mean, prior_std)  # align=True

    # ---- pairwise decoder (lane-dense, z_t never materialized) ----
    dh = dec_w2.shape[0]                                        # 256
    p_out = _mm(zout, dec_w1a[...])                             # (N, dh): zout-side, per row
    q_in = _mm(zin, dec_w1b[...]) + dec_b1[...]                 # (N, dh): zin-side, once
    h1 = _prelu(p_out[:, None, :] + q_in[None, :, :])           # (N, N, dh)
    h2 = _prelu(_mm(h1.reshape(N * N, dh), dec_w2[...]) + dec_b2[...])
    h2 = h2.reshape(N, N, dh)
    # final 256 -> 1 layer as a lane reduction (a 1-column MXU matmul would waste it)
    y = jnp.sum(h2 * dec_w3[...].reshape(1, 1, dh), axis=-1) + dec_b3[...]
    dec = jax.nn.sigmoid(y)                                     # (N, N)
    dec_o[0] = dec

    # ---- masked PoissonNLLLoss(full=True), lane-dense, accumulated in-kernel ----
    inp = dec * scale + mean                                    # A_scaler.inverse_transform
    nll = inp - truth * jnp.log(inp + POISSON_EPS)
    t_safe = jnp.maximum(truth, 1.0)
    logt = jnp.log(t_safe)                                      # reused in the Stirling term
    stirling = t_safe * logt - t_safe + 0.5 * (LOG_2PI + logt)
    nll = nll + jnp.where(truth > 1.0, stirling, 0.0)
    pis_t = 11.0 * jnp.sum(nll * mask, keepdims=True) / jnp.sum(mask)
    gate = jnp.where(T - t <= 24, 1.0, 0.0)                     # loss only on last 24 steps
    pis_o[...] += gate * pis_t

    # ---- graph-GRU stack (all layers, gates packed along the lane axis) ----
    gi = 0
    prev = None
    for layer in range(n_layers):
        if layer == 0:
            wxa, wxb, bx, whzr, bhzr, whh, bhh = gru_refs[gi:gi + 7]
            gi += 7
            # rnn input = concat(phi_x, phi_e_x); weight rows pre-split -> no concat
            xw = _mm(px, wxa[...]) + _mm(phi_e_x, wxb[...])     # (N, 3h)
        else:
            wx, bx, whzr, bhzr, whh, bhh = gru_refs[gi:gi + 6]
            gi += 6
            xw = _mm(prev, wx[...])                             # (N, 3h)
        h_l = h_scr[layer]
        gx = prop(A, xw, bx[...])                               # (N, 3h): gates z|r|h
        gh_zr = prop(A, _mm(h_l, whzr[...]), bhzr[...])         # (N, 2h): gates z|r
        z = jax.nn.sigmoid(gx[:, :h_dim] + gh_zr[:, :h_dim])
        r = jax.nn.sigmoid(gx[:, h_dim:2 * h_dim] + gh_zr[:, h_dim:])
        ghh = prop(A, _mm(r * h_l, whh[...]), bhh[...])
        h_tilde = jnp.tanh(gx[:, 2 * h_dim:] + ghh)
        h_new = z * h_l + (1.0 - z) * h_tilde
        h_scr[layer] = h_new                                    # carried to step t+1
        h_o[0, layer] = h_new
        prev = h_new

    # ---- per-timestep outputs ----
    encm_o[0] = enc_mean
    priorm_o[0] = prior_mean
    encdm_o[0] = enc_d_mean
    zin_o[0] = zin
    zout_o[0] = zout


# ----------------------------- pallas_call wrapper ---------------------------

def pallas_vmr_gae_fused(x, A_hat_bf, A_sup_bf, eps_x, eps_d, truths, mask, prep, *,
                         n_layers, h_dim, scale, mean):
    T, N, x_dim = x.shape
    e_dim = h_dim // 2
    z_dim = 64

    weights = [prep[k] for k in _W_KEYS]
    gru_flat = []
    for lw in prep["rnn"]:
        gru_flat.extend(lw)

    args = [x, A_hat_bf, A_sup_bf, eps_x, eps_d, truths, mask] + weights + gru_flat

    tmap3 = lambda t: (t, 0, 0)

    def const_map(ndim):
        return lambda t: (0,) * ndim

    in_specs = [
        pl.BlockSpec((1, N, x_dim), tmap3),       # x_t
        pl.BlockSpec((1, N, N), tmap3),           # A_hat_t (bf16)
        pl.BlockSpec((1, N, N), tmap3),           # A_sup_hat_t (bf16)
        pl.BlockSpec((1, N, e_dim), tmap3),       # eps_x_t
        pl.BlockSpec((1, N, e_dim), tmap3),       # eps_d_t
        pl.BlockSpec((1, N, N), tmap3),           # truth_t
        pl.BlockSpec((N, N), lambda t: (0, 0)),   # mask (resident)
    ]
    for w in weights + gru_flat:                  # all weights VMEM-resident across T
        in_specs.append(pl.BlockSpec(w.shape, const_map(w.ndim)))

    out_shape = (
        jax.ShapeDtypeStruct((T, N, e_dim), jnp.float32),             # enc_mean
        jax.ShapeDtypeStruct((T, N, e_dim), jnp.float32),             # prior_mean
        jax.ShapeDtypeStruct((T, N, e_dim), jnp.float32),             # enc_d_mean
        jax.ShapeDtypeStruct((T, N, z_dim), jnp.float32),             # z_in (compact)
        jax.ShapeDtypeStruct((T, N, z_dim), jnp.float32),             # z_out (compact)
        jax.ShapeDtypeStruct((T, N, N), jnp.float32),                 # dec
        jax.ShapeDtypeStruct((T, n_layers, N, h_dim), jnp.float32),   # h per step
        jax.ShapeDtypeStruct((1, 1), jnp.float32),                    # kld_tvge
        jax.ShapeDtypeStruct((1, 1), jnp.float32),                    # kld_avde (weighted)
        jax.ShapeDtypeStruct((1, 1), jnp.float32),                    # pis_loss
    )
    out_specs = (
        pl.BlockSpec((1, N, e_dim), tmap3),
        pl.BlockSpec((1, N, e_dim), tmap3),
        pl.BlockSpec((1, N, e_dim), tmap3),
        pl.BlockSpec((1, N, z_dim), tmap3),
        pl.BlockSpec((1, N, z_dim), tmap3),
        pl.BlockSpec((1, N, N), tmap3),
        pl.BlockSpec((1, n_layers, N, h_dim), lambda t: (t, 0, 0, 0)),
        pl.BlockSpec((1, 1), lambda t: (0, 0)),   # resident accumulator
        pl.BlockSpec((1, 1), lambda t: (0, 0)),   # resident accumulator
        pl.BlockSpec((1, 1), lambda t: (0, 0)),   # resident accumulator
    )

    kernel = functools.partial(
        fused_timestep_kernel,
        n_layers=n_layers, h_dim=h_dim, e_dim=e_dim, z_dim=z_dim,
        scale=scale, mean=mean)

    return pl.pallas_call(
        kernel,
        grid=(T,),
        out_shape=out_shape,
        in_specs=in_specs,
        out_specs=out_specs,
        scratch_shapes=[pltpu.VMEM((n_layers, N, h_dim), jnp.float32)],  # GRU carry
        compiler_params=pltpu.CompilerParams(
            dimension_semantics=("arbitrary",)),   # T is a recurrence axis
    )(*args)


# ----------------------------- params / glue --------------------------------

def init_params(key, x_dim, h_dim, e_dim, n_layers):
    keys = iter(jax.random.split(key, 64))

    def lin(fan_in, fan_out):
        k1, k2 = jax.random.split(next(keys))
        lim = 1.0 / float(np.sqrt(fan_in))
        w = jax.random.uniform(k1, (fan_in, fan_out), jnp.float32, -lim, lim)
        b = jax.random.uniform(k2, (1, fan_out), jnp.float32, -lim, lim)
        return (w, b)

    p = {}
    p["phi_x"] = lin(x_dim, h_dim)
    p["phi_d"] = lin(x_dim, h_dim)
    p["phi_e_x"] = lin(e_dim, h_dim)
    p["enc"] = lin(2 * h_dim, h_dim)
    p["enc_mean"] = lin(h_dim, e_dim)
    p["enc_std"] = lin(h_dim, e_dim)
    p["sup_enc"] = lin(h_dim, h_dim)
    p["sup_enc_mean"] = lin(h_dim, e_dim)
    p["sup_enc_std"] = lin(h_dim, e_dim)
    p["prior"] = lin(h_dim, h_dim)
    p["prior_mean"] = lin(h_dim, e_dim)
    p["prior_std"] = lin(h_dim, e_dim)
    two_e = 2 * e_dim
    p["phi_z_in_1"] = lin(two_e, 4 * two_e)
    p["phi_z_in_2"] = lin(4 * two_e, 64)
    p["phi_z_out_1"] = lin(two_e, 4 * two_e)
    p["phi_z_out_2"] = lin(4 * two_e, 64)
    p["phi_dec"] = (lin(128, 256), lin(256, 256), lin(256, 1))
    rnn = []
    for layer in range(n_layers):
        d_in = 2 * h_dim if layer == 0 else h_dim
        rnn.append({
            "xz": lin(d_in, h_dim), "hz": lin(h_dim, h_dim),
            "xr": lin(d_in, h_dim), "hr": lin(h_dim, h_dim),
            "xh": lin(d_in, h_dim), "hh": lin(h_dim, h_dim),
        })
    p["rnn"] = rnn
    return p


def prepare_params(params, h_dim, e_dim, n_layers):
    """Pack / split raw per-module weights into the fused-kernel layout.
    All matmul weight matrices are pre-cast to bf16 (MXU-native); biases stay f32."""
    bf = lambda w: w.astype(jnp.bfloat16)
    p = {}

    # phi_x / phi_d share the same input x_t -> pack output dims
    p["phi_xd_w"] = bf(jnp.concatenate([params["phi_x"][0], params["phi_d"][0]], axis=1))
    p["phi_xd_b"] = jnp.concatenate([params["phi_x"][1], params["phi_d"][1]], axis=1)

    w_enc, b_enc = params["enc"]
    p["enc_wa"], p["enc_wb"], p["enc_b"] = bf(w_enc[:h_dim]), bf(w_enc[h_dim:]), b_enc
    # mean|std heads packed along the lane axis (one matmul + one propagation each)
    p["encms_w"] = bf(jnp.concatenate([params["enc_mean"][0], params["enc_std"][0]], axis=1))
    p["encms_b"] = jnp.concatenate([params["enc_mean"][1], params["enc_std"][1]], axis=1)
    p["sup_w"], p["sup_b"] = bf(params["sup_enc"][0]), params["sup_enc"][1]
    p["supms_w"] = bf(jnp.concatenate([params["sup_enc_mean"][0],
                                       params["sup_enc_std"][0]], axis=1))
    p["supms_b"] = jnp.concatenate([params["sup_enc_mean"][1],
                                    params["sup_enc_std"][1]], axis=1)
    p["prior_w"], p["prior_b"] = bf(params["prior"][0]), params["prior"][1]
    p["priorms_w"] = bf(jnp.concatenate([params["prior_mean"][0],
                                         params["prior_std"][0]], axis=1))
    p["priorms_b"] = jnp.concatenate([params["prior_mean"][1],
                                      params["prior_std"][1]], axis=1)
    p["pex_w"], p["pex_b"] = bf(params["phi_e_x"][0]), params["phi_e_x"][1]

    # phi_z_in / phi_z_out layer 1 packed over outputs (same input [e_x, e_d])
    w_in1, b_in1 = params["phi_z_in_1"]
    w_out1, b_out1 = params["phi_z_out_1"]
    w_z1 = jnp.concatenate([w_in1, w_out1], axis=1)
    p["z1a_w"], p["z1b_w"] = bf(w_z1[:e_dim]), bf(w_z1[e_dim:])
    p["z1_b"] = jnp.concatenate([b_in1, b_out1], axis=1)
    # layer 2 block-diagonal so zcat = [zin | zout] comes from one matmul
    w_in2, b_in2 = params["phi_z_in_2"]
    w_out2, b_out2 = params["phi_z_out_2"]
    d1, c_in = w_in2.shape
    c_out = w_out2.shape[1]
    z2 = jnp.zeros((2 * d1, c_in + c_out), jnp.float32)
    z2 = z2.at[:d1, :c_in].set(w_in2).at[d1:, c_in:].set(w_out2)
    p["z2_w"] = bf(z2)
    p["z2_b"] = jnp.concatenate([b_in2, b_out2], axis=1)

    # decoder: split W1 between the zout / zin halves; final layer as an f32 row vector
    (w1, b1), (w2, b2), (w3, b3) = params["phi_dec"]
    p["dec_w1a"], p["dec_w1b"], p["dec_b1"] = bf(w1[:64]), bf(w1[64:]), b1
    p["dec_w2"], p["dec_b2"] = bf(w2), b2
    p["dec_w3"], p["dec_b3"] = jnp.transpose(w3), b3       # lane-reduction weight (f32)

    # GRU: pack the three gate x-weights along the lane axis [d_in, 3h] and the
    # z|r h-weights along [h, 2h]; split layer-0 x-weights into phi_x / phi_e_x halves.
    rnn = []
    for layer, lp in enumerate(params["rnn"]):
        wxz, bxz = lp["xz"]; wxr, bxr = lp["xr"]; wxh, bxh = lp["xh"]
        whz, bhz = lp["hz"]; whr, bhr = lp["hr"]; whh, bhh = lp["hh"]
        wx = jnp.concatenate([wxz, wxr, wxh], axis=1)        # [d_in, 3h]
        bx = jnp.concatenate([bxz, bxr, bxh], axis=1)        # [1, 3h]
        wh_zr = jnp.concatenate([whz, whr], axis=1)          # [h, 2h]
        bh_zr = jnp.concatenate([bhz, bhr], axis=1)          # [1, 2h]
        if layer == 0:
            rnn.append((bf(wx[:h_dim]), bf(wx[h_dim:]), bx,
                        bf(wh_zr), bh_zr, bf(whh), bhh))
        else:
            rnn.append((bf(wx), bx, bf(wh_zr), bh_zr, bf(whh), bhh))
    p["rnn"] = rnn
    return p


def normalize_adj(A):
    # dense equivalent of GCNConv normalization with self-loops
    n = A.shape[0]
    A_t = A + jnp.eye(n, dtype=A.dtype)
    d = jnp.sum(A_t, axis=1)
    d_inv_sqrt = 1.0 / jnp.sqrt(jnp.maximum(d, 1e-12))
    return A_t * d_inv_sqrt[:, None] * d_inv_sqrt[None, :]


def vmr_gae_forward(prep, x, A_hat, A_sup_hat, mask, truths, key, *,
                    scaler_scale, scaler_mean, n_layers, num_nodes, h_dim):
    T = A_hat.shape[0]
    N = num_nodes
    e_dim = h_dim // 2

    # pre-draw reparameterization noise (jax.random replaces torch CPU RNG)
    k1, k2 = jax.random.split(key)
    eps_x = jax.random.normal(k1, (T, N, e_dim), jnp.float32)
    eps_d = jax.random.normal(k2, (T, N, e_dim), jnp.float32)

    # bf16 adjacency halves the per-step DMA bytes and removes in-kernel casts
    A_bf = A_hat.astype(jnp.bfloat16)
    As_bf = A_sup_hat.astype(jnp.bfloat16)

    (enc_means, prior_means, enc_d_means, zins, zouts, decs, hs,
     kld_tvge, kld_avde, pis_loss) = pallas_vmr_gae_fused(
        x, A_bf, As_bf, eps_x, eps_d, truths, mask, prep,
        n_layers=n_layers, h_dim=h_dim,
        scale=scaler_scale, mean=scaler_mean)

    h0 = jnp.zeros((n_layers, N, h_dim), jnp.float32)
    all_h = [[h0[l] for l in range(n_layers)]]
    all_h += [[hs[t, l] for l in range(n_layers)] for t in range(T)]
    all_enc_mean = [enc_means[t] for t in range(T)]
    all_prior_mean = [prior_means[t] for t in range(T)]
    all_enc_d_mean = [enc_d_means[t] for t in range(T)]
    all_dec = [decs[t] for t in range(T)]
    # z_in / z_out are returned compact as [T, N, 64]; the reference's [N, N, 64]
    # views are pure broadcasts -- consumers should broadcast lazily (saves
    # T*N^2*64*4 bytes of HBM writes).
    return (kld_tvge[0, 0], kld_avde[0, 0], pis_loss[0, 0], all_h, all_enc_mean,
            all_prior_mean, all_enc_d_mean, all_dec, zins, zouts)


# ----------------------------- main ------------------------------------------

if __name__ == "__main__":
    key = jax.random.PRNGKey(0)
    x_dim, h_dim, num_nodes, n_layers, T = 4, 32, 8, 2, 3
    e_dim = h_dim // 2

    k_param, k_x, k_a, k_s, k_mask, k_truth, k_fwd = jax.random.split(key, 7)
    params = init_params(k_param, x_dim, h_dim, e_dim, n_layers)
    prep = prepare_params(params, h_dim, e_dim, n_layers)

    x = jax.random.normal(k_x, (T, num_nodes, x_dim), jnp.float32)

    def rand_adj(k):
        a = jax.random.uniform(k, (T, num_nodes, num_nodes))
        return jnp.where(a > 0.5, a, 0.0).astype(jnp.float32)

    A_dense = rand_adj(k_a)          # dense stand-in for A_flow edge lists
    A_sup_dense = rand_adj(k_s)      # dense stand-in for supple_flow edge lists
    A_hat = jnp.stack([normalize_adj(A_dense[t]) for t in range(T)])
    A_sup_hat = jnp.stack([normalize_adj(A_sup_dense[t]) for t in range(T)])

    mask = (jax.random.uniform(k_mask, (num_nodes, num_nodes)) > 0.3).astype(jnp.float32)
    mask = jnp.maximum(mask, jnp.eye(num_nodes, dtype=jnp.float32))  # mask.sum() > 0
    truths = jnp.floor(jax.random.uniform(k_truth, (T, num_nodes, num_nodes)) * 5.0)

    # A_scaler.inverse_transform(x) = x * scale + mean (keeps Poisson rate positive)
    scaler_scale, scaler_mean = 10.0, 1.0

    fwd = jax.jit(vmr_gae_forward,
                  static_argnames=("scaler_scale", "scaler_mean",
                                   "n_layers", "num_nodes", "h_dim"))
    out = fwd(prep, x, A_hat, A_sup_hat, mask, truths, k_fwd,
              scaler_scale=scaler_scale, scaler_mean=scaler_mean,
              n_layers=n_layers, num_nodes=num_nodes, h_dim=h_dim)
    jax.block_until_ready(jax.tree_util.tree_leaves(out))
    print("KERNEL_OK")
</pallas_src>

<mosaic_0001>
module attributes {stable_mosaic.version = 11 : i64} {
  func.func @fused_timestep_kernel(%arg0: i32, %arg1: memref<1x8x4xf32, #tpu.memory_space<vmem>>, %arg2: memref<1x8x8xbf16, #tpu.memory_space<vmem>>, %arg3: memref<1x8x8xbf16, #tpu.memory_space<vmem>>, %arg4: memref<1x8x16xf32, #tpu.memory_space<vmem>>, %arg5: memref<1x8x16xf32, #tpu.memory_space<vmem>>, %arg6: memref<1x8x8xf32, #tpu.memory_space<vmem>>, %arg7: memref<8x8xf32, #tpu.memory_space<vmem>>, %arg8: memref<4x64xbf16, #tpu.memory_space<vmem>>, %arg9: memref<1x64xf32, #tpu.memory_space<vmem>>, %arg10: memref<32x32xbf16, #tpu.memory_space<vmem>>, %arg11: memref<32x32xbf16, #tpu.memory_space<vmem>>, %arg12: memref<1x32xf32, #tpu.memory_space<vmem>>, %arg13: memref<32x32xbf16, #tpu.memory_space<vmem>>, %arg14: memref<1x32xf32, #tpu.memory_space<vmem>>, %arg15: memref<32x32xbf16, #tpu.memory_space<vmem>>, %arg16: memref<1x32xf32, #tpu.memory_space<vmem>>, %arg17: memref<32x32xbf16, #tpu.memory_space<vmem>>, %arg18: memref<1x32xf32, #tpu.memory_space<vmem>>, %arg19: memref<32x32xbf16, #tpu.memory_space<vmem>>, %arg20: memref<1x32xf32, #tpu.memory_space<vmem>>, %arg21: memref<32x32xbf16, #tpu.memory_space<vmem>>, %arg22: memref<1x32xf32, #tpu.memory_space<vmem>>, %arg23: memref<16x32xbf16, #tpu.memory_space<vmem>>, %arg24: memref<1x32xf32, #tpu.memory_space<vmem>>, %arg25: memref<16x256xbf16, #tpu.memory_space<vmem>>, %arg26: memref<16x256xbf16, #tpu.memory_space<vmem>>, %arg27: memref<1x256xf32, #tpu.memory_space<vmem>>, %arg28: memref<256x128xbf16, #tpu.memory_space<vmem>>, %arg29: memref<1x128xf32, #tpu.memory_space<vmem>>, %arg30: memref<64x256xbf16, #tpu.memory_space<vmem>>, %arg31: memref<64x256xbf16, #tpu.memory_space<vmem>>, %arg32: memref<1x256xf32, #tpu.memory_space<vmem>>, %arg33: memref<256x256xbf16, #tpu.memory_space<vmem>>, %arg34: memref<1x256xf32, #tpu.memory_space<vmem>>, %arg35: memref<1x256xf32, #tpu.memory_space<vmem>>, %arg36: memref<1x1xf32, #tpu.memory_space<vmem>>, %arg37: memref<32x96xbf16, #tpu.memory_space<vmem>>, %arg38: memref<32x96xbf16, #tpu.memory_space<vmem>>, %arg39: memref<1x96xf32, #tpu.memory_space<vmem>>, %arg40: memref<32x64xbf16, #tpu.memory_space<vmem>>, %arg41: memref<1x64xf32, #tpu.memory_space<vmem>>, %arg42: memref<32x32xbf16, #tpu.memory_space<vmem>>, %arg43: memref<1x32xf32, #tpu.memory_space<vmem>>, %arg44: memref<32x96xbf16, #tpu.memory_space<vmem>>, %arg45: memref<1x96xf32, #tpu.memory_space<vmem>>, %arg46: memref<32x64xbf16, #tpu.memory_space<vmem>>, %arg47: memref<1x64xf32, #tpu.memory_space<vmem>>, %arg48: memref<32x32xbf16, #tpu.memory_space<vmem>>, %arg49: memref<1x32xf32, #tpu.memory_space<vmem>>, %arg50: memref<1x8x16xf32, #tpu.memory_space<vmem>>, %arg51: memref<1x8x16xf32, #tpu.memory_space<vmem>>, %arg52: memref<1x8x16xf32, #tpu.memory_space<vmem>>, %arg53: memref<1x8x64xf32, #tpu.memory_space<vmem>>, %arg54: memref<1x8x64xf32, #tpu.memory_space<vmem>>, %arg55: memref<1x8x8xf32, #tpu.memory_space<vmem>>, %arg56: memref<1x2x8x32xf32, #tpu.memory_space<vmem>>, %arg57: memref<1x1xf32, #tpu.memory_space<vmem>>, %arg58: memref<1x1xf32, #tpu.memory_space<vmem>>, %arg59: memref<1x1xf32, #tpu.memory_space<vmem>>, %arg60: memref<2x8x32xf32, #tpu.memory_space<vmem>>) attributes {dimension_semantics = [#tpu.dimension_semantics<arbitrary>], iteration_bounds = array<i64: 3>, scalar_prefetch = 0 : i64, scratch_operands = 1 : i64, tpu.core_type = #tpu.core_type<tc>, window_params = [{transform_indices = @transform_0, window_bounds = array<i64: 1, 8, 4>}, {transform_indices = @transform_1, window_bounds = array<i64: 1, 8, 8>}, {transform_indices = @transform_2, window_bounds = array<i64: 1, 8, 8>}, {transform_indices = @transform_3, window_bounds = array<i64: 1, 8, 16>}, {transform_indices = @transform_4, window_bounds = array<i64: 1, 8, 16>}, {transform_indices = @transform_5, window_bounds = array<i64: 1, 8, 8>}, {pipeline_mode = #tpu.pipeline_mode<synchronous>, transform_indices = @transform_6, window_bounds = array<i64: 8, 8>}, {pipeline_mode = #tpu.pipeline_mode<synchronous>, transform_indices = @transform_7, window_bounds = array<i64: 4, 64>}, {pipeline_mode = #tpu.pipeline_mode<synchronous>, transform_indices = @transform_8, window_bounds = array<i64: 1, 64>}, {pipeline_mode = #tpu.pipeline_mode<synchronous>, transform_indices = @transform_9, window_bounds = array<i64: 32, 32>}, {pipeline_mode = #tpu.pipeline_mode<synchronous>, transform_indices = @transform_10, window_bounds = array<i64: 32, 32>}, {pipeline_mode = #tpu.pipeline_mode<synchronous>, transform_indices = @transform_11, window_bounds = array<i64: 1, 32>}, {pipeline_mode = #tpu.pipeline_mode<synchronous>, transform_indices = @transform_12, window_bounds = array<i64: 32, 32>}, {pipeline_mode = #tpu.pipeline_mode<synchronous>, transform_indices = @transform_13, window_bounds = array<i64: 1, 32>}, {pipeline_mode = #tpu.pipeline_mode<synchronous>, transform_indices = @transform_14, window_bounds = array<i64: 32, 32>}, {pipeline_mode = #tpu.pipeline_mode<synchronous>, transform_indices = @transform_15, window_bounds = array<i64: 1, 32>}, {pipeline_mode = #tpu.pipeline_mode<synchronous>, transform_indices = @transform_16, window_bounds = array<i64: 32, 32>}, {pipeline_mode = #tpu.pipeline_mode<synchronous>, transform_indices = @transform_17, window_bounds = array<i64: 1, 32>}, {pipeline_mode = #tpu.pipeline_mode<synchronous>, transform_indices = @transform_18, window_bounds = array<i64: 32, 32>}, {pipeline_mode = #tpu.pipeline_mode<synchronous>, transform_indices = @transform_19, window_bounds = array<i64: 1, 32>}, {pipeline_mode = #tpu.pipeline_mode<synchronous>, transform_indices = @transform_20, window_bounds = array<i64: 32, 32>}, {pipeline_mode = #tpu.pipeline_mode<synchronous>, transform_indices = @transform_21, window_bounds = array<i64: 1, 32>}, {pipeline_mode = #tpu.pipeline_mode<synchronous>, transform_indices = @transform_22, window_bounds = array<i64: 16, 32>}, {pipeline_mode = #tpu.pipeline_mode<synchronous>, transform_indices = @transform_23, window_bounds = array<i64: 1, 32>}, {pipeline_mode = #tpu.pipeline_mode<synchronous>, transform_indices = @transform_24, window_bounds = array<i64: 16, 256>}, {pipeline_mode = #tpu.pipeline_mode<synchronous>, transform_indices = @transform_25, window_bounds = array<i64: 16, 256>}, {pipeline_mode = #tpu.pipeline_mode<synchronous>, transform_indices = @transform_26, window_bounds = array<i64: 1, 256>}, {pipeline_mode = #tpu.pipeline_mode<synchronous>, transform_indices = @transform_27, window_bounds = array<i64: 256, 128>}, {pipeline_mode = #tpu.pipeline_mode<synchronous>, transform_indices = @transform_28, window_bounds = array<i64: 1, 128>}, {pipeline_mode = #tpu.pipeline_mode<synchronous>, transform_indices = @transform_29, window_bounds = array<i64: 64, 256>}, {pipeline_mode = #tpu.pipeline_mode<synchronous>, transform_indices = @transform_30, window_bounds = array<i64: 64, 256>}, {pipeline_mode = #tpu.pipeline_mode<synchronous>, transform_indices = @transform_31, window_bounds = array<i64: 1, 256>}, {pipeline_mode = #tpu.pipeline_mode<synchronous>, transform_indices = @transform_32, window_bounds = array<i64: 256, 256>}, {pipeline_mode = #tpu.pipeline_mode<synchronous>, transform_indices = @transform_33, window_bounds = array<i64: 1, 256>}, {pipeline_mode = #tpu.pipeline_mode<synchronous>, transform_indices = @transform_34, window_bounds = array<i64: 1, 256>}, {pipeline_mode = #tpu.pipeline_mode<synchronous>, transform_indices = @transform_35, window_bounds = array<i64: 1, 1>}, {pipeline_mode = #tpu.pipeline_mode<synchronous>, transform_indices = @transform_36, window_bounds = array<i64: 32, 96>}, {pipeline_mode = #tpu.pipeline_mode<synchronous>, transform_indices = @transform_37, window_bounds = array<i64: 32, 96>}, {pipeline_mode = #tpu.pipeline_mode<synchronous>, transform_indices = @transform_38, window_bounds = array<i64: 1, 96>}, {pipeline_mode = #tpu.pipeline_mode<synchronous>, transform_indices = @transform_39, window_bounds = array<i64: 32, 64>}, {pipeline_mode = #tpu.pipeline_mode<synchronous>, transform_indices = @transform_40, window_bounds = array<i64: 1, 64>}, {pipeline_mode = #tpu.pipeline_mode<synchronous>, transform_indices = @transform_41, window_bounds = array<i64: 32, 32>}, {pipeline_mode = #tpu.pipeline_mode<synchronous>, transform_indices = @transform_42, window_bounds = array<i64: 1, 32>}, {pipeline_mode = #tpu.pipeline_mode<synchronous>, transform_indices = @transform_43, window_bounds = array<i64: 32, 96>}, {pipeline_mode = #tpu.pipeline_mode<synchronous>, transform_indices = @transform_44, window_bounds = array<i64: 1, 96>}, {pipeline_mode = #tpu.pipeline_mode<synchronous>, transform_indices = @transform_45, window_bounds = array<i64: 32, 64>}, {pipeline_mode = #tpu.pipeline_mode<synchronous>, transform_indices = @transform_46, window_bounds = array<i64: 1, 64>}, {pipeline_mode = #tpu.pipeline_mode<synchronous>, transform_indices = @transform_47, window_bounds = array<i64: 32, 32>}, {pipeline_mode = #tpu.pipeline_mode<synchronous>, transform_indices = @transform_48, window_bounds = array<i64: 1, 32>}, {transform_indices = @transform_49, window_bounds = array<i64: 1, 8, 16>}, {transform_indices = @transform_50, window_bounds = array<i64: 1, 8, 16>}, {transform_indices = @transform_51, window_bounds = array<i64: 1, 8, 16>}, {transform_indices = @transform_52, window_bounds = array<i64: 1, 8, 64>}, {transform_indices = @transform_53, window_bounds = array<i64: 1, 8, 64>}, {transform_indices = @transform_54, window_bounds = array<i64: 1, 8, 8>}, {transform_indices = @transform_55, window_bounds = array<i64: 1, 2, 8, 32>}, {pipeline_mode = #tpu.pipeline_mode<synchronous>, transform_indices = @transform_56, window_bounds = array<i64: 1, 1>}, {pipeline_mode = #tpu.pipeline_mode<synchronous>, transform_indices = @transform_57, window_bounds = array<i64: 1, 1>}, {pipeline_mode = #tpu.pipeline_mode<synchronous>, transform_indices = @transform_58, window_bounds = array<i64: 1, 1>}]} {
    %c0_i32 = arith.constant 0 : i32
    %0 = arith.cmpi eq, %arg0, %c0_i32 : i32
    %1 = arith.extui %0 : i1 to i32
    %c0_i32_0 = arith.constant 0 : i32
    %2 = arith.cmpi ne, %1, %c0_i32_0 : i32
    scf.if %2 {
      %cst_240 = arith.constant 0.000000e+00 : f32
      %453 = vector.broadcast %cst_240 : f32 to vector<2x8x32xf32>
      %c0_241 = arith.constant 0 : index
      %c0_242 = arith.constant 0 : index
      %c0_243 = arith.constant 0 : index
      %454 = vector.load %arg60[%c0_241, %c0_242, %c0_243] : memref<2x8x32xf32, #tpu.memory_space<vmem>>, vector<2x8x32xf32>
      tpu.vector_store %arg60[%c0_241, %c0_242, %c0_243], %453 {strides = array<i32>} : memref<2x8x32xf32, #tpu.memory_space<vmem>>, vector<2x8x32xf32>,
      %cst_244 = arith.constant 0.000000e+00 : f32
      %455 = vector.broadcast %cst_244 : f32 to vector<1x1xf32>
      %c0_245 = arith.constant 0 : index
      %c0_246 = arith.constant 0 : index
      %456 = vector.load %arg57[%c0_245, %c0_246] : memref<1x1xf32, #tpu.memory_space<vmem>>, vector<1x1xf32>
      tpu.vector_store %arg57[%c0_245, %c0_246], %455 {strides = array<i32>} : memref<1x1xf32, #tpu.memory_space<vmem>>, vector<1x1xf32>,
      %cst_247 = arith.constant 0.000000e+00 : f32
      %457 = vector.broadcast %cst_247 : f32 to vector<1x1xf32>
      %c0_248 = arith.constant 0 : index
      %c0_249 = arith.constant 0 : index
      %458 = vector.load %arg58[%c0_248, %c0_249] : memref<1x1xf32, #tpu.memory_space<vmem>>, vector<1x1xf32>
      tpu.vector_store %arg58[%c0_248, %c0_249], %457 {strides = array<i32>} : memref<1x1xf32, #tpu.memory_space<vmem>>, vector<1x1xf32>,
      %cst_250 = arith.constant 0.000000e+00 : f32
      %459 = vector.broadcast %cst_250 : f32 to vector<1x1xf32>
      %c0_251 = arith.constant 0 : index
      %c0_252 = arith.constant 0 : index
      %460 = vector.load %arg59[%c0_251, %c0_252] : memref<1x1xf32, #tpu.memory_space<vmem>>, vector<1x1xf32>
      tpu.vector_store %arg59[%c0_251, %c0_252], %459 {strides = array<i32>} : memref<1x1xf32, #tpu.memory_space<vmem>>, vector<1x1xf32>,
    } else {
    }
    %c0 = arith.constant 0 : index
    %c0_1 = arith.constant 0 : index
    %c0_2 = arith.constant 0 : index
    %3 = vector.load %arg2[%c0, %c0_1, %c0_2] : memref<1x8x8xbf16, #tpu.memory_space<vmem>>, vector<1x8x8xbf16>
    %4 = vector.shape_cast %3 : vector<1x8x8xbf16> to vector<8x8xbf16>
    %c0_3 = arith.constant 0 : index
    %c0_4 = arith.constant 0 : index
    %c0_5 = arith.constant 0 : index
    %5 = vector.load %arg3[%c0_3, %c0_4, %c0_5] : memref<1x8x8xbf16, #tpu.memory_space<vmem>>, vector<1x8x8xbf16>
    %6 = vector.shape_cast %5 : vector<1x8x8xbf16> to vector<8x8xbf16>
    %c0_6 = arith.constant 0 : index
    %c0_7 = arith.constant 0 : index
    %c0_8 = arith.constant 0 : index
    %7 = vector.load %arg1[%c0_6, %c0_7, %c0_8] : memref<1x8x4xf32, #tpu.memory_space<vmem>>, vector<1x8x4xf32>
    %8 = vector.shape_cast %7 : vector<1x8x4xf32> to vector<8x4xf32>
    %c0_9 = arith.constant 0 : index
    %c0_10 = arith.constant 0 : index
    %c0_11 = arith.constant 0 : index
    %9 = vector.load %arg4[%c0_9, %c0_10, %c0_11] : memref<1x8x16xf32, #tpu.memory_space<vmem>>, vector<1x8x16xf32>
    %10 = vector.shape_cast %9 : vector<1x8x16xf32> to vector<8x16xf32>
    %c0_12 = arith.constant 0 : index
    %c0_13 = arith.constant 0 : index
    %c0_14 = arith.constant 0 : index
    %11 = vector.load %arg5[%c0_12, %c0_13, %c0_14] : memref<1x8x16xf32, #tpu.memory_space<vmem>>, vector<1x8x16xf32>
    %12 = vector.shape_cast %11 : vector<1x8x16xf32> to vector<8x16xf32>
    %c0_15 = arith.constant 0 : index
    %c0_16 = arith.constant 0 : index
    %c0_17 = arith.constant 0 : index
    %13 = vector.load %arg6[%c0_15, %c0_16, %c0_17] : memref<1x8x8xf32, #tpu.memory_space<vmem>>, vector<1x8x8xf32>
    %14 = vector.shape_cast %13 : vector<1x8x8xf32> to vector<8x8xf32>
    %c0_18 = arith.constant 0 : index
    %c0_19 = arith.constant 0 : index
    %15 = vector.load %arg7[%c0_18, %c0_19] : memref<8x8xf32, #tpu.memory_space<vmem>>, vector<8x8xf32>
    %c1 = arith.constant 1 : index
    %c0_20 = arith.constant 0 : index
    %c0_21 = arith.constant 0 : index
    %16 = vector.load %arg60[%c1, %c0_20, %c0_21] : memref<2x8x32xf32, #tpu.memory_space<vmem>>, vector<1x8x32xf32>
    %17 = vector.shape_cast %16 : vector<1x8x32xf32> to vector<8x32xf32>
    %c0_22 = arith.constant 0 : index
    %c0_23 = arith.constant 0 : index
    %18 = vector.load %arg8[%c0_22, %c0_23] : memref<4x64xbf16, #tpu.memory_space<vmem>>, vector<4x64xbf16>
    %19 = arith.truncf %8 : vector<8x4xf32> to vector<8x4xbf16>
    %cst = arith.constant dense<0.000000e+00> : vector<8x64xf32>
    %20 = tpu.matmul %19, %18, %cst {dimension_numbers = #tpu.dot_dimension_numbers<[1], [0], [0], [1], [0, 0, 1, 1], [], []>} : vector<8x4xbf16>, vector<4x64xbf16>, vector<8x64xf32> -> vector<8x64xf32>
    %c0_24 = arith.constant 0 : index
    %c0_25 = arith.constant 0 : index
    %21 = vector.load %arg9[%c0_24, %c0_25] : memref<1x64xf32, #tpu.memory_space<vmem>>, vector<1x64xf32>
    %22 = vector.broadcast %21 : vector<1x64xf32> to vector<8x64xf32>
    %23 = arith.addf %20, %22 : vector<8x64xf32>
    %cst_26 = arith.constant 0.000000e+00 : f32
    %24 = vector.broadcast %cst_26 : f32 to vector<8x64xf32>
    %25 = arith.maximumf %23, %24 : vector<8x64xf32>
    %26 = vector.extract_strided_slice %25 {offsets = [0, 0], sizes = [8, 32], strides = [1, 1]} : vector<8x64xf32> to vector<8x32xf32>
    %27 = vector.extract_strided_slice %25 {offsets = [0, 32], sizes = [8, 32], strides = [1, 1]} : vector<8x64xf32> to vector<8x32xf32>
    %c0_27 = arith.constant 0 : index
    %c0_28 = arith.constant 0 : index
    %28 = vector.load %arg10[%c0_27, %c0_28] : memref<32x32xbf16, #tpu.memory_space<vmem>>, vector<32x32xbf16>
    %29 = arith.truncf %26 : vector<8x32xf32> to vector<8x32xbf16>
    %cst_29 = arith.constant dense<0.000000e+00> : vector<8x32xf32>
    %30 = tpu.matmul %29, %28, %cst_29 {dimension_numbers = #tpu.dot_dimension_numbers<[1], [0], [0], [1], [0, 0, 1, 1], [], []>} : vector<8x32xbf16>, vector<32x32xbf16>, vector<8x32xf32> -> vector<8x32xf32>
    %c0_30 = arith.constant 0 : index
    %c0_31 = arith.constant 0 : index
    %31 = vector.load %arg11[%c0_30, %c0_31] : memref<32x32xbf16, #tpu.memory_space<vmem>>, vector<32x32xbf16>
    %32 = arith.truncf %17 : vector<8x32xf32> to vector<8x32xbf16>
    %cst_32 = arith.constant dense<0.000000e+00> : vector<8x32xf32>
    %33 = tpu.matmul %32, %31, %cst_32 {dimension_numbers = #tpu.dot_dimension_numbers<[1], [0], [0], [1], [0, 0, 1, 1], [], []>} : vector<8x32xbf16>, vector<32x32xbf16>, vector<8x32xf32> -> vector<8x32xf32>
    %34 = arith.addf %30, %33 : vector<8x32xf32>
    %c0_33 = arith.constant 0 : index
    %c0_34 = arith.constant 0 : index
    %35 = vector.load %arg12[%c0_33, %c0_34] : memref<1x32xf32, #tpu.memory_space<vmem>>, vector<1x32xf32>
    %36 = arith.truncf %34 : vector<8x32xf32> to vector<8x32xbf16>
    %cst_35 = arith.constant dense<0.000000e+00> : vector<8x32xf32>
    %37 = tpu.matmul %4, %36, %cst_35 {dimension_numbers = #tpu.dot_dimension_numbers<[1], [0], [0], [1], [0, 0, 1, 1], [], []>} : vector<8x8xbf16>, vector<8x32xbf16>, vector<8x32xf32> -> vector<8x32xf32>
    %38 = vector.broadcast %35 : vector<1x32xf32> to vector<8x32xf32>
    %39 = arith.addf %37, %38 : vector<8x32xf32>
    %cst_36 = arith.constant 0.000000e+00 : f32
    %40 = vector.broadcast %cst_36 : f32 to vector<8x32xf32>
    %41 = arith.maximumf %39, %40 : vector<8x32xf32>
    %c0_37 = arith.constant 0 : index
    %c0_38 = arith.constant 0 : index
    %42 = vector.load %arg13[%c0_37, %c0_38] : memref<32x32xbf16, #tpu.memory_space<vmem>>, vector<32x32xbf16>
    %43 = arith.truncf %41 : vector<8x32xf32> to vector<8x32xbf16>
    %cst_39 = arith.constant dense<0.000000e+00> : vector<8x32xf32>
    %44 = tpu.matmul %43, %42, %cst_39 {dimension_numbers = #tpu.dot_dimension_numbers<[1], [0], [0], [1], [0, 0, 1, 1], [], []>} : vector<8x32xbf16>, vector<32x32xbf16>, vector<8x32xf32> -> vector<8x32xf32>
    %c0_40 = arith.constant 0 : index
    %c0_41 = arith.constant 0 : index
    %45 = vector.load %arg14[%c0_40, %c0_41] : memref<1x32xf32, #tpu.memory_space<vmem>>, vector<1x32xf32>
    %46 = arith.truncf %44 : vector<8x32xf32> to vector<8x32xbf16>
    %cst_42 = arith.constant dense<0.000000e+00> : vector<8x32xf32>
    %47 = tpu.matmul %4, %46, %cst_42 {dimension_numbers = #tpu.dot_dimension_numbers<[1], [0], [0], [1], [0, 0, 1, 1], [], []>} : vector<8x8xbf16>, vector<8x32xbf16>, vector<8x32xf32> -> vector<8x32xf32>
    %48 = vector.broadcast %45 : vector<1x32xf32> to vector<8x32xf32>
    %49 = arith.addf %47, %48 : vector<8x32xf32>
    %50 = vector.extract_strided_slice %49 {offsets = [0, 0], sizes = [8, 16], strides = [1, 1]} : vector<8x32xf32> to vector<8x16xf32>
    %51 = vector.extract_strided_slice %49 {offsets = [0, 16], sizes = [8, 16], strides = [1, 1]} : vector<8x32xf32> to vector<8x16xf32>
    %cst_43 = arith.constant 0.000000e+00 : f32
    %52 = vector.broadcast %cst_43 : f32 to vector<8x16xf32>
    %53 = arith.maximumf %51, %52 : vector<8x16xf32>
    %54 = vector.broadcast %cst_43 : f32 to vector<8x16xf32>
    %55 = arith.subf %51, %54 : vector<8x16xf32>
    %56 = arith.cmpf one, %55, %55 : vector<8x16xf32>
    %57 = vector.broadcast %cst_43 : f32 to vector<8x16xf32>
    %58 = arith.addf %51, %57 : vector<8x16xf32>
    %59 = math.absf %55 : vector<8x16xf32>
    %cst_44 = arith.constant 0.000000e+00 : f32
    %60 = vector.broadcast %cst_44 : f32 to vector<8x16xf32>
    %61 = arith.subf %60, %59 : vector<8x16xf32>
    %62 = math.exp %61 : vector<8x16xf32>
    %63 = math.log1p %62 : vector<8x16xf32>
    %64 = arith.addf %53, %63 : vector<8x16xf32>
    %65 = arith.select %56, %58, %64 : vector<8x16xi1>, vector<8x16xf32>
    %c0_45 = arith.constant 0 : index
    %c0_46 = arith.constant 0 : index
    %66 = vector.load %arg15[%c0_45, %c0_46] : memref<32x32xbf16, #tpu.memory_space<vmem>>, vector<32x32xbf16>
    %67 = arith.truncf %27 : vector<8x32xf32> to vector<8x32xbf16>
    %cst_47 = arith.constant dense<0.000000e+00> : vector<8x32xf32>
    %68 = tpu.matmul %67, %66, %cst_47 {dimension_numbers = #tpu.dot_dimension_numbers<[1], [0], [0], [1], [0, 0, 1, 1], [], []>} : vector<8x32xbf16>, vector<32x32xbf16>, vector<8x32xf32> -> vector<8x32xf32>
    %c0_48 = arith.constant 0 : index
    %c0_49 = arith.constant 0 : index
    %69 = vector.load %arg16[%c0_48, %c0_49] : memref<1x32xf32, #tpu.memory_space<vmem>>, vector<1x32xf32>
    %70 = arith.truncf %68 : vector<8x32xf32> to vector<8x32xbf16>
    %cst_50 = arith.constant dense<0.000000e+00> : vector<8x32xf32>
    %71 = tpu.matmul %6, %70, %cst_50 {dimension_numbers = #tpu.dot_dimension_numbers<[1], [0], [0], [1], [0, 0, 1, 1], [], []>} : vector<8x8xbf16>, vector<8x32xbf16>, vector<8x32xf32> -> vector<8x32xf32>
    %72 = vector.broadcast %69 : vector<1x32xf32> to vector<8x32xf32>
    %73 = arith.addf %71, %72 : vector<8x32xf32>
    %cst_51 = arith.constant 0.000000e+00 : f32
    %74 = vector.broadcast %cst_51 : f32 to vector<8x32xf32>
    %75 = arith.maximumf %73, %74 : vector<8x32xf32>
    %c0_52 = arith.constant 0 : index
    %c0_53 = arith.constant 0 : index
    %76 = vector.load %arg17[%c0_52, %c0_53] : memref<32x32xbf16, #tpu.memory_space<vmem>>, vector<32x32xbf16>
    %77 = arith.truncf %75 : vector<8x32xf32> to vector<8x32xbf16>
    %cst_54 = arith.constant dense<0.000000e+00> : vector<8x32xf32>
    %78 = tpu.matmul %77, %76, %cst_54 {dimension_numbers = #tpu.dot_dimension_numbers<[1], [0], [0], [1], [0, 0, 1, 1], [], []>} : vector<8x32xbf16>, vector<32x32xbf16>, vector<8x32xf32> -> vector<8x32xf32>
    %c0_55 = arith.constant 0 : index
    %c0_56 = arith.constant 0 : index
    %79 = vector.load %arg18[%c0_55, %c0_56] : memref<1x32xf32, #tpu.memory_space<vmem>>, vector<1x32xf32>
    %80 = arith.truncf %78 : vector<8x32xf32> to vector<8x32xbf16>
    %cst_57 = arith.constant dense<0.000000e+00> : vector<8x32xf32>
    %81 = tpu.matmul %6, %80, %cst_57 {dimension_numbers = #tpu.dot_dimension_numbers<[1], [0], [0], [1], [0, 0, 1, 1], [], []>} : vector<8x8xbf16>, vector<8x32xbf16>, vector<8x32xf32> -> vector<8x32xf32>
    %82 = vector.broadcast %79 : vector<1x32xf32> to vector<8x32xf32>
    %83 = arith.addf %81, %82 : vector<8x32xf32>
    %84 = vector.extract_strided_slice %83 {offsets = [0, 0], sizes = [8, 16], strides = [1, 1]} : vector<8x32xf32> to vector<8x16xf32>
    %85 = vector.extract_strided_slice %83 {offsets = [0, 16], sizes = [8, 16], strides = [1, 1]} : vector<8x32xf32> to vector<8x16xf32>
    %cst_58 = arith.constant 0.000000e+00 : f32
    %86 = vector.broadcast %cst_58 : f32 to vector<8x16xf32>
    %87 = arith.maximumf %85, %86 : vector<8x16xf32>
    %88 = vector.broadcast %cst_58 : f32 to vector<8x16xf32>
    %89 = arith.subf %85, %88 : vector<8x16xf32>
    %90 = arith.cmpf one, %89, %89 : vector<8x16xf32>
    %91 = vector.broadcast %cst_58 : f32 to vector<8x16xf32>
    %92 = arith.addf %85, %91 : vector<8x16xf32>
    %93 = math.absf %89 : vector<8x16xf32>
    %cst_59 = arith.constant 0.000000e+00 : f32
    %94 = vector.broadcast %cst_59 : f32 to vector<8x16xf32>
    %95 = arith.subf %94, %93 : vector<8x16xf32>
    %96 = math.exp %95 : vector<8x16xf32>
    %97 = math.log1p %96 : vector<8x16xf32>
    %98 = arith.addf %87, %97 : vector<8x16xf32>
    %99 = arith.select %90, %92, %98 : vector<8x16xi1>, vector<8x16xf32>
    %c0_60 = arith.constant 0 : index
    %c0_61 = arith.constant 0 : index
    %100 = vector.load %arg19[%c0_60, %c0_61] : memref<32x32xbf16, #tpu.memory_space<vmem>>, vector<32x32xbf16>
    %101 = arith.truncf %17 : vector<8x32xf32> to vector<8x32xbf16>
    %cst_62 = arith.constant dense<0.000000e+00> : vector<8x32xf32>
    %102 = tpu.matmul %101, %100, %cst_62 {dimension_numbers = #tpu.dot_dimension_numbers<[1], [0], [0], [1], [0, 0, 1, 1], [], []>} : vector<8x32xbf16>, vector<32x32xbf16>, vector<8x32xf32> -> vector<8x32xf32>
    %c0_63 = arith.constant 0 : index
    %c0_64 = arith.constant 0 : index
    %103 = vector.load %arg20[%c0_63, %c0_64] : memref<1x32xf32, #tpu.memory_space<vmem>>, vector<1x32xf32>
    %104 = vector.broadcast %103 : vector<1x32xf32> to vector<8x32xf32>
    %105 = arith.addf %102, %104 : vector<8x32xf32>
    %cst_65 = arith.constant 0.000000e+00 : f32
    %106 = vector.broadcast %cst_65 : f32 to vector<8x32xf32>
    %107 = arith.maximumf %105, %106 : vector<8x32xf32>
    %c0_66 = arith.constant 0 : index
    %c0_67 = arith.constant 0 : index
    %108 = vector.load %arg21[%c0_66, %c0_67] : memref<32x32xbf16, #tpu.memory_space<vmem>>, vector<32x32xbf16>
    %109 = arith.truncf %107 : vector<8x32xf32> to vector<8x32xbf16>
    %cst_68 = arith.constant dense<0.000000e+00> : vector<8x32xf32>
    %110 = tpu.matmul %109, %108, %cst_68 {dimension_numbers = #tpu.dot_dimension_numbers<[1], [0], [0], [1], [0, 0, 1, 1], [], []>} : vector<8x32xbf16>, vector<32x32xbf16>, vector<8x32xf32> -> vector<8x32xf32>
    %c0_69 = arith.constant 0 : index
    %c0_70 = arith.constant 0 : index
    %111 = vector.load %arg22[%c0_69, %c0_70] : memref<1x32xf32, #tpu.memory_space<vmem>>, vector<1x32xf32>
    %112 = vector.broadcast %111 : vector<1x32xf32> to vector<8x32xf32>
    %113 = arith.addf %110, %112 : vector<8x32xf32>
    %114 = vector.extract_strided_slice %113 {offsets = [0, 0], sizes = [8, 16], strides = [1, 1]} : vector<8x32xf32> to vector<8x16xf32>
    %115 = vector.extract_strided_slice %113 {offsets = [0, 16], sizes = [8, 16], strides = [1, 1]} : vector<8x32xf32> to vector<8x16xf32>
    %cst_71 = arith.constant 0.000000e+00 : f32
    %116 = vector.broadcast %cst_71 : f32 to vector<8x16xf32>
    %117 = arith.maximumf %115, %116 : vector<8x16xf32>
    %118 = vector.broadcast %cst_71 : f32 to vector<8x16xf32>
    %119 = arith.subf %115, %118 : vector<8x16xf32>
    %120 = arith.cmpf one, %119, %119 : vector<8x16xf32>
    %121 = vector.broadcast %cst_71 : f32 to vector<8x16xf32>
    %122 = arith.addf %115, %121 : vector<8x16xf32>
    %123 = math.absf %119 : vector<8x16xf32>
    %cst_72 = arith.constant 0.000000e+00 : f32
    %124 = vector.broadcast %cst_72 : f32 to vector<8x16xf32>
    %125 = arith.subf %124, %123 : vector<8x16xf32>
    %126 = math.exp %125 : vector<8x16xf32>
    %127 = math.log1p %126 : vector<8x16xf32>
    %128 = arith.addf %117, %127 : vector<8x16xf32>
    %129 = arith.select %120, %122, %128 : vector<8x16xi1>, vector<8x16xf32>
    %130 = arith.mulf %10, %65 : vector<8x16xf32>
    %131 = arith.addf %130, %50 : vector<8x16xf32>
    %132 = arith.mulf %12, %99 : vector<8x16xf32>
    %133 = arith.addf %132, %84 : vector<8x16xf32>
    %c0_73 = arith.constant 0 : index
    %c0_74 = arith.constant 0 : index
    %134 = vector.load %arg23[%c0_73, %c0_74] : memref<16x32xbf16, #tpu.memory_space<vmem>>, vector<16x32xbf16>
    %135 = arith.truncf %131 : vector<8x16xf32> to vector<8x16xbf16>
    %cst_75 = arith.constant dense<0.000000e+00> : vector<8x32xf32>
    %136 = tpu.matmul %135, %134, %cst_75 {dimension_numbers = #tpu.dot_dimension_numbers<[1], [0], [0], [1], [0, 0, 1, 1], [], []>} : vector<8x16xbf16>, vector<16x32xbf16>, vector<8x32xf32> -> vector<8x32xf32>
    %c0_76 = arith.constant 0 : index
    %c0_77 = arith.constant 0 : index
    %137 = vector.load %arg24[%c0_76, %c0_77] : memref<1x32xf32, #tpu.memory_space<vmem>>, vector<1x32xf32>
    %138 = vector.broadcast %137 : vector<1x32xf32> to vector<8x32xf32>
    %139 = arith.addf %136, %138 : vector<8x32xf32>
    %cst_78 = arith.constant 0.000000e+00 : f32
    %140 = vector.broadcast %cst_78 : f32 to vector<8x32xf32>
    %141 = arith.maximumf %139, %140 : vector<8x32xf32>
    %c0_79 = arith.constant 0 : index
    %c0_80 = arith.constant 0 : index
    %142 = vector.load %arg25[%c0_79, %c0_80] : memref<16x256xbf16, #tpu.memory_space<vmem>>, vector<16x256xbf16>
    %143 = arith.truncf %131 : vector<8x16xf32> to vector<8x16xbf16>
    %cst_81 = arith.constant dense<0.000000e+00> : vector<8x256xf32>
    %144 = tpu.matmul %143, %142, %cst_81 {dimension_numbers = #tpu.dot_dimension_numbers<[1], [0], [0], [1], [0, 0, 1, 1], [], []>} : vector<8x16xbf16>, vector<16x256xbf16>, vector<8x256xf32> -> vector<8x256xf32>
    %c0_82 = arith.constant 0 : index
    %c0_83 = arith.constant 0 : index
    %145 = vector.load %arg26[%c0_82, %c0_83] : memref<16x256xbf16, #tpu.memory_space<vmem>>, vector<16x256xbf16>
    %146 = arith.truncf %133 : vector<8x16xf32> to vector<8x16xbf16>
    %cst_84 = arith.constant dense<0.000000e+00> : vector<8x256xf32>
    %147 = tpu.matmul %146, %145, %cst_84 {dimension_numbers = #tpu.dot_dimension_numbers<[1], [0], [0], [1], [0, 0, 1, 1], [], []>} : vector<8x16xbf16>, vector<16x256xbf16>, vector<8x256xf32> -> vector<8x256xf32>
    %148 = arith.addf %144, %147 : vector<8x256xf32>
    %c0_85 = arith.constant 0 : index
    %c0_86 = arith.constant 0 : index
    %149 = vector.load %arg27[%c0_85, %c0_86] : memref<1x256xf32, #tpu.memory_space<vmem>>, vector<1x256xf32>
    %150 = vector.broadcast %149 : vector<1x256xf32> to vector<8x256xf32>
    %151 = arith.addf %148, %150 : vector<8x256xf32>
    %cst_87 = arith.constant 0.000000e+00 : f32
    %152 = vector.broadcast %cst_87 : f32 to vector<8x256xf32>
    %153 = arith.cmpf ogt, %151, %152 : vector<8x256xf32>
    %cst_88 = arith.constant 2.500000e-01 : f32
    %154 = vector.broadcast %cst_88 : f32 to vector<8x256xf32>
    %155 = arith.mulf %154, %151 : vector<8x256xf32>
    %156 = arith.select %153, %151, %155 : vector<8x256xi1>, vector<8x256xf32>
    %c0_89 = arith.constant 0 : index
    %c0_90 = arith.constant 0 : index
    %157 = vector.load %arg28[%c0_89, %c0_90] : memref<256x128xbf16, #tpu.memory_space<vmem>>, vector<256x128xbf16>
    %158 = arith.truncf %156 : vector<8x256xf32> to vector<8x256xbf16>
    %cst_91 = arith.constant dense<0.000000e+00> : vector<8x128xf32>
    %159 = tpu.matmul %158, %157, %cst_91 {dimension_numbers = #tpu.dot_dimension_numbers<[1], [0], [0], [1], [0, 0, 1, 1], [], []>} : vector<8x256xbf16>, vector<256x128xbf16>, vector<8x128xf32> -> vector<8x128xf32>
    %c0_92 = arith.constant 0 : index
    %c0_93 = arith.constant 0 : index
    %160 = vector.load %arg29[%c0_92, %c0_93] : memref<1x128xf32, #tpu.memory_space<vmem>>, vector<1x128xf32>
    %161 = vector.broadcast %160 : vector<1x128xf32> to vector<8x128xf32>
    %162 = arith.addf %159, %161 : vector<8x128xf32>
    %cst_94 = arith.constant 0.000000e+00 : f32
    %163 = vector.broadcast %cst_94 : f32 to vector<8x128xf32>
    %164 = arith.cmpf ogt, %162, %163 : vector<8x128xf32>
    %cst_95 = arith.constant 2.500000e-01 : f32
    %165 = vector.broadcast %cst_95 : f32 to vector<8x128xf32>
    %166 = arith.mulf %165, %162 : vector<8x128xf32>
    %167 = arith.select %164, %162, %166 : vector<8x128xi1>, vector<8x128xf32>
    %168 = vector.extract_strided_slice %167 {offsets = [0, 0], sizes = [8, 64], strides = [1, 1]} : vector<8x128xf32> to vector<8x64xf32>
    %169 = vector.extract_strided_slice %167 {offsets = [0, 64], sizes = [8, 64], strides = [1, 1]} : vector<8x128xf32> to vector<8x64xf32>
    %c0_96 = arith.constant 0 : index
    %c0_97 = arith.constant 0 : index
    %170 = vector.load %arg57[%c0_96, %c0_97] : memref<1x1xf32, #tpu.memory_space<vmem>>, vector<1x1xf32>
    %cst_98 = arith.constant 1.000000e-10 : f32
    %171 = vector.broadcast %cst_98 : f32 to vector<8x16xf32>
    %172 = arith.addf %65, %171 : vector<8x16xf32>
    %cst_99 = arith.constant 1.000000e-10 : f32
    %173 = vector.broadcast %cst_99 : f32 to vector<8x16xf32>
    %174 = arith.addf %129, %173 : vector<8x16xf32>
    %175 = arith.subf %50, %114 : vector<8x16xf32>
    %176 = arith.divf %174, %172 : vector<8x16xf32>
    %177 = math.log %176 : vector<8x16xf32>
    %cst_100 = arith.constant 2.000000e+00 : f32
    %178 = vector.broadcast %cst_100 : f32 to vector<8x16xf32>
    %179 = arith.mulf %178, %177 : vector<8x16xf32>
    %180 = arith.mulf %172, %172 : vector<8x16xf32>
    %181 = arith.mulf %175, %175 : vector<8x16xf32>
    %182 = arith.addf %180, %181 : vector<8x16xf32>
    %183 = arith.mulf %174, %174 : vector<8x16xf32>
    %184 = arith.divf %182, %183 : vector<8x16xf32>
    %185 = arith.addf %179, %184 : vector<8x16xf32>
    %cst_101 = arith.constant 1.000000e+00 : f32
    %186 = vector.broadcast %cst_101 : f32 to vector<8x16xf32>
    %187 = arith.subf %185, %186 : vector<8x16xf32>
    %188 = vector.shape_cast %187 : vector<8x16xf32> to vector<1x8x16xf32>
    %cst_102 = arith.constant dense<0.000000e+00> : vector<1xf32>
    %189 = vector.multi_reduction <add>, %188, %cst_102 [1, 2] : vector<1x8x16xf32> to vector<1xf32>
    %190 = vector.shape_cast %189 : vector<1xf32> to vector<1x1x1xf32>
    %191 = vector.extract %190[0, 0, 0] : f32 from vector<1x1x1xf32>
    %192 = vector.broadcast %191 : f32 to vector<1x1xf32>
    %cst_103 = arith.constant 7.812500e-03 : f32
    %193 = vector.broadcast %cst_103 : f32 to vector<1x1xf32>
    %194 = arith.mulf %193, %192 : vector<1x1xf32>
    %195 = arith.addf %170, %194 : vector<1x1xf32>
    %c0_104 = arith.constant 0 : index
    %c0_105 = arith.constant 0 : index
    %196 = vector.load %arg57[%c0_104, %c0_105] : memref<1x1xf32, #tpu.memory_space<vmem>>, vector<1x1xf32>
    tpu.vector_store %arg57[%c0_104, %c0_105], %195 {strides = array<i32>} : memref<1x1xf32, #tpu.memory_space<vmem>>, vector<1x1xf32>,
    %c0_106 = arith.constant 0 : index
    %c0_107 = arith.constant 0 : index
    %197 = vector.load %arg58[%c0_106, %c0_107] : memref<1x1xf32, #tpu.memory_space<vmem>>, vector<1x1xf32>
    %cst_108 = arith.constant 1.000000e-10 : f32
    %198 = vector.broadcast %cst_108 : f32 to vector<8x16xf32>
    %199 = arith.addf %99, %198 : vector<8x16xf32>
    %cst_109 = arith.constant 1.000000e-10 : f32
    %200 = vector.broadcast %cst_109 : f32 to vector<8x16xf32>
    %201 = arith.addf %129, %200 : vector<8x16xf32>
    %202 = arith.subf %84, %114 : vector<8x16xf32>
    %203 = arith.divf %201, %199 : vector<8x16xf32>
    %204 = math.log %203 : vector<8x16xf32>
    %cst_110 = arith.constant 2.000000e+00 : f32
    %205 = vector.broadcast %cst_110 : f32 to vector<8x16xf32>
    %206 = arith.mulf %205, %204 : vector<8x16xf32>
    %207 = arith.mulf %199, %199 : vector<8x16xf32>
    %208 = arith.mulf %202, %202 : vector<8x16xf32>
    %209 = arith.addf %207, %208 : vector<8x16xf32>
    %210 = arith.mulf %201, %201 : vector<8x16xf32>
    %211 = arith.divf %209, %210 : vector<8x16xf32>
    %212 = arith.addf %206, %211 : vector<8x16xf32>
    %cst_111 = arith.constant 1.000000e+00 : f32
    %213 = vector.broadcast %cst_111 : f32 to vector<8x16xf32>
    %214 = arith.subf %212, %213 : vector<8x16xf32>
    %215 = vector.shape_cast %214 : vector<8x16xf32> to vector<1x8x16xf32>
    %cst_112 = arith.constant dense<0.000000e+00> : vector<1xf32>
    %216 = vector.multi_reduction <add>, %215, %cst_112 [1, 2] : vector<1x8x16xf32> to vector<1xf32>
    %217 = vector.shape_cast %216 : vector<1xf32> to vector<1x1x1xf32>
    %218 = vector.extract %217[0, 0, 0] : f32 from vector<1x1x1xf32>
    %219 = vector.broadcast %218 : f32 to vector<1x1xf32>
    %cst_113 = arith.constant 7.812500e-03 : f32
    %220 = vector.broadcast %cst_113 : f32 to vector<1x1xf32>
    %221 = arith.mulf %220, %219 : vector<1x1xf32>
    %cst_114 = arith.constant 2.000000e-01 : f32
    %222 = vector.broadcast %cst_114 : f32 to vector<1x1xf32>
    %223 = arith.mulf %222, %221 : vector<1x1xf32>
    %224 = arith.addf %197, %223 : vector<1x1xf32>
    %c0_115 = arith.constant 0 : index
    %c0_116 = arith.constant 0 : index
    %225 = vector.load %arg58[%c0_115, %c0_116] : memref<1x1xf32, #tpu.memory_space<vmem>>, vector<1x1xf32>
    tpu.vector_store %arg58[%c0_115, %c0_116], %224 {strides = array<i32>} : memref<1x1xf32, #tpu.memory_space<vmem>>, vector<1x1xf32>,
    %c0_117 = arith.constant 0 : index
    %c0_118 = arith.constant 0 : index
    %226 = vector.load %arg30[%c0_117, %c0_118] : memref<64x256xbf16, #tpu.memory_space<vmem>>, vector<64x256xbf16>
    %227 = arith.truncf %169 : vector<8x64xf32> to vector<8x64xbf16>
    %cst_119 = arith.constant dense<0.000000e+00> : vector<8x256xf32>
    %228 = tpu.matmul %227, %226, %cst_119 {dimension_numbers = #tpu.dot_dimension_numbers<[1], [0], [0], [1], [0, 0, 1, 1], [], []>} : vector<8x64xbf16>, vector<64x256xbf16>, vector<8x256xf32> -> vector<8x256xf32>
    %c0_120 = arith.constant 0 : index
    %c0_121 = arith.constant 0 : index
    %229 = vector.load %arg31[%c0_120, %c0_121] : memref<64x256xbf16, #tpu.memory_space<vmem>>, vector<64x256xbf16>
    %230 = arith.truncf %168 : vector<8x64xf32> to vector<8x64xbf16>
    %cst_122 = arith.constant dense<0.000000e+00> : vector<8x256xf32>
    %231 = tpu.matmul %230, %229, %cst_122 {dimension_numbers = #tpu.dot_dimension_numbers<[1], [0], [0], [1], [0, 0, 1, 1], [], []>} : vector<8x64xbf16>, vector<64x256xbf16>, vector<8x256xf32> -> vector<8x256xf32>
    %c0_123 = arith.constant 0 : index
    %c0_124 = arith.constant 0 : index
    %232 = vector.load %arg32[%c0_123, %c0_124] : memref<1x256xf32, #tpu.memory_space<vmem>>, vector<1x256xf32>
    %233 = vector.broadcast %232 : vector<1x256xf32> to vector<8x256xf32>
    %234 = arith.addf %231, %233 : vector<8x256xf32>
    %235 = vector.shape_cast %228 : vector<8x256xf32> to vector<8x1x256xf32>
    %236 = vector.shape_cast %234 : vector<8x256xf32> to vector<1x8x256xf32>
    %237 = vector.broadcast %235 : vector<8x1x256xf32> to vector<8x8x256xf32>
    %238 = vector.broadcast %236 : vector<1x8x256xf32> to vector<8x8x256xf32>
    %239 = arith.addf %237, %238 : vector<8x8x256xf32>
    %cst_125 = arith.constant 0.000000e+00 : f32
    %240 = vector.broadcast %cst_125 : f32 to vector<8x8x256xf32>
    %241 = arith.cmpf ogt, %239, %240 : vector<8x8x256xf32>
    %cst_126 = arith.constant 2.500000e-01 : f32
    %242 = vector.broadcast %cst_126 : f32 to vector<8x8x256xf32>
    %243 = arith.mulf %242, %239 : vector<8x8x256xf32>
    %244 = arith.select %241, %239, %243 : vector<8x8x256xi1>, vector<8x8x256xf32>
    %245 = vector.shape_cast %244 : vector<8x8x256xf32> to vector<64x256xf32>
    %c0_127 = arith.constant 0 : index
    %c0_128 = arith.constant 0 : index
    %246 = vector.load %arg33[%c0_127, %c0_128] : memref<256x256xbf16, #tpu.memory_space<vmem>>, vector<256x256xbf16>
    %247 = arith.truncf %245 : vector<64x256xf32> to vector<64x256xbf16>
    %cst_129 = arith.constant dense<0.000000e+00> : vector<64x256xf32>
    %248 = tpu.matmul %247, %246, %cst_129 {dimension_numbers = #tpu.dot_dimension_numbers<[1], [0], [0], [1], [0, 0, 1, 1], [], []>} : vector<64x256xbf16>, vector<256x256xbf16>, vector<64x256xf32> -> vector<64x256xf32>
    %c0_130 = arith.constant 0 : index
    %c0_131 = arith.constant 0 : index
    %249 = vector.load %arg34[%c0_130, %c0_131] : memref<1x256xf32, #tpu.memory_space<vmem>>, vector<1x256xf32>
    %250 = vector.broadcast %249 : vector<1x256xf32> to vector<64x256xf32>
    %251 = arith.addf %248, %250 : vector<64x256xf32>
    %cst_132 = arith.constant 0.000000e+00 : f32
    %252 = vector.broadcast %cst_132 : f32 to vector<64x256xf32>
    %253 = arith.cmpf ogt, %251, %252 : vector<64x256xf32>
    %cst_133 = arith.constant 2.500000e-01 : f32
    %254 = vector.broadcast %cst_133 : f32 to vector<64x256xf32>
    %255 = arith.mulf %254, %251 : vector<64x256xf32>
    %256 = arith.select %253, %251, %255 : vector<64x256xi1>, vector<64x256xf32>
    %257 = vector.shape_cast %256 : vector<64x256xf32> to vector<8x8x256xf32>
    %c0_134 = arith.constant 0 : index
    %c0_135 = arith.constant 0 : index
    %258 = vector.load %arg35[%c0_134, %c0_135] : memref<1x256xf32, #tpu.memory_space<vmem>>, vector<1x256xf32>
    %259 = vector.shape_cast %258 : vector<1x256xf32> to vector<1x1x256xf32>
    %260 = vector.broadcast %259 : vector<1x1x256xf32> to vector<8x8x256xf32>
    %261 = arith.mulf %257, %260 : vector<8x8x256xf32>
    %cst_136 = arith.constant dense<0.000000e+00> : vector<8x8xf32>
    %262 = vector.multi_reduction <add>, %261, %cst_136 [2] : vector<8x8x256xf32> to vector<8x8xf32>
    %c0_137 = arith.constant 0 : index
    %c0_138 = arith.constant 0 : index
    %263 = vector.load %arg36[%c0_137, %c0_138] : memref<1x1xf32, #tpu.memory_space<vmem>>, vector<1x1xf32>
    %264 = vector.broadcast %263 : vector<1x1xf32> to vector<8x8xf32>
    %265 = arith.addf %262, %264 : vector<8x8xf32>
    %266 = arith.negf %265 : vector<8x8xf32>
    %267 = math.exp %266 : vector<8x8xf32>
    %cst_139 = arith.constant 1.000000e+00 : f32
    %268 = vector.broadcast %cst_139 : f32 to vector<8x8xf32>
    %269 = arith.addf %268, %267 : vector<8x8xf32>
    %270 = arith.divf %268, %269 : vector<8x8xf32>
    %c0_140 = arith.constant 0 : index
    %c0_141 = arith.constant 0 : index
    %c0_142 = arith.constant 0 : index
    %271 = vector.load %arg55[%c0_140, %c0_141, %c0_142] : memref<1x8x8xf32, #tpu.memory_space<vmem>>, vector<1x8x8xf32>
    %272 = vector.shape_cast %271 : vector<1x8x8xf32> to vector<8x8xf32>
    %273 = vector.shape_cast %270 : vector<8x8xf32> to vector<1x8x8xf32>
    tpu.vector_store %arg55[%c0_140, %c0_141, %c0_142], %273 {strides = array<i32>} : memref<1x8x8xf32, #tpu.memory_space<vmem>>, vector<1x8x8xf32>,
    %cst_143 = arith.constant 1.000000e+01 : f32
    %274 = vector.broadcast %cst_143 : f32 to vector<8x8xf32>
    %275 = arith.mulf %270, %274 : vector<8x8xf32>
    %cst_144 = arith.constant 1.000000e+00 : f32
    %276 = vector.broadcast %cst_144 : f32 to vector<8x8xf32>
    %277 = arith.addf %275, %276 : vector<8x8xf32>
    %cst_145 = arith.constant 9.99999993E-9 : f32
    %278 = vector.broadcast %cst_145 : f32 to vector<8x8xf32>
    %279 = arith.addf %277, %278 : vector<8x8xf32>
    %280 = math.log %279 : vector<8x8xf32>
    %281 = arith.mulf %14, %280 : vector<8x8xf32>
    %282 = arith.subf %277, %281 : vector<8x8xf32>
    %cst_146 = arith.constant 1.000000e+00 : f32
    %283 = vector.broadcast %cst_146 : f32 to vector<8x8xf32>
    %284 = arith.maximumf %14, %283 : vector<8x8xf32>
    %285 = math.log %284 : vector<8x8xf32>
    %286 = arith.mulf %284, %285 : vector<8x8xf32>
    %287 = arith.subf %286, %284 : vector<8x8xf32>
    %cst_147 = arith.constant 1.83787704 : f32
    %288 = vector.broadcast %cst_147 : f32 to vector<8x8xf32>
    %289 = arith.addf %288, %285 : vector<8x8xf32>
    %cst_148 = arith.constant 5.000000e-01 : f32
    %290 = vector.broadcast %cst_148 : f32 to vector<8x8xf32>
    %291 = arith.mulf %290, %289 : vector<8x8xf32>
    %292 = arith.addf %287, %291 : vector<8x8xf32>
    %cst_149 = arith.constant 1.000000e+00 : f32
    %293 = vector.broadcast %cst_149 : f32 to vector<8x8xf32>
    %294 = arith.cmpf ogt, %14, %293 : vector<8x8xf32>
    %cst_150 = arith.constant 0.000000e+00 : f32
    %295 = vector.broadcast %cst_150 : f32 to vector<8x8xf32>
    %296 = arith.select %294, %292, %295 : vector<8x8xi1>, vector<8x8xf32>
    %297 = arith.addf %282, %296 : vector<8x8xf32>
    %298 = arith.mulf %297, %15 : vector<8x8xf32>
    %299 = vector.shape_cast %298 : vector<8x8xf32> to vector<1x8x8xf32>
    %cst_151 = arith.constant dense<0.000000e+00> : vector<1xf32>
    %300 = vector.multi_reduction <add>, %299, %cst_151 [1, 2] : vector<1x8x8xf32> to vector<1xf32>
    %301 = vector.shape_cast %300 : vector<1xf32> to vector<1x1x1xf32>
    %302 = vector.extract %301[0, 0, 0] : f32 from vector<1x1x1xf32>
    %303 = vector.broadcast %302 : f32 to vector<1x1xf32>
    %cst_152 = arith.constant 1.100000e+01 : f32
    %304 = vector.broadcast %cst_152 : f32 to vector<1x1xf32>
    %305 = arith.mulf %304, %303 : vector<1x1xf32>
    %306 = vector.shape_cast %15 : vector<8x8xf32> to vector<1x8x8xf32>
    %cst_153 = arith.constant dense<0.000000e+00> : vector<1xf32>
    %307 = vector.multi_reduction <add>, %306, %cst_153 [1, 2] : vector<1x8x8xf32> to vector<1xf32>
    %308 = vector.shape_cast %307 : vector<1xf32> to vector<1x1x1xf32>
    %309 = vector.extract %308[0, 0, 0] : f32 from vector<1x1x1xf32>
    %310 = vector.broadcast %309 : f32 to vector<1x1xf32>
    %311 = arith.divf %305, %310 : vector<1x1xf32>
    %c3_i32 = arith.constant 3 : i32
    %312 = arith.subi %c3_i32, %arg0 : i32
    %c24_i32 = arith.constant 24 : i32
    %313 = arith.cmpi sle, %312, %c24_i32 : i32
    %cst_154 = arith.constant 1.000000e+00 : f32
    %cst_155 = arith.constant 0.000000e+00 : f32
    %314 = arith.select %313, %cst_154, %cst_155 : f32
    %c0_156 = arith.constant 0 : index
    %c0_157 = arith.constant 0 : index
    %315 = vector.load %arg59[%c0_156, %c0_157] : memref<1x1xf32, #tpu.memory_space<vmem>>, vector<1x1xf32>
    %316 = vector.broadcast %314 : f32 to vector<1x1xf32>
    %317 = arith.mulf %316, %311 : vector<1x1xf32>
    %318 = arith.addf %315, %317 : vector<1x1xf32>
    %c0_158 = arith.constant 0 : index
    %c0_159 = arith.constant 0 : index
    %319 = vector.load %arg59[%c0_158, %c0_159] : memref<1x1xf32, #tpu.memory_space<vmem>>, vector<1x1xf32>
    tpu.vector_store %arg59[%c0_158, %c0_159], %318 {strides = array<i32>} : memref<1x1xf32, #tpu.memory_space<vmem>>, vector<1x1xf32>,
    %c0_160 = arith.constant 0 : index
    %c0_161 = arith.constant 0 : index
    %320 = vector.load %arg37[%c0_160, %c0_161] : memref<32x96xbf16, #tpu.memory_space<vmem>>, vector<32x96xbf16>
    %321 = arith.truncf %26 : vector<8x32xf32> to vector<8x32xbf16>
    %cst_162 = arith.constant dense<0.000000e+00> : vector<8x96xf32>
    %322 = tpu.matmul %321, %320, %cst_162 {dimension_numbers = #tpu.dot_dimension_numbers<[1], [0], [0], [1], [0, 0, 1, 1], [], []>} : vector<8x32xbf16>, vector<32x96xbf16>, vector<8x96xf32> -> vector<8x96xf32>
    %c0_163 = arith.constant 0 : index
    %c0_164 = arith.constant 0 : index
    %323 = vector.load %arg38[%c0_163, %c0_164] : memref<32x96xbf16, #tpu.memory_space<vmem>>, vector<32x96xbf16>
    %324 = arith.truncf %141 : vector<8x32xf32> to vector<8x32xbf16>
    %cst_165 = arith.constant dense<0.000000e+00> : vector<8x96xf32>
    %325 = tpu.matmul %324, %323, %cst_165 {dimension_numbers = #tpu.dot_dimension_numbers<[1], [0], [0], [1], [0, 0, 1, 1], [], []>} : vector<8x32xbf16>, vector<32x96xbf16>, vector<8x96xf32> -> vector<8x96xf32>
    %326 = arith.addf %322, %325 : vector<8x96xf32>
    %c0_166 = arith.constant 0 : index
    %c0_167 = arith.constant 0 : index
    %c0_168 = arith.constant 0 : index
    %327 = vector.load %arg60[%c0_166, %c0_167, %c0_168] : memref<2x8x32xf32, #tpu.memory_space<vmem>>, vector<1x8x32xf32>
    %328 = vector.shape_cast %327 : vector<1x8x32xf32> to vector<8x32xf32>
    %c0_169 = arith.constant 0 : index
    %c0_170 = arith.constant 0 : index
    %329 = vector.load %arg39[%c0_169, %c0_170] : memref<1x96xf32, #tpu.memory_space<vmem>>, vector<1x96xf32>
    %330 = arith.truncf %326 : vector<8x96xf32> to vector<8x96xbf16>
    %cst_171 = arith.constant dense<0.000000e+00> : vector<8x96xf32>
    %331 = tpu.matmul %4, %330, %cst_171 {dimension_numbers = #tpu.dot_dimension_numbers<[1], [0], [0], [1], [0, 0, 1, 1], [], []>} : vector<8x8xbf16>, vector<8x96xbf16>, vector<8x96xf32> -> vector<8x96xf32>
    %332 = vector.broadcast %329 : vector<1x96xf32> to vector<8x96xf32>
    %333 = arith.addf %331, %332 : vector<8x96xf32>
    %c0_172 = arith.constant 0 : index
    %c0_173 = arith.constant 0 : index
    %334 = vector.load %arg40[%c0_172, %c0_173] : memref<32x64xbf16, #tpu.memory_space<vmem>>, vector<32x64xbf16>
    %335 = arith.truncf %328 : vector<8x32xf32> to vector<8x32xbf16>
    %cst_174 = arith.constant dense<0.000000e+00> : vector<8x64xf32>
    %336 = tpu.matmul %335, %334, %cst_174 {dimension_numbers = #tpu.dot_dimension_numbers<[1], [0], [0], [1], [0, 0, 1, 1], [], []>} : vector<8x32xbf16>, vector<32x64xbf16>, vector<8x64xf32> -> vector<8x64xf32>
    %c0_175 = arith.constant 0 : index
    %c0_176 = arith.constant 0 : index
    %337 = vector.load %arg41[%c0_175, %c0_176] : memref<1x64xf32, #tpu.memory_space<vmem>>, vector<1x64xf32>
    %338 = arith.truncf %336 : vector<8x64xf32> to vector<8x64xbf16>
    %cst_177 = arith.constant dense<0.000000e+00> : vector<8x64xf32>
    %339 = tpu.matmul %4, %338, %cst_177 {dimension_numbers = #tpu.dot_dimension_numbers<[1], [0], [0], [1], [0, 0, 1, 1], [], []>} : vector<8x8xbf16>, vector<8x64xbf16>, vector<8x64xf32> -> vector<8x64xf32>
    %340 = vector.broadcast %337 : vector<1x64xf32> to vector<8x64xf32>
    %341 = arith.addf %339, %340 : vector<8x64xf32>
    %342 = vector.extract_strided_slice %333 {offsets = [0, 0], sizes = [8, 32], strides = [1, 1]} : vector<8x96xf32> to vector<8x32xf32>
    %343 = vector.extract_strided_slice %341 {offsets = [0, 0], sizes = [8, 32], strides = [1, 1]} : vector<8x64xf32> to vector<8x32xf32>
    %344 = arith.addf %342, %343 : vector<8x32xf32>
    %345 = arith.negf %344 : vector<8x32xf32>
    %346 = math.exp %345 : vector<8x32xf32>
    %cst_178 = arith.constant 1.000000e+00 : f32
    %347 = vector.broadcast %cst_178 : f32 to vector<8x32xf32>
    %348 = arith.addf %347, %346 : vector<8x32xf32>
    %349 = arith.divf %347, %348 : vector<8x32xf32>
    %350 = vector.extract_strided_slice %333 {offsets = [0, 32], sizes = [8, 32], strides = [1, 1]} : vector<8x96xf32> to vector<8x32xf32>
    %351 = vector.extract_strided_slice %341 {offsets = [0, 32], sizes = [8, 32], strides = [1, 1]} : vector<8x64xf32> to vector<8x32xf32>
    %352 = arith.addf %350, %351 : vector<8x32xf32>
    %353 = arith.negf %352 : vector<8x32xf32>
    %354 = math.exp %353 : vector<8x32xf32>
    %cst_179 = arith.constant 1.000000e+00 : f32
    %355 = vector.broadcast %cst_179 : f32 to vector<8x32xf32>
    %356 = arith.addf %355, %354 : vector<8x32xf32>
    %357 = arith.divf %355, %356 : vector<8x32xf32>
    %358 = arith.mulf %357, %328 : vector<8x32xf32>
    %c0_180 = arith.constant 0 : index
    %c0_181 = arith.constant 0 : index
    %359 = vector.load %arg42[%c0_180, %c0_181] : memref<32x32xbf16, #tpu.memory_space<vmem>>, vector<32x32xbf16>
    %360 = arith.truncf %358 : vector<8x32xf32> to vector<8x32xbf16>
    %cst_182 = arith.constant dense<0.000000e+00> : vector<8x32xf32>
    %361 = tpu.matmul %360, %359, %cst_182 {dimension_numbers = #tpu.dot_dimension_numbers<[1], [0], [0], [1], [0, 0, 1, 1], [], []>} : vector<8x32xbf16>, vector<32x32xbf16>, vector<8x32xf32> -> vector<8x32xf32>
    %c0_183 = arith.constant 0 : index
    %c0_184 = arith.constant 0 : index
    %362 = vector.load %arg43[%c0_183, %c0_184] : memref<1x32xf32, #tpu.memory_space<vmem>>, vector<1x32xf32>
    %363 = arith.truncf %361 : vector<8x32xf32> to vector<8x32xbf16>
    %cst_185 = arith.constant dense<0.000000e+00> : vector<8x32xf32>
    %364 = tpu.matmul %4, %363, %cst_185 {dimension_numbers = #tpu.dot_dimension_numbers<[1], [0], [0], [1], [0, 0, 1, 1], [], []>} : vector<8x8xbf16>, vector<8x32xbf16>, vector<8x32xf32> -> vector<8x32xf32>
    %365 = vector.broadcast %362 : vector<1x32xf32> to vector<8x32xf32>
    %366 = arith.addf %364, %365 : vector<8x32xf32>
    %367 = vector.extract_strided_slice %333 {offsets = [0, 64], sizes = [8, 32], strides = [1, 1]} : vector<8x96xf32> to vector<8x32xf32>
    %368 = arith.addf %367, %366 : vector<8x32xf32>
    %369 = math.tanh %368 : vector<8x32xf32>
    %370 = arith.mulf %349, %328 : vector<8x32xf32>
    %cst_186 = arith.constant 1.000000e+00 : f32
    %371 = vector.broadcast %cst_186 : f32 to vector<8x32xf32>
    %372 = arith.subf %371, %349 : vector<8x32xf32>
    %373 = arith.mulf %372, %369 : vector<8x32xf32>
    %374 = arith.addf %370, %373 : vector<8x32xf32>
    %c0_187 = arith.constant 0 : index
    %c0_188 = arith.constant 0 : index
    %c0_189 = arith.constant 0 : index
    %375 = vector.load %arg60[%c0_187, %c0_188, %c0_189] : memref<2x8x32xf32, #tpu.memory_space<vmem>>, vector<1x8x32xf32>
    %376 = vector.shape_cast %375 : vector<1x8x32xf32> to vector<8x32xf32>
    %377 = vector.shape_cast %374 : vector<8x32xf32> to vector<1x8x32xf32>
    tpu.vector_store %arg60[%c0_187, %c0_188, %c0_189], %377 {strides = array<i32>} : memref<2x8x32xf32, #tpu.memory_space<vmem>>, vector<1x8x32xf32>,
    %c0_190 = arith.constant 0 : index
    %c0_191 = arith.constant 0 : index
    %c0_192 = arith.constant 0 : index
    %c0_193 = arith.constant 0 : index
    %378 = vector.load %arg56[%c0_190, %c0_191, %c0_192, %c0_193] : memref<1x2x8x32xf32, #tpu.memory_space<vmem>>, vector<1x1x8x32xf32>
    %379 = vector.shape_cast %378 : vector<1x1x8x32xf32> to vector<8x32xf32>
    %380 = vector.shape_cast %374 : vector<8x32xf32> to vector<1x1x8x32xf32>
    tpu.vector_store %arg56[%c0_190, %c0_191, %c0_192, %c0_193], %380 {strides = array<i32>} : memref<1x2x8x32xf32, #tpu.memory_space<vmem>>, vector<1x1x8x32xf32>,
    %c0_194 = arith.constant 0 : index
    %c0_195 = arith.constant 0 : index
    %381 = vector.load %arg44[%c0_194, %c0_195] : memref<32x96xbf16, #tpu.memory_space<vmem>>, vector<32x96xbf16>
    %382 = arith.truncf %374 : vector<8x32xf32> to vector<8x32xbf16>
    %cst_196 = arith.constant dense<0.000000e+00> : vector<8x96xf32>
    %383 = tpu.matmul %382, %381, %cst_196 {dimension_numbers = #tpu.dot_dimension_numbers<[1], [0], [0], [1], [0, 0, 1, 1], [], []>} : vector<8x32xbf16>, vector<32x96xbf16>, vector<8x96xf32> -> vector<8x96xf32>
    %c1_197 = arith.constant 1 : index
    %c0_198 = arith.constant 0 : index
    %c0_199 = arith.constant 0 : index
    %384 = vector.load %arg60[%c1_197, %c0_198, %c0_199] : memref<2x8x32xf32, #tpu.memory_space<vmem>>, vector<1x8x32xf32>
    %385 = vector.shape_cast %384 : vector<1x8x32xf32> to vector<8x32xf32>
    %c0_200 = arith.constant 0 : index
    %c0_201 = arith.constant 0 : index
    %386 = vector.load %arg45[%c0_200, %c0_201] : memref<1x96xf32, #tpu.memory_space<vmem>>, vector<1x96xf32>
    %387 = arith.truncf %383 : vector<8x96xf32> to vector<8x96xbf16>
    %cst_202 = arith.constant dense<0.000000e+00> : vector<8x96xf32>
    %388 = tpu.matmul %4, %387, %cst_202 {dimension_numbers = #tpu.dot_dimension_numbers<[1], [0], [0], [1], [0, 0, 1, 1], [], []>} : vector<8x8xbf16>, vector<8x96xbf16>, vector<8x96xf32> -> vector<8x96xf32>
    %389 = vector.broadcast %386 : vector<1x96xf32> to vector<8x96xf32>
    %390 = arith.addf %388, %389 : vector<8x96xf32>
    %c0_203 = arith.constant 0 : index
    %c0_204 = arith.constant 0 : index
    %391 = vector.load %arg46[%c0_203, %c0_204] : memref<32x64xbf16, #tpu.memory_space<vmem>>, vector<32x64xbf16>
    %392 = arith.truncf %385 : vector<8x32xf32> to vector<8x32xbf16>
    %cst_205 = arith.constant dense<0.000000e+00> : vector<8x64xf32>
    %393 = tpu.matmul %392, %391, %cst_205 {dimension_numbers = #tpu.dot_dimension_numbers<[1], [0], [0], [1], [0, 0, 1, 1], [], []>} : vector<8x32xbf16>, vector<32x64xbf16>, vector<8x64xf32> -> vector<8x64xf32>
    %c0_206 = arith.constant 0 : index
    %c0_207 = arith.constant 0 : index
    %394 = vector.load %arg47[%c0_206, %c0_207] : memref<1x64xf32, #tpu.memory_space<vmem>>, vector<1x64xf32>
    %395 = arith.truncf %393 : vector<8x64xf32> to vector<8x64xbf16>
    %cst_208 = arith.constant dense<0.000000e+00> : vector<8x64xf32>
    %396 = tpu.matmul %4, %395, %cst_208 {dimension_numbers = #tpu.dot_dimension_numbers<[1], [0], [0], [1], [0, 0, 1, 1], [], []>} : vector<8x8xbf16>, vector<8x64xbf16>, vector<8x64xf32> -> vector<8x64xf32>
    %397 = vector.broadcast %394 : vector<1x64xf32> to vector<8x64xf32>
    %398 = arith.addf %396, %397 : vector<8x64xf32>
    %399 = vector.extract_strided_slice %390 {offsets = [0, 0], sizes = [8, 32], strides = [1, 1]} : vector<8x96xf32> to vector<8x32xf32>
    %400 = vector.extract_strided_slice %398 {offsets = [0, 0], sizes = [8, 32], strides = [1, 1]} : vector<8x64xf32> to vector<8x32xf32>
    %401 = arith.addf %399, %400 : vector<8x32xf32>
    %402 = arith.negf %401 : vector<8x32xf32>
    %403 = math.exp %402 : vector<8x32xf32>
    %cst_209 = arith.constant 1.000000e+00 : f32
    %404 = vector.broadcast %cst_209 : f32 to vector<8x32xf32>
    %405 = arith.addf %404, %403 : vector<8x32xf32>
    %406 = arith.divf %404, %405 : vector<8x32xf32>
    %407 = vector.extract_strided_slice %390 {offsets = [0, 32], sizes = [8, 32], strides = [1, 1]} : vector<8x96xf32> to vector<8x32xf32>
    %408 = vector.extract_strided_slice %398 {offsets = [0, 32], sizes = [8, 32], strides = [1, 1]} : vector<8x64xf32> to vector<8x32xf32>
    %409 = arith.addf %407, %408 : vector<8x32xf32>
    %410 = arith.negf %409 : vector<8x32xf32>
    %411 = math.exp %410 : vector<8x32xf32>
    %cst_210 = arith.constant 1.000000e+00 : f32
    %412 = vector.broadcast %cst_210 : f32 to vector<8x32xf32>
    %413 = arith.addf %412, %411 : vector<8x32xf32>
    %414 = arith.divf %412, %413 : vector<8x32xf32>
    %415 = arith.mulf %414, %385 : vector<8x32xf32>
    %c0_211 = arith.constant 0 : index
    %c0_212 = arith.constant 0 : index
    %416 = vector.load %arg48[%c0_211, %c0_212] : memref<32x32xbf16, #tpu.memory_space<vmem>>, vector<32x32xbf16>
    %417 = arith.truncf %415 : vector<8x32xf32> to vector<8x32xbf16>
    %cst_213 = arith.constant dense<0.000000e+00> : vector<8x32xf32>
    %418 = tpu.matmul %417, %416, %cst_213 {dimension_numbers = #tpu.dot_dimension_numbers<[1], [0], [0], [1], [0, 0, 1, 1], [], []>} : vector<8x32xbf16>, vector<32x32xbf16>, vector<8x32xf32> -> vector<8x32xf32>
    %c0_214 = arith.constant 0 : index
    %c0_215 = arith.constant 0 : index
    %419 = vector.load %arg49[%c0_214, %c0_215] : memref<1x32xf32, #tpu.memory_space<vmem>>, vector<1x32xf32>
    %420 = arith.truncf %418 : vector<8x32xf32> to vector<8x32xbf16>
    %cst_216 = arith.constant dense<0.000000e+00> : vector<8x32xf32>
    %421 = tpu.matmul %4, %420, %cst_216 {dimension_numbers = #tpu.dot_dimension_numbers<[1], [0], [0], [1], [0, 0, 1, 1], [], []>} : vector<8x8xbf16>, vector<8x32xbf16>, vector<8x32xf32> -> vector<8x32xf32>
    %422 = vector.broadcast %419 : vector<1x32xf32> to vector<8x32xf32>
    %423 = arith.addf %421, %422 : vector<8x32xf32>
    %424 = vector.extract_strided_slice %390 {offsets = [0, 64], sizes = [8, 32], strides = [1, 1]} : vector<8x96xf32> to vector<8x32xf32>
    %425 = arith.addf %424, %423 : vector<8x32xf32>
    %426 = math.tanh %425 : vector<8x32xf32>
    %427 = arith.mulf %406, %385 : vector<8x32xf32>
    %cst_217 = arith.constant 1.000000e+00 : f32
    %428 = vector.broadcast %cst_217 : f32 to vector<8x32xf32>
    %429 = arith.subf %428, %406 : vector<8x32xf32>
    %430 = arith.mulf %429, %426 : vector<8x32xf32>
    %431 = arith.addf %427, %430 : vector<8x32xf32>
    %c1_218 = arith.constant 1 : index
    %c0_219 = arith.constant 0 : index
    %c0_220 = arith.constant 0 : index
    %432 = vector.load %arg60[%c1_218, %c0_219, %c0_220] : memref<2x8x32xf32, #tpu.memory_space<vmem>>, vector<1x8x32xf32>
    %433 = vector.shape_cast %432 : vector<1x8x32xf32> to vector<8x32xf32>
    %434 = vector.shape_cast %431 : vector<8x32xf32> to vector<1x8x32xf32>
    tpu.vector_store %arg60[%c1_218, %c0_219, %c0_220], %434 {strides = array<i32>} : memref<2x8x32xf32, #tpu.memory_space<vmem>>, vector<1x8x32xf32>,
    %c0_221 = arith.constant 0 : index
    %c1_222 = arith.constant 1 : index
    %c0_223 = arith.constant 0 : index
    %c0_224 = arith.constant 0 : index
    %435 = vector.load %arg56[%c0_221, %c1_222, %c0_223, %c0_224] : memref<1x2x8x32xf32, #tpu.memory_space<vmem>>, vector<1x1x8x32xf32>
    %436 = vector.shape_cast %435 : vector<1x1x8x32xf32> to vector<8x32xf32>
    %437 = vector.shape_cast %431 : vector<8x32xf32> to vector<1x1x8x32xf32>
    tpu.vector_store %arg56[%c0_221, %c1_222, %c0_223, %c0_224], %437 {strides = array<i32>} : memref<1x2x8x32xf32, #tpu.memory_space<vmem>>, vector<1x1x8x32xf32>,
    %c0_225 = arith.constant 0 : index
    %c0_226 = arith.constant 0 : index
    %c0_227 = arith.constant 0 : index
    %438 = vector.load %arg50[%c0_225, %c0_226, %c0_227] : memref<1x8x16xf32, #tpu.memory_space<vmem>>, vector<1x8x16xf32>
    %439 = vector.shape_cast %438 : vector<1x8x16xf32> to vector<8x16xf32>
    %440 = vector.shape_cast %50 : vector<8x16xf32> to vector<1x8x16xf32>
    tpu.vector_store %arg50[%c0_225, %c0_226, %c0_227], %440 {strides = array<i32>} : memref<1x8x16xf32, #tpu.memory_space<vmem>>, vector<1x8x16xf32>,
    %c0_228 = arith.constant 0 : index
    %c0_229 = arith.constant 0 : index
    %c0_230 = arith.constant 0 : index
    %441 = vector.load %arg51[%c0_228, %c0_229, %c0_230] : memref<1x8x16xf32, #tpu.memory_space<vmem>>, vector<1x8x16xf32>
    %442 = vector.shape_cast %441 : vector<1x8x16xf32> to vector<8x16xf32>
    %443 = vector.shape_cast %114 : vector<8x16xf32> to vector<1x8x16xf32>
    tpu.vector_store %arg51[%c0_228, %c0_229, %c0_230], %443 {strides = array<i32>} : memref<1x8x16xf32, #tpu.memory_space<vmem>>, vector<1x8x16xf32>,
    %c0_231 = arith.constant 0 : index
    %c0_232 = arith.constant 0 : index
    %c0_233 = arith.constant 0 : index
    %444 = vector.load %arg52[%c0_231, %c0_232, %c0_233] : memref<1x8x16xf32, #tpu.memory_space<vmem>>, vector<1x8x16xf32>
    %445 = vector.shape_cast %444 : vector<1x8x16xf32> to vector<8x16xf32>
    %446 = vector.shape_cast %84 : vector<8x16xf32> to vector<1x8x16xf32>
    tpu.vector_store %arg52[%c0_231, %c0_232, %c0_233], %446 {strides = array<i32>} : memref<1x8x16xf32, #tpu.memory_space<vmem>>, vector<1x8x16xf32>,
    %c0_234 = arith.constant 0 : index
    %c0_235 = arith.constant 0 : index
    %c0_236 = arith.constant 0 : index
    %447 = vector.load %arg53[%c0_234, %c0_235, %c0_236] : memref<1x8x64xf32, #tpu.memory_space<vmem>>, vector<1x8x64xf32>
    %448 = vector.shape_cast %447 : vector<1x8x64xf32> to vector<8x64xf32>
    %449 = vector.shape_cast %168 : vector<8x64xf32> to vector<1x8x64xf32>
    tpu.vector_store %arg53[%c0_234, %c0_235, %c0_236], %449 {strides = array<i32>} : memref<1x8x64xf32, #tpu.memory_space<vmem>>, vector<1x8x64xf32>,
    %c0_237 = arith.constant 0 : index
    %c0_238 = arith.constant 0 : index
    %c0_239 = arith.constant 0 : index
    %450 = vector.load %arg54[%c0_237, %c0_238, %c0_239] : memref<1x8x64xf32, #tpu.memory_space<vmem>>, vector<1x8x64xf32>
    %451 = vector.shape_cast %450 : vector<1x8x64xf32> to vector<8x64xf32>
    %452 = vector.shape_cast %169 : vector<8x64xf32> to vector<1x8x64xf32>
    tpu.vector_store %arg54[%c0_237, %c0_238, %c0_239], %452 {strides = array<i32>} : memref<1x8x64xf32, #tpu.memory_space<vmem>>, vector<1x8x64xf32>,
    return
  }
  func.func @transform_0(%arg0: i32) -> (i32, i32, i32) {
    %c0_i32 = arith.constant 0 : i32
    %c0_i32_0 = arith.constant 0 : i32
    %c0_i32_1 = arith.constant 0 : i32
    return %arg0, %c0_i32, %c0_i32_0 : i32, i32, i32
  }
  func.func @transform_1(%arg0: i32) -> (i32, i32, i32) {
    %c0_i32 = arith.constant 0 : i32
    %c0_i32_0 = arith.constant 0 : i32
    %c0_i32_1 = arith.constant 0 : i32
    return %arg0, %c0_i32, %c0_i32_0 : i32, i32, i32
  }
  func.func @transform_2(%arg0: i32) -> (i32, i32, i32) {
    %c0_i32 = arith.constant 0 : i32
    %c0_i32_0 = arith.constant 0 : i32
    %c0_i32_1 = arith.constant 0 : i32
    return %arg0, %c0_i32, %c0_i32_0 : i32, i32, i32
  }
  func.func @transform_3(%arg0: i32) -> (i32, i32, i32) {
    %c0_i32 = arith.constant 0 : i32
    %c0_i32_0 = arith.constant 0 : i32
    %c0_i32_1 = arith.constant 0 : i32
    return %arg0, %c0_i32, %c0_i32_0 : i32, i32, i32
  }
  func.func @transform_4(%arg0: i32) -> (i32, i32, i32) {
    %c0_i32 = arith.constant 0 : i32
    %c0_i32_0 = arith.constant 0 : i32
    %c0_i32_1 = arith.constant 0 : i32
    return %arg0, %c0_i32, %c0_i32_0 : i32, i32, i32
  }
  func.func @transform_5(%arg0: i32) -> (i32, i32, i32) {
    %c0_i32 = arith.constant 0 : i32
    %c0_i32_0 = arith.constant 0 : i32
    %c0_i32_1 = arith.constant 0 : i32
    return %arg0, %c0_i32, %c0_i32_0 : i32, i32, i32
  }
  func.func @transform_6(%arg0: i32) -> (i32, i32) {
    %c0_i32 = arith.constant 0 : i32
    %c0_i32_0 = arith.constant 0 : i32
    %c0_i32_1 = arith.constant 0 : i32
    return %c0_i32, %c0_i32_0 : i32, i32
  }
  func.func @transform_7(%arg0: i32) -> (i32, i32) {
    %c0_i32 = arith.constant 0 : i32
    %c0_i32_0 = arith.constant 0 : i32
    %c0_i32_1 = arith.constant 0 : i32
    return %c0_i32, %c0_i32_0 : i32, i32
  }
  func.func @transform_8(%arg0: i32) -> (i32, i32) {
    %c0_i32 = arith.constant 0 : i32
    %c0_i32_0 = arith.constant 0 : i32
    %c0_i32_1 = arith.constant 0 : i32
    return %c0_i32, %c0_i32_0 : i32, i32
  }
  func.func @transform_9(%arg0: i32) -> (i32, i32) {
    %c0_i32 = arith.constant 0 : i32
    %c0_i32_0 = arith.constant 0 : i32
    %c0_i32_1 = arith.constant 0 : i32
    return %c0_i32, %c0_i32_0 : i32, i32
  }
  func.func @transform_10(%arg0: i32) -> (i32, i32) {
    %c0_i32 = arith.constant 0 : i32
    %c0_i32_0 = arith.constant 0 : i32
    %c0_i32_1 = arith.constant 0 : i32
    return %c0_i32, %c0_i32_0 : i32, i32
  }
  func.func @transform_11(%arg0: i32) -> (i32, i32) {
    %c0_i32 = arith.constant 0 : i32
    %c0_i32_0 = arith.constant 0 : i32
    %c0_i32_1 = arith.constant 0 : i32
    return %c0_i32, %c0_i32_0 : i32, i32
  }
  func.func @transform_12(%arg0: i32) -> (i32, i32) {
    %c0_i32 = arith.constant 0 : i32
    %c0_i32_0 = arith.constant 0 : i32
    %c0_i32_1 = arith.constant 0 : i32
    return %c0_i32, %c0_i32_0 : i32, i32
  }
  func.func @transform_13(%arg0: i32) -> (i32, i32) {
    %c0_i32 = arith.constant 0 : i32
    %c0_i32_0 = arith.constant 0 : i32
    %c0_i32_1 = arith.constant 0 : i32
    return %c0_i32, %c0_i32_0 : i32, i32
  }
  func.func @transform_14(%arg0: i32) -> (i32, i32) {
    %c0_i32 = arith.constant 0 : i32
    %c0_i32_0 = arith.constant 0 : i32
    %c0_i32_1 = arith.constant 0 : i32
    return %c0_i32, %c0_i32_0 : i32, i32
  }
  func.func @transform_15(%arg0: i32) -> (i32, i32) {
    %c0_i32 = arith.constant 0 : i32
    %c0_i32_0 = arith.constant 0 : i32
    %c0_i32_1 = arith.constant 0 : i32
    return %c0_i32, %c0_i32_0 : i32, i32
  }
  func.func @transform_16(%arg0: i32) -> (i32, i32) {
    %c0_i32 = arith.constant 0 : i32
    %c0_i32_0 = arith.constant 0 : i32
    %c0_i32_1 = arith.constant 0 : i32
    return %c0_i32, %c0_i32_0 : i32, i32
  }
  func.func @transform_17(%arg0: i32) -> (i32, i32) {
    %c0_i32 = arith.constant 0 : i32
    %c0_i32_0 = arith.constant 0 : i32
    %c0_i32_1 = arith.constant 0 : i32
    return %c0_i32, %c0_i32_0 : i32, i32
  }
  func.func @transform_18(%arg0: i32) -> (i32, i32) {
    %c0_i32 = arith.constant 0 : i32
    %c0_i32_0 = arith.constant 0 : i32
    %c0_i32_1 = arith.constant 0 : i32
    return %c0_i32, %c0_i32_0 : i32, i32
  }
  func.func @transform_19(%arg0: i32) -> (i32, i32) {
    %c0_i32 = arith.constant 0 : i32
    %c0_i32_0 = arith.constant 0 : i32
    %c0_i32_1 = arith.constant 0 : i32
    return %c0_i32, %c0_i32_0 : i32, i32
  }
  func.func @transform_20(%arg0: i32) -> (i32, i32) {
    %c0_i32 = arith.constant 0 : i32
    %c0_i32_0 = arith.constant 0 : i32
    %c0_i32_1 = arith.constant 0 : i32
    return %c0_i32, %c0_i32_0 : i32, i32
  }
  func.func @transform_21(%arg0: i32) -> (i32, i32) {
    %c0_i32 = arith.constant 0 : i32
    %c0_i32_0 = arith.constant 0 : i32
    %c0_i32_1 = arith.constant 0 : i32
    return %c0_i32, %c0_i32_0 : i32, i32
  }
  func.func @transform_22(%arg0: i32) -> (i32, i32) {
    %c0_i32 = arith.constant 0 : i32
    %c0_i32_0 = arith.constant 0 : i32
    %c0_i32_1 = arith.constant 0 : i32
    return %c0_i32, %c0_i32_0 : i32, i32
  }
  func.func @transform_23(%arg0: i32) -> (i32, i32) {
    %c0_i32 = arith.constant 0 : i32
    %c0_i32_0 = arith.constant 0 : i32
    %c0_i32_1 = arith.constant 0 : i32
    return %c0_i32, %c0_i32_0 : i32, i32
  }
  func.func @transform_24(%arg0: i32) -> (i32, i32) {
    %c0_i32 = arith.constant 0 : i32
    %c0_i32_0 = arith.constant 0 : i32
    %c0_i32_1 = arith.constant 0 : i32
    return %c0_i32, %c0_i32_0 : i32, i32
  }
  func.func @transform_25(%arg0: i32) -> (i32, i32) {
    %c0_i32 = arith.constant 0 : i32
    %c0_i32_0 = arith.constant 0 : i32
    %c0_i32_1 = arith.constant 0 : i32
    return %c0_i32, %c0_i32_0 : i32, i32
  }
  func.func @transform_26(%arg0: i32) -> (i32, i32) {
    %c0_i32 = arith.constant 0 : i32
    %c0_i32_0 = arith.constant 0 : i32
    %c0_i32_1 = arith.constant 0 : i32
    return %c0_i32, %c0_i32_0 : i32, i32
  }
  func.func @transform_27(%arg0: i32) -> (i32, i32) {
    %c0_i32 = arith.constant 0 : i32
    %c0_i32_0 = arith.constant 0 : i32
    %c0_i32_1 = arith.constant 0 : i32
    return %c0_i32, %c0_i32_0 : i32, i32
  }
  func.func @transform_28(%arg0: i32) -> (i32, i32) {
    %c0_i32 = arith.constant 0 : i32
    %c0_i32_0 = arith.constant 0 : i32
    %c0_i32_1 = arith.constant 0 : i32
    return %c0_i32, %c0_i32_0 : i32, i32
  }
  func.func @transform_29(%arg0: i32) -> (i32, i32) {
    %c0_i32 = arith.constant 0 : i32
    %c0_i32_0 = arith.constant 0 : i32
    %c0_i32_1 = arith.constant 0 : i32
    return %c0_i32, %c0_i32_0 : i32, i32
  }
  func.func @transform_30(%arg0: i32) -> (i32, i32) {
    %c0_i32 = arith.constant 0 : i32
    %c0_i32_0 = arith.constant 0 : i32
    %c0_i32_1 = arith.constant 0 : i32
    return %c0_i32, %c0_i32_0 : i32, i32
  }
  func.func @transform_31(%arg0: i32) -> (i32, i32) {
    %c0_i32 = arith.constant 0 : i32
    %c0_i32_0 = arith.constant 0 : i32
    %c0_i32_1 = arith.constant 0 : i32
    return %c0_i32, %c0_i32_0 : i32, i32
  }
  func.func @transform_32(%arg0: i32) -> (i32, i32) {
    %c0_i32 = arith.constant 0 : i32
    %c0_i32_0 = arith.constant 0 : i32
    %c0_i32_1 = arith.constant 0 : i32
    return %c0_i32, %c0_i32_0 : i32, i32
  }
  func.func @transform_33(%arg0: i32) -> (i32, i32) {
    %c0_i32 = arith.constant 0 : i32
    %c0_i32_0 = arith.constant 0 : i32
    %c0_i32_1 = arith.constant 0 : i32
    return %c0_i32, %c0_i32_0 : i32, i32
  }
  func.func @transform_34(%arg0: i32) -> (i32, i32) {
    %c0_i32 = arith.constant 0 : i32
    %c0_i32_0 = arith.constant 0 : i32
    %c0_i32_1 = arith.constant 0 : i32
    return %c0_i32, %c0_i32_0 : i32, i32
  }
  func.func @transform_35(%arg0: i32) -> (i32, i32) {
    %c0_i32 = arith.constant 0 : i32
    %c0_i32_0 = arith.constant 0 : i32
    %c0_i32_1 = arith.constant 0 : i32
    return %c0_i32, %c0_i32_0 : i32, i32
  }
  func.func @transform_36(%arg0: i32) -> (i32, i32) {
    %c0_i32 = arith.constant 0 : i32
    %c0_i32_0 = arith.constant 0 : i32
    %c0_i32_1 = arith.constant 0 : i32
    return %c0_i32, %c0_i32_0 : i32, i32
  }
  func.func @transform_37(%arg0: i32) -> (i32, i32) {
    %c0_i32 = arith.constant 0 : i32
    %c0_i32_0 = arith.constant 0 : i32
    %c0_i32_1 = arith.constant 0 : i32
    return %c0_i32, %c0_i32_0 : i32, i32
  }
  func.func @transform_38(%arg0: i32) -> (i32, i32) {
    %c0_i32 = arith.constant 0 : i32
    %c0_i32_0 = arith.constant 0 : i32
    %c0_i32_1 = arith.constant 0 : i32
    return %c0_i32, %c0_i32_0 : i32, i32
  }
  func.func @transform_39(%arg0: i32) -> (i32, i32) {
    %c0_i32 = arith.constant 0 : i32
    %c0_i32_0 = arith.constant 0 : i32
    %c0_i32_1 = arith.constant 0 : i32
    return %c0_i32, %c0_i32_0 : i32, i32
  }
  func.func @transform_40(%arg0: i32) -> (i32, i32) {
    %c0_i32 = arith.constant 0 : i32
    %c0_i32_0 = arith.constant 0 : i32
    %c0_i32_1 = arith.constant 0 : i32
    return %c0_i32, %c0_i32_0 : i32, i32
  }
  func.func @transform_41(%arg0: i32) -> (i32, i32) {
    %c0_i32 = arith.constant 0 : i32
    %c0_i32_0 = arith.constant 0 : i32
    %c0_i32_1 = arith.constant 0 : i32
    return %c0_i32, %c0_i32_0 : i32, i32
  }
  func.func @transform_42(%arg0: i32) -> (i32, i32) {
    %c0_i32 = arith.constant 0 : i32
    %c0_i32_0 = arith.constant 0 : i32
    %c0_i32_1 = arith.constant 0 : i32
    return %c0_i32, %c0_i32_0 : i32, i32
  }
  func.func @transform_43(%arg0: i32) -> (i32, i32) {
    %c0_i32 = arith.constant 0 : i32
    %c0_i32_0 = arith.constant 0 : i32
    %c0_i32_1 = arith.constant 0 : i32
    return %c0_i32, %c0_i32_0 : i32, i32
  }
  func.func @transform_44(%arg0: i32) -> (i32, i32) {
    %c0_i32 = arith.constant 0 : i32
    %c0_i32_0 = arith.constant 0 : i32
    %c0_i32_1 = arith.constant 0 : i32
    return %c0_i32, %c0_i32_0 : i32, i32
  }
  func.func @transform_45(%arg0: i32) -> (i32, i32) {
    %c0_i32 = arith.constant 0 : i32
    %c0_i32_0 = arith.constant 0 : i32
    %c0_i32_1 = arith.constant 0 : i32
    return %c0_i32, %c0_i32_0 : i32, i32
  }
  func.func @transform_46(%arg0: i32) -> (i32, i32) {
    %c0_i32 = arith.constant 0 : i32
    %c0_i32_0 = arith.constant 0 : i32
    %c0_i32_1 = arith.constant 0 : i32
    return %c0_i32, %c0_i32_0 : i32, i32
  }
  func.func @transform_47(%arg0: i32) -> (i32, i32) {
    %c0_i32 = arith.constant 0 : i32
    %c0_i32_0 = arith.constant 0 : i32
    %c0_i32_1 = arith.constant 0 : i32
    return %c0_i32, %c0_i32_0 : i32, i32
  }
  func.func @transform_48(%arg0: i32) -> (i32, i32) {
    %c0_i32 = arith.constant 0 : i32
    %c0_i32_0 = arith.constant 0 : i32
    %c0_i32_1 = arith.constant 0 : i32
    return %c0_i32, %c0_i32_0 : i32, i32
  }
  func.func @transform_49(%arg0: i32) -> (i32, i32, i32) {
    %c0_i32 = arith.constant 0 : i32
    %c0_i32_0 = arith.constant 0 : i32
    %c0_i32_1 = arith.constant 0 : i32
    return %arg0, %c0_i32, %c0_i32_0 : i32, i32, i32
  }
  func.func @transform_50(%arg0: i32) -> (i32, i32, i32) {
    %c0_i32 = arith.constant 0 : i32
    %c0_i32_0 = arith.constant 0 : i32
    %c0_i32_1 = arith.constant 0 : i32
    return %arg0, %c0_i32, %c0_i32_0 : i32, i32, i32
  }
  func.func @transform_51(%arg0: i32) -> (i32, i32, i32) {
    %c0_i32 = arith.constant 0 : i32
    %c0_i32_0 = arith.constant 0 : i32
    %c0_i32_1 = arith.constant 0 : i32
    return %arg0, %c0_i32, %c0_i32_0 : i32, i32, i32
  }
  func.func @transform_52(%arg0: i32) -> (i32, i32, i32) {
    %c0_i32 = arith.constant 0 : i32
    %c0_i32_0 = arith.constant 0 : i32
    %c0_i32_1 = arith.constant 0 : i32
    return %arg0, %c0_i32, %c0_i32_0 : i32, i32, i32
  }
  func.func @transform_53(%arg0: i32) -> (i32, i32, i32) {
    %c0_i32 = arith.constant 0 : i32
    %c0_i32_0 = arith.constant 0 : i32
    %c0_i32_1 = arith.constant 0 : i32
    return %arg0, %c0_i32, %c0_i32_0 : i32, i32, i32
  }
  func.func @transform_54(%arg0: i32) -> (i32, i32, i32) {
    %c0_i32 = arith.constant 0 : i32
    %c0_i32_0 = arith.constant 0 : i32
    %c0_i32_1 = arith.constant 0 : i32
    return %arg0, %c0_i32, %c0_i32_0 : i32, i32, i32
  }
  func.func @transform_55(%arg0: i32) -> (i32, i32, i32, i32) {
    %c0_i32 = arith.constant 0 : i32
    %c0_i32_0 = arith.constant 0 : i32
    %c0_i32_1 = arith.constant 0 : i32
    %c0_i32_2 = arith.constant 0 : i32
    return %arg0, %c0_i32, %c0_i32_0, %c0_i32_1 : i32, i32, i32, i32
  }
  func.func @transform_56(%arg0: i32) -> (i32, i32) {
    %c0_i32 = arith.constant 0 : i32
    %c0_i32_0 = arith.constant 0 : i32
    %c0_i32_1 = arith.constant 0 : i32
    return %c0_i32, %c0_i32_0 : i32, i32
  }
  func.func @transform_57(%arg0: i32) -> (i32, i32) {
    %c0_i32 = arith.constant 0 : i32
    %c0_i32_0 = arith.constant 0 : i32
    %c0_i32_1 = arith.constant 0 : i32
    return %c0_i32, %c0_i32_0 : i32, i32
  }
  func.func @transform_58(%arg0: i32) -> (i32, i32) {
    %c0_i32 = arith.constant 0 : i32
    %c0_i32_0 = arith.constant 0 : i32
    %c0_i32_1 = arith.constant 0 : i32
    return %c0_i32, %c0_i32_0 : i32, i32
  }
}

</mosaic_0001>

<llo_original>
// kernel: vmr_gae_forward.3
$region0: #{vmr_gae_forward.3}
  #allocation0 [shape = 'u32[]', space=smem, size = 0x4, offset = 0x4, fixed_abs, tag = 'smem constant byte address 0x4 - core index']
  #allocation1 [shape = 'u32[144,128]{1,0:T(1,128)}', space=vmem, size = 0x12000, scoped, tag = 'internal scratch']
  #allocation2 [shape = 'f32[2,8,32]{2,1,0:T(8,128)}', space=vmem, size = 0x2000, scoped, tag = 'scratch operand']
  #allocation3 [shape = 'f32[1,1]{1,0:T(1,128)S(1)}', space=vmem, size = 0x200, scoped, tag = 'scoped memory for vmr_gae_forward.3']
  %s0 = inlined_call_operand.smem [shape: u32[59], index: -1, kind: input, shape index: {}]
  %s1 = sld [smem:[%s0]]
  %s2 = scalar_lea.smem %s0, 1
  %s3 = sld [smem:[%s2]]
  %s4 = scalar_lea.smem %s0, 2
  %s5 = sld [smem:[%s4]]
  %s6 = scalar_lea.smem %s0, 3
  %s7 = sld [smem:[%s6]]
  %s8 = scalar_lea.smem %s0, 4
  %s9 = sld [smem:[%s8]]
  %s10 = scalar_lea.smem %s0, 5
  %s11 = sld [smem:[%s10]]
  %s12 = scalar_lea.smem %s0, 6
  %s13 = sld [smem:[%s12]]
  %s14 = scalar_lea.smem %s0, 7
  %s15 = sld [smem:[%s14]]
  %s16 = scalar_lea.smem %s0, 8
  %s17 = sld [smem:[%s16]]
  %s18 = scalar_lea.smem %s0, 9
  %s19 = sld [smem:[%s18]]
  %s20 = scalar_lea.smem %s0, 10
  %s21 = sld [smem:[%s20]]
  %s22 = scalar_lea.smem %s0, 11
  %s23 = sld [smem:[%s22]]
  %s24 = scalar_lea.smem %s0, 12
  %s25 = sld [smem:[%s24]]
  %s26 = scalar_lea.smem %s0, 13
  %s27 = sld [smem:[%s26]]
  %s28 = scalar_lea.smem %s0, 14
  %s29 = sld [smem:[%s28]]
  %s30 = scalar_lea.smem %s0, 15
  %s31 = sld [smem:[%s30]]
  %s32 = scalar_lea.smem %s0, 16
  %s33 = sld [smem:[%s32]]
  %s34 = scalar_lea.smem %s0, 17
  %s35 = sld [smem:[%s34]]
  %s36 = scalar_lea.smem %s0, 18
  %s37 = sld [smem:[%s36]]
  %s38 = scalar_lea.smem %s0, 19
  %s39 = sld [smem:[%s38]]
  %s40 = scalar_lea.smem %s0, 20
  %s41 = sld [smem:[%s40]]
  %s42 = scalar_lea.smem %s0, 21
  %s43 = sld [smem:[%s42]]
  %s44 = scalar_lea.smem %s0, 22
  %s45 = sld [smem:[%s44]]
  %s46 = scalar_lea.smem %s0, 23
  %s47 = sld [smem:[%s46]]
  %s48 = scalar_lea.smem %s0, 24
  %s49 = sld [smem:[%s48]]
  %s50 = scalar_lea.smem %s0, 25
  %s51 = sld [smem:[%s50]]
  %s52 = scalar_lea.smem %s0, 26
  %s53 = sld [smem:[%s52]]
  %s54 = scalar_lea.smem %s0, 27
  %s55 = sld [smem:[%s54]]
  %s56 = scalar_lea.smem %s0, 28
  %s57 = sld [smem:[%s56]]
  %s58 = scalar_lea.smem %s0, 29
  %s59 = sld [smem:[%s58]]
  %s60 = scalar_lea.smem %s0, 30
  %s61 = sld [smem:[%s60]]
  %s62 = scalar_lea.smem %s0, 31
  %s63 = sld [smem:[%s62]]
  %s64 = scalar_lea.smem %s0, 32
  %s65 = sld [smem:[%s64]]
  %s66 = scalar_lea.smem %s0, 33
  %s67 = sld [smem:[%s66]]
  %s68 = scalar_lea.smem %s0, 34
  %s69 = sld [smem:[%s68]]
  %s70 = scalar_lea.smem %s0, 35
  %s71 = sld [smem:[%s70]]
  %s72 = scalar_lea.smem %s0, 36
  %s73 = sld [smem:[%s72]]
  %s74 = scalar_lea.smem %s0, 37
  %s75 = sld [smem:[%s74]]
  %s76 = scalar_lea.smem %s0, 38
  %s77 = sld [smem:[%s76]]
  %s78 = scalar_lea.smem %s0, 39
  %s79 = sld [smem:[%s78]]
  %s80 = scalar_lea.smem %s0, 40
  %s81 = sld [smem:[%s80]]
  %s82 = scalar_lea.smem %s0, 41
  %s83 = sld [smem:[%s82]]
  %s84 = scalar_lea.smem %s0, 42
  %s85 = sld [smem:[%s84]]
  %s86 = scalar_lea.smem %s0, 43
  %s87 = sld [smem:[%s86]]
  %s88 = scalar_lea.smem %s0, 44
  %s89 = sld [smem:[%s88]]
  %s90 = scalar_lea.smem %s0, 45
  %s91 = sld [smem:[%s90]]
  %s92 = scalar_lea.smem %s0, 46
  %s93 = sld [smem:[%s92]]
  %s94 = scalar_lea.smem %s0, 47
  %s95 = sld [smem:[%s94]]
  %s96 = scalar_lea.smem %s0, 48
  %s97 = sld [smem:[%s96]]
  %s98 = scalar_lea.smem %s0, 49
  %s99 = sld [smem:[%s98]]
  %s100 = scalar_lea.smem %s0, 50
  %s101 = sld [smem:[%s100]]
  %s102 = scalar_lea.smem %s0, 51
  %s103 = sld [smem:[%s102]]
  %s104 = scalar_lea.smem %s0, 52
  %s105 = sld [smem:[%s104]]
  %s106 = scalar_lea.smem %s0, 53
  %s107 = sld [smem:[%s106]]
  %s108 = scalar_lea.smem %s0, 54
  %s109 = sld [smem:[%s108]]
  %s110 = scalar_lea.smem %s0, 55
  %s111 = sld [smem:[%s110]]
  %s112 = scalar_lea.smem %s0, 56
  %s113 = sld [smem:[%s112]]
  %s114 = scalar_lea.smem %s0, 57
  %s115 = sld [smem:[%s114]]
  %s116 = scalar_lea.smem %s0, 58
  %s117 = sld [smem:[%s116]]
  %118 = xla_tuple %s99, %s101, %s103, %s105, %s107, %s109, %s111, %s113, %s115, %s117
  %s119 = sld [smem:[#allocation0]]
  $region461: #{vmr_gae_forward.3} parent=0
    _
  %s121 = ssub.s32 1, %s119
  %s122 = scalar_select 0, %s121, %s119
  %v123 = vstv %s71
  %124 = vst [vmem:[#allocation3] sm:$0x1] %v123
  $region1: #{vmr_gae_forward.3} parent=0
    #allocation4 [shape = 'u8[8192]{0}', space=vmem, size = 0x2000, scoped, tag = 'input window, operand 5']
    #allocation5 [shape = 's32[2]{0}', space=sflag, size = 0x8, scoped, tag = 'scoped memory for vmr_gae_forward.3']
    #allocation6 [shape = 's32[2]{0}', space=sflag, size = 0x8, scoped, tag = 'scoped memory for vmr_gae_forward.3']
    #allocation7 [shape = 'u8[4096]{0}', space=vmem, size = 0x1000, scoped, tag = 'input window, operand 6, single buffered']
    #allocation8 [shape = 's32[1]{0}', space=sflag, size = 0x4, scoped, tag = 'scoped memory for vmr_gae_forward.3']
    #allocation9 [shape = 'u8[1024]{0}', space=vmem, size = 0x400, scoped, tag = 'input window, operand 7, single buffered']
    #allocation10 [shape = 'u8[8192]{0}', space=vmem, size = 0x2000, scoped, tag = 'input window, operand 9, single buffered']
    #allocation11 [shape = 's32[1]{0}', space=sflag, size = 0x4, scoped, tag = 'scoped memory for vmr_gae_forward.3']
    #allocation12 [shape = 'u8[8192]{0}', space=vmem, size = 0x2000, scoped, tag = 'input window, operand 10, single buffered']
    #allocation13 [shape = 'u8[512]{0}', space=vmem, size = 0x400, scoped, tag = 'input window, operand 11, single buffered']
    #allocation14 [shape = 's32[1]{0}', space=sflag, size = 0x4, scoped, tag = 'scoped memory for vmr_gae_forward.3']
    #allocation15 [shape = 'u8[8192]{0}', space=vmem, size = 0x2000, scoped, tag = 'input window, operand 12, single buffered']
    #allocation16 [shape = 'u8[512]{0}', space=vmem, size = 0x400, scoped, tag = 'input window, operand 13, single buffered']
    #allocation17 [shape = 's32[1]{0}', space=sflag, size = 0x4, scoped, tag = 'scoped memory for vmr_gae_forward.3']
    #allocation18 [shape = 'u8[8192]{0}', space=vmem, size = 0x2000, scoped, tag = 'input window, operand 14, single buffered']
    #allocation19 [shape = 'u8[512]{0}', space=vmem, size = 0x400, scoped, tag = 'input window, operand 15, single buffered']
    #allocation20 [shape = 's32[1]{0}', space=sflag, size = 0x4, scoped, tag = 'scoped memory for vmr_gae_forward.3']
    #allocation21 [shape = 'u8[8192]{0}', space=vmem, size = 0x2000, scoped, tag = 'input window, operand 16, single buffered']
    #allocation22 [shape = 'u8[512]{0}', space=vmem, size = 0x400, scoped, tag = 'input window, operand 17, single buffered']
    #allocation23 [shape = 's32[1]{0}', space=sflag, size = 0x4, scoped, tag = 'scoped memory for vmr_gae_forward.3']
    #allocation24 [shape = 'u8[8192]{0}', space=vmem, size = 0x2000, scoped, tag = 'input window, operand 18, single buffered']
    #allocation25 [shape = 'u8[512]{0}', space=vmem, size = 0x400, scoped, tag = 'input window, operand 19, single buffered']
    #allocation26 [shape = 's32[1]{0}', space=sflag, size = 0x4, scoped, tag = 'scoped memory for vmr_gae_forward.3']
    #allocation27 [shape = 'u8[8192]{0}', space=vmem, size = 0x2000, scoped, tag = 'input window, operand 20, single buffered']
    #allocation28 [shape = 'u8[512]{0}', space=vmem, size = 0x400, scoped, tag = 'input window, operand 21, single buffered']
    #allocation29 [shape = 's32[1]{0}', space=sflag, size = 0x4, scoped, tag = 'scoped memory for vmr_gae_forward.3']
    #allocation30 [shape = 'u8[4096]{0}', space=vmem, size = 0x1000, scoped, tag = 'input window, operand 22, single buffered']
    #allocation31 [shape = 'u8[512]{0}', space=vmem, size = 0x400, scoped, tag = 'input window, operand 23, single buffered']
    #allocation32 [shape = 's32[1]{0}', space=sflag, size = 0x4, scoped, tag = 'scoped memory for vmr_gae_forward.3']
    #allocation33 [shape = 'u8[8192]{0}', space=vmem, size = 0x2000, scoped, tag = 'input window, operand 24, single buffered']
    #allocation34 [shape = 'u8[8192]{0}', space=vmem, size = 0x2000, scoped, tag = 'input window, operand 25, single buffered']
    #allocation35 [shape = 's32[1]{0}', space=sflag, size = 0x4, scoped, tag = 'scoped memory for vmr_gae_forward.3']
    #allocation36 [shape = 'u8[1024]{0}', space=vmem, size = 0x400, scoped, tag = 'input window, operand 26, single buffered']
    #allocation37 [shape = 'u8[512]{0}', space=vmem, size = 0x400, scoped, tag = 'input window, operand 28, single buffered']
    #allocation38 [shape = 's32[1]{0}', space=sflag, size = 0x4, scoped, tag = 'scoped memory for vmr_gae_forward.3']
    #allocation39 [shape = 'u8[32768]{0}', space=vmem, size = 0x8000, scoped, tag = 'input window, operand 30, single buffered']
    #allocation40 [shape = 'u8[1024]{0}', space=vmem, size = 0x400, scoped, tag = 'input window, operand 31, single buffered']
    #allocation41 [shape = 's32[1]{0}', space=sflag, size = 0x4, scoped, tag = 'scoped memory for vmr_gae_forward.3']
    #allocation42 [shape = 'u8[1024]{0}', space=vmem, size = 0x400, scoped, tag = 'input window, operand 33, single buffered']
    #allocation43 [shape = 'u8[1024]{0}', space=vmem, size = 0x400, scoped, tag = 'input window, operand 34, single buffered']
    #allocation44 [shape = 's32[1]{0}', space=sflag, size = 0x4, scoped, tag = 'scoped memory for vmr_gae_forward.3']
    #allocation45 [shape = 'u8[8192]{0}', space=vmem, size = 0x2000, scoped, tag = 'input window, operand 36, single buffered']
    #allocation46 [shape = 'u8[8192]{0}', space=vmem, size = 0x2000, scoped, tag = 'input window, operand 37, single buffered']
    #allocation47 [shape = 's32[1]{0}', space=sflag, size = 0x4, scoped, tag = 'scoped memory for vmr_gae_forward.3']
    #allocation48 [shape = 'u8[512]{0}', space=vmem, size = 0x400, scoped, tag = 'input window, operand 38, single buffered']
    #allocation49 [shape = 'u8[8192]{0}', space=vmem, size = 0x2000, scoped, tag = 'input window, operand 39, single buffered']
    #allocation50 [shape = 's32[1]{0}', space=sflag, size = 0x4, scoped, tag = 'scoped memory for vmr_gae_forward.3']
    #allocation51 [shape = 'u8[512]{0}', space=vmem, size = 0x400, scoped, tag = 'input window, operand 40, single buffered']
    #allocation52 [shape = 'u8[8192]{0}', space=vmem, size = 0x2000, scoped, tag = 'input window, operand 41, single buffered']
    #allocation53 [shape = 's32[1]{0}', space=sflag, size = 0x4, scoped, tag = 'scoped memory for vmr_gae_forward.3']
    #allocation54 [shape = 'u8[512]{0}', space=vmem, size = 0x400, scoped, tag = 'input window, operand 42, single buffered']
    #allocation55 [shape = 'u8[8192]{0}', space=vmem, size = 0x2000, scoped, tag = 'input window, operand 43, single buffered']
    #allocation56 [shape = 's32[1]{0}', space=sflag, size = 0x4, scoped, tag = 'scoped memory for vmr_gae_forward.3']
    #allocation57 [shape = 'u8[512]{0}', space=vmem, size = 0x400, scoped, tag = 'input window, operand 44, single buffered']
    #allocation58 [shape = 'u8[8192]{0}', space=vmem, size = 0x2000, scoped, tag = 'input window, operand 45, single buffered']
    #allocation59 [shape = 's32[1]{0}', space=sflag, size = 0x4, scoped, tag = 'scoped memory for vmr_gae_forward.3']
    #allocation60 [shape = 'u8[512]{0}', space=vmem, size = 0x400, scoped, tag = 'input window, operand 46, single buffered']
    #allocation61 [shape = 'u8[8192]{0}', space=vmem, size = 0x2000, scoped, tag = 'input window, operand 47, single buffered']
    #allocation62 [shape = 's32[1]{0}', space=sflag, size = 0x4, scoped, tag = 'scoped memory for vmr_gae_forward.3']
    #allocation63 [shape = 'u8[512]{0}', space=vmem, size = 0x400, scoped, tag = 'input window, operand 48, single buffered']
    #allocation64 [shape = 'u8[8192]{0}', space=vmem, size = 0x2000, scoped, tag = 'output window, operand 3']
    #allocation65 [shape = 'u8[8192]{0}', space=vmem, size = 0x2000, scoped, tag = 'output window, operand 4']
    #allocation66 [shape = 's32[2]{0}', space=sflag, size = 0x8, scoped, tag = 'scoped memory for vmr_gae_forward.3']
    #allocation67 [shape = 'u8[512]{0}', space=vmem, size = 0x400, scoped, tag = 'output window, operand 7, single buffered']
    #allocation68 [shape = 'u8[512]{0}', space=vmem, size = 0x400, scoped, tag = 'output window, operand 8, single buffered']
    #allocation69 [shape = 's32[1]{0}', space=sflag, size = 0x4, scoped, tag = 'scoped memory for vmr_gae_forward.3']
    #allocation70 [shape = 'u8[512]{0}', space=vmem, size = 0x400, scoped, tag = 'output window, operand 9, single buffered']
    %125 = vsyncpa [#allocation5], 0
    %s126 = scalar_lea.sflag [#allocation5], 1
    %127 = vsyncpa %s126, 0
    %128 = vsyncpa [#allocation8], 0
    %129 = vsyncpa [#allocation11], 0
    %130 = vsyncpa [#allocation14], 0
    %131 = vsyncpa [#allocation17], 0
    %132 = vsyncpa [#allocation20], 0
    %133 = vsyncpa [#allocation23], 0
    %134 = vsyncpa [#allocation26], 0
    %135 = vsyncpa [#allocation29], 0
    %136 = vsyncpa [#allocation32], 0
    %137 = vsyncpa [#allocation35], 0
    %138 = vsyncpa [#allocation38], 0
    %139 = vsyncpa [#allocation41], 0
    %140 = vsyncpa [#allocation44], 0
    %141 = vsyncpa [#allocation47], 0
    %142 = vsyncpa [#allocation50], 0
    %143 = vsyncpa [#allocation53], 0
    %144 = vsyncpa [#allocation56], 0
    %145 = vsyncpa [#allocation59], 0
    %146 = vsyncpa [#allocation62], 0
    %147 = vsyncpa [#allocation6], 0
    %s148 = scalar_lea.sflag [#allocation6], 1
    %149 = vsyncpa %s148, 0
    %150 = vsyncpa [#allocation66], 0
    %s151 = scalar_lea.sflag [#allocation66], 1
    %152 = vsyncpa %s151, 0
    %153 = vsyncpa [#allocation69], 0
    loop: start=0, step=1, limit=5
    $region2: #{vmr_gae_forward.3} parent=1 // loop_pre_header
      _
    $region3: #{vmr_gae_forward.3} parent=1 // loop_header
      %s155 = sphi 0, %s159
      %p156 = scmp.ge.s32.totalorder %s155, 5
      %s165 = sphi 0, %s167
      %s168 = sphi 0, %s165
      %s169 = sphi 0, %s168
      %s185 = sphi 0, %s169
      %s191 = sphi 0, %s193
      %s194 = sphi 0, %s191
      %s195 = sphi 0, %s194
      %s211 = sphi 0, %s195
      %s217 = sphi 0, %s219
      %s220 = sphi 0, %s217
      %s221 = sphi 0, %s220
      %s237 = sphi 0, %s221
      %s243 = sphi 0, %s245
      %s246 = sphi 0, %s243
      %s247 = sphi 0, %s246
      %s263 = sphi 0, %s247
      %s269 = sphi 0, %s271
      %s272 = sphi 0, %s269
      %s273 = sphi 0, %s272
      %s289 = sphi 0, %s273
      %s295 = sphi 0, %s297
      %s298 = sphi 0, %s295
      %s299 = sphi 0, %s298
      %s315 = sphi 0, %s299
      %s319 = sphi 0, %s319
      %s321 = sphi 0, %s319
      %s322 = sphi 0, %s321
      %s336 = sphi 0, %s322
      %s340 = sphi 0, %s340
      %s342 = sphi 0, %s340
      %s343 = sphi 0, %s342
      %s357 = sphi 0, %s343
      %s361 = sphi 0, %s361
      %s363 = sphi 0, %s361
      %s364 = sphi 0, %s363
      %s378 = sphi 0, %s364
      %s382 = sphi 0, %s382
      %s384 = sphi 0, %s382
      %s385 = sphi 0, %s384
      %s399 = sphi 0, %s385
      %s403 = sphi 0, %s403
      %s405 = sphi 0, %s403
      %s406 = sphi 0, %s405
      %s420 = sphi 0, %s406
      %s424 = sphi 0, %s424
      %s426 = sphi 0, %s424
      %s427 = sphi 0, %s426
      %s441 = sphi 0, %s427
      %s445 = sphi 0, %s445
      %s447 = sphi 0, %s445
      %s448 = sphi 0, %s447
      %s462 = sphi 0, %s448
      %s466 = sphi 0, %s466
      %s468 = sphi 0, %s466
      %s469 = sphi 0, %s468
      %s483 = sphi 0, %s469
      %s487 = sphi 0, %s487
      %s489 = sphi 0, %s487
      %s490 = sphi 0, %s489
      %s504 = sphi 0, %s490
      %s508 = sphi 0, %s508
      %s510 = sphi 0, %s508
      %s511 = sphi 0, %s510
      %s525 = sphi 0, %s511
      %s529 = sphi 0, %s529
      %s531 = sphi 0, %s529
      %s532 = sphi 0, %s531
      %s546 = sphi 0, %s532
      %s550 = sphi 0, %s550
      %s552 = sphi 0, %s550
      %s553 = sphi 0, %s552
      %s567 = sphi 0, %s553
      %s571 = sphi 0, %s571
      %s573 = sphi 0, %s571
      %s574 = sphi 0, %s573
      %s588 = sphi 0, %s574
      %s592 = sphi 0, %s592
      %s594 = sphi 0, %s592
      %s595 = sphi 0, %s594
      %s609 = sphi 0, %s595
      %s613 = sphi 0, %s613
      %s615 = sphi 0, %s613
      %s616 = sphi 0, %s615
      %s630 = sphi 0, %s616
      %s634 = sphi 0, %s634
      %s636 = sphi 0, %s634
      %s637 = sphi 0, %s636
      %s651 = sphi 0, %s637
      %s655 = sphi 0, %s655
      %s657 = sphi 0, %s655
      %s658 = sphi 0, %s657
      %s672 = sphi 0, %s658
      %s676 = sphi 0, %s676
      %s678 = sphi 0, %s676
      %s679 = sphi 0, %s678
      %s693 = sphi 0, %s679
      %s697 = sphi 0, %s697
      %s699 = sphi 0, %s697
      %s700 = sphi 0, %s699
      %s714 = sphi 0, %s700
      %s718 = sphi 0, %s718
      %s720 = sphi 0, %s718
      %s721 = sphi 0, %s720
      %s735 = sphi 0, %s721
      %s739 = sphi 0, %s739
      %s741 = sphi 0, %s739
      %s742 = sphi 0, %s741
      %s756 = sphi 0, %s742
      %s760 = sphi 0, %s760
      %s762 = sphi 0, %s760
      %s763 = sphi 0, %s762
      %s777 = sphi 0, %s763
      %s781 = sphi 0, %s781
      %s783 = sphi 0, %s781
      %s784 = sphi 0, %s783
      %s798 = sphi 0, %s784
      %s802 = sphi 0, %s802
      %s804 = sphi 0, %s802
      %s805 = sphi 0, %s804
      %s819 = sphi 0, %s805
      %s823 = sphi 0, %s823
      %s825 = sphi 0, %s823
      %s826 = sphi 0, %s825
      %s840 = sphi 0, %s826
      %s844 = sphi 0, %s844
      %s846 = sphi 0, %s844
      %s847 = sphi 0, %s846
      %s861 = sphi 0, %s847
      %s865 = sphi 0, %s865
      %s867 = sphi 0, %s865
      %s868 = sphi 0, %s867
      %s882 = sphi 0, %s868
      %s886 = sphi 0, %s886
      %s888 = sphi 0, %s886
      %s889 = sphi 0, %s888
      %s903 = sphi 0, %s889
      %s907 = sphi 0, %s907
      %s909 = sphi 0, %s907
      %s910 = sphi 0, %s909
      %s924 = sphi 0, %s910
      %s928 = sphi 0, %s928
      %s930 = sphi 0, %s928
      %s931 = sphi 0, %s930
      %s945 = sphi 0, %s931
      %s949 = sphi 0, %s949
      %s951 = sphi 0, %s949
      %s952 = sphi 0, %s951
      %s966 = sphi 0, %s952
      %s970 = sphi 0, %s970
      %s972 = sphi 0, %s970
      %s973 = sphi 0, %s972
      %s987 = sphi 0, %s973
      %s991 = sphi 0, %s991
      %s993 = sphi 0, %s991
      %s994 = sphi 0, %s993
      %s1008 = sphi 0, %s994
      %s1012 = sphi 0, %s1012
      %s1014 = sphi 0, %s1012
      %s1015 = sphi 0, %s1014
      %s1029 = sphi 0, %s1015
      %s1033 = sphi 0, %s1033
      %s1035 = sphi 0, %s1033
      %s1036 = sphi 0, %s1035
      %s1050 = sphi 0, %s1036
      %s1054 = sphi 0, %s1054
      %s1056 = sphi 0, %s1054
      %s1057 = sphi 0, %s1056
      %s1071 = sphi 0, %s1057
      %s1075 = sphi 0, %s1075
      %s1077 = sphi 0, %s1075
      %s1078 = sphi 0, %s1077
      %s1092 = sphi 0, %s1078
      %s1096 = sphi 0, %s1096
      %s1098 = sphi 0, %s1096
      %s1099 = sphi 0, %s1098
      %s1113 = sphi 0, %s1099
      %s1117 = sphi 0, %s1117
      %s1119 = sphi 0, %s1117
      %s1120 = sphi 0, %s1119
      %s1134 = sphi 0, %s1120
      %s1138 = sphi 0, %s1138
      %s1140 = sphi 0, %s1138
      %s1141 = sphi 0, %s1140
      %s1155 = sphi 0, %s1141
      %s1159 = sphi 0, %s1159
      %s1161 = sphi 0, %s1159
      %s1162 = sphi 0, %s1161
      %s1176 = sphi 0, %s1162
      %s1180 = sphi 0, %s1180
      %s1182 = sphi 0, %s1180
      %s1183 = sphi 0, %s1182
      %s1197 = sphi 0, %s1183
      %s1201 = sphi 0, %s1201
      %s1203 = sphi 0, %s1201
      %s1204 = sphi 0, %s1203
      %s1218 = sphi 0, %s1204
      %s1224 = sphi 0, %s1226
      %s1227 = sphi 0, %s1224
      %s1228 = sphi 0, %s1227
      %s1244 = sphi 0, %s1228
      %s1250 = sphi 0, %s1252
      %s1253 = sphi 0, %s1250
      %s1254 = sphi 0, %s1253
      %s1270 = sphi 0, %s1254
      %s1276 = sphi 0, %s1278
      %s1279 = sphi 0, %s1276
      %s1280 = sphi 0, %s1279
      %s1296 = sphi 0, %s1280
      %s1302 = sphi 0, %s1304
      %s1305 = sphi 0, %s1302
      %s1306 = sphi 0, %s1305
      %s1322 = sphi 0, %s1306
      %s1328 = sphi 0, %s1330
      %s1331 = sphi 0, %s1328
      %s1332 = sphi 0, %s1331
      %s1348 = sphi 0, %s1332
      %s1354 = sphi 0, %s1356
      %s1357 = sphi 0, %s1354
      %s1358 = sphi 0, %s1357
      %s1374 = sphi 0, %s1358
      %s1380 = sphi 0, %s1382
      %s1383 = sphi 0, %s1380
      %s1384 = sphi 0, %s1383
      %s1400 = sphi 0, %s1384
      %s1404 = sphi 0, %s1404
      %s1406 = sphi 0, %s1404
      %s1407 = sphi 0, %s1406
      %s1421 = sphi 0, %s1407
      %s1425 = sphi 0, %s1425
      %s1427 = sphi 0, %s1425
      %s1428 = sphi 0, %s1427
      %s1442 = sphi 0, %s1428
      %s1446 = sphi 0, %s1446
      %s1448 = sphi 0, %s1446
      %s1449 = sphi 0, %s1448
      %s1463 = sphi 0, %s1449
    $region4: #{vmr_gae_forward.3} parent=1 // loop_header_branch
      %158 = sbr.rel (%p156) target = $region8
    $region5: #{vmr_gae_forward.3} parent=1 // loop_body
      %s160 = ssub.s32 %s155, 1
      %s161 = ssub.s32 %s155, 2
      %s162 = sadd.s32 %s155, 1
      %s163 = ssub.s32 %s155, %s162
      %p164 = scmp.eq.s32.totalorder %s163, 0
      %s166 = sadd.s32 %s165, 1
      %s167 = scalar_select %p164, %s165, %s166
      %p170 = pneg %p164
      %p171 = scmp.eq.s32.totalorder %s155, 2
      %p172 = por %p170, %p171
      %p173 = scmp.ne.s32.totalorder %s165, %s168
      %p174 = scmp.eq.s32.totalorder %s155, 0
      %p175 = por %p173, %p174
      %p176 = scmp.ne.s32.totalorder %s165, %s168
      %p177 = scmp.eq.s32.totalorder %s160, 2
      %p178 = por %p176, %p177
      %p179 = scmp.ne.s32.totalorder %s168, %s169
      %p180 = scmp.eq.s32.totalorder %s160, 0
      %p181 = por %p179, %p180
      %p182 = scmp.ne.s32.totalorder %s168, %s169
      %p183 = scmp.eq.s32.totalorder %s161, 2
      %p184 = por %p182, %p183
      %p186 = scmp.ne.s32.totalorder %s169, %s185
      %p187 = scmp.eq.s32.totalorder %s161, 0
      %p188 = por %p186, %p187
      %s189 = ssub.s32 %s155, %s162
      %p190 = scmp.eq.s32.totalorder %s189, 0
      %s192 = sadd.s32 %s191, 1
      %s193 = scalar_select %p190, %s191, %s192
      %p196 = pneg %p190
      %p197 = scmp.eq.s32.totalorder %s155, 2
      %p198 = por %p196, %p197
      %p199 = scmp.ne.s32.totalorder %s191, %s194
      %p200 = scmp.eq.s32.totalorder %s155, 0
      %p201 = por %p199, %p200
      %p202 = scmp.ne.s32.totalorder %s191, %s194
      %p203 = scmp.eq.s32.totalorder %s160, 2
      %p204 = por %p202, %p203
      %p205 = scmp.ne.s32.totalorder %s194, %s195
      %p206 = scmp.eq.s32.totalorder %s160, 0
      %p207 = por %p205, %p206
      %p208 = scmp.ne.s32.totalorder %s194, %s195
      %p209 = scmp.eq.s32.totalorder %s161, 2
      %p210 = por %p208, %p209
      %p212 = scmp.ne.s32.totalorder %s195, %s211
      %p213 = scmp.eq.s32.totalorder %s161, 0
      %p214 = por %p212, %p213
      %s215 = ssub.s32 %s155, %s162
      %p216 = scmp.eq.s32.totalorder %s215, 0
      %s218 = sadd.s32 %s217, 1
      %s219 = scalar_select %p216, %s217, %s218
      %p222 = pneg %p216
      %p223 = scmp.eq.s32.totalorder %s155, 2
      %p224 = por %p222, %p223
      %p225 = scmp.ne.s32.totalorder %s217, %s220
      %p226 = scmp.eq.s32.totalorder %s155, 0
      %p227 = por %p225, %p226
      %p228 = scmp.ne.s32.totalorder %s217, %s220
      %p229 = scmp.eq.s32.totalorder %s160, 2
      %p230 = por %p228, %p229
      %p231 = scmp.ne.s32.totalorder %s220, %s221
      %p232 = scmp.eq.s32.totalorder %s160, 0
      %p233 = por %p231, %p232
      %p234 = scmp.ne.s32.totalorder %s220, %s221
      %p235 = scmp.eq.s32.totalorder %s161, 2
      %p236 = por %p234, %p235
      %p238 = scmp.ne.s32.totalorder %s221, %s237
      %p239 = scmp.eq.s32.totalorder %s161, 0
      %p240 = por %p238, %p239
      %s241 = ssub.s32 %s155, %s162
      %p242 = scmp.eq.s32.totalorder %s241, 0
      %s244 = sadd.s32 %s243, 1
      %s245 = scalar_select %p242, %s243, %s244
      %p248 = pneg %p242
      %p249 = scmp.eq.s32.totalorder %s155, 2
      %p250 = por %p248, %p249
      %p251 = scmp.ne.s32.totalorder %s243, %s246
      %p252 = scmp.eq.s32.totalorder %s155, 0
      %p253 = por %p251, %p252
      %p254 = scmp.ne.s32.totalorder %s243, %s246
      %p255 = scmp.eq.s32.totalorder %s160, 2
      %p256 = por %p254, %p255
      %p257 = scmp.ne.s32.totalorder %s246, %s247
      %p258 = scmp.eq.s32.totalorder %s160, 0
      %p259 = por %p257, %p258
      %p260 = scmp.ne.s32.totalorder %s246, %s247
      %p261 = scmp.eq.s32.totalorder %s161, 2
      %p262 = por %p260, %p261
      %p264 = scmp.ne.s32.totalorder %s247, %s263
      %p265 = scmp.eq.s32.totalorder %s161, 0
      %p266 = por %p264, %p265
      %s267 = ssub.s32 %s155, %s162
      %p268 = scmp.eq.s32.totalorder %s267, 0
      %s270 = sadd.s32 %s269, 1
      %s271 = scalar_select %p268, %s269, %s270
      %p274 = pneg %p268
      %p275 = scmp.eq.s32.totalorder %s155, 2
      %p276 = por %p274, %p275
      %p277 = scmp.ne.s32.totalorder %s269, %s272
      %p278 = scmp.eq.s32.totalorder %s155, 0
      %p279 = por %p277, %p278
      %p280 = scmp.ne.s32.totalorder %s269, %s272
      %p281 = scmp.eq.s32.totalorder %s160, 2
      %p282 = por %p280, %p281
      %p283 = scmp.ne.s32.totalorder %s272, %s273
      %p284 = scmp.eq.s32.totalorder %s160, 0
      %p285 = por %p283, %p284
      %p286 = scmp.ne.s32.totalorder %s272, %s273
      %p287 = scmp.eq.s32.totalorder %s161, 2
      %p288 = por %p286, %p287
      %p290 = scmp.ne.s32.totalorder %s273, %s289
      %p291 = scmp.eq.s32.totalorder %s161, 0
      %p292 = por %p290, %p291
      %s293 = ssub.s32 %s155, %s162
      %p294 = scmp.eq.s32.totalorder %s293, 0
      %s296 = sadd.s32 %s295, 1
      %s297 = scalar_select %p294, %s295, %s296
      %p300 = pneg %p294
      %p301 = scmp.eq.s32.totalorder %s155, 2
      %p302 = por %p300, %p301
      %p303 = scmp.ne.s32.totalorder %s295, %s298
      %p304 = scmp.eq.s32.totalorder %s155, 0
      %p305 = por %p303, %p304
      %p306 = scmp.ne.s32.totalorder %s295, %s298
      %p307 = scmp.eq.s32.totalorder %s160, 2
      %p308 = por %p306, %p307
      %p309 = scmp.ne.s32.totalorder %s298, %s299
      %p310 = scmp.eq.s32.totalorder %s160, 0
      %p311 = por %p309, %p310
      %p312 = scmp.ne.s32.totalorder %s298, %s299
      %p313 = scmp.eq.s32.totalorder %s161, 2
      %p314 = por %p312, %p313
      %p316 = scmp.ne.s32.totalorder %s299, %s315
      %p317 = scmp.eq.s32.totalorder %s161, 0
      %p318 = por %p316, %p317
      %s320 = sadd.s32 %s319, 1
      %p323 = scmp.eq.s32.totalorder %s155, 2
      %p324 = scmp.ne.s32.totalorder %s319, %s321
      %p325 = scmp.eq.s32.totalorder %s155, 0
      %p326 = por %p324, %p325
      %p327 = scmp.ne.s32.totalorder %s319, %s321
      %p328 = scmp.eq.s32.totalorder %s160, 2
      %p329 = por %p327, %p328
      %p330 = scmp.ne.s32.totalorder %s321, %s322
      %p331 = scmp.eq.s32.totalorder %s160, 0
      %p332 = por %p330, %p331
      %p333 = scmp.ne.s32.totalorder %s321, %s322
      %p334 = scmp.eq.s32.totalorder %s161, 2
      %p335 = por %p333, %p334
      %p337 = scmp.ne.s32.totalorder %s322, %s336
      %p338 = scmp.eq.s32.totalorder %s161, 0
      %p339 = por %p337, %p338
      %s341 = sadd.s32 %s340, 1
      %p344 = scmp.eq.s32.totalorder %s155, 2
      %p345 = scmp.ne.s32.totalorder %s340, %s342
      %p346 = scmp.eq.s32.totalorder %s155, 0
      %p347 = por %p345, %p346
      %p348 = scmp.ne.s32.totalorder %s340, %s342
      %p349 = scmp.eq.s32.totalorder %s160, 2
      %p350 = por %p348, %p349
      %p351 = scmp.ne.s32.totalorder %s342, %s343
      %p352 = scmp.eq.s32.totalorder %s160, 0
      %p353 = por %p351, %p352
      %p354 = scmp.ne.s32.totalorder %s342, %s343
      %p355 = scmp.eq.s32.totalorder %s161, 2
      %p356 = por %p354, %p355
      %p358 = scmp.ne.s32.totalorder %s343, %s357
      %p359 = scmp.eq.s32.totalorder %s161, 0
      %p360 = por %p358, %p359
      %s362 = sadd.s32 %s361, 1
      %p365 = scmp.eq.s32.totalorder %s155, 2
      %p366 = scmp.ne.s32.totalorder %s361, %s363
      %p367 = scmp.eq.s32.totalorder %s155, 0
      %p368 = por %p366, %p367
      %p369 = scmp.ne.s32.totalorder %s361, %s363
      %p370 = scmp.eq.s32.totalorder %s160, 2
      %p371 = por %p369, %p370
      %p372 = scmp.ne.s32.totalorder %s363, %s364
      %p373 = scmp.eq.s32.totalorder %s160, 0
      %p374 = por %p372, %p373
      %p375 = scmp.ne.s32.totalorder %s363, %s364
      %p376 = scmp.eq.s32.totalorder %s161, 2
      %p377 = por %p375, %p376
      %p379 = scmp.ne.s32.totalorder %s364, %s378
      %p380 = scmp.eq.s32.totalorder %s161, 0
      %p381 = por %p379, %p380
      %s383 = sadd.s32 %s382, 1
      %p386 = scmp.eq.s32.totalorder %s155, 2
      %p387 = scmp.ne.s32.totalorder %s382, %s384
      %p388 = scmp.eq.s32.totalorder %s155, 0
      %p389 = por %p387, %p388
      %p390 = scmp.ne.s32.totalorder %s382, %s384
      %p391 = scmp.eq.s32.totalorder %s160, 2
      %p392 = por %p390, %p391
      %p393 = scmp.ne.s32.totalorder %s384, %s385
      %p394 = scmp.eq.s32.totalorder %s160, 0
      %p395 = por %p393, %p394
      %p396 = scmp.ne.s32.totalorder %s384, %s385
      %p397 = scmp.eq.s32.totalorder %s161, 2
      %p398 = por %p396, %p397
      %p400 = scmp.ne.s32.totalorder %s385, %s399
      %p401 = scmp.eq.s32.totalorder %s161, 0
      %p402 = por %p400, %p401
      %s404 = sadd.s32 %s403, 1
      %p407 = scmp.eq.s32.totalorder %s155, 2
      %p408 = scmp.ne.s32.totalorder %s403, %s405
      %p409 = scmp.eq.s32.totalorder %s155, 0
      %p410 = por %p408, %p409
      %p411 = scmp.ne.s32.totalorder %s403, %s405
      %p412 = scmp.eq.s32.totalorder %s160, 2
      %p413 = por %p411, %p412
      %p414 = scmp.ne.s32.totalorder %s405, %s406
      %p415 = scmp.eq.s32.totalorder %s160, 0
      %p416 = por %p414, %p415
      %p417 = scmp.ne.s32.totalorder %s405, %s406
      %p418 = scmp.eq.s32.totalorder %s161, 2
      %p419 = por %p417, %p418
      %p421 = scmp.ne.s32.totalorder %s406, %s420
      %p422 = scmp.eq.s32.totalorder %s161, 0
      %p423 = por %p421, %p422
      %s425 = sadd.s32 %s424, 1
      %p428 = scmp.eq.s32.totalorder %s155, 2
      %p429 = scmp.ne.s32.totalorder %s424, %s426
      %p430 = scmp.eq.s32.totalorder %s155, 0
      %p431 = por %p429, %p430
      %p432 = scmp.ne.s32.totalorder %s424, %s426
      %p433 = scmp.eq.s32.totalorder %s160, 2
      %p434 = por %p432, %p433
      %p435 = scmp.ne.s32.totalorder %s426, %s427
      %p436 = scmp.eq.s32.totalorder %s160, 0
      %p437 = por %p435, %p436
      %p438 = scmp.ne.s32.totalorder %s426, %s427
      %p439 = scmp.eq.s32.totalorder %s161, 2
      %p440 = por %p438, %p439
      %p442 = scmp.ne.s32.totalorder %s427, %s441
      %p443 = scmp.eq.s32.totalorder %s161, 0
      %p444 = por %p442, %p443
      %s446 = sadd.s32 %s445, 1
      %p449 = scmp.eq.s32.totalorder %s155, 2
      %p450 = scmp.ne.s32.totalorder %s445, %s447
      %p451 = scmp.eq.s32.totalorder %s155, 0
      %p452 = por %p450, %p451
      %p453 = scmp.ne.s32.totalorder %s445, %s447
      %p454 = scmp.eq.s32.totalorder %s160, 2
      %p455 = por %p453, %p454
      %p456 = scmp.ne.s32.totalorder %s447, %s448
      %p457 = scmp.eq.s32.totalorder %s160, 0
      %p458 = por %p456, %p457
      %p459 = scmp.ne.s32.totalorder %s447, %s448
      %p460 = scmp.eq.s32.totalorder %s161, 2
      %p461 = por %p459, %p460
      %p463 = scmp.ne.s32.totalorder %s448, %s462
      %p464 = scmp.eq.s32.totalorder %s161, 0
      %p465 = por %p463, %p464
      %s467 = sadd.s32 %s466, 1
      %p470 = scmp.eq.s32.totalorder %s155, 2
      %p471 = scmp.ne.s32.totalorder %s466, %s468
      %p472 = scmp.eq.s32.totalorder %s155, 0
      %p473 = por %p471, %p472
      %p474 = scmp.ne.s32.totalorder %s466, %s468
      %p475 = scmp.eq.s32.totalorder %s160, 2
      %p476 = por %p474, %p475
      %p477 = scmp.ne.s32.totalorder %s468, %s469
      %p478 = scmp.eq.s32.totalorder %s160, 0
      %p479 = por %p477, %p478
      %p480 = scmp.ne.s32.totalorder %s468, %s469
      %p481 = scmp.eq.s32.totalorder %s161, 2
      %p482 = por %p480, %p481
      %p484 = scmp.ne.s32.totalorder %s469, %s483
      %p485 = scmp.eq.s32.totalorder %s161, 0
      %p486 = por %p484, %p485
      %s488 = sadd.s32 %s487, 1
      %p491 = scmp.eq.s32.totalorder %s155, 2
      %p492 = scmp.ne.s32.totalorder %s487, %s489
      %p493 = scmp.eq.s32.totalorder %s155, 0
      %p494 = por %p492, %p493
      %p495 = scmp.ne.s32.totalorder %s487, %s489
      %p496 = scmp.eq.s32.totalorder %s160, 2
      %p497 = por %p495, %p496
      %p498 = scmp.ne.s32.totalorder %s489, %s490
      %p499 = scmp.eq.s32.totalorder %s160, 0
      %p500 = por %p498, %p499
      %p501 = scmp.ne.s32.totalorder %s489, %s490
      %p502 = scmp.eq.s32.totalorder %s161, 2
      %p503 = por %p501, %p502
      %p505 = scmp.ne.s32.totalorder %s490, %s504
      %p506 = scmp.eq.s32.totalorder %s161, 0
      %p507 = por %p505, %p506
      %s509 = sadd.s32 %s508, 1
      %p512 = scmp.eq.s32.totalorder %s155, 2
      %p513 = scmp.ne.s32.totalorder %s508, %s510
      %p514 = scmp.eq.s32.totalorder %s155, 0
      %p515 = por %p513, %p514
      %p516 = scmp.ne.s32.totalorder %s508, %s510
      %p517 = scmp.eq.s32.totalorder %s160, 2
      %p518 = por %p516, %p517
      %p519 = scmp.ne.s32.totalorder %s510, %s511
      %p520 = scmp.eq.s32.totalorder %s160, 0
      %p521 = por %p519, %p520
      %p522 = scmp.ne.s32.totalorder %s510, %s511
      %p523 = scmp.eq.s32.totalorder %s161, 2
      %p524 = por %p522, %p523
      %p526 = scmp.ne.s32.totalorder %s511, %s525
      %p527 = scmp.eq.s32.totalorder %s161, 0
      %p528 = por %p526, %p527
      %s530 = sadd.s32 %s529, 1
      %p533 = scmp.eq.s32.totalorder %s155, 2
      %p534 = scmp.ne.s32.totalorder %s529, %s531
      %p535 = scmp.eq.s32.totalorder %s155, 0
      %p536 = por %p534, %p535
      %p537 = scmp.ne.s32.totalorder %s529, %s531
      %p538 = scmp.eq.s32.totalorder %s160, 2
      %p539 = por %p537, %p538
      %p540 = scmp.ne.s32.totalorder %s531, %s532
      %p541 = scmp.eq.s32.totalorder %s160, 0
      %p542 = por %p540, %p541
      %p543 = scmp.ne.s32.totalorder %s531, %s532
      %p544 = scmp.eq.s32.totalorder %s161, 2
      %p545 = por %p543, %p544
      %p547 = scmp.ne.s32.totalorder %s532, %s546
      %p548 = scmp.eq.s32.totalorder %s161, 0
      %p549 = por %p547, %p548
      %s551 = sadd.s32 %s550, 1
      %p554 = scmp.eq.s32.totalorder %s155, 2
      %p555 = scmp.ne.s32.totalorder %s550, %s552
      %p556 = scmp.eq.s32.totalorder %s155, 0
      %p557 = por %p555, %p556
      %p558 = scmp.ne.s32.totalorder %s550, %s552
      %p559 = scmp.eq.s32.totalorder %s160, 2
      %p560 = por %p558, %p559
      %p561 = scmp.ne.s32.totalorder %s552, %s553
      %p562 = scmp.eq.s32.totalorder %s160, 0
      %p563 = por %p561, %p562
      %p564 = scmp.ne.s32.totalorder %s552, %s553
      %p565 = scmp.eq.s32.totalorder %s161, 2
      %p566 = por %p564, %p565
      %p568 = scmp.ne.s32.totalorder %s553, %s567
      %p569 = scmp.eq.s32.totalorder %s161, 0
      %p570 = por %p568, %p569
      %s572 = sadd.s32 %s571, 1
      %p575 = scmp.eq.s32.totalorder %s155, 2
      %p576 = scmp.ne.s32.totalorder %s571, %s573
      %p577 = scmp.eq.s32.totalorder %s155, 0
      %p578 = por %p576, %p577
      %p579 = scmp.ne.s32.totalorder %s571, %s573
      %p580 = scmp.eq.s32.totalorder %s160, 2
      %p581 = por %p579, %p580
      %p582 = scmp.ne.s32.totalorder %s573, %s574
      %p583 = scmp.eq.s32.totalorder %s160, 0
      %p584 = por %p582, %p583
      %p585 = scmp.ne.s32.totalorder %s573, %s574
      %p586 = scmp.eq.s32.totalorder %s161, 2
      %p587 = por %p585, %p586
      %p589 = scmp.ne.s32.totalorder %s574, %s588
      %p590 = scmp.eq.s32.totalorder %s161, 0
      %p591 = por %p589, %p590
      %s593 = sadd.s32 %s592, 1
      %p596 = scmp.eq.s32.totalorder %s155, 2
      %p597 = scmp.ne.s32.totalorder %s592, %s594
      %p598 = scmp.eq.s32.totalorder %s155, 0
      %p599 = por %p597, %p598
      %p600 = scmp.ne.s32.totalorder %s592, %s594
      %p601 = scmp.eq.s32.totalorder %s160, 2
      %p602 = por %p600, %p601
      %p603 = scmp.ne.s32.totalorder %s594, %s595
      %p604 = scmp.eq.s32.totalorder %s160, 0
      %p605 = por %p603, %p604
      %p606 = scmp.ne.s32.totalorder %s594, %s595
      %p607 = scmp.eq.s32.totalorder %s161, 2
      %p608 = por %p606, %p607
      %p610 = scmp.ne.s32.totalorder %s595, %s609
      %p611 = scmp.eq.s32.totalorder %s161, 0
      %p612 = por %p610, %p611
      %s614 = sadd.s32 %s613, 1
      %p617 = scmp.eq.s32.totalorder %s155, 2
      %p618 = scmp.ne.s32.totalorder %s613, %s615
      %p619 = scmp.eq.s32.totalorder %s155, 0
      %p620 = por %p618, %p619
      %p621 = scmp.ne.s32.totalorder %s613, %s615
      %p622 = scmp.eq.s32.totalorder %s160, 2
      %p623 = por %p621, %p622
      %p624 = scmp.ne.s32.totalorder %s615, %s616
      %p625 = scmp.eq.s32.totalorder %s160, 0
      %p626 = por %p624, %p625
      %p627 = scmp.ne.s32.totalorder %s615, %s616
      %p628 = scmp.eq.s32.totalorder %s161, 2
      %p629 = por %p627, %p628
      %p631 = scmp.ne.s32.totalorder %s616, %s630
      %p632 = scmp.eq.s32.totalorder %s161, 0
      %p633 = por %p631, %p632
      %s635 = sadd.s32 %s634, 1
      %p638 = scmp.eq.s32.totalorder %s155, 2
      %p639 = scmp.ne.s32.totalorder %s634, %s636
      %p640 = scmp.eq.s32.totalorder %s155, 0
      %p641 = por %p639, %p640
      %p642 = scmp.ne.s32.totalorder %s634, %s636
      %p643 = scmp.eq.s32.totalorder %s160, 2
      %p644 = por %p642, %p643
      %p645 = scmp.ne.s32.totalorder %s636, %s637
      %p646 = scmp.eq.s32.totalorder %s160, 0
      %p647 = por %p645, %p646
      %p648 = scmp.ne.s32.totalorder %s636, %s637
      %p649 = scmp.eq.s32.totalorder %s161, 2
      %p650 = por %p648, %p649
      %p652 = scmp.ne.s32.totalorder %s637, %s651
      %p653 = scmp.eq.s32.totalorder %s161, 0
      %p654 = por %p652, %p653
      %s656 = sadd.s32 %s655, 1
      %p659 = scmp.eq.s32.totalorder %s155, 2
      %p660 = scmp.ne.s32.totalorder %s655, %s657
      %p661 = scmp.eq.s32.totalorder %s155, 0
      %p662 = por %p660, %p661
      %p663 = scmp.ne.s32.totalorder %s655, %s657
      %p664 = scmp.eq.s32.totalorder %s160, 2
      %p665 = por %p663, %p664
      %p666 = scmp.ne.s32.totalorder %s657, %s658
      %p667 = scmp.eq.s32.totalorder %s160, 0
      %p668 = por %p666, %p667
      %p669 = scmp.ne.s32.totalorder %s657, %s658
      %p670 = scmp.eq.s32.totalorder %s161, 2
      %p671 = por %p669, %p670
      %p673 = scmp.ne.s32.totalorder %s658, %s672
      %p674 = scmp.eq.s32.totalorder %s161, 0
      %p675 = por %p673, %p674
      %s677 = sadd.s32 %s676, 1
      %p680 = scmp.eq.s32.totalorder %s155, 2
      %p681 = scmp.ne.s32.totalorder %s676, %s678
      %p682 = scmp.eq.s32.totalorder %s155, 0
      %p683 = por %p681, %p682
      %p684 = scmp.ne.s32.totalorder %s676, %s678
      %p685 = scmp.eq.s32.totalorder %s160, 2
      %p686 = por %p684, %p685
      %p687 = scmp.ne.s32.totalorder %s678, %s679
      %p688 = scmp.eq.s32.totalorder %s160, 0
      %p689 = por %p687, %p688
      %p690 = scmp.ne.s32.totalorder %s678, %s679
      %p691 = scmp.eq.s32.totalorder %s161, 2
      %p692 = por %p690, %p691
      %p694 = scmp.ne.s32.totalorder %s679, %s693
      %p695 = scmp.eq.s32.totalorder %s161, 0
      %p696 = por %p694, %p695
      %s698 = sadd.s32 %s697, 1
      %p701 = scmp.eq.s32.totalorder %s155, 2
      %p702 = scmp.ne.s32.totalorder %s697, %s699
      %p703 = scmp.eq.s32.totalorder %s155, 0
      %p704 = por %p702, %p703
      %p705 = scmp.ne.s32.totalorder %s697, %s699
      %p706 = scmp.eq.s32.totalorder %s160, 2
      %p707 = por %p705, %p706
      %p708 = scmp.ne.s32.totalorder %s699, %s700
      %p709 = scmp.eq.s32.totalorder %s160, 0
      %p710 = por %p708, %p709
      %p711 = scmp.ne.s32.totalorder %s699, %s700
      %p712 = scmp.eq.s32.totalorder %s161, 2
      %p713 = por %p711, %p712
      %p715 = scmp.ne.s32.totalorder %s700, %s714
      %p716 = scmp.eq.s32.totalorder %s161, 0
      %p717 = por %p715, %p716
      %s719 = sadd.s32 %s718, 1
      %p722 = scmp.eq.s32.totalorder %s155, 2
      %p723 = scmp.ne.s32.totalorder %s718, %s720
      %p724 = scmp.eq.s32.totalorder %s155, 0
      %p725 = por %p723, %p724
      %p726 = scmp.ne.s32.totalorder %s718, %s720
      %p727 = scmp.eq.s32.totalorder %s160, 2
      %p728 = por %p726, %p727
      %p729 = scmp.ne.s32.totalorder %s720, %s721
      %p730 = scmp.eq.s32.totalorder %s160, 0
      %p731 = por %p729, %p730
      %p732 = scmp.ne.s32.totalorder %s720, %s721
      %p733 = scmp.eq.s32.totalorder %s161, 2
      %p734 = por %p732, %p733
      %p736 = scmp.ne.s32.totalorder %s721, %s735
      %p737 = scmp.eq.s32.totalorder %s161, 0
      %p738 = por %p736, %p737
      %s740 = sadd.s32 %s739, 1
      %p743 = scmp.eq.s32.totalorder %s155, 2
      %p744 = scmp.ne.s32.totalorder %s739, %s741
      %p745 = scmp.eq.s32.totalorder %s155, 0
      %p746 = por %p744, %p745
      %p747 = scmp.ne.s32.totalorder %s739, %s741
      %p748 = scmp.eq.s32.totalorder %s160, 2
      %p749 = por %p747, %p748
      %p750 = scmp.ne.s32.totalorder %s741, %s742
      %p751 = scmp.eq.s32.totalorder %s160, 0
      %p752 = por %p750, %p751
      %p753 = scmp.ne.s32.totalorder %s741, %s742
      %p754 = scmp.eq.s32.totalorder %s161, 2
      %p755 = por %p753, %p754
      %p757 = scmp.ne.s32.totalorder %s742, %s756
      %p758 = scmp.eq.s32.totalorder %s161, 0
      %p759 = por %p757, %p758
      %s761 = sadd.s32 %s760, 1
      %p764 = scmp.eq.s32.totalorder %s155, 2
      %p765 = scmp.ne.s32.totalorder %s760, %s762
      %p766 = scmp.eq.s32.totalorder %s155, 0
      %p767 = por %p765, %p766
      %p768 = scmp.ne.s32.totalorder %s760, %s762
      %p769 = scmp.eq.s32.totalorder %s160, 2
      %p770 = por %p768, %p769
      %p771 = scmp.ne.s32.totalorder %s762, %s763
      %p772 = scmp.eq.s32.totalorder %s160, 0
      %p773 = por %p771, %p772
      %p774 = scmp.ne.s32.totalorder %s762, %s763
      %p775 = scmp.eq.s32.totalorder %s161, 2
      %p776 = por %p774, %p775
      %p778 = scmp.ne.s32.totalorder %s763, %s777
      %p779 = scmp.eq.s32.totalorder %s161, 0
      %p780 = por %p778, %p779
      %s782 = sadd.s32 %s781, 1
      %p785 = scmp.eq.s32.totalorder %s155, 2
      %p786 = scmp.ne.s32.totalorder %s781, %s783
      %p787 = scmp.eq.s32.totalorder %s155, 0
      %p788 = por %p786, %p787
      %p789 = scmp.ne.s32.totalorder %s781, %s783
      %p790 = scmp.eq.s32.totalorder %s160, 2
      %p791 = por %p789, %p790
      %p792 = scmp.ne.s32.totalorder %s783, %s784
      %p793 = scmp.eq.s32.totalorder %s160, 0
      %p794 = por %p792, %p793
      %p795 = scmp.ne.s32.totalorder %s783, %s784
      %p796 = scmp.eq.s32.totalorder %s161, 2
      %p797 = por %p795, %p796
      %p799 = scmp.ne.s32.totalorder %s784, %s798
      %p800 = scmp.eq.s32.totalorder %s161, 0
      %p801 = por %p799, %p800
      %s803 = sadd.s32 %s802, 1
      %p806 = scmp.eq.s32.totalorder %s155, 2
      %p807 = scmp.ne.s32.totalorder %s802, %s804
      %p808 = scmp.eq.s32.totalorder %s155, 0
      %p809 = por %p807, %p808
      %p810 = scmp.ne.s32.totalorder %s802, %s804
      %p811 = scmp.eq.s32.totalorder %s160, 2
      %p812 = por %p810, %p811
      %p813 = scmp.ne.s32.totalorder %s804, %s805
      %p814 = scmp.eq.s32.totalorder %s160, 0
      %p815 = por %p813, %p814
      %p816 = scmp.ne.s32.totalorder %s804, %s805
      %p817 = scmp.eq.s32.totalorder %s161, 2
      %p818 = por %p816, %p817
      %p820 = scmp.ne.s32.totalorder %s805, %s819
      %p821 = scmp.eq.s32.totalorder %s161, 0
      %p822 = por %p820, %p821
      %s824 = sadd.s32 %s823, 1
      %p827 = scmp.eq.s32.totalorder %s155, 2
      %p828 = scmp.ne.s32.totalorder %s823, %s825
      %p829 = scmp.eq.s32.totalorder %s155, 0
      %p830 = por %p828, %p829
      %p831 = scmp.ne.s32.totalorder %s823, %s825
      %p832 = scmp.eq.s32.totalorder %s160, 2
      %p833 = por %p831, %p832
      %p834 = scmp.ne.s32.totalorder %s825, %s826
      %p835 = scmp.eq.s32.totalorder %s160, 0
      %p836 = por %p834, %p835
      %p837 = scmp.ne.s32.totalorder %s825, %s826
      %p838 = scmp.eq.s32.totalorder %s161, 2
      %p839 = por %p837, %p838
      %p841 = scmp.ne.s32.totalorder %s826, %s840
      %p842 = scmp.eq.s32.totalorder %s161, 0
      %p843 = por %p841, %p842
      %s845 = sadd.s32 %s844, 1
      %p848 = scmp.eq.s32.totalorder %s155, 2
      %p849 = scmp.ne.s32.totalorder %s844, %s846
      %p850 = scmp.eq.s32.totalorder %s155, 0
      %p851 = por %p849, %p850
      %p852 = scmp.ne.s32.totalorder %s844, %s846
      %p853 = scmp.eq.s32.totalorder %s160, 2
      %p854 = por %p852, %p853
      %p855 = scmp.ne.s32.totalorder %s846, %s847
      %p856 = scmp.eq.s32.totalorder %s160, 0
      %p857 = por %p855, %p856
      %p858 = scmp.ne.s32.totalorder %s846, %s847
      %p859 = scmp.eq.s32.totalorder %s161, 2
      %p860 = por %p858, %p859
      %p862 = scmp.ne.s32.totalorder %s847, %s861
      %p863 = scmp.eq.s32.totalorder %s161, 0
      %p864 = por %p862, %p863
      %s866 = sadd.s32 %s865, 1
      %p869 = scmp.eq.s32.totalorder %s155, 2
      %p870 = scmp.ne.s32.totalorder %s865, %s867
      %p871 = scmp.eq.s32.totalorder %s155, 0
      %p872 = por %p870, %p871
      %p873 = scmp.ne.s32.totalorder %s865, %s867
      %p874 = scmp.eq.s32.totalorder %s160, 2
      %p875 = por %p873, %p874
      %p876 = scmp.ne.s32.totalorder %s867, %s868
      %p877 = scmp.eq.s32.totalorder %s160, 0
      %p878 = por %p876, %p877
      %p879 = scmp.ne.s32.totalorder %s867, %s868
      %p880 = scmp.eq.s32.totalorder %s161, 2
      %p881 = por %p879, %p880
      %p883 = scmp.ne.s32.totalorder %s868, %s882
      %p884 = scmp.eq.s32.totalorder %s161, 0
      %p885 = por %p883, %p884
      %s887 = sadd.s32 %s886, 1
      %p890 = scmp.eq.s32.totalorder %s155, 2
      %p891 = scmp.ne.s32.totalorder %s886, %s888
      %p892 = scmp.eq.s32.totalorder %s155, 0
      %p893 = por %p891, %p892
      %p894 = scmp.ne.s32.totalorder %s886, %s888
      %p895 = scmp.eq.s32.totalorder %s160, 2
      %p896 = por %p894, %p895
      %p897 = scmp.ne.s32.totalorder %s888, %s889
      %p898 = scmp.eq.s32.totalorder %s160, 0
      %p899 = por %p897, %p898
      %p900 = scmp.ne.s32.totalorder %s888, %s889
      %p901 = scmp.eq.s32.totalorder %s161, 2
      %p902 = por %p900, %p901
      %p904 = scmp.ne.s32.totalorder %s889, %s903
      %p905 = scmp.eq.s32.totalorder %s161, 0
      %p906 = por %p904, %p905
      %s908 = sadd.s32 %s907, 1
      %p911 = scmp.eq.s32.totalorder %s155, 2
      %p912 = scmp.ne.s32.totalorder %s907, %s909
      %p913 = scmp.eq.s32.totalorder %s155, 0
      %p914 = por %p912, %p913
      %p915 = scmp.ne.s32.totalorder %s907, %s909
      %p916 = scmp.eq.s32.totalorder %s160, 2
      %p917 = por %p915, %p916
      %p918 = scmp.ne.s32.totalorder %s909, %s910
      %p919 = scmp.eq.s32.totalorder %s160, 0
      %p920 = por %p918, %p919
      %p921 = scmp.ne.s32.totalorder %s909, %s910
      %p922 = scmp.eq.s32.totalorder %s161, 2
      %p923 = por %p921, %p922
      %p925 = scmp.ne.s32.totalorder %s910, %s924
      %p926 = scmp.eq.s32.totalorder %s161, 0
      %p927 = por %p925, %p926
      %s929 = sadd.s32 %s928, 1
      %p932 = scmp.eq.s32.totalorder %s155, 2
      %p933 = scmp.ne.s32.totalorder %s928, %s930
      %p934 = scmp.eq.s32.totalorder %s155, 0
      %p935 = por %p933, %p934
      %p936 = scmp.ne.s32.totalorder %s928, %s930
      %p937 = scmp.eq.s32.totalorder %s160, 2
      %p938 = por %p936, %p937
      %p939 = scmp.ne.s32.totalorder %s930, %s931
      %p940 = scmp.eq.s32.totalorder %s160, 0
      %p941 = por %p939, %p940
      %p942 = scmp.ne.s32.totalorder %s930, %s931
      %p943 = scmp.eq.s32.totalorder %s161, 2
      %p944 = por %p942, %p943
      %p946 = scmp.ne.s32.totalorder %s931, %s945
      %p947 = scmp.eq.s32.totalorder %s161, 0
      %p948 = por %p946, %p947
      %s950 = sadd.s32 %s949, 1
      %p953 = scmp.eq.s32.totalorder %s155, 2
      %p954 = scmp.ne.s32.totalorder %s949, %s951
      %p955 = scmp.eq.s32.totalorder %s155, 0
      %p956 = por %p954, %p955
      %p957 = scmp.ne.s32.totalorder %s949, %s951
      %p958 = scmp.eq.s32.totalorder %s160, 2
      %p959 = por %p957, %p958
      %p960 = scmp.ne.s32.totalorder %s951, %s952
      %p961 = scmp.eq.s32.totalorder %s160, 0
      %p962 = por %p960, %p961
      %p963 = scmp.ne.s32.totalorder %s951, %s952
      %p964 = scmp.eq.s32.totalorder %s161, 2
      %p965 = por %p963, %p964
      %p967 = scmp.ne.s32.totalorder %s952, %s966
      %p968 = scmp.eq.s32.totalorder %s161, 0
      %p969 = por %p967, %p968
      %s971 = sadd.s32 %s970, 1
      %p974 = scmp.eq.s32.totalorder %s155, 2
      %p975 = scmp.ne.s32.totalorder %s970, %s972
      %p976 = scmp.eq.s32.totalorder %s155, 0
      %p977 = por %p975, %p976
      %p978 = scmp.ne.s32.totalorder %s970, %s972
      %p979 = scmp.eq.s32.totalorder %s160, 2
      %p980 = por %p978, %p979
      %p981 = scmp.ne.s32.totalorder %s972, %s973
      %p982 = scmp.eq.s32.totalorder %s160, 0
      %p983 = por %p981, %p982
      %p984 = scmp.ne.s32.totalorder %s972, %s973
      %p985 = scmp.eq.s32.totalorder %s161, 2
      %p986 = por %p984, %p985
      %p988 = scmp.ne.s32.totalorder %s973, %s987
      %p989 = scmp.eq.s32.totalorder %s161, 0
      %p990 = por %p988, %p989
      %s992 = sadd.s32 %s991, 1
      %p995 = scmp.eq.s32.totalorder %s155, 2
      %p996 = scmp.ne.s32.totalorder %s991, %s993
      %p997 = scmp.eq.s32.totalorder %s155, 0
      %p998 = por %p996, %p997
      %p999 = scmp.ne.s32.totalorder %s991, %s993
      %p1000 = scmp.eq.s32.totalorder %s160, 2
      %p1001 = por %p999, %p1000
      %p1002 = scmp.ne.s32.totalorder %s993, %s994
      %p1003 = scmp.eq.s32.totalorder %s160, 0
      %p1004 = por %p1002, %p1003
      %p1005 = scmp.ne.s32.totalorder %s993, %s994
      %p1006 = scmp.eq.s32.totalorder %s161, 2
      %p1007 = por %p1005, %p1006
      %p1009 = scmp.ne.s32.totalorder %s994, %s1008
      %p1010 = scmp.eq.s32.totalorder %s161, 0
      %p1011 = por %p1009, %p1010
      %s1013 = sadd.s32 %s1012, 1
      %p1016 = scmp.eq.s32.totalorder %s155, 2
      %p1017 = scmp.ne.s32.totalorder %s1012, %s1014
      %p1018 = scmp.eq.s32.totalorder %s155, 0
      %p1019 = por %p1017, %p1018
      %p1020 = scmp.ne.s32.totalorder %s1012, %s1014
      %p1021 = scmp.eq.s32.totalorder %s160, 2
      %p1022 = por %p1020, %p1021
      %p1023 = scmp.ne.s32.totalorder %s1014, %s1015
      %p1024 = scmp.eq.s32.totalorder %s160, 0
      %p1025 = por %p1023, %p1024
      %p1026 = scmp.ne.s32.totalorder %s1014, %s1015
      %p1027 = scmp.eq.s32.totalorder %s161, 2
      %p1028 = por %p1026, %p1027
      %p1030 = scmp.ne.s32.totalorder %s1015, %s1029
      %p1031 = scmp.eq.s32.totalorder %s161, 0
      %p1032 = por %p1030, %p1031
      %s1034 = sadd.s32 %s1033, 1
      %p1037 = scmp.eq.s32.totalorder %s155, 2
      %p1038 = scmp.ne.s32.totalorder %s1033, %s1035
      %p1039 = scmp.eq.s32.totalorder %s155, 0
      %p1040 = por %p1038, %p1039
      %p1041 = scmp.ne.s32.totalorder %s1033, %s1035
      %p1042 = scmp.eq.s32.totalorder %s160, 2
      %p1043 = por %p1041, %p1042
      %p1044 = scmp.ne.s32.totalorder %s1035, %s1036
      %p1045 = scmp.eq.s32.totalorder %s160, 0
      %p1046 = por %p1044, %p1045
      %p1047 = scmp.ne.s32.totalorder %s1035, %s1036
      %p1048 = scmp.eq.s32.totalorder %s161, 2
      %p1049 = por %p1047, %p1048
      %p1051 = scmp.ne.s32.totalorder %s1036, %s1050
      %p1052 = scmp.eq.s32.totalorder %s161, 0
      %p1053 = por %p1051, %p1052
      %s1055 = sadd.s32 %s1054, 1
      %p1058 = scmp.eq.s32.totalorder %s155, 2
      %p1059 = scmp.ne.s32.totalorder %s1054, %s1056
      %p1060 = scmp.eq.s32.totalorder %s155, 0
      %p1061 = por %p1059, %p1060
      %p1062 = scmp.ne.s32.totalorder %s1054, %s1056
      %p1063 = scmp.eq.s32.totalorder %s160, 2
      %p1064 = por %p1062, %p1063
      %p1065 = scmp.ne.s32.totalorder %s1056, %s1057
      %p1066 = scmp.eq.s32.totalorder %s160, 0
      %p1067 = por %p1065, %p1066
      %p1068 = scmp.ne.s32.totalorder %s1056, %s1057
      %p1069 = scmp.eq.s32.totalorder %s161, 2
      %p1070 = por %p1068, %p1069
      %p1072 = scmp.ne.s32.totalorder %s1057, %s1071
      %p1073 = scmp.eq.s32.totalorder %s161, 0
      %p1074 = por %p1072, %p1073
      %s1076 = sadd.s32 %s1075, 1
      %p1079 = scmp.eq.s32.totalorder %s155, 2
      %p1080 = scmp.ne.s32.totalorder %s1075, %s1077
      %p1081 = scmp.eq.s32.totalorder %s155, 0
      %p1082 = por %p1080, %p1081
      %p1083 = scmp.ne.s32.totalorder %s1075, %s1077
      %p1084 = scmp.eq.s32.totalorder %s160, 2
      %p1085 = por %p1083, %p1084
      %p1086 = scmp.ne.s32.totalorder %s1077, %s1078
      %p1087 = scmp.eq.s32.totalorder %s160, 0
      %p1088 = por %p1086, %p1087
      %p1089 = scmp.ne.s32.totalorder %s1077, %s1078
      %p1090 = scmp.eq.s32.totalorder %s161, 2
      %p1091 = por %p1089, %p1090
      %p1093 = scmp.ne.s32.totalorder %s1078, %s1092
      %p1094 = scmp.eq.s32.totalorder %s161, 0
      %p1095 = por %p1093, %p1094
      %s1097 = sadd.s32 %s1096, 1
      %p1100 = scmp.eq.s32.totalorder %s155, 2
      %p1101 = scmp.ne.s32.totalorder %s1096, %s1098
      %p1102 = scmp.eq.s32.totalorder %s155, 0
      %p1103 = por %p1101, %p1102
      %p1104 = scmp.ne.s32.totalorder %s1096, %s1098
      %p1105 = scmp.eq.s32.totalorder %s160, 2
      %p1106 = por %p1104, %p1105
      %p1107 = scmp.ne.s32.totalorder %s1098, %s1099
      %p1108 = scmp.eq.s32.totalorder %s160, 0
      %p1109 = por %p1107, %p1108
      %p1110 = scmp.ne.s32.totalorder %s1098, %s1099
      %p1111 = scmp.eq.s32.totalorder %s161, 2
      %p1112 = por %p1110, %p1111
      %p1114 = scmp.ne.s32.totalorder %s1099, %s1113
      %p1115 = scmp.eq.s32.totalorder %s161, 0
      %p1116 = por %p1114, %p1115
      %s1118 = sadd.s32 %s1117, 1
      %p1121 = scmp.eq.s32.totalorder %s155, 2
      %p1122 = scmp.ne.s32.totalorder %s1117, %s1119
      %p1123 = scmp.eq.s32.totalorder %s155, 0
      %p1124 = por %p1122, %p1123
      %p1125 = scmp.ne.s32.totalorder %s1117, %s1119
      %p1126 = scmp.eq.s32.totalorder %s160, 2
      %p1127 = por %p1125, %p1126
      %p1128 = scmp.ne.s32.totalorder %s1119, %s1120
      %p1129 = scmp.eq.s32.totalorder %s160, 0
      %p1130 = por %p1128, %p1129
      %p1131 = scmp.ne.s32.totalorder %s1119, %s1120
      %p1132 = scmp.eq.s32.totalorder %s161, 2
      %p1133 = por %p1131, %p1132
      %p1135 = scmp.ne.s32.totalorder %s1120, %s1134
      %p1136 = scmp.eq.s32.totalorder %s161, 0
      %p1137 = por %p1135, %p1136
      %s1139 = sadd.s32 %s1138, 1
      %p1142 = scmp.eq.s32.totalorder %s155, 2
      %p1143 = scmp.ne.s32.totalorder %s1138, %s1140
      %p1144 = scmp.eq.s32.totalorder %s155, 0
      %p1145 = por %p1143, %p1144
      %p1146 = scmp.ne.s32.totalorder %s1138, %s1140
      %p1147 = scmp.eq.s32.totalorder %s160, 2
      %p1148 = por %p1146, %p1147
      %p1149 = scmp.ne.s32.totalorder %s1140, %s1141
      %p1150 = scmp.eq.s32.totalorder %s160, 0
      %p1151 = por %p1149, %p1150
      %p1152 = scmp.ne.s32.totalorder %s1140, %s1141
      %p1153 = scmp.eq.s32.totalorder %s161, 2
      %p1154 = por %p1152, %p1153
      %p1156 = scmp.ne.s32.totalorder %s1141, %s1155
      %p1157 = scmp.eq.s32.totalorder %s161, 0
      %p1158 = por %p1156, %p1157
      %s1160 = sadd.s32 %s1159, 1
      %p1163 = scmp.eq.s32.totalorder %s155, 2
      %p1164 = scmp.ne.s32.totalorder %s1159, %s1161
      %p1165 = scmp.eq.s32.totalorder %s155, 0
      %p1166 = por %p1164, %p1165
      %p1167 = scmp.ne.s32.totalorder %s1159, %s1161
      %p1168 = scmp.eq.s32.totalorder %s160, 2
      %p1169 = por %p1167, %p1168
      %p1170 = scmp.ne.s32.totalorder %s1161, %s1162
      %p1171 = scmp.eq.s32.totalorder %s160, 0
      %p1172 = por %p1170, %p1171
      %p1173 = scmp.ne.s32.totalorder %s1161, %s1162
      %p1174 = scmp.eq.s32.totalorder %s161, 2
      %p1175 = por %p1173, %p1174
      %p1177 = scmp.ne.s32.totalorder %s1162, %s1176
      %p1178 = scmp.eq.s32.totalorder %s161, 0
      %p1179 = por %p1177, %p1178
      %s1181 = sadd.s32 %s1180, 1
      %p1184 = scmp.eq.s32.totalorder %s155, 2
      %p1185 = scmp.ne.s32.totalorder %s1180, %s1182
      %p1186 = scmp.eq.s32.totalorder %s155, 0
      %p1187 = por %p1185, %p1186
      %p1188 = scmp.ne.s32.totalorder %s1180, %s1182
      %p1189 = scmp.eq.s32.totalorder %s160, 2
      %p1190 = por %p1188, %p1189
      %p1191 = scmp.ne.s32.totalorder %s1182, %s1183
      %p1192 = scmp.eq.s32.totalorder %s160, 0
      %p1193 = por %p1191, %p1192
      %p1194 = scmp.ne.s32.totalorder %s1182, %s1183
      %p1195 = scmp.eq.s32.totalorder %s161, 2
      %p1196 = por %p1194, %p1195
      %p1198 = scmp.ne.s32.totalorder %s1183, %s1197
      %p1199 = scmp.eq.s32.totalorder %s161, 0
      %p1200 = por %p1198, %p1199
      %s1202 = sadd.s32 %s1201, 1
      %p1205 = scmp.eq.s32.totalorder %s155, 2
      %p1206 = scmp.ne.s32.totalorder %s1201, %s1203
      %p1207 = scmp.eq.s32.totalorder %s155, 0
      %p1208 = por %p1206, %p1207
      %p1209 = scmp.ne.s32.totalorder %s1201, %s1203
      %p1210 = scmp.eq.s32.totalorder %s160, 2
      %p1211 = por %p1209, %p1210
      %p1212 = scmp.ne.s32.totalorder %s1203, %s1204
      %p1213 = scmp.eq.s32.totalorder %s160, 0
      %p1214 = por %p1212, %p1213
      %p1215 = scmp.ne.s32.totalorder %s1203, %s1204
      %p1216 = scmp.eq.s32.totalorder %s161, 2
      %p1217 = por %p1215, %p1216
      %p1219 = scmp.ne.s32.totalorder %s1204, %s1218
      %p1220 = scmp.eq.s32.totalorder %s161, 0
      %p1221 = por %p1219, %p1220
      %s1222 = ssub.s32 %s155, %s162
      %p1223 = scmp.eq.s32.totalorder %s1222, 0
      %s1225 = sadd.s32 %s1224, 1
      %s1226 = scalar_select %p1223, %s1224, %s1225
      %p1229 = pneg %p1223
      %p1230 = scmp.eq.s32.totalorder %s155, 2
      %p1231 = por %p1229, %p1230
      %p1232 = scmp.ne.s32.totalorder %s1224, %s1227
      %p1233 = scmp.eq.s32.totalorder %s155, 0
      %p1234 = por %p1232, %p1233
      %p1235 = scmp.ne.s32.totalorder %s1224, %s1227
      %p1236 = scmp.eq.s32.totalorder %s160, 2
      %p1237 = por %p1235, %p1236
      %p1238 = scmp.ne.s32.totalorder %s1227, %s1228
      %p1239 = scmp.eq.s32.totalorder %s160, 0
      %p1240 = por %p1238, %p1239
      %p1241 = scmp.ne.s32.totalorder %s1227, %s1228
      %p1242 = scmp.eq.s32.totalorder %s161, 2
      %p1243 = por %p1241, %p1242
      %p1245 = scmp.ne.s32.totalorder %s1228, %s1244
      %p1246 = scmp.eq.s32.totalorder %s161, 0
      %p1247 = por %p1245, %p1246
      %s1248 = ssub.s32 %s155, %s162
      %p1249 = scmp.eq.s32.totalorder %s1248, 0
      %s1251 = sadd.s32 %s1250, 1
      %s1252 = scalar_select %p1249, %s1250, %s1251
      %p1255 = pneg %p1249
      %p1256 = scmp.eq.s32.totalorder %s155, 2
      %p1257 = por %p1255, %p1256
      %p1258 = scmp.ne.s32.totalorder %s1250, %s1253
      %p1259 = scmp.eq.s32.totalorder %s155, 0
      %p1260 = por %p1258, %p1259
      %p1261 = scmp.ne.s32.totalorder %s1250, %s1253
      %p1262 = scmp.eq.s32.totalorder %s160, 2
      %p1263 = por %p1261, %p1262
      %p1264 = scmp.ne.s32.totalorder %s1253, %s1254
      %p1265 = scmp.eq.s32.totalorder %s160, 0
      %p1266 = por %p1264, %p1265
      %p1267 = scmp.ne.s32.totalorder %s1253, %s1254
      %p1268 = scmp.eq.s32.totalorder %s161, 2
      %p1269 = por %p1267, %p1268
      %p1271 = scmp.ne.s32.totalorder %s1254, %s1270
      %p1272 = scmp.eq.s32.totalorder %s161, 0
      %p1273 = por %p1271, %p1272
      %s1274 = ssub.s32 %s155, %s162
      %p1275 = scmp.eq.s32.totalorder %s1274, 0
      %s1277 = sadd.s32 %s1276, 1
      %s1278 = scalar_select %p1275, %s1276, %s1277
      %p1281 = pneg %p1275
      %p1282 = scmp.eq.s32.totalorder %s155, 2
      %p1283 = por %p1281, %p1282
      %p1284 = scmp.ne.s32.totalorder %s1276, %s1279
      %p1285 = scmp.eq.s32.totalorder %s155, 0
      %p1286 = por %p1284, %p1285
      %p1287 = scmp.ne.s32.totalorder %s1276, %s1279
      %p1288 = scmp.eq.s32.totalorder %s160, 2
      %p1289 = por %p1287, %p1288
      %p1290 = scmp.ne.s32.totalorder %s1279, %s1280
      %p1291 = scmp.eq.s32.totalorder %s160, 0
      %p1292 = por %p1290, %p1291
      %p1293 = scmp.ne.s32.totalorder %s1279, %s1280
      %p1294 = scmp.eq.s32.totalorder %s161, 2
      %p1295 = por %p1293, %p1294
      %p1297 = scmp.ne.s32.totalorder %s1280, %s1296
      %p1298 = scmp.eq.s32.totalorder %s161, 0
      %p1299 = por %p1297, %p1298
      %s1300 = ssub.s32 %s155, %s162
      %p1301 = scmp.eq.s32.totalorder %s1300, 0
      %s1303 = sadd.s32 %s1302, 1
      %s1304 = scalar_select %p1301, %s1302, %s1303
      %p1307 = pneg %p1301
      %p1308 = scmp.eq.s32.totalorder %s155, 2
      %p1309 = por %p1307, %p1308
      %p1310 = scmp.ne.s32.totalorder %s1302, %s1305
      %p1311 = scmp.eq.s32.totalorder %s155, 0
      %p1312 = por %p1310, %p1311
      %p1313 = scmp.ne.s32.totalorder %s1302, %s1305
      %p1314 = scmp.eq.s32.totalorder %s160, 2
      %p1315 = por %p1313, %p1314
      %p1316 = scmp.ne.s32.totalorder %s1305, %s1306
      %p1317 = scmp.eq.s32.totalorder %s160, 0
      %p1318 = por %p1316, %p1317
      %p1319 = scmp.ne.s32.totalorder %s1305, %s1306
      %p1320 = scmp.eq.s32.totalorder %s161, 2
      %p1321 = por %p1319, %p1320
      %p1323 = scmp.ne.s32.totalorder %s1306, %s1322
      %p1324 = scmp.eq.s32.totalorder %s161, 0
      %p1325 = por %p1323, %p1324
      %s1326 = ssub.s32 %s155, %s162
      %p1327 = scmp.eq.s32.totalorder %s1326, 0
      %s1329 = sadd.s32 %s1328, 1
      %s1330 = scalar_select %p1327, %s1328, %s1329
      %p1333 = pneg %p1327
      %p1334 = scmp.eq.s32.totalorder %s155, 2
      %p1335 = por %p1333, %p1334
      %p1336 = scmp.ne.s32.totalorder %s1328, %s1331
      %p1337 = scmp.eq.s32.totalorder %s155, 0
      %p1338 = por %p1336, %p1337
      %p1339 = scmp.ne.s32.totalorder %s1328, %s1331
      %p1340 = scmp.eq.s32.totalorder %s160, 2
      %p1341 = por %p1339, %p1340
      %p1342 = scmp.ne.s32.totalorder %s1331, %s1332
      %p1343 = scmp.eq.s32.totalorder %s160, 0
      %p1344 = por %p1342, %p1343
      %p1345 = scmp.ne.s32.totalorder %s1331, %s1332
      %p1346 = scmp.eq.s32.totalorder %s161, 2
      %p1347 = por %p1345, %p1346
      %p1349 = scmp.ne.s32.totalorder %s1332, %s1348
      %p1350 = scmp.eq.s32.totalorder %s161, 0
      %p1351 = por %p1349, %p1350
      %s1352 = ssub.s32 %s155, %s162
      %p1353 = scmp.eq.s32.totalorder %s1352, 0
      %s1355 = sadd.s32 %s1354, 1
      %s1356 = scalar_select %p1353, %s1354, %s1355
      %p1359 = pneg %p1353
      %p1360 = scmp.eq.s32.totalorder %s155, 2
      %p1361 = por %p1359, %p1360
      %p1362 = scmp.ne.s32.totalorder %s1354, %s1357
      %p1363 = scmp.eq.s32.totalorder %s155, 0
      %p1364 = por %p1362, %p1363
      %p1365 = scmp.ne.s32.totalorder %s1354, %s1357
      %p1366 = scmp.eq.s32.totalorder %s160, 2
      %p1367 = por %p1365, %p1366
      %p1368 = scmp.ne.s32.totalorder %s1357, %s1358
      %p1369 = scmp.eq.s32.totalorder %s160, 0
      %p1370 = por %p1368, %p1369
      %p1371 = scmp.ne.s32.totalorder %s1357, %s1358
      %p1372 = scmp.eq.s32.totalorder %s161, 2
      %p1373 = por %p1371, %p1372
      %p1375 = scmp.ne.s32.totalorder %s1358, %s1374
      %p1376 = scmp.eq.s32.totalorder %s161, 0
      %p1377 = por %p1375, %p1376
      %s1378 = ssub.s32 %s155, %s162
      %p1379 = scmp.eq.s32.totalorder %s1378, 0
      %s1381 = sadd.s32 %s1380, 1
      %s1382 = scalar_select %p1379, %s1380, %s1381
      %p1385 = pneg %p1379
      %p1386 = scmp.eq.s32.totalorder %s155, 2
      %p1387 = por %p1385, %p1386
      %p1388 = scmp.ne.s32.totalorder %s1380, %s1383
      %p1389 = scmp.eq.s32.totalorder %s155, 0
      %p1390 = por %p1388, %p1389
      %p1391 = scmp.ne.s32.totalorder %s1380, %s1383
      %p1392 = scmp.eq.s32.totalorder %s160, 2
      %p1393 = por %p1391, %p1392
      %p1394 = scmp.ne.s32.totalorder %s1383, %s1384
      %p1395 = scmp.eq.s32.totalorder %s160, 0
      %p1396 = por %p1394, %p1395
      %p1397 = scmp.ne.s32.totalorder %s1383, %s1384
      %p1398 = scmp.eq.s32.totalorder %s161, 2
      %p1399 = por %p1397, %p1398
      %p1401 = scmp.ne.s32.totalorder %s1384, %s1400
      %p1402 = scmp.eq.s32.totalorder %s161, 0
      %p1403 = por %p1401, %p1402
      %s1405 = sadd.s32 %s1404, 1
      %p1408 = scmp.eq.s32.totalorder %s155, 2
      %p1409 = scmp.ne.s32.totalorder %s1404, %s1406
      %p1410 = scmp.eq.s32.totalorder %s155, 0
      %p1411 = por %p1409, %p1410
      %p1412 = scmp.ne.s32.totalorder %s1404, %s1406
      %p1413 = scmp.eq.s32.totalorder %s160, 2
      %p1414 = por %p1412, %p1413
      %p1415 = scmp.ne.s32.totalorder %s1406, %s1407
      %p1416 = scmp.eq.s32.totalorder %s160, 0
      %p1417 = por %p1415, %p1416
      %p1418 = scmp.ne.s32.totalorder %s1406, %s1407
      %p1419 = scmp.eq.s32.totalorder %s161, 2
      %p1420 = por %p1418, %p1419
      %p1422 = scmp.ne.s32.totalorder %s1407, %s1421
      %p1423 = scmp.eq.s32.totalorder %s161, 0
      %p1424 = por %p1422, %p1423
      %s1426 = sadd.s32 %s1425, 1
      %p1429 = scmp.eq.s32.totalorder %s155, 2
      %p1430 = scmp.ne.s32.totalorder %s1425, %s1427
      %p1431 = scmp.eq.s32.totalorder %s155, 0
      %p1432 = por %p1430, %p1431
      %p1433 = scmp.ne.s32.totalorder %s1425, %s1427
      %p1434 = scmp.eq.s32.totalorder %s160, 2
      %p1435 = por %p1433, %p1434
      %p1436 = scmp.ne.s32.totalorder %s1427, %s1428
      %p1437 = scmp.eq.s32.totalorder %s160, 0
      %p1438 = por %p1436, %p1437
      %p1439 = scmp.ne.s32.totalorder %s1427, %s1428
      %p1440 = scmp.eq.s32.totalorder %s161, 2
      %p1441 = por %p1439, %p1440
      %p1443 = scmp.ne.s32.totalorder %s1428, %s1442
      %p1444 = scmp.eq.s32.totalorder %s161, 0
      %p1445 = por %p1443, %p1444
      %s1447 = sadd.s32 %s1446, 1
      %p1450 = scmp.eq.s32.totalorder %s155, 2
      %p1451 = scmp.ne.s32.totalorder %s1446, %s1448
      %p1452 = scmp.eq.s32.totalorder %s155, 0
      %p1453 = por %p1451, %p1452
      %p1454 = scmp.ne.s32.totalorder %s1446, %s1448
      %p1455 = scmp.eq.s32.totalorder %s160, 2
      %p1456 = por %p1454, %p1455
      %p1457 = scmp.ne.s32.totalorder %s1448, %s1449
      %p1458 = scmp.eq.s32.totalorder %s160, 0
      %p1459 = por %p1457, %p1458
      %p1460 = scmp.ne.s32.totalorder %s1448, %s1449
      %p1461 = scmp.eq.s32.totalorder %s161, 2
      %p1462 = por %p1460, %p1461
      %p1464 = scmp.ne.s32.totalorder %s1449, %s1463
      %p1465 = scmp.eq.s32.totalorder %s161, 0
      %p1466 = por %p1464, %p1465
      %p1467 = scmp.le.s32.totalorder 1, %s155
      %p1468 = scmp.lt.s32.totalorder %s155, 4
      %p1469 = pnand %p1467, %p1468
      %p1470 = pneg %p1469
      // Predicated region
      $region9: #{vmr_gae_forward.3} parent=5 // pred_check
        _
      $region10: #{vmr_gae_forward.3} parent=5 // pred_check_branch
        %1472 = sbr.rel (%p1469) target = $region12
      $region11: #{vmr_gae_forward.3} parent=5 // pred_region
        %s1473 = ssub.s32 %s155, 1
        // Predicated region
        $region13: #{vmr_gae_forward.3} parent=11 // pred_check
          %p1474 = pneg %p332
        $region14: #{vmr_gae_forward.3} parent=11 // pred_check_branch
          %1476 = sbr.rel (%p1474) target = $region16
        $region15: #{vmr_gae_forward.3} parent=11 // pred_region
          %s1478 = ssub.s32 128, 128
          %1479 = vsyncadd [#allocation8], %s1478
          %s1481 = sshll.u32 [#allocation7], 4
          %s1482 = int_to_ptr.vmem [resolvable:$true] %s1481
          %1484 = dma.hbm_to_vmem [thread:$0]  %s13, 128, %s1482, [#allocation8]
        $region16: #{vmr_gae_forward.3} parent=11 // pred_fallthru
          _
        // Predicated region
        $region17: #{vmr_gae_forward.3} parent=11 // pred_check
          %p1485 = pneg %p353
        $region18: #{vmr_gae_forward.3} parent=11 // pred_check_branch
          %1487 = sbr.rel (%p1485) target = $region20
        $region19: #{vmr_gae_forward.3} parent=11 // pred_region
          %s1489 = ssub.s32 32, 32
          %1490 = vsyncadd [#allocation8], %s1489
          %s1492 = sshll.u32 [#allocation9], 4
          %s1493 = int_to_ptr.vmem [resolvable:$true] %s1492
          %1495 = dma.hbm_to_vmem [thread:$0]  %s15, 32, %s1493, [#allocation8]
        $region20: #{vmr_gae_forward.3} parent=11 // pred_fallthru
          _
        // Predicated region
        $region21: #{vmr_gae_forward.3} parent=11 // pred_check
          %p1496 = pneg %p374
        $region22: #{vmr_gae_forward.3} parent=11 // pred_check_branch
          %1498 = sbr.rel (%p1496) target = $region24
        $region23: #{vmr_gae_forward.3} parent=11 // pred_region
          _
        $region24: #{vmr_gae_forward.3} parent=11 // pred_fallthru
          _
        // Predicated region
        $region25: #{vmr_gae_forward.3} parent=11 // pred_check
          %p1499 = pneg %p395
        $region26: #{vmr_gae_forward.3} parent=11 // pred_check_branch
          %1501 = sbr.rel (%p1499) target = $region28
        $region27: #{vmr_gae_forward.3} parent=11 // pred_region
          %s1503 = ssub.s32 256, 256
          %1504 = vsyncadd [#allocation11], %s1503
          %s1505 = sshll.u32 [#allocation10], 4
          %s1506 = int_to_ptr.vmem [resolvable:$true] %s1505
          %1511 = dma.hbm_to_vmem [thread:$0]  %s19, 256, %s1506, [#allocation11], 64, 64, 4
        $region28: #{vmr_gae_forward.3} parent=11 // pred_fallthru
          _
        // Predicated region
        $region29: #{vmr_gae_forward.3} parent=11 // pred_check
          %p1512 = pneg %p416
        $region30: #{vmr_gae_forward.3} parent=11 // pred_check_branch
          %1514 = sbr.rel (%p1512) target = $region32
        $region31: #{vmr_gae_forward.3} parent=11 // pred_region
          %s1516 = ssub.s32 256, 256
          %1517 = vsyncadd [#allocation11], %s1516
          %s1518 = sshll.u32 [#allocation12], 4
          %s1519 = int_to_ptr.vmem [resolvable:$true] %s1518
          %1524 = dma.hbm_to_vmem [thread:$0]  %s21, 256, %s1519, [#allocation11], 64, 64, 4
        $region32: #{vmr_gae_forward.3} parent=11 // pred_fallthru
          _
        // Predicated region
        $region33: #{vmr_gae_forward.3} parent=11 // pred_check
          %p1525 = pneg %p437
        $region34: #{vmr_gae_forward.3} parent=11 // pred_check_branch
          %1527 = sbr.rel (%p1525) target = $region36
        $region35: #{vmr_gae_forward.3} parent=11 // pred_region
          %s1529 = ssub.s32 16, 16
          %1530 = vsyncadd [#allocation14], %s1529
          %s1532 = sshll.u32 [#allocation13], 4
          %s1533 = int_to_ptr.vmem [resolvable:$true] %s1532
          %1535 = dma.hbm_to_vmem [thread:$0]  %s23, 16, %s1533, [#allocation14]
        $region36: #{vmr_gae_forward.3} parent=11 // pred_fallthru
          _
        // Predicated region
        $region37: #{vmr_gae_forward.3} parent=11 // pred_check
          %p1536 = pneg %p458
        $region38: #{vmr_gae_forward.3} parent=11 // pred_check_branch
          %1538 = sbr.rel (%p1536) target = $region40
        $region39: #{vmr_gae_forward.3} parent=11 // pred_region
          %s1540 = ssub.s32 256, 256
          %1541 = vsyncadd [#allocation14], %s1540
          %s1542 = sshll.u32 [#allocation15], 4
          %s1543 = int_to_ptr.vmem [resolvable:$true] %s1542
          %1548 = dma.hbm_to_vmem [thread:$0]  %s25, 256, %s1543, [#allocation14], 64, 64, 4
        $region40: #{vmr_gae_forward.3} parent=11 // pred_fallthru
          _
        // Predicated region
        $region41: #{vmr_gae_forward.3} parent=11 // pred_check
          %p1549 = pneg %p479
        $region42: #{vmr_gae_forward.3} parent=11 // pred_check_branch
          %1551 = sbr.rel (%p1549) target = $region44
        $region43: #{vmr_gae_forward.3} parent=11 // pred_region
          %s1553 = ssub.s32 16, 16
          %1554 = vsyncadd [#allocation17], %s1553
          %s1556 = sshll.u32 [#allocation16], 4
          %s1557 = int_to_ptr.vmem [resolvable:$true] %s1556
          %1559 = dma.hbm_to_vmem [thread:$0]  %s27, 16, %s1557, [#allocation17]
        $region44: #{vmr_gae_forward.3} parent=11 // pred_fallthru
          _
        // Predicated region
        $region45: #{vmr_gae_forward.3} parent=11 // pred_check
          %p1560 = pneg %p500
        $region46: #{vmr_gae_forward.3} parent=11 // pred_check_branch
          %1562 = sbr.rel (%p1560) target = $region48
        $region47: #{vmr_gae_forward.3} parent=11 // pred_region
          %s1564 = ssub.s32 256, 256
          %1565 = vsyncadd [#allocation17], %s1564
          %s1566 = sshll.u32 [#allocation18], 4
          %s1567 = int_to_ptr.vmem [resolvable:$true] %s1566
          %1572 = dma.hbm_to_vmem [thread:$0]  %s29, 256, %s1567, [#allocation17], 64, 64, 4
        $region48: #{vmr_gae_forward.3} parent=11 // pred_fallthru
          _
        // Predicated region
        $region49: #{vmr_gae_forward.3} parent=11 // pred_check
          %p1573 = pneg %p521
        $region50: #{vmr_gae_forward.3} parent=11 // pred_check_branch
          %1575 = sbr.rel (%p1573) target = $region52
        $region51: #{vmr_gae_forward.3} parent=11 // pred_region
          %s1577 = ssub.s32 16, 16
          %1578 = vsyncadd [#allocation20], %s1577
          %s1580 = sshll.u32 [#allocation19], 4
          %s1581 = int_to_ptr.vmem [resolvable:$true] %s1580
          %1583 = dma.hbm_to_vmem [thread:$0]  %s31, 16, %s1581, [#allocation20]
        $region52: #{vmr_gae_forward.3} parent=11 // pred_fallthru
          _
        // Predicated region
        $region53: #{vmr_gae_forward.3} parent=11 // pred_check
          %p1584 = pneg %p542
        $region54: #{vmr_gae_forward.3} parent=11 // pred_check_branch
          %1586 = sbr.rel (%p1584) target = $region56
        $region55: #{vmr_gae_forward.3} parent=11 // pred_region
          %s1588 = ssub.s32 256, 256
          %1589 = vsyncadd [#allocation20], %s1588
          %s1590 = sshll.u32 [#allocation21], 4
          %s1591 = int_to_ptr.vmem [resolvable:$true] %s1590
          %1596 = dma.hbm_to_vmem [thread:$0]  %s33, 256, %s1591, [#allocation20], 64, 64, 4
        $region56: #{vmr_gae_forward.3} parent=11 // pred_fallthru
          _
        // Predicated region
        $region57: #{vmr_gae_forward.3} parent=11 // pred_check
          %p1597 = pneg %p563
        $region58: #{vmr_gae_forward.3} parent=11 // pred_check_branch
          %1599 = sbr.rel (%p1597) target = $region60
        $region59: #{vmr_gae_forward.3} parent=11 // pred_region
          %s1601 = ssub.s32 16, 16
          %1602 = vsyncadd [#allocation23], %s1601
          %s1604 = sshll.u32 [#allocation22], 4
          %s1605 = int_to_ptr.vmem [resolvable:$true] %s1604
          %1607 = dma.hbm_to_vmem [thread:$0]  %s35, 16, %s1605, [#allocation23]
        $region60: #{vmr_gae_forward.3} parent=11 // pred_fallthru
          _
        // Predicated region
        $region61: #{vmr_gae_forward.3} parent=11 // pred_check
          %p1608 = pneg %p584
        $region62: #{vmr_gae_forward.3} parent=11 // pred_check_branch
          %1610 = sbr.rel (%p1608) target = $region64
        $region63: #{vmr_gae_forward.3} parent=11 // pred_region
          %s1612 = ssub.s32 256, 256
          %1613 = vsyncadd [#allocation23], %s1612
          %s1614 = sshll.u32 [#allocation24], 4
          %s1615 = int_to_ptr.vmem [resolvable:$true] %s1614
          %1620 = dma.hbm_to_vmem [thread:$0]  %s37, 256, %s1615, [#allocation23], 64, 64, 4
        $region64: #{vmr_gae_forward.3} parent=11 // pred_fallthru
          _
        // Predicated region
        $region65: #{vmr_gae_forward.3} parent=11 // pred_check
          %p1621 = pneg %p605
        $region66: #{vmr_gae_forward.3} parent=11 // pred_check_branch
          %1623 = sbr.rel (%p1621) target = $region68
        $region67: #{vmr_gae_forward.3} parent=11 // pred_region
          %s1625 = ssub.s32 16, 16
          %1626 = vsyncadd [#allocation26], %s1625
          %s1628 = sshll.u32 [#allocation25], 4
          %s1629 = int_to_ptr.vmem [resolvable:$true] %s1628
          %1631 = dma.hbm_to_vmem [thread:$0]  %s39, 16, %s1629, [#allocation26]
        $region68: #{vmr_gae_forward.3} parent=11 // pred_fallthru
          _
        // Predicated region
        $region69: #{vmr_gae_forward.3} parent=11 // pred_check
          %p1632 = pneg %p626
        $region70: #{vmr_gae_forward.3} parent=11 // pred_check_branch
          %1634 = sbr.rel (%p1632) target = $region72
        $region71: #{vmr_gae_forward.3} parent=11 // pred_region
          %s1636 = ssub.s32 256, 256
          %1637 = vsyncadd [#allocation26], %s1636
          %s1638 = sshll.u32 [#allocation27], 4
          %s1639 = int_to_ptr.vmem [resolvable:$true] %s1638
          %1644 = dma.hbm_to_vmem [thread:$0]  %s41, 256, %s1639, [#allocation26], 64, 64, 4
        $region72: #{vmr_gae_forward.3} parent=11 // pred_fallthru
          _
        // Predicated region
        $region73: #{vmr_gae_forward.3} parent=11 // pred_check
          %p1645 = pneg %p647
        $region74: #{vmr_gae_forward.3} parent=11 // pred_check_branch
          %1647 = sbr.rel (%p1645) target = $region76
        $region75: #{vmr_gae_forward.3} parent=11 // pred_region
          %s1649 = ssub.s32 16, 16
          %1650 = vsyncadd [#allocation29], %s1649
          %s1652 = sshll.u32 [#allocation28], 4
          %s1653 = int_to_ptr.vmem [resolvable:$true] %s1652
          %1655 = dma.hbm_to_vmem [thread:$0]  %s43, 16, %s1653, [#allocation29]
        $region76: #{vmr_gae_forward.3} parent=11 // pred_fallthru
          _
        // Predicated region
        $region77: #{vmr_gae_forward.3} parent=11 // pred_check
          %p1656 = pneg %p668
        $region78: #{vmr_gae_forward.3} parent=11 // pred_check_branch
          %1658 = sbr.rel (%p1656) target = $region80
        $region79: #{vmr_gae_forward.3} parent=11 // pred_region
          %s1660 = ssub.s32 128, 128
          %1661 = vsyncadd [#allocation29], %s1660
          %s1662 = sshll.u32 [#allocation30], 4
          %s1663 = int_to_ptr.vmem [resolvable:$true] %s1662
          %1668 = dma.hbm_to_vmem [thread:$0]  %s45, 128, %s1663, [#allocation29], 64, 64, 4
        $region80: #{vmr_gae_forward.3} parent=11 // pred_fallthru
          _
        // Predicated region
        $region81: #{vmr_gae_forward.3} parent=11 // pred_check
          %p1669 = pneg %p689
        $region82: #{vmr_gae_forward.3} parent=11 // pred_check_branch
          %1671 = sbr.rel (%p1669) target = $region84
        $region83: #{vmr_gae_forward.3} parent=11 // pred_region
          %s1673 = ssub.s32 16, 16
          %1674 = vsyncadd [#allocation32], %s1673
          %s1676 = sshll.u32 [#allocation31], 4
          %s1677 = int_to_ptr.vmem [resolvable:$true] %s1676
          %1679 = dma.hbm_to_vmem [thread:$0]  %s47, 16, %s1677, [#allocation32]
        $region84: #{vmr_gae_forward.3} parent=11 // pred_fallthru
          _
        // Predicated region
        $region85: #{vmr_gae_forward.3} parent=11 // pred_check
          %p1680 = pneg %p710
        $region86: #{vmr_gae_forward.3} parent=11 // pred_check_branch
          %1682 = sbr.rel (%p1680) target = $region88
        $region87: #{vmr_gae_forward.3} parent=11 // pred_region
          %s1684 = ssub.s32 256, 256
          %1685 = vsyncadd [#allocation32], %s1684
          %s1686 = sshll.u32 [#allocation33], 4
          %s1687 = int_to_ptr.vmem [resolvable:$true] %s1686
          %1692 = dma.hbm_to_vmem [thread:$0]  %s49, 256, %s1687, [#allocation32], 128, 128, 8
        $region88: #{vmr_gae_forward.3} parent=11 // pred_fallthru
          _
        // Predicated region
        $region89: #{vmr_gae_forward.3} parent=11 // pred_check
          %p1693 = pneg %p731
        $region90: #{vmr_gae_forward.3} parent=11 // pred_check_branch
          %1695 = sbr.rel (%p1693) target = $region92
        $region91: #{vmr_gae_forward.3} parent=11 // pred_region
          %s1697 = ssub.s32 256, 256
          %1698 = vsyncadd [#allocation35], %s1697
          %s1699 = sshll.u32 [#allocation34], 4
          %s1700 = int_to_ptr.vmem [resolvable:$true] %s1699
          %1705 = dma.hbm_to_vmem [thread:$0]  %s51, 256, %s1700, [#allocation35], 128, 128, 8
        $region92: #{vmr_gae_forward.3} parent=11 // pred_fallthru
          _
        // Predicated region
        $region93: #{vmr_gae_forward.3} parent=11 // pred_check
          %p1706 = pneg %p752
        $region94: #{vmr_gae_forward.3} parent=11 // pred_check_branch
          %1708 = sbr.rel (%p1706) target = $region96
        $region95: #{vmr_gae_forward.3} parent=11 // pred_region
          %s1710 = ssub.s32 32, 32
          %1711 = vsyncadd [#allocation35], %s1710
          %s1713 = sshll.u32 [#allocation36], 4
          %s1714 = int_to_ptr.vmem [resolvable:$true] %s1713
          %1716 = dma.hbm_to_vmem [thread:$0]  %s53, 32, %s1714, [#allocation35]
        $region96: #{vmr_gae_forward.3} parent=11 // pred_fallthru
          _
        // Predicated region
        $region97: #{vmr_gae_forward.3} parent=11 // pred_check
          %p1717 = pneg %p773
        $region98: #{vmr_gae_forward.3} parent=11 // pred_check_branch
          %1719 = sbr.rel (%p1717) target = $region100
        $region99: #{vmr_gae_forward.3} parent=11 // pred_region
          _
        $region100: #{vmr_gae_forward.3} parent=11 // pred_fallthru
          _
        // Predicated region
        $region101: #{vmr_gae_forward.3} parent=11 // pred_check
          %p1720 = pneg %p794
        $region102: #{vmr_gae_forward.3} parent=11 // pred_check_branch
          %1722 = sbr.rel (%p1720) target = $region104
        $region103: #{vmr_gae_forward.3} parent=11 // pred_region
          %s1724 = ssub.s32 16, 16
          %1725 = vsyncadd [#allocation38], %s1724
          %s1727 = sshll.u32 [#allocation37], 4
          %s1728 = int_to_ptr.vmem [resolvable:$true] %s1727
          %1730 = dma.hbm_to_vmem [thread:$0]  %s57, 16, %s1728, [#allocation38]
        $region104: #{vmr_gae_forward.3} parent=11 // pred_fallthru
          _
        // Predicated region
        $region105: #{vmr_gae_forward.3} parent=11 // pred_check
          %p1731 = pneg %p815
        $region106: #{vmr_gae_forward.3} parent=11 // pred_check_branch
          %1733 = sbr.rel (%p1731) target = $region108
        $region107: #{vmr_gae_forward.3} parent=11 // pred_region
          _
        $region108: #{vmr_gae_forward.3} parent=11 // pred_fallthru
          _
        // Predicated region
        $region109: #{vmr_gae_forward.3} parent=11 // pred_check
          %p1734 = pneg %p836
        $region110: #{vmr_gae_forward.3} parent=11 // pred_check_branch
          %1736 = sbr.rel (%p1734) target = $region112
        $region111: #{vmr_gae_forward.3} parent=11 // pred_region
          %s1738 = ssub.s32 1024, 1024
          %1739 = vsyncadd [#allocation38], %s1738
          %s1740 = sshll.u32 [#allocation39], 4
          %s1741 = int_to_ptr.vmem [resolvable:$true] %s1740
          %1746 = dma.hbm_to_vmem [thread:$0]  %s61, 1024, %s1741, [#allocation38], 128, 128, 8
        $region112: #{vmr_gae_forward.3} parent=11 // pred_fallthru
          _
        // Predicated region
        $region113: #{vmr_gae_forward.3} parent=11 // pred_check
          %p1747 = pneg %p857
        $region114: #{vmr_gae_forward.3} parent=11 // pred_check_branch
          %1749 = sbr.rel (%p1747) target = $region116
        $region115: #{vmr_gae_forward.3} parent=11 // pred_region
          %s1751 = ssub.s32 32, 32
          %1752 = vsyncadd [#allocation41], %s1751
          %s1754 = sshll.u32 [#allocation40], 4
          %s1755 = int_to_ptr.vmem [resolvable:$true] %s1754
          %1757 = dma.hbm_to_vmem [thread:$0]  %s63, 32, %s1755, [#allocation41]
        $region116: #{vmr_gae_forward.3} parent=11 // pred_fallthru
          _
        // Predicated region
        $region117: #{vmr_gae_forward.3} parent=11 // pred_check
          %p1758 = pneg %p878
        $region118: #{vmr_gae_forward.3} parent=11 // pred_check_branch
          %1760 = sbr.rel (%p1758) target = $region120
        $region119: #{vmr_gae_forward.3} parent=11 // pred_region
          _
        $region120: #{vmr_gae_forward.3} parent=11 // pred_fallthru
          _
        // Predicated region
        $region121: #{vmr_gae_forward.3} parent=11 // pred_check
          %p1761 = pneg %p899
        $region122: #{vmr_gae_forward.3} parent=11 // pred_check_branch
          %1763 = sbr.rel (%p1761) target = $region124
        $region123: #{vmr_gae_forward.3} parent=11 // pred_region
          %s1765 = ssub.s32 32, 32
          %1766 = vsyncadd [#allocation41], %s1765
          %s1768 = sshll.u32 [#allocation42], 4
          %s1769 = int_to_ptr.vmem [resolvable:$true] %s1768
          %1771 = dma.hbm_to_vmem [thread:$0]  %s67, 32, %s1769, [#allocation41]
        $region124: #{vmr_gae_forward.3} parent=11 // pred_fallthru
          _
        // Predicated region
        $region125: #{vmr_gae_forward.3} parent=11 // pred_check
          %p1772 = pneg %p920
        $region126: #{vmr_gae_forward.3} parent=11 // pred_check_branch
          %1774 = sbr.rel (%p1772) target = $region128
        $region127: #{vmr_gae_forward.3} parent=11 // pred_region
          %s1776 = ssub.s32 32, 32
          %1777 = vsyncadd [#allocation44], %s1776
          %s1779 = sshll.u32 [#allocation43], 4
          %s1780 = int_to_ptr.vmem [resolvable:$true] %s1779
          %1782 = dma.hbm_to_vmem [thread:$0]  %s69, 32, %s1780, [#allocation44]
        $region128: #{vmr_gae_forward.3} parent=11 // pred_fallthru
          _
        // Predicated region
        $region129: #{vmr_gae_forward.3} parent=11 // pred_check
          %p1783 = pneg %p941
        $region130: #{vmr_gae_forward.3} parent=11 // pred_check_branch
          %1785 = sbr.rel (%p1783) target = $region132
        $region131: #{vmr_gae_forward.3} parent=11 // pred_region
          _
        $region132: #{vmr_gae_forward.3} parent=11 // pred_fallthru
          _
        // Predicated region
        $region133: #{vmr_gae_forward.3} parent=11 // pred_check
          %p1786 = pneg %p962
        $region134: #{vmr_gae_forward.3} parent=11 // pred_check_branch
          %1788 = sbr.rel (%p1786) target = $region136
        $region135: #{vmr_gae_forward.3} parent=11 // pred_region
          %s1790 = ssub.s32 256, 256
          %1791 = vsyncadd [#allocation44], %s1790
          %s1792 = sshll.u32 [#allocation45], 4
          %s1793 = int_to_ptr.vmem [resolvable:$true] %s1792
          %1798 = dma.hbm_to_vmem [thread:$0]  %s73, 256, %s1793, [#allocation44], 64, 64, 4
        $region136: #{vmr_gae_forward.3} parent=11 // pred_fallthru
          _
        // Predicated region
        $region137: #{vmr_gae_forward.3} parent=11 // pred_check
          %p1799 = pneg %p983
        $region138: #{vmr_gae_forward.3} parent=11 // pred_check_branch
          %1801 = sbr.rel (%p1799) target = $region140
        $region139: #{vmr_gae_forward.3} parent=11 // pred_region
          %s1803 = ssub.s32 256, 256
          %1804 = vsyncadd [#allocation47], %s1803
          %s1805 = sshll.u32 [#allocation46], 4
          %s1806 = int_to_ptr.vmem [resolvable:$true] %s1805
          %1811 = dma.hbm_to_vmem [thread:$0]  %s75, 256, %s1806, [#allocation47], 64, 64, 4
        $region140: #{vmr_gae_forward.3} parent=11 // pred_fallthru
          _
        // Predicated region
        $region141: #{vmr_gae_forward.3} parent=11 // pred_check
          %p1812 = pneg %p1004
        $region142: #{vmr_gae_forward.3} parent=11 // pred_check_branch
          %1814 = sbr.rel (%p1812) target = $region144
        $region143: #{vmr_gae_forward.3} parent=11 // pred_region
          %s1816 = ssub.s32 16, 16
          %1817 = vsyncadd [#allocation47], %s1816
          %s1819 = sshll.u32 [#allocation48], 4
          %s1820 = int_to_ptr.vmem [resolvable:$true] %s1819
          %1822 = dma.hbm_to_vmem [thread:$0]  %s77, 16, %s1820, [#allocation47]
        $region144: #{vmr_gae_forward.3} parent=11 // pred_fallthru
          _
        // Predicated region
        $region145: #{vmr_gae_forward.3} parent=11 // pred_check
          %p1823 = pneg %p1025
        $region146: #{vmr_gae_forward.3} parent=11 // pred_check_branch
          %1825 = sbr.rel (%p1823) target = $region148
        $region147: #{vmr_gae_forward.3} parent=11 // pred_region
          %s1827 = ssub.s32 256, 256
          %1828 = vsyncadd [#allocation50], %s1827
          %s1829 = sshll.u32 [#allocation49], 4
          %s1830 = int_to_ptr.vmem [resolvable:$true] %s1829
          %1835 = dma.hbm_to_vmem [thread:$0]  %s79, 256, %s1830, [#allocation50], 64, 64, 4
        $region148: #{vmr_gae_forward.3} parent=11 // pred_fallthru
          _
        // Predicated region
        $region149: #{vmr_gae_forward.3} parent=11 // pred_check
          %p1836 = pneg %p1046
        $region150: #{vmr_gae_forward.3} parent=11 // pred_check_branch
          %1838 = sbr.rel (%p1836) target = $region152
        $region151: #{vmr_gae_forward.3} parent=11 // pred_region
          %s1840 = ssub.s32 16, 16
          %1841 = vsyncadd [#allocation50], %s1840
          %s1843 = sshll.u32 [#allocation51], 4
          %s1844 = int_to_ptr.vmem [resolvable:$true] %s1843
          %1846 = dma.hbm_to_vmem [thread:$0]  %s81, 16, %s1844, [#allocation50]
        $region152: #{vmr_gae_forward.3} parent=11 // pred_fallthru
          _
        // Predicated region
        $region153: #{vmr_gae_forward.3} parent=11 // pred_check
          %p1847 = pneg %p1067
        $region154: #{vmr_gae_forward.3} parent=11 // pred_check_branch
          %1849 = sbr.rel (%p1847) target = $region156
        $region155: #{vmr_gae_forward.3} parent=11 // pred_region
          %s1851 = ssub.s32 256, 256
          %1852 = vsyncadd [#allocation53], %s1851
          %s1853 = sshll.u32 [#allocation52], 4
          %s1854 = int_to_ptr.vmem [resolvable:$true] %s1853
          %1859 = dma.hbm_to_vmem [thread:$0]  %s83, 256, %s1854, [#allocation53], 64, 64, 4
        $region156: #{vmr_gae_forward.3} parent=11 // pred_fallthru
          _
        // Predicated region
        $region157: #{vmr_gae_forward.3} parent=11 // pred_check
          %p1860 = pneg %p1088
        $region158: #{vmr_gae_forward.3} parent=11 // pred_check_branch
          %1862 = sbr.rel (%p1860) target = $region160
        $region159: #{vmr_gae_forward.3} parent=11 // pred_region
          %s1864 = ssub.s32 16, 16
          %1865 = vsyncadd [#allocation53], %s1864
          %s1867 = sshll.u32 [#allocation54], 4
          %s1868 = int_to_ptr.vmem [resolvable:$true] %s1867
          %1870 = dma.hbm_to_vmem [thread:$0]  %s85, 16, %s1868, [#allocation53]
        $region160: #{vmr_gae_forward.3} parent=11 // pred_fallthru
          _
        // Predicated region
        $region161: #{vmr_gae_forward.3} parent=11 // pred_check
          %p1871 = pneg %p1109
        $region162: #{vmr_gae_forward.3} parent=11 // pred_check_branch
          %1873 = sbr.rel (%p1871) target = $region164
        $region163: #{vmr_gae_forward.3} parent=11 // pred_region
          %s1875 = ssub.s32 256, 256
          %1876 = vsyncadd [#allocation56], %s1875
          %s1877 = sshll.u32 [#allocation55], 4
          %s1878 = int_to_ptr.vmem [resolvable:$true] %s1877
          %1883 = dma.hbm_to_vmem [thread:$0]  %s87, 256, %s1878, [#allocation56], 64, 64, 4
        $region164: #{vmr_gae_forward.3} parent=11 // pred_fallthru
          _
        // Predicated region
        $region165: #{vmr_gae_forward.3} parent=11 // pred_check
          %p1884 = pneg %p1130
        $region166: #{vmr_gae_forward.3} parent=11 // pred_check_branch
          %1886 = sbr.rel (%p1884) target = $region168
        $region167: #{vmr_gae_forward.3} parent=11 // pred_region
          %s1888 = ssub.s32 16, 16
          %1889 = vsyncadd [#allocation56], %s1888
          %s1891 = sshll.u32 [#allocation57], 4
          %s1892 = int_to_ptr.vmem [resolvable:$true] %s1891
          %1894 = dma.hbm_to_vmem [thread:$0]  %s89, 16, %s1892, [#allocation56]
        $region168: #{vmr_gae_forward.3} parent=11 // pred_fallthru
          _
        // Predicated region
        $region169: #{vmr_gae_forward.3} parent=11 // pred_check
          %p1895 = pneg %p1151
        $region170: #{vmr_gae_forward.3} parent=11 // pred_check_branch
          %1897 = sbr.rel (%p1895) target = $region172
        $region171: #{vmr_gae_forward.3} parent=11 // pred_region
          %s1899 = ssub.s32 256, 256
          %1900 = vsyncadd [#allocation59], %s1899
          %s1901 = sshll.u32 [#allocation58], 4
          %s1902 = int_to_ptr.vmem [resolvable:$true] %s1901
          %1907 = dma.hbm_to_vmem [thread:$0]  %s91, 256, %s1902, [#allocation59], 64, 64, 4
        $region172: #{vmr_gae_forward.3} parent=11 // pred_fallthru
          _
        // Predicated region
        $region173: #{vmr_gae_forward.3} parent=11 // pred_check
          %p1908 = pneg %p1172
        $region174: #{vmr_gae_forward.3} parent=11 // pred_check_branch
          %1910 = sbr.rel (%p1908) target = $region176
        $region175: #{vmr_gae_forward.3} parent=11 // pred_region
          %s1912 = ssub.s32 16, 16
          %1913 = vsyncadd [#allocation59], %s1912
          %s1915 = sshll.u32 [#allocation60], 4
          %s1916 = int_to_ptr.vmem [resolvable:$true] %s1915
          %1918 = dma.hbm_to_vmem [thread:$0]  %s93, 16, %s1916, [#allocation59]
        $region176: #{vmr_gae_forward.3} parent=11 // pred_fallthru
          _
        // Predicated region
        $region177: #{vmr_gae_forward.3} parent=11 // pred_check
          %p1919 = pneg %p1193
        $region178: #{vmr_gae_forward.3} parent=11 // pred_check_branch
          %1921 = sbr.rel (%p1919) target = $region180
        $region179: #{vmr_gae_forward.3} parent=11 // pred_region
          %s1923 = ssub.s32 256, 256
          %1924 = vsyncadd [#allocation62], %s1923
          %s1925 = sshll.u32 [#allocation61], 4
          %s1926 = int_to_ptr.vmem [resolvable:$true] %s1925
          %1931 = dma.hbm_to_vmem [thread:$0]  %s95, 256, %s1926, [#allocation62], 64, 64, 4
        $region180: #{vmr_gae_forward.3} parent=11 // pred_fallthru
          _
        // Predicated region
        $region181: #{vmr_gae_forward.3} parent=11 // pred_check
          %p1932 = pneg %p1214
        $region182: #{vmr_gae_forward.3} parent=11 // pred_check_branch
          %1934 = sbr.rel (%p1932) target = $region184
        $region183: #{vmr_gae_forward.3} parent=11 // pred_region
          %s1936 = ssub.s32 16, 16
          %1937 = vsyncadd [#allocation62], %s1936
          %s1939 = sshll.u32 [#allocation63], 4
          %s1940 = int_to_ptr.vmem [resolvable:$true] %s1939
          %1942 = dma.hbm_to_vmem [thread:$0]  %s97, 16, %s1940, [#allocation62]
        $region184: #{vmr_gae_forward.3} parent=11 // pred_fallthru
          _
      $region12: #{vmr_gae_forward.3} parent=5 // pred_fallthru
        _
      %p1943 = scmp.lt.s32.totalorder %s155, 3
      // Predicated region
      $region185: #{vmr_gae_forward.3} parent=5 // pred_check
        %p1944 = pneg %p1943
      $region186: #{vmr_gae_forward.3} parent=5 // pred_check_branch
        %1946 = sbr.rel (%p1944) target = $region188
      $region187: #{vmr_gae_forward.3} parent=5 // pred_region
        // Predicated region
        $region189: #{vmr_gae_forward.3} parent=187 // pred_check
          %p1947 = pneg %p175
        $region190: #{vmr_gae_forward.3} parent=187 // pred_check_branch
          %1949 = sbr.rel (%p1947) target = $region192
        $region191: #{vmr_gae_forward.3} parent=187 // pred_region
          %p1950 = scmp.lt.s32.totalorder %s155, 2
          %s1951 = scalar_select %p1950, %s155, 2
          %s1952 = smul.addr %s1951, 8
          %s1953 = scalar_lea.vmem %s1, %s1952
        $region192: #{vmr_gae_forward.3} parent=187 // pred_fallthru
          _
        // Predicated region
        $region193: #{vmr_gae_forward.3} parent=187 // pred_check
          %p1954 = pneg %p201
        $region194: #{vmr_gae_forward.3} parent=187 // pred_check_branch
          %1956 = sbr.rel (%p1954) target = $region196
        $region195: #{vmr_gae_forward.3} parent=187 // pred_region
          %p1957 = scmp.lt.s32.totalorder %s155, 2
          %s1958 = scalar_select %p1957, %s155, 2
          %s1959 = smul.addr %s1958, 4
          %s1960 = scalar_lea.vmem %s3, %s1959
        $region196: #{vmr_gae_forward.3} parent=187 // pred_fallthru
          _
        // Predicated region
        $region197: #{vmr_gae_forward.3} parent=187 // pred_check
          %p1961 = pneg %p227
        $region198: #{vmr_gae_forward.3} parent=187 // pred_check_branch
          %1963 = sbr.rel (%p1961) target = $region200
        $region199: #{vmr_gae_forward.3} parent=187 // pred_region
          %p1964 = scmp.lt.s32.totalorder %s155, 2
          %s1965 = scalar_select %p1964, %s155, 2
          %s1966 = smul.addr %s1965, 4
          %s1967 = scalar_lea.vmem %s5, %s1966
        $region200: #{vmr_gae_forward.3} parent=187 // pred_fallthru
          _
        // Predicated region
        $region201: #{vmr_gae_forward.3} parent=187 // pred_check
          %p1968 = pneg %p253
        $region202: #{vmr_gae_forward.3} parent=187 // pred_check_branch
          %1970 = sbr.rel (%p1968) target = $region204
        $region203: #{vmr_gae_forward.3} parent=187 // pred_region
          %p1971 = scmp.lt.s32.totalorder %s155, 2
          %s1972 = scalar_select %p1971, %s155, 2
          %s1973 = smul.addr %s1972, 8
          %s1974 = scalar_lea.vmem %s7, %s1973
        $region204: #{vmr_gae_forward.3} parent=187 // pred_fallthru
          _
        // Predicated region
        $region205: #{vmr_gae_forward.3} parent=187 // pred_check
          %p1975 = pneg %p279
        $region206: #{vmr_gae_forward.3} parent=187 // pred_check_branch
          %1977 = sbr.rel (%p1975) target = $region208
        $region207: #{vmr_gae_forward.3} parent=187 // pred_region
          %p1978 = scmp.lt.s32.totalorder %s155, 2
          %s1979 = scalar_select %p1978, %s155, 2
          %s1980 = smul.addr %s1979, 8
          %s1981 = scalar_lea.vmem %s9, %s1980
        $region208: #{vmr_gae_forward.3} parent=187 // pred_fallthru
          _
        // Predicated region
        $region209: #{vmr_gae_forward.3} parent=187 // pred_check
          %p1982 = pneg %p305
        $region210: #{vmr_gae_forward.3} parent=187 // pred_check_branch
          %1984 = sbr.rel (%p1982) target = $region212
        $region211: #{vmr_gae_forward.3} parent=187 // pred_region
          %s1985 = sand.u32 %s295, 1
          %s1986 = scalar_lea.sflag [#allocation5], %s1985
          %s1987 = sand.u32 %s295, 1
          %s1988 = smul.addr %s1987, 8
          %s1989 = scalar_lea.vmem [#allocation4], %s1988
          %s1991 = ssub.s32 128, 128
          %1992 = vsyncadd %s1986, %s1991
          %s1993 = smul.addr %s155, 128
          %s1994 = scalar_lea.hbm %s11, %s1993
          %s1996 = sshll.u32 %s1989, 4
          %s1997 = int_to_ptr.vmem [resolvable:$true] %s1996
          %1999 = dma.hbm_to_vmem [thread:$0]  %s1994, 128, %s1997, %s1986
        $region212: #{vmr_gae_forward.3} parent=187 // pred_fallthru
          _
      $region188: #{vmr_gae_forward.3} parent=5 // pred_fallthru
        _
      %p2000 = scmp.le.s32.totalorder 1, %s155
      %p2001 = scmp.lt.s32.totalorder %s155, 4
      %p2002 = pnand %p2000, %p2001
      %p2003 = pneg %p2002
      // Predicated region
      $region213: #{vmr_gae_forward.3} parent=5 // pred_check
        _
      $region214: #{vmr_gae_forward.3} parent=5 // pred_check_branch
        %2005 = sbr.rel (%p2002) target = $region216
      $region215: #{vmr_gae_forward.3} parent=5 // pred_region
        %s2006 = ssub.s32 %s155, 1
        %s2007 = sand.u32 %s298, 1
        %s2008 = scalar_lea.sflag [#allocation5], %s2007
        %s2009 = sand.u32 %s298, 1
        %s2010 = smul.addr %s2009, 8
        %s2011 = scalar_lea.vmem [#allocation4], %s2010
        // Predicated region
        $region217: #{vmr_gae_forward.3} parent=215 // pred_check
          %p2012 = pneg %p311
        $region218: #{vmr_gae_forward.3} parent=215 // pred_check_branch
          %2014 = sbr.rel (%p2012) target = $region220
        $region219: #{vmr_gae_forward.3} parent=215 // pred_region
          %2015 = dma.done %s2008, 128
        $region220: #{vmr_gae_forward.3} parent=215 // pred_fallthru
          _
        // Predicated region
        $region221: #{vmr_gae_forward.3} parent=215 // pred_check
          %p2016 = pneg %p332
        $region222: #{vmr_gae_forward.3} parent=215 // pred_check_branch
          %2018 = sbr.rel (%p2016) target = $region224
        $region223: #{vmr_gae_forward.3} parent=215 // pred_region
          %2019 = dma.done [#allocation8], 128
        $region224: #{vmr_gae_forward.3} parent=215 // pred_fallthru
          _
        // Predicated region
        $region225: #{vmr_gae_forward.3} parent=215 // pred_check
          %p2020 = pneg %p353
        $region226: #{vmr_gae_forward.3} parent=215 // pred_check_branch
          %2022 = sbr.rel (%p2020) target = $region228
        $region227: #{vmr_gae_forward.3} parent=215 // pred_region
          %2023 = dma.done [#allocation8], 32
        $region228: #{vmr_gae_forward.3} parent=215 // pred_fallthru
          _
        // Predicated region
        $region229: #{vmr_gae_forward.3} parent=215 // pred_check
          %p2024 = pneg %p395
        $region230: #{vmr_gae_forward.3} parent=215 // pred_check_branch
          %2026 = sbr.rel (%p2024) target = $region232
        $region231: #{vmr_gae_forward.3} parent=215 // pred_region
          %2027 = dma.done [#allocation11], 256
        $region232: #{vmr_gae_forward.3} parent=215 // pred_fallthru
          _
        // Predicated region
        $region233: #{vmr_gae_forward.3} parent=215 // pred_check
          %p2028 = pneg %p416
        $region234: #{vmr_gae_forward.3} parent=215 // pred_check_branch
          %2030 = sbr.rel (%p2028) target = $region236
        $region235: #{vmr_gae_forward.3} parent=215 // pred_region
          %2031 = dma.done [#allocation11], 256
        $region236: #{vmr_gae_forward.3} parent=215 // pred_fallthru
          _
        // Predicated region
        $region237: #{vmr_gae_forward.3} parent=215 // pred_check
          %p2032 = pneg %p437
        $region238: #{vmr_gae_forward.3} parent=215 // pred_check_branch
          %2034 = sbr.rel (%p2032) target = $region240
        $region239: #{vmr_gae_forward.3} parent=215 // pred_region
          %2035 = dma.done [#allocation14], 16
        $region240: #{vmr_gae_forward.3} parent=215 // pred_fallthru
          _
        // Predicated region
        $region241: #{vmr_gae_forward.3} parent=215 // pred_check
          %p2036 = pneg %p458
        $region242: #{vmr_gae_forward.3} parent=215 // pred_check_branch
          %2038 = sbr.rel (%p2036) target = $region244
        $region243: #{vmr_gae_forward.3} parent=215 // pred_region
          %2039 = dma.done [#allocation14], 256
        $region244: #{vmr_gae_forward.3} parent=215 // pred_fallthru
          _
        // Predicated region
        $region245: #{vmr_gae_forward.3} parent=215 // pred_check
          %p2040 = pneg %p479
        $region246: #{vmr_gae_forward.3} parent=215 // pred_check_branch
          %2042 = sbr.rel (%p2040) target = $region248
        $region247: #{vmr_gae_forward.3} parent=215 // pred_region
          %2043 = dma.done [#allocation17], 16
        $region248: #{vmr_gae_forward.3} parent=215 // pred_fallthru
          _
        // Predicated region
        $region249: #{vmr_gae_forward.3} parent=215 // pred_check
          %p2044 = pneg %p500
        $region250: #{vmr_gae_forward.3} parent=215 // pred_check_branch
          %2046 = sbr.rel (%p2044) target = $region252
        $region251: #{vmr_gae_forward.3} parent=215 // pred_region
          %2047 = dma.done [#allocation17], 256
        $region252: #{vmr_gae_forward.3} parent=215 // pred_fallthru
          _
        // Predicated region
        $region253: #{vmr_gae_forward.3} parent=215 // pred_check
          %p2048 = pneg %p521
        $region254: #{vmr_gae_forward.3} parent=215 // pred_check_branch
          %2050 = sbr.rel (%p2048) target = $region256
        $region255: #{vmr_gae_forward.3} parent=215 // pred_region
          %2051 = dma.done [#allocation20], 16
        $region256: #{vmr_gae_forward.3} parent=215 // pred_fallthru
          _
        // Predicated region
        $region257: #{vmr_gae_forward.3} parent=215 // pred_check
          %p2052 = pneg %p542
        $region258: #{vmr_gae_forward.3} parent=215 // pred_check_branch
          %2054 = sbr.rel (%p2052) target = $region260
        $region259: #{vmr_gae_forward.3} parent=215 // pred_region
          %2055 = dma.done [#allocation20], 256
        $region260: #{vmr_gae_forward.3} parent=215 // pred_fallthru
          _
        // Predicated region
        $region261: #{vmr_gae_forward.3} parent=215 // pred_check
          %p2056 = pneg %p563
        $region262: #{vmr_gae_forward.3} parent=215 // pred_check_branch
          %2058 = sbr.rel (%p2056) target = $region264
        $region263: #{vmr_gae_forward.3} parent=215 // pred_region
          %2059 = dma.done [#allocation23], 16
        $region264: #{vmr_gae_forward.3} parent=215 // pred_fallthru
          _
        // Predicated region
        $region265: #{vmr_gae_forward.3} parent=215 // pred_check
          %p2060 = pneg %p584
        $region266: #{vmr_gae_forward.3} parent=215 // pred_check_branch
          %2062 = sbr.rel (%p2060) target = $region268
        $region267: #{vmr_gae_forward.3} parent=215 // pred_region
          %2063 = dma.done [#allocation23], 256
        $region268: #{vmr_gae_forward.3} parent=215 // pred_fallthru
          _
        // Predicated region
        $region269: #{vmr_gae_forward.3} parent=215 // pred_check
          %p2064 = pneg %p605
        $region270: #{vmr_gae_forward.3} parent=215 // pred_check_branch
          %2066 = sbr.rel (%p2064) target = $region272
        $region271: #{vmr_gae_forward.3} parent=215 // pred_region
          %2067 = dma.done [#allocation26], 16
        $region272: #{vmr_gae_forward.3} parent=215 // pred_fallthru
          _
        // Predicated region
        $region273: #{vmr_gae_forward.3} parent=215 // pred_check
          %p2068 = pneg %p626
        $region274: #{vmr_gae_forward.3} parent=215 // pred_check_branch
          %2070 = sbr.rel (%p2068) target = $region276
        $region275: #{vmr_gae_forward.3} parent=215 // pred_region
          %2071 = dma.done [#allocation26], 256
        $region276: #{vmr_gae_forward.3} parent=215 // pred_fallthru
          _
        // Predicated region
        $region277: #{vmr_gae_forward.3} parent=215 // pred_check
          %p2072 = pneg %p647
        $region278: #{vmr_gae_forward.3} parent=215 // pred_check_branch
          %2074 = sbr.rel (%p2072) target = $region280
        $region279: #{vmr_gae_forward.3} parent=215 // pred_region
          %2075 = dma.done [#allocation29], 16
        $region280: #{vmr_gae_forward.3} parent=215 // pred_fallthru
          _
        // Predicated region
        $region281: #{vmr_gae_forward.3} parent=215 // pred_check
          %p2076 = pneg %p668
        $region282: #{vmr_gae_forward.3} parent=215 // pred_check_branch
          %2078 = sbr.rel (%p2076) target = $region284
        $region283: #{vmr_gae_forward.3} parent=215 // pred_region
          %2079 = dma.done [#allocation29], 128
        $region284: #{vmr_gae_forward.3} parent=215 // pred_fallthru
          _
        // Predicated region
        $region285: #{vmr_gae_forward.3} parent=215 // pred_check
          %p2080 = pneg %p689
        $region286: #{vmr_gae_forward.3} parent=215 // pred_check_branch
          %2082 = sbr.rel (%p2080) target = $region288
        $region287: #{vmr_gae_forward.3} parent=215 // pred_region
          %2083 = dma.done [#allocation32], 16
        $region288: #{vmr_gae_forward.3} parent=215 // pred_fallthru
          _
        // Predicated region
        $region289: #{vmr_gae_forward.3} parent=215 // pred_check
          %p2084 = pneg %p710
        $region290: #{vmr_gae_forward.3} parent=215 // pred_check_branch
          %2086 = sbr.rel (%p2084) target = $region292
        $region291: #{vmr_gae_forward.3} parent=215 // pred_region
          %2087 = dma.done [#allocation32], 256
        $region292: #{vmr_gae_forward.3} parent=215 // pred_fallthru
          _
        // Predicated region
        $region293: #{vmr_gae_forward.3} parent=215 // pred_check
          %p2088 = pneg %p731
        $region294: #{vmr_gae_forward.3} parent=215 // pred_check_branch
          %2090 = sbr.rel (%p2088) target = $region296
        $region295: #{vmr_gae_forward.3} parent=215 // pred_region
          %2091 = dma.done [#allocation35], 256
        $region296: #{vmr_gae_forward.3} parent=215 // pred_fallthru
          _
        // Predicated region
        $region297: #{vmr_gae_forward.3} parent=215 // pred_check
          %p2092 = pneg %p752
        $region298: #{vmr_gae_forward.3} parent=215 // pred_check_branch
          %2094 = sbr.rel (%p2092) target = $region300
        $region299: #{vmr_gae_forward.3} parent=215 // pred_region
          %2095 = dma.done [#allocation35], 32
        $region300: #{vmr_gae_forward.3} parent=215 // pred_fallthru
          _
        // Predicated region
        $region301: #{vmr_gae_forward.3} parent=215 // pred_check
          %p2096 = pneg %p794
        $region302: #{vmr_gae_forward.3} parent=215 // pred_check_branch
          %2098 = sbr.rel (%p2096) target = $region304
        $region303: #{vmr_gae_forward.3} parent=215 // pred_region
          %2099 = dma.done [#allocation38], 16
        $region304: #{vmr_gae_forward.3} parent=215 // pred_fallthru
          _
        // Predicated region
        $region305: #{vmr_gae_forward.3} parent=215 // pred_check
          %p2100 = pneg %p836
        $region306: #{vmr_gae_forward.3} parent=215 // pred_check_branch
          %2102 = sbr.rel (%p2100) target = $region308
        $region307: #{vmr_gae_forward.3} parent=215 // pred_region
          %2103 = dma.done [#allocation38], 1024
        $region308: #{vmr_gae_forward.3} parent=215 // pred_fallthru
          _
        // Predicated region
        $region309: #{vmr_gae_forward.3} parent=215 // pred_check
          %p2104 = pneg %p857
        $region310: #{vmr_gae_forward.3} parent=215 // pred_check_branch
          %2106 = sbr.rel (%p2104) target = $region312
        $region311: #{vmr_gae_forward.3} parent=215 // pred_region
          %2107 = dma.done [#allocation41], 32
        $region312: #{vmr_gae_forward.3} parent=215 // pred_fallthru
          _
        // Predicated region
        $region313: #{vmr_gae_forward.3} parent=215 // pred_check
          %p2108 = pneg %p899
        $region314: #{vmr_gae_forward.3} parent=215 // pred_check_branch
          %2110 = sbr.rel (%p2108) target = $region316
        $region315: #{vmr_gae_forward.3} parent=215 // pred_region
          %2111 = dma.done [#allocation41], 32
        $region316: #{vmr_gae_forward.3} parent=215 // pred_fallthru
          _
        // Predicated region
        $region317: #{vmr_gae_forward.3} parent=215 // pred_check
          %p2112 = pneg %p920
        $region318: #{vmr_gae_forward.3} parent=215 // pred_check_branch
          %2114 = sbr.rel (%p2112) target = $region320
        $region319: #{vmr_gae_forward.3} parent=215 // pred_region
          %2115 = dma.done [#allocation44], 32
        $region320: #{vmr_gae_forward.3} parent=215 // pred_fallthru
          _
        // Predicated region
        $region321: #{vmr_gae_forward.3} parent=215 // pred_check
          %p2116 = pneg %p962
        $region322: #{vmr_gae_forward.3} parent=215 // pred_check_branch
          %2118 = sbr.rel (%p2116) target = $region324
        $region323: #{vmr_gae_forward.3} parent=215 // pred_region
          %2119 = dma.done [#allocation44], 256
        $region324: #{vmr_gae_forward.3} parent=215 // pred_fallthru
          _
        // Predicated region
        $region325: #{vmr_gae_forward.3} parent=215 // pred_check
          %p2120 = pneg %p983
        $region326: #{vmr_gae_forward.3} parent=215 // pred_check_branch
          %2122 = sbr.rel (%p2120) target = $region328
        $region327: #{vmr_gae_forward.3} parent=215 // pred_region
          %2123 = dma.done [#allocation47], 256
        $region328: #{vmr_gae_forward.3} parent=215 // pred_fallthru
          _
        // Predicated region
        $region329: #{vmr_gae_forward.3} parent=215 // pred_check
          %p2124 = pneg %p1004
        $region330: #{vmr_gae_forward.3} parent=215 // pred_check_branch
          %2126 = sbr.rel (%p2124) target = $region332
        $region331: #{vmr_gae_forward.3} parent=215 // pred_region
          %2127 = dma.done [#allocation47], 16
        $region332: #{vmr_gae_forward.3} parent=215 // pred_fallthru
          _
        // Predicated region
        $region333: #{vmr_gae_forward.3} parent=215 // pred_check
          %p2128 = pneg %p1025
        $region334: #{vmr_gae_forward.3} parent=215 // pred_check_branch
          %2130 = sbr.rel (%p2128) target = $region336
        $region335: #{vmr_gae_forward.3} parent=215 // pred_region
          %2131 = dma.done [#allocation50], 256
        $region336: #{vmr_gae_forward.3} parent=215 // pred_fallthru
          _
        // Predicated region
        $region337: #{vmr_gae_forward.3} parent=215 // pred_check
          %p2132 = pneg %p1046
        $region338: #{vmr_gae_forward.3} parent=215 // pred_check_branch
          %2134 = sbr.rel (%p2132) target = $region340
        $region339: #{vmr_gae_forward.3} parent=215 // pred_region
          %2135 = dma.done [#allocation50], 16
        $region340: #{vmr_gae_forward.3} parent=215 // pred_fallthru
          _
        // Predicated region
        $region341: #{vmr_gae_forward.3} parent=215 // pred_check
          %p2136 = pneg %p1067
        $region342: #{vmr_gae_forward.3} parent=215 // pred_check_branch
          %2138 = sbr.rel (%p2136) target = $region344
        $region343: #{vmr_gae_forward.3} parent=215 // pred_region
          %2139 = dma.done [#allocation53], 256
        $region344: #{vmr_gae_forward.3} parent=215 // pred_fallthru
          _
        // Predicated region
        $region345: #{vmr_gae_forward.3} parent=215 // pred_check
          %p2140 = pneg %p1088
        $region346: #{vmr_gae_forward.3} parent=215 // pred_check_branch
          %2142 = sbr.rel (%p2140) target = $region348
        $region347: #{vmr_gae_forward.3} parent=215 // pred_region
          %2143 = dma.done [#allocation53], 16
        $region348: #{vmr_gae_forward.3} parent=215 // pred_fallthru
          _
        // Predicated region
        $region349: #{vmr_gae_forward.3} parent=215 // pred_check
          %p2144 = pneg %p1109
        $region350: #{vmr_gae_forward.3} parent=215 // pred_check_branch
          %2146 = sbr.rel (%p2144) target = $region352
        $region351: #{vmr_gae_forward.3} parent=215 // pred_region
          %2147 = dma.done [#allocation56], 256
        $region352: #{vmr_gae_forward.3} parent=215 // pred_fallthru
          _
        // Predicated region
        $region353: #{vmr_gae_forward.3} parent=215 // pred_check
          %p2148 = pneg %p1130
        $region354: #{vmr_gae_forward.3} parent=215 // pred_check_branch
          %2150 = sbr.rel (%p2148) target = $region356
        $region355: #{vmr_gae_forward.3} parent=215 // pred_region
          %2151 = dma.done [#allocation56], 16
        $region356: #{vmr_gae_forward.3} parent=215 // pred_fallthru
          _
        // Predicated region
        $region357: #{vmr_gae_forward.3} parent=215 // pred_check
          %p2152 = pneg %p1151
        $region358: #{vmr_gae_forward.3} parent=215 // pred_check_branch
          %2154 = sbr.rel (%p2152) target = $region360
        $region359: #{vmr_gae_forward.3} parent=215 // pred_region
          %2155 = dma.done [#allocation59], 256
        $region360: #{vmr_gae_forward.3} parent=215 // pred_fallthru
          _
        // Predicated region
        $region361: #{vmr_gae_forward.3} parent=215 // pred_check
          %p2156 = pneg %p1172
        $region362: #{vmr_gae_forward.3} parent=215 // pred_check_branch
          %2158 = sbr.rel (%p2156) target = $region364
        $region363: #{vmr_gae_forward.3} parent=215 // pred_region
          %2159 = dma.done [#allocation59], 16
        $region364: #{vmr_gae_forward.3} parent=215 // pred_fallthru
          _
        // Predicated region
        $region365: #{vmr_gae_forward.3} parent=215 // pred_check
          %p2160 = pneg %p1193
        $region366: #{vmr_gae_forward.3} parent=215 // pred_check_branch
          %2162 = sbr.rel (%p2160) target = $region368
        $region367: #{vmr_gae_forward.3} parent=215 // pred_region
          %2163 = dma.done [#allocation62], 256
        $region368: #{vmr_gae_forward.3} parent=215 // pred_fallthru
          _
        // Predicated region
        $region369: #{vmr_gae_forward.3} parent=215 // pred_check
          %p2164 = pneg %p1214
        $region370: #{vmr_gae_forward.3} parent=215 // pred_check_branch
          %2166 = sbr.rel (%p2164) target = $region372
        $region371: #{vmr_gae_forward.3} parent=215 // pred_region
          %2167 = dma.done [#allocation62], 16
        $region372: #{vmr_gae_forward.3} parent=215 // pred_fallthru
          _
        %p2168 = scmp.lt.s32.totalorder %s160, 2
        %s2169 = scalar_select %p2168, %s160, 2
        %s2170 = smul.addr %s2169, 8
        %s2171 = scalar_lea.vmem %s1, %s2170
        %p2172 = pneg %p181
        %p2173 = pneg %p178
        %p2174 = scmp.lt.s32.totalorder %s160, 2
        %s2175 = scalar_select %p2174, %s160, 2
        %s2176 = smul.addr %s2175, 4
        %s2177 = scalar_lea.vmem %s3, %s2176
        %p2178 = pneg %p207
        %p2179 = pneg %p204
        %p2180 = scmp.lt.s32.totalorder %s160, 2
        %s2181 = scalar_select %p2180, %s160, 2
        %s2182 = smul.addr %s2181, 4
        %s2183 = scalar_lea.vmem %s5, %s2182
        %p2184 = pneg %p233
        %p2185 = pneg %p230
        %p2186 = scmp.lt.s32.totalorder %s160, 2
        %s2187 = scalar_select %p2186, %s160, 2
        %s2188 = smul.addr %s2187, 8
        %s2189 = scalar_lea.vmem %s7, %s2188
        %p2190 = pneg %p259
        %p2191 = pneg %p256
        %p2192 = scmp.lt.s32.totalorder %s160, 2
        %s2193 = scalar_select %p2192, %s160, 2
        %s2194 = smul.addr %s2193, 8
        %s2195 = scalar_lea.vmem %s9, %s2194
        %p2196 = pneg %p285
        %p2197 = pneg %p282
        %s2198 = sand.u32 %s298, 1
        %s2199 = scalar_lea.sflag [#allocation5], %s2198
        %s2200 = sand.u32 %s298, 1
        %s2201 = smul.addr %s2200, 8
        %s2202 = scalar_lea.vmem [#allocation4], %s2201
        %p2203 = pneg %p311
        %p2204 = pneg %p308
        %p2205 = pneg %p332
        %p2206 = pneg %p329
        %p2207 = pneg %p353
        %p2208 = pneg %p350
        %p2209 = pneg %p374
        %p2210 = pneg %p371
        %p2211 = pneg %p395
        %p2212 = pneg %p392
        %p2213 = pneg %p416
        %p2214 = pneg %p413
        %p2215 = pneg %p437
        %p2216 = pneg %p434
        %p2217 = pneg %p458
        %p2218 = pneg %p455
        %p2219 = pneg %p479
        %p2220 = pneg %p476
        %p2221 = pneg %p500
        %p2222 = pneg %p497
        %p2223 = pneg %p521
        %p2224 = pneg %p518
        %p2225 = pneg %p542
        %p2226 = pneg %p539
        %p2227 = pneg %p563
        %p2228 = pneg %p560
        %p2229 = pneg %p584
        %p2230 = pneg %p581
        %p2231 = pneg %p605
        %p2232 = pneg %p602
        %p2233 = pneg %p626
        %p2234 = pneg %p623
        %p2235 = pneg %p647
        %p2236 = pneg %p644
        %p2237 = pneg %p668
        %p2238 = pneg %p665
        %p2239 = pneg %p689
        %p2240 = pneg %p686
        %p2241 = pneg %p710
        %p2242 = pneg %p707
        %p2243 = pneg %p731
        %p2244 = pneg %p728
        %p2245 = pneg %p752
        %p2246 = pneg %p749
        %p2247 = pneg %p773
        %p2248 = pneg %p770
        %p2249 = pneg %p794
        %p2250 = pneg %p791
        %p2251 = pneg %p815
        %p2252 = pneg %p812
        %p2253 = pneg %p836
        %p2254 = pneg %p833
        %p2255 = pneg %p857
        %p2256 = pneg %p854
        %p2257 = pneg %p878
        %p2258 = pneg %p875
        %p2259 = pneg %p899
        %p2260 = pneg %p896
        %p2261 = pneg %p920
        %p2262 = pneg %p917
        %p2263 = pneg %p941
        %p2264 = pneg %p938
        %p2265 = pneg %p962
        %p2266 = pneg %p959
        %p2267 = pneg %p983
        %p2268 = pneg %p980
        %p2269 = pneg %p1004
        %p2270 = pneg %p1001
        %p2271 = pneg %p1025
        %p2272 = pneg %p1022
        %p2273 = pneg %p1046
        %p2274 = pneg %p1043
        %p2275 = pneg %p1067
        %p2276 = pneg %p1064
        %p2277 = pneg %p1088
        %p2278 = pneg %p1085
        %p2279 = pneg %p1109
        %p2280 = pneg %p1106
        %p2281 = pneg %p1130
        %p2282 = pneg %p1127
        %p2283 = pneg %p1151
        %p2284 = pneg %p1148
        %p2285 = pneg %p1172
        %p2286 = pneg %p1169
        %p2287 = pneg %p1193
        %p2288 = pneg %p1190
        %p2289 = pneg %p1214
        %p2290 = pneg %p1211
        %p2291 = pneg %p1240
        %p2292 = pneg %p1237
        %p2293 = scmp.lt.s32.totalorder %s160, 2
        %s2294 = scalar_select %p2293, %s160, 2
        %s2295 = smul.addr %s2294, 8
        %s2296 = scalar_lea.vmem %s99, %s2295
        %p2297 = pneg %p1266
        %p2298 = pneg %p1263
        %p2299 = scmp.lt.s32.totalorder %s160, 2
        %s2300 = scalar_select %p2299, %s160, 2
        %s2301 = smul.addr %s2300, 8
        %s2302 = scalar_lea.vmem %s101, %s2301
        %p2303 = pneg %p1292
        %p2304 = pneg %p1289
        %p2305 = scmp.lt.s32.totalorder %s160, 2
        %s2306 = scalar_select %p2305, %s160, 2
        %s2307 = smul.addr %s2306, 8
        %s2308 = scalar_lea.vmem %s103, %s2307
        %p2309 = pneg %p1318
        %p2310 = pneg %p1315
        %s2311 = sand.u32 %s1305, 1
        %s2312 = scalar_lea.sflag [#allocation6], %s2311
        %s2313 = sand.u32 %s1305, 1
        %s2314 = smul.addr %s2313, 8
        %s2315 = scalar_lea.vmem [#allocation64], %s2314
        %p2316 = pneg %p1344
        %p2317 = pneg %p1341
        %s2318 = sand.u32 %s160, 1
        %s2319 = scalar_lea.sflag [#allocation66], %s2318
        %s2320 = sand.u32 %s1331, 1
        %s2321 = smul.addr %s2320, 8
        %s2322 = scalar_lea.vmem [#allocation65], %s2321
        %p2323 = pneg %p1370
        %p2324 = pneg %p1367
        %p2325 = scmp.lt.s32.totalorder %s160, 2
        %s2326 = scalar_select %p2325, %s160, 2
        %s2327 = smul.addr %s2326, 8
        %s2328 = scalar_lea.vmem %s109, %s2327
        %p2329 = pneg %p1396
        %p2330 = pneg %p1393
        %p2331 = scmp.lt.s32.totalorder %s160, 2
        %s2332 = scalar_select %p2331, %s160, 2
        %s2333 = smul.addr %s2332, 2
        %s2334 = smul.addr %s2333, 8
        %s2335 = scalar_lea.vmem %s111, %s2334
        %p2336 = pneg %p1417
        %p2337 = pneg %p1414
        %p2338 = pneg %p1438
        %p2339 = pneg %p1435
        %p2340 = pneg %p1459
        %p2341 = pneg %p1456
        %p2342 = scmp.lt.s32.totalorder %s160, 2
        %s2343 = scalar_select %p2342, %s160, 2
        %s2344 = smul.addr %s2343, 8
        %s2345 = scalar_lea.vmem %s1, %s2344
        %p2346 = scmp.lt.s32.totalorder %s160, 2
        %s2347 = scalar_select %p2346, %s160, 2
        %s2348 = smul.addr %s2347, 4
        %s2349 = scalar_lea.vmem %s3, %s2348
        %p2350 = scmp.lt.s32.totalorder %s160, 2
        %s2351 = scalar_select %p2350, %s160, 2
        %s2352 = smul.addr %s2351, 4
        %s2353 = scalar_lea.vmem %s5, %s2352
        %p2354 = scmp.lt.s32.totalorder %s160, 2
        %s2355 = scalar_select %p2354, %s160, 2
        %s2356 = smul.addr %s2355, 8
        %s2357 = scalar_lea.vmem %s7, %s2356
        %p2358 = scmp.lt.s32.totalorder %s160, 2
        %s2359 = scalar_select %p2358, %s160, 2
        %s2360 = smul.addr %s2359, 8
        %s2361 = scalar_lea.vmem %s9, %s2360
        %p2362 = scmp.lt.s32.totalorder %s160, 2
        %s2363 = scalar_select %p2362, %s160, 2
        %s2364 = smul.addr %s2363, 8
        %s2365 = scalar_lea.vmem %s99, %s2364
        %p2366 = scmp.lt.s32.totalorder %s160, 2
        %s2367 = scalar_select %p2366, %s160, 2
        %s2368 = smul.addr %s2367, 8
        %s2369 = scalar_lea.vmem %s101, %s2368
        %p2370 = scmp.lt.s32.totalorder %s160, 2
        %s2371 = scalar_select %p2370, %s160, 2
        %s2372 = smul.addr %s2371, 8
        %s2373 = scalar_lea.vmem %s103, %s2372
        %p2374 = scmp.lt.s32.totalorder %s160, 2
        %s2375 = scalar_select %p2374, %s160, 2
        %s2376 = smul.addr %s2375, 8
        %s2377 = scalar_lea.vmem %s109, %s2376
        %p2378 = scmp.lt.s32.totalorder %s160, 2
        %s2379 = scalar_select %p2378, %s160, 2
        %s2380 = smul.addr %s2379, 2
        %s2381 = smul.addr %s2380, 8
        %s2382 = scalar_lea.vmem %s111, %s2381
        %p2384 = scmp.eq.s32.totalorder %s160, 0
        // Predicated region
        $region373: #{vmr_gae_forward.3} parent=215 // pred_check
          %p2385 = pneg %p2384
        $region374: #{vmr_gae_forward.3} parent=215 // pred_check_branch
          %2387 = sbr.rel (%p2385) target = $region376
        $region375: #{vmr_gae_forward.3} parent=215 // pred_region
          %vm2388 = vcmask 261120
          %2389 = vst.msk [vmem:[#allocation2] sm:$0xff] %vm2388, 0.0
          %2390 = vst.msk [vmem:[#allocation2 + $0x8] sm:$0xff] %vm2388, 0.0
          %vm2391 = vcmask 0
          %2392 = vst.msk [vmem:[#allocation67] sm:$0x1] %vm2391, 0.0
          %2393 = vst.msk [vmem:[#allocation68] sm:$0x1] %vm2391, 0.0
          %2394 = vst.msk [vmem:[#allocation70] sm:$0x1] %vm2391, 0.0
        $region376: #{vmr_gae_forward.3} parent=215 // pred_fallthru
          _
        %v2395 = vld [vmem:[%s2349] sm:$0xf]
        %v2396 = vld [vmem:[%s2353] sm:$0xf]
        %v2397 = vld [vmem:[%s2345] sm:$0xff]
        %v2398 = vld [vmem:[%s2357] sm:$0xff]
        %v2399 = vld [vmem:[%s2361] sm:$0xff]
        %v2400 = vld [vmem:[%s2011] sm:$0xff]
        %v2401 = vld [vmem:[#allocation7] sm:$0xff]
        %s2402 = scalar_lea.vmem [#allocation2], 8
        %v2403 = vld [vmem:[%s2402] sm:$0xff]
        %v2404 = vld [vmem:[#allocation9] sm:$0x3]
        %v2405 = vpack.c.bf16 %v2397, %v2397
        %v2406 = vld [vmem:[%s17] sm:$0x1]
        %v2408 = vlaneseq
        %v2409 = vshrl.u32 %v2408, 7
        %v2410 = vsub.s32 0, %v2409
        %v2411 = vrot.slane %v2406, %v2410
        %vm2413 = vcmask 31744
        %v2415 = vsel %vm2413, %v2405, 0
        %vm2417 = vcmask 1041408
        %v2419 = vsel %vm2417, %v2404, 0
        %2421 = vmatprep.subr.bf16.mxu0 0
        %2422 = vmatpush1.bf16.msra.mxu0 %v2419
        %2423 = vmatprep.subr.bf16.mxu0 0
        %2424 = vmatpush1.bf16.msra.mxu0 0
        %2425 = vmatprep.subr.bf16.mxu0 0
        %2426 = vmatpush1.bf16.msra.mxu0 0
        %2427 = vmatprep.subr.bf16.mxu0 0
        %2428 = vmatpush1.bf16.msra.mxu0 0
        %2429 = vmatprep.subr.bf16.mxu0 0
        %2430 = vmatpush1.bf16.msra.mxu0 0
        %2431 = vmatprep.subr.bf16.mxu0 0
        %2432 = vmatpush1.bf16.msra.mxu0 0
        %2433 = vmatprep.subr.bf16.mxu0 0
        %2434 = vmatpush1.bf16.msra.mxu0 0
        %2435 = vmatprep.subr.bf16.mxu0 0
        %2436 = vmatpush1.bf16.msra.mxu0 0
        %2437 = vmatprep.subr.bf16.mxu0 0
        %2438 = vmatpush1.bf16.msra.mxu0 0
        %2439 = vmatprep.subr.bf16.mxu0 0
        %2440 = vmatpush1.bf16.msra.mxu0 0
        %2441 = vmatprep.subr.bf16.mxu0 0
        %2442 = vmatpush1.bf16.msra.mxu0 0
        %2443 = vmatprep.subr.bf16.mxu0 0
        %2444 = vmatpush1.bf16.msra.mxu0 0
        %2445 = vmatprep.subr.bf16.mxu0 0
        %2446 = vmatpush1.bf16.msra.mxu0 0
        %2447 = vmatprep.subr.bf16.mxu0 0
        %2448 = vmatpush1.bf16.msra.mxu0 0
        %2449 = vmatprep.subr.bf16.mxu0 0
        %2450 = vmatpush1.bf16.msra.mxu0 0
        %2451 = vmatprep.subr.bf16.mxu0 0
        %2452 = vmatpush1.bf16.msra.mxu0 0
        %2453 = vmatprep.mubr.bf16.mxu0 0
        %2454 = vmatmul.mubr.bf16.gmra.mrb[0].mxu0 %v2415
        %v2455 = vpop.f32.mrb[0].mxu0
        %v2456 = vadd.f32 %v2411, %v2455
        %v2457 = vpop.f32.mrb[0].mxu0
        %v2458 = vpop.f32.mrb[0].mxu0
        %v2459 = vpop.f32.mrb[0].mxu0
        %2460 = vdwg.mxu0
        %v2461 = vmax.f32 %v2456, 0.0
        %v2462 = vld [vmem:[#allocation10] sm:$0xf]
        %v2463 = vld [vmem:[#allocation10 + $0x4] sm:$0xf]
        %v2464 = vld [vmem:[#allocation10 + $0x8] sm:$0xf]
        %v2465 = vld [vmem:[#allocation10 + $0xc] sm:$0xf]
        %v2466 = vpack.c.bf16 %v2461, %v2461
        %v2467 = vld [vmem:[#allocation12] sm:$0xf]
        %v2468 = vld [vmem:[#allocation12 + $0x4] sm:$0xf]
        %v2469 = vld [vmem:[#allocation12 + $0x8] sm:$0xf]
        %v2470 = vld [vmem:[#allocation12 + $0xc] sm:$0xf]
        %v2471 = vpack.c.bf16 %v2403, %v2403
        %v2476 = vunpack.c.l.b16 %v2467
        %v2477 = vunpack.c.l.b16 %v2468
        %v2478 = vunpack.c.l.b16 %v2469
        %v2479 = vunpack.c.l.b16 %v2470
        %v2480 = vpack.c.b16 %v2477, %v2476
        %v2481 = vpack.c.b16 %v2479, %v2478
        %vm2484 = vcmask 261120
        %v2486 = vsel %vm2484, %v2471, 0
        %2488 = vmatprep.subr.bf16.mxu0 0
        %2489 = vmatpush1.bf16.msra.mxu0 %v2480
        %2490 = vmatprep.subr.bf16.mxu0 0
        %2491 = vmatpush1.bf16.msra.mxu0 %v2481
        %2492 = vmatprep.subr.bf16.mxu0 0
        %2493 = vmatpush1.bf16.msra.mxu0 0
        %2494 = vmatprep.subr.bf16.mxu0 0
        %2495 = vmatpush1.bf16.msra.mxu0 0
        %2496 = vmatprep.subr.bf16.mxu0 0
        %2497 = vmatpush1.bf16.msra.mxu0 0
        %2498 = vmatprep.subr.bf16.mxu0 0
        %2499 = vmatpush1.bf16.msra.mxu0 0
        %2500 = vmatprep.subr.bf16.mxu0 0
        %2501 = vmatpush1.bf16.msra.mxu0 0
        %2502 = vmatprep.subr.bf16.mxu0 0
        %2503 = vmatpush1.bf16.msra.mxu0 0
        %2504 = vmatprep.subr.bf16.mxu0 0
        %2505 = vmatpush1.bf16.msra.mxu0 0
        %2506 = vmatprep.subr.bf16.mxu0 0
        %2507 = vmatpush1.bf16.msra.mxu0 0
        %2508 = vmatprep.subr.bf16.mxu0 0
        %2509 = vmatpush1.bf16.msra.mxu0 0
        %2510 = vmatprep.subr.bf16.mxu0 0
        %2511 = vmatpush1.bf16.msra.mxu0 0
        %2512 = vmatprep.subr.bf16.mxu0 0
        %2513 = vmatpush1.bf16.msra.mxu0 0
        %2514 = vmatprep.subr.bf16.mxu0 0
        %2515 = vmatpush1.bf16.msra.mxu0 0
        %2516 = vmatprep.subr.bf16.mxu0 0
        %2517 = vmatpush1.bf16.msra.mxu0 0
        %2518 = vmatprep.subr.bf16.mxu0 0
        %2519 = vmatpush1.bf16.msra.mxu0 0
        %2520 = vmatprep.mubr.bf16.mxu0 0
        %2521 = vmatmul.mubr.bf16.gmra.mrb[0].mxu0 %v2486
        %v2522 = vpop.f32.mrb[0].mxu0
        %v2523 = vadd.f32 0.0, %v2522
        %v2524 = vpop.f32.mrb[0].mxu0
        %v2525 = vpop.f32.mrb[0].mxu0
        %v2526 = vpop.f32.mrb[0].mxu0
        %2527 = vdwg.mxu0
        %v2532 = vunpack.c.l.b16 %v2462
        %v2533 = vunpack.c.l.b16 %v2463
        %v2534 = vunpack.c.l.b16 %v2464
        %v2535 = vunpack.c.l.b16 %v2465
        %v2536 = vpack.c.b16 %v2533, %v2532
        %v2537 = vpack.c.b16 %v2535, %v2534
        %v2541 = vsel %vm2484, %v2466, 0
        %2543 = vmatprep.subr.bf16.mxu0 0
        %2544 = vmatpush1.bf16.msra.mxu0 %v2536
        %2545 = vmatprep.subr.bf16.mxu0 0
        %2546 = vmatpush1.bf16.msra.mxu0 %v2537
        %2547 = vmatprep.subr.bf16.mxu0 0
        %2548 = vmatpush1.bf16.msra.mxu0 0
        %2549 = vmatprep.subr.bf16.mxu0 0
        %2550 = vmatpush1.bf16.msra.mxu0 0
        %2551 = vmatprep.subr.bf16.mxu0 0
        %2552 = vmatpush1.bf16.msra.mxu0 0
        %2553 = vmatprep.subr.bf16.mxu0 0
        %2554 = vmatpush1.bf16.msra.mxu0 0
        %2555 = vmatprep.subr.bf16.mxu0 0
        %2556 = vmatpush1.bf16.msra.mxu0 0
        %2557 = vmatprep.subr.bf16.mxu0 0
        %2558 = vmatpush1.bf16.msra.mxu0 0
        %2559 = vmatprep.subr.bf16.mxu0 0
        %2560 = vmatpush1.bf16.msra.mxu0 0
        %2561 = vmatprep.subr.bf16.mxu0 0
        %2562 = vmatpush1.bf16.msra.mxu0 0
        %2563 = vmatprep.subr.bf16.mxu0 0
        %2564 = vmatpush1.bf16.msra.mxu0 0
        %2565 = vmatprep.subr.bf16.mxu0 0
        %2566 = vmatpush1.bf16.msra.mxu0 0
        %2567 = vmatprep.subr.bf16.mxu0 0
        %2568 = vmatpush1.bf16.msra.mxu0 0
        %2569 = vmatprep.subr.bf16.mxu0 0
        %2570 = vmatpush1.bf16.msra.mxu0 0
        %2571 = vmatprep.subr.bf16.mxu0 0
        %2572 = vmatpush1.bf16.msra.mxu0 0
        %2573 = vmatprep.subr.bf16.mxu0 0
        %2574 = vmatpush1.bf16.msra.mxu0 0
        %2575 = vmatprep.mubr.bf16.mxu0 0
        %2576 = vmatmul.mubr.bf16.gmra.mrb[0].mxu0 %v2541
        %v2577 = vpop.f32.mrb[0].mxu0
        %v2578 = vadd.f32 %v2523, %v2577
        %v2579 = vpop.f32.mrb[0].mxu0
        %v2580 = vpop.f32.mrb[0].mxu0
        %v2581 = vpop.f32.mrb[0].mxu0
        %2582 = vdwg.mxu0
        %v2583 = vld [vmem:[#allocation13] sm:$0x1]
        %v2584 = vpack.c.bf16 %v2578, %v2578
        %v2586 = vlaneseq
        %v2587 = vshrl.u32 %v2586, 7
        %v2588 = vsub.s32 0, %v2587
        %v2589 = vrot.slane %v2583, %v2588
        %vm2591 = vcmask 64512
        %v2593 = vsel %vm2591, %v2395, 0
        %vm2595 = vcmask 1043456
        %v2597 = vsel %vm2595, %v2584, 0
        %2599 = vmatprep.subr.bf16.mxu0 0
        %2600 = vmatpush1.bf16.msra.mxu0 %v2597
        %2601 = vmatprep.subr.bf16.mxu0 0
        %2602 = vmatpush1.bf16.msra.mxu0 0
        %2603 = vmatprep.subr.bf16.mxu0 0
        %2604 = vmatpush1.bf16.msra.mxu0 0
        %2605 = vmatprep.subr.bf16.mxu0 0
        %2606 = vmatpush1.bf16.msra.mxu0 0
        %2607 = vmatprep.subr.bf16.mxu0 0
        %2608 = vmatpush1.bf16.msra.mxu0 0
        %2609 = vmatprep.subr.bf16.mxu0 0
        %2610 = vmatpush1.bf16.msra.mxu0 0
        %2611 = vmatprep.subr.bf16.mxu0 0
        %2612 = vmatpush1.bf16.msra.mxu0 0
        %2613 = vmatprep.subr.bf16.mxu0 0
        %2614 = vmatpush1.bf16.msra.mxu0 0
        %2615 = vmatprep.subr.bf16.mxu0 0
        %2616 = vmatpush1.bf16.msra.mxu0 0
        %2617 = vmatprep.subr.bf16.mxu0 0
        %2618 = vmatpush1.bf16.msra.mxu0 0
        %2619 = vmatprep.subr.bf16.mxu0 0
        %2620 = vmatpush1.bf16.msra.mxu0 0
        %2621 = vmatprep.subr.bf16.mxu0 0
        %2622 = vmatpush1.bf16.msra.mxu0 0
        %2623 = vmatprep.subr.bf16.mxu0 0
        %2624 = vmatpush1.bf16.msra.mxu0 0
        %2625 = vmatprep.subr.bf16.mxu0 0
        %2626 = vmatpush1.bf16.msra.mxu0 0
        %2627 = vmatprep.subr.bf16.mxu0 0
        %2628 = vmatpush1.bf16.msra.mxu0 0
        %2629 = vmatprep.subr.bf16.mxu0 0
        %2630 = vmatpush1.bf16.msra.mxu0 0
        %2631 = vmatprep.mubr.bf16.mxu0 0
        %2632 = vmatmul.mubr.bf16.gmra.mrb[0].mxu0 %v2593
        %v2633 = vpop.f32.mrb[0].mxu0
        %v2634 = vadd.f32 %v2589, %v2633
        %v2635 = vpop.f32.mrb[0].mxu0
        %v2636 = vpop.f32.mrb[0].mxu0
        %v2637 = vpop.f32.mrb[0].mxu0
        %2638 = vdwg.mxu0
        %v2639 = vmax.f32 %v2634, 0.0
        %v2640 = vld [vmem:[#allocation15] sm:$0xf]
        %v2641 = vld [vmem:[#allocation15 + $0x4] sm:$0xf]
        %v2642 = vld [vmem:[#allocation15 + $0x8] sm:$0xf]
        %v2643 = vld [vmem:[#allocation15 + $0xc] sm:$0xf]
        %v2644 = vpack.c.bf16 %v2639, %v2639
        %v2649 = vunpack.c.l.b16 %v2640
        %v2650 = vunpack.c.l.b16 %v2641
        %v2651 = vunpack.c.l.b16 %v2642
        %v2652 = vunpack.c.l.b16 %v2643
        %v2653 = vpack.c.b16 %v2650, %v2649
        %v2654 = vpack.c.b16 %v2652, %v2651
        %v2658 = vsel %vm2484, %v2644, 0
        %2660 = vmatprep.subr.bf16.mxu0 0
        %2661 = vmatpush1.bf16.msra.mxu0 %v2653
        %2662 = vmatprep.subr.bf16.mxu0 0
        %2663 = vmatpush1.bf16.msra.mxu0 %v2654
        %2664 = vmatprep.subr.bf16.mxu0 0
        %2665 = vmatpush1.bf16.msra.mxu0 0
        %2666 = vmatprep.subr.bf16.mxu0 0
        %2667 = vmatpush1.bf16.msra.mxu0 0
        %2668 = vmatprep.subr.bf16.mxu0 0
        %2669 = vmatpush1.bf16.msra.mxu0 0
        %2670 = vmatprep.subr.bf16.mxu0 0
        %2671 = vmatpush1.bf16.msra.mxu0 0
        %2672 = vmatprep.subr.bf16.mxu0 0
        %2673 = vmatpush1.bf16.msra.mxu0 0
        %2674 = vmatprep.subr.bf16.mxu0 0
        %2675 = vmatpush1.bf16.msra.mxu0 0
        %2676 = vmatprep.subr.bf16.mxu0 0
        %2677 = vmatpush1.bf16.msra.mxu0 0
        %2678 = vmatprep.subr.bf16.mxu0 0
        %2679 = vmatpush1.bf16.msra.mxu0 0
        %2680 = vmatprep.subr.bf16.mxu0 0
        %2681 = vmatpush1.bf16.msra.mxu0 0
        %2682 = vmatprep.subr.bf16.mxu0 0
        %2683 = vmatpush1.bf16.msra.mxu0 0
        %2684 = vmatprep.subr.bf16.mxu0 0
        %2685 = vmatpush1.bf16.msra.mxu0 0
        %2686 = vmatprep.subr.bf16.mxu0 0
        %2687 = vmatpush1.bf16.msra.mxu0 0
        %2688 = vmatprep.subr.bf16.mxu0 0
        %2689 = vmatpush1.bf16.msra.mxu0 0
        %2690 = vmatprep.subr.bf16.mxu0 0
        %2691 = vmatpush1.bf16.msra.mxu0 0
        %2692 = vmatprep.mubr.bf16.mxu0 0
        %2693 = vmatmul.mubr.bf16.gmra.mrb[0].mxu0 %v2658
        %v2694 = vpop.f32.mrb[0].mxu0
        %v2695 = vadd.f32 0.0, %v2694
        %v2696 = vpop.f32.mrb[0].mxu0
        %v2697 = vpop.f32.mrb[0].mxu0
        %v2698 = vpop.f32.mrb[0].mxu0
        %2699 = vdwg.mxu0
        %v2700 = vld [vmem:[#allocation16] sm:$0x1]
        %v2701 = vpack.c.bf16 %v2695, %v2695
        %v2703 = vlaneseq
        %v2704 = vshrl.u32 %v2703, 7
        %v2705 = vsub.s32 0, %v2704
        %v2706 = vrot.slane %v2700, %v2705
        %v2709 = vsel %vm2595, %v2701, 0
        %2711 = vmatprep.subr.bf16.mxu0 0
        %2712 = vmatpush1.bf16.msra.mxu0 %v2709
        %2713 = vmatprep.subr.bf16.mxu0 0
        %2714 = vmatpush1.bf16.msra.mxu0 0
        %2715 = vmatprep.subr.bf16.mxu0 0
        %2716 = vmatpush1.bf16.msra.mxu0 0
        %2717 = vmatprep.subr.bf16.mxu0 0
        %2718 = vmatpush1.bf16.msra.mxu0 0
        %2719 = vmatprep.subr.bf16.mxu0 0
        %2720 = vmatpush1.bf16.msra.mxu0 0
        %2721 = vmatprep.subr.bf16.mxu0 0
        %2722 = vmatpush1.bf16.msra.mxu0 0
        %2723 = vmatprep.subr.bf16.mxu0 0
        %2724 = vmatpush1.bf16.msra.mxu0 0
        %2725 = vmatprep.subr.bf16.mxu0 0
        %2726 = vmatpush1.bf16.msra.mxu0 0
        %2727 = vmatprep.subr.bf16.mxu0 0
        %2728 = vmatpush1.bf16.msra.mxu0 0
        %2729 = vmatprep.subr.bf16.mxu0 0
        %2730 = vmatpush1.bf16.msra.mxu0 0
        %2731 = vmatprep.subr.bf16.mxu0 0
        %2732 = vmatpush1.bf16.msra.mxu0 0
        %2733 = vmatprep.subr.bf16.mxu0 0
        %2734 = vmatpush1.bf16.msra.mxu0 0
        %2735 = vmatprep.subr.bf16.mxu0 0
        %2736 = vmatpush1.bf16.msra.mxu0 0
        %2737 = vmatprep.subr.bf16.mxu0 0
        %2738 = vmatpush1.bf16.msra.mxu0 0
        %2739 = vmatprep.subr.bf16.mxu0 0
        %2740 = vmatpush1.bf16.msra.mxu0 0
        %2741 = vmatprep.subr.bf16.mxu0 0
        %2742 = vmatpush1.bf16.msra.mxu0 0
        %2743 = vmatprep.mubr.bf16.mxu0 0
        %2744 = vmatmul.mubr.bf16.gmra.mrb[0].mxu0 %v2593
        %v2745 = vpop.f32.mrb[0].mxu0
        %v2746 = vadd.f32 %v2706, %v2745
        %v2747 = vpop.f32.mrb[0].mxu0
        %v2748 = vpop.f32.mrb[0].mxu0
        %v2749 = vpop.f32.mrb[0].mxu0
        %2750 = vdwg.mxu0
        %v2751 = vmax.f32 %v2746, 0.0
        %vm2752 = vcmp.ne.f32.partialorder %v2746, %v2746
        %v2753 = vadd.f32 %v2746, 0.0
        %v2754 = vand.u32 2147483647, %v2746
        %v2755 = vsub.f32 0.0, %v2754
        %v2756 = vmul.f32 %v2755, 1.442695
        %v2757 = vpow.pop %v2756
        %v2758 = vadd.f32 %v2757, 1.0
        %v2759 = vlog2.pop %v2758
        %v2760 = vmul.f32 %v2759, 0.6931472
        %v2761 = vmul.f32 -0.5, %v2757
        %v2762 = vadd.f32 %v2761, 1.0
        %v2763 = vmul.f32 %v2762, %v2757
        %v2764 = vand.u32 2147483647, %v2757
        %vm2765 = vcmp.lt.f32.partialorder %v2764, 0.0004427343
        %v2766 = vsel %vm2765, %v2763, %v2760
        %v2767 = vadd.f32 %v2751, %v2766
        %v2768 = vsel %vm2752, %v2753, %v2767
        %v2769 = vld [vmem:[#allocation18] sm:$0xf]
        %v2770 = vld [vmem:[#allocation18 + $0x4] sm:$0xf]
        %v2771 = vld [vmem:[#allocation18 + $0x8] sm:$0xf]
        %v2772 = vld [vmem:[#allocation18 + $0xc] sm:$0xf]
        %2774 = vrot.lane.b32.xlu0 %v2466, 96
        %v2775 = vpop.permute.xlu0 %2774
        %v2780 = vunpack.c.l.b16 %v2769
        %v2781 = vunpack.c.l.b16 %v2770
        %v2782 = vunpack.c.l.b16 %v2771
        %v2783 = vunpack.c.l.b16 %v2772
        %v2784 = vpack.c.b16 %v2781, %v2780
        %v2785 = vpack.c.b16 %v2783, %v2782
        %v2789 = vsel %vm2484, %v2775, 0
        %2791 = vmatprep.subr.bf16.mxu0 0
        %2792 = vmatpush1.bf16.msra.mxu0 %v2784
        %2793 = vmatprep.subr.bf16.mxu0 0
        %2794 = vmatpush1.bf16.msra.mxu0 %v2785
        %2795 = vmatprep.subr.bf16.mxu0 0
        %2796 = vmatpush1.bf16.msra.mxu0 0
        %2797 = vmatprep.subr.bf16.mxu0 0
        %2798 = vmatpush1.bf16.msra.mxu0 0
        %2799 = vmatprep.subr.bf16.mxu0 0
        %2800 = vmatpush1.bf16.msra.mxu0 0
        %2801 = vmatprep.subr.bf16.mxu0 0
        %2802 = vmatpush1.bf16.msra.mxu0 0
        %2803 = vmatprep.subr.bf16.mxu0 0
        %2804 = vmatpush1.bf16.msra.mxu0 0
        %2805 = vmatprep.subr.bf16.mxu0 0
        %2806 = vmatpush1.bf16.msra.mxu0 0
        %2807 = vmatprep.subr.bf16.mxu0 0
        %2808 = vmatpush1.bf16.msra.mxu0 0
        %2809 = vmatprep.subr.bf16.mxu0 0
        %2810 = vmatpush1.bf16.msra.mxu0 0
        %2811 = vmatprep.subr.bf16.mxu0 0
        %2812 = vmatpush1.bf16.msra.mxu0 0
        %2813 = vmatprep.subr.bf16.mxu0 0
        %2814 = vmatpush1.bf16.msra.mxu0 0
        %2815 = vmatprep.subr.bf16.mxu0 0
        %2816 = vmatpush1.bf16.msra.mxu0 0
        %2817 = vmatprep.subr.bf16.mxu0 0
        %2818 = vmatpush1.bf16.msra.mxu0 0
        %2819 = vmatprep.subr.bf16.mxu0 0
        %2820 = vmatpush1.bf16.msra.mxu0 0
        %2821 = vmatprep.subr.bf16.mxu0 0
        %2822 = vmatpush1.bf16.msra.mxu0 0
        %2823 = vmatprep.mubr.bf16.mxu0 0
        %2824 = vmatmul.mubr.bf16.gmra.mrb[0].mxu0 %v2789
        %v2825 = vpop.f32.mrb[0].mxu0
        %v2826 = vadd.f32 0.0, %v2825
        %v2827 = vpop.f32.mrb[0].mxu0
        %v2828 = vpop.f32.mrb[0].mxu0
        %v2829 = vpop.f32.mrb[0].mxu0
        %2830 = vdwg.mxu0
        %v2831 = vld [vmem:[#allocation19] sm:$0x1]
        %v2832 = vpack.c.bf16 %v2826, %v2826
        %v2834 = vlaneseq
        %v2835 = vshrl.u32 %v2834, 7
        %v2836 = vsub.s32 0, %v2835
        %v2837 = vrot.slane %v2831, %v2836
        %v2840 = vsel %vm2591, %v2396, 0
        %v2843 = vsel %vm2595, %v2832, 0
        %2845 = vmatprep.subr.bf16.mxu0 0
        %2846 = vmatpush1.bf16.msra.mxu0 %v2843
        %2847 = vmatprep.subr.bf16.mxu0 0
        %2848 = vmatpush1.bf16.msra.mxu0 0
        %2849 = vmatprep.subr.bf16.mxu0 0
        %2850 = vmatpush1.bf16.msra.mxu0 0
        %2851 = vmatprep.subr.bf16.mxu0 0
        %2852 = vmatpush1.bf16.msra.mxu0 0
        %2853 = vmatprep.subr.bf16.mxu0 0
        %2854 = vmatpush1.bf16.msra.mxu0 0
        %2855 = vmatprep.subr.bf16.mxu0 0
        %2856 = vmatpush1.bf16.msra.mxu0 0
        %2857 = vmatprep.subr.bf16.mxu0 0
        %2858 = vmatpush1.bf16.msra.mxu0 0
        %2859 = vmatprep.subr.bf16.mxu0 0
        %2860 = vmatpush1.bf16.msra.mxu0 0
        %2861 = vmatprep.subr.bf16.mxu0 0
        %2862 = vmatpush1.bf16.msra.mxu0 0
        %2863 = vmatprep.subr.bf16.mxu0 0
        %2864 = vmatpush1.bf16.msra.mxu0 0
        %2865 = vmatprep.subr.bf16.mxu0 0
        %2866 = vmatpush1.bf16.msra.mxu0 0
        %2867 = vmatprep.subr.bf16.mxu0 0
        %2868 = vmatpush1.bf16.msra.mxu0 0
        %2869 = vmatprep.subr.bf16.mxu0 0
        %2870 = vmatpush1.bf16.msra.mxu0 0
        %2871 = vmatprep.subr.bf16.mxu0 0
        %2872 = vmatpush1.bf16.msra.mxu0 0
        %2873 = vmatprep.subr.bf16.mxu0 0
        %2874 = vmatpush1.bf16.msra.mxu0 0
        %2875 = vmatprep.subr.bf16.mxu0 0
        %2876 = vmatpush1.bf16.msra.mxu0 0
        %2877 = vmatprep.mubr.bf16.mxu0 0
        %2878 = vmatmul.mubr.bf16.gmra.mrb[0].mxu0 %v2840
        %v2879 = vpop.f32.mrb[0].mxu0
        %v2880 = vadd.f32 %v2837, %v2879
        %v2881 = vpop.f32.mrb[0].mxu0
        %v2882 = vpop.f32.mrb[0].mxu0
        %v2883 = vpop.f32.mrb[0].mxu0
        %2884 = vdwg.mxu0
        %v2885 = vmax.f32 %v2880, 0.0
        %v2886 = vld [vmem:[#allocation21] sm:$0xf]
        %v2887 = vld [vmem:[#allocation21 + $0x4] sm:$0xf]
        %v2888 = vld [vmem:[#allocation21 + $0x8] sm:$0xf]
        %v2889 = vld [vmem:[#allocation21 + $0xc] sm:$0xf]
        %v2890 = vpack.c.bf16 %v2885, %v2885
        %v2895 = vunpack.c.l.b16 %v2886
        %v2896 = vunpack.c.l.b16 %v2887
        %v2897 = vunpack.c.l.b16 %v2888
        %v2898 = vunpack.c.l.b16 %v2889
        %v2899 = vpack.c.b16 %v2896, %v2895
        %v2900 = vpack.c.b16 %v2898, %v2897
        %v2904 = vsel %vm2484, %v2890, 0
        %2906 = vmatprep.subr.bf16.mxu0 0
        %2907 = vmatpush1.bf16.msra.mxu0 %v2899
        %2908 = vmatprep.subr.bf16.mxu0 0
        %2909 = vmatpush1.bf16.msra.mxu0 %v2900
        %2910 = vmatprep.subr.bf16.mxu0 0
        %2911 = vmatpush1.bf16.msra.mxu0 0
        %2912 = vmatprep.subr.bf16.mxu0 0
        %2913 = vmatpush1.bf16.msra.mxu0 0
        %2914 = vmatprep.subr.bf16.mxu0 0
        %2915 = vmatpush1.bf16.msra.mxu0 0
        %2916 = vmatprep.subr.bf16.mxu0 0
        %2917 = vmatpush1.bf16.msra.mxu0 0
        %2918 = vmatprep.subr.bf16.mxu0 0
        %2919 = vmatpush1.bf16.msra.mxu0 0
        %2920 = vmatprep.subr.bf16.mxu0 0
        %2921 = vmatpush1.bf16.msra.mxu0 0
        %2922 = vmatprep.subr.bf16.mxu0 0
        %2923 = vmatpush1.bf16.msra.mxu0 0
        %2924 = vmatprep.subr.bf16.mxu0 0
        %2925 = vmatpush1.bf16.msra.mxu0 0
        %2926 = vmatprep.subr.bf16.mxu0 0
        %2927 = vmatpush1.bf16.msra.mxu0 0
        %2928 = vmatprep.subr.bf16.mxu0 0
        %2929 = vmatpush1.bf16.msra.mxu0 0
        %2930 = vmatprep.subr.bf16.mxu0 0
        %2931 = vmatpush1.bf16.msra.mxu0 0
        %2932 = vmatprep.subr.bf16.mxu0 0
        %2933 = vmatpush1.bf16.msra.mxu0 0
        %2934 = vmatprep.subr.bf16.mxu0 0
        %2935 = vmatpush1.bf16.msra.mxu0 0
        %2936 = vmatprep.subr.bf16.mxu0 0
        %2937 = vmatpush1.bf16.msra.mxu0 0
        %2938 = vmatprep.mubr.bf16.mxu0 0
        %2939 = vmatmul.mubr.bf16.gmra.mrb[0].mxu0 %v2904
        %v2940 = vpop.f32.mrb[0].mxu0
        %v2941 = vadd.f32 0.0, %v2940
        %v2942 = vpop.f32.mrb[0].mxu0
        %v2943 = vpop.f32.mrb[0].mxu0
        %v2944 = vpop.f32.mrb[0].mxu0
        %2945 = vdwg.mxu0
        %v2946 = vld [vmem:[#allocation22] sm:$0x1]
        %v2947 = vpack.c.bf16 %v2941, %v2941
        %v2949 = vlaneseq
        %v2950 = vshrl.u32 %v2949, 7
        %v2951 = vsub.s32 0, %v2950
        %v2952 = vrot.slane %v2946, %v2951
        %v2955 = vsel %vm2595, %v2947, 0
        %2957 = vmatprep.subr.bf16.mxu0 0
        %2958 = vmatpush1.bf16.msra.mxu0 %v2955
        %2959 = vmatprep.subr.bf16.mxu0 0
        %2960 = vmatpush1.bf16.msra.mxu0 0
        %2961 = vmatprep.subr.bf16.mxu0 0
        %2962 = vmatpush1.bf16.msra.mxu0 0
        %2963 = vmatprep.subr.bf16.mxu0 0
        %2964 = vmatpush1.bf16.msra.mxu0 0
        %2965 = vmatprep.subr.bf16.mxu0 0
        %2966 = vmatpush1.bf16.msra.mxu0 0
        %2967 = vmatprep.subr.bf16.mxu0 0
        %2968 = vmatpush1.bf16.msra.mxu0 0
        %2969 = vmatprep.subr.bf16.mxu0 0
        %2970 = vmatpush1.bf16.msra.mxu0 0
        %2971 = vmatprep.subr.bf16.mxu0 0
        %2972 = vmatpush1.bf16.msra.mxu0 0
        %2973 = vmatprep.subr.bf16.mxu0 0
        %2974 = vmatpush1.bf16.msra.mxu0 0
        %2975 = vmatprep.subr.bf16.mxu0 0
        %2976 = vmatpush1.bf16.msra.mxu0 0
        %2977 = vmatprep.subr.bf16.mxu0 0
        %2978 = vmatpush1.bf16.msra.mxu0 0
        %2979 = vmatprep.subr.bf16.mxu0 0
        %2980 = vmatpush1.bf16.msra.mxu0 0
        %2981 = vmatprep.subr.bf16.mxu0 0
        %2982 = vmatpush1.bf16.msra.mxu0 0
        %2983 = vmatprep.subr.bf16.mxu0 0
        %2984 = vmatpush1.bf16.msra.mxu0 0
        %2985 = vmatprep.subr.bf16.mxu0 0
        %2986 = vmatpush1.bf16.msra.mxu0 0
        %2987 = vmatprep.subr.bf16.mxu0 0
        %2988 = vmatpush1.bf16.msra.mxu0 0
        %2989 = vmatprep.mubr.bf16.mxu0 0
        %2990 = vmatmul.mubr.bf16.gmra.mrb[0].mxu0 %v2840
        %v2991 = vpop.f32.mrb[0].mxu0
        %v2992 = vadd.f32 %v2952, %v2991
        %v2993 = vpop.f32.mrb[0].mxu0
        %v2994 = vpop.f32.mrb[0].mxu0
        %v2995 = vpop.f32.mrb[0].mxu0
        %2996 = vdwg.mxu0
        %v2997 = vmax.f32 %v2992, 0.0
        %vm2998 = vcmp.ne.f32.partialorder %v2992, %v2992
        %v2999 = vadd.f32 %v2992, 0.0
        %v3000 = vand.u32 2147483647, %v2992
        %v3001 = vsub.f32 0.0, %v3000
        %v3002 = vmul.f32 %v3001, 1.442695
        %v3003 = vpow.pop %v3002
        %v3004 = vadd.f32 %v3003, 1.0
        %v3005 = vlog2.pop %v3004
        %v3006 = vmul.f32 %v3005, 0.6931472
        %v3007 = vmul.f32 -0.5, %v3003
        %v3008 = vadd.f32 %v3007, 1.0
        %v3009 = vmul.f32 %v3008, %v3003
        %v3010 = vand.u32 2147483647, %v3003
        %vm3011 = vcmp.lt.f32.partialorder %v3010, 0.0004427343
        %v3012 = vsel %vm3011, %v3009, %v3006
        %v3013 = vadd.f32 %v2997, %v3012
        %v3014 = vsel %vm2998, %v2999, %v3013
        %v3015 = vld [vmem:[#allocation24] sm:$0xf]
        %v3016 = vld [vmem:[#allocation24 + $0x4] sm:$0xf]
        %v3017 = vld [vmem:[#allocation24 + $0x8] sm:$0xf]
        %v3018 = vld [vmem:[#allocation24 + $0xc] sm:$0xf]
        %v3019 = vld [vmem:[#allocation25] sm:$0x1]
        %v3021 = vlaneseq
        %v3022 = vshrl.u32 %v3021, 7
        %v3023 = vsub.s32 0, %v3022
        %v3024 = vrot.slane %v3019, %v3023
        %v3030 = vunpack.c.l.b16 %v3015
        %v3031 = vunpack.c.l.b16 %v3016
        %v3032 = vunpack.c.l.b16 %v3017
        %v3033 = vunpack.c.l.b16 %v3018
        %v3034 = vpack.c.b16 %v3031, %v3030
        %v3035 = vpack.c.b16 %v3033, %v3032
        %3038 = vmatprep.subr.bf16.mxu0 0
        %3039 = vmatpush1.bf16.msra.mxu0 %v3034
        %3040 = vmatprep.subr.bf16.mxu0 0
        %3041 = vmatpush1.bf16.msra.mxu0 %v3035
        %3042 = vmatprep.subr.bf16.mxu0 0
        %3043 = vmatpush1.bf16.msra.mxu0 0
        %3044 = vmatprep.subr.bf16.mxu0 0
        %3045 = vmatpush1.bf16.msra.mxu0 0
        %3046 = vmatprep.subr.bf16.mxu0 0
        %3047 = vmatpush1.bf16.msra.mxu0 0
        %3048 = vmatprep.subr.bf16.mxu0 0
        %3049 = vmatpush1.bf16.msra.mxu0 0
        %3050 = vmatprep.subr.bf16.mxu0 0
        %3051 = vmatpush1.bf16.msra.mxu0 0
        %3052 = vmatprep.subr.bf16.mxu0 0
        %3053 = vmatpush1.bf16.msra.mxu0 0
        %3054 = vmatprep.subr.bf16.mxu0 0
        %3055 = vmatpush1.bf16.msra.mxu0 0
        %3056 = vmatprep.subr.bf16.mxu0 0
        %3057 = vmatpush1.bf16.msra.mxu0 0
        %3058 = vmatprep.subr.bf16.mxu0 0
        %3059 = vmatpush1.bf16.msra.mxu0 0
        %3060 = vmatprep.subr.bf16.mxu0 0
        %3061 = vmatpush1.bf16.msra.mxu0 0
        %3062 = vmatprep.subr.bf16.mxu0 0
        %3063 = vmatpush1.bf16.msra.mxu0 0
        %3064 = vmatprep.subr.bf16.mxu0 0
        %3065 = vmatpush1.bf16.msra.mxu0 0
        %3066 = vmatprep.subr.bf16.mxu0 0
        %3067 = vmatpush1.bf16.msra.mxu0 0
        %3068 = vmatprep.subr.bf16.mxu0 0
        %3069 = vmatpush1.bf16.msra.mxu0 0
        %3070 = vmatprep.mubr.bf16.mxu0 0
        %3071 = vmatmul.mubr.bf16.gmra.mrb[0].mxu0 %v2486
        %v3072 = vpop.f32.mrb[0].mxu0
        %v3073 = vadd.f32 %v3024, %v3072
        %v3074 = vpop.f32.mrb[0].mxu0
        %v3075 = vpop.f32.mrb[0].mxu0
        %v3076 = vpop.f32.mrb[0].mxu0
        %3077 = vdwg.mxu0
        %v3078 = vmax.f32 %v3073, 0.0
        %v3079 = vld [vmem:[#allocation27] sm:$0xf]
        %v3080 = vld [vmem:[#allocation27 + $0x4] sm:$0xf]
        %v3081 = vld [vmem:[#allocation27 + $0x8] sm:$0xf]
        %v3082 = vld [vmem:[#allocation27 + $0xc] sm:$0xf]
        %v3083 = vpack.c.bf16 %v3078, %v3078
        %v3084 = vld [vmem:[#allocation28] sm:$0x1]
        %v3086 = vlaneseq
        %v3087 = vshrl.u32 %v3086, 7
        %v3088 = vsub.s32 0, %v3087
        %v3089 = vrot.slane %v3084, %v3088
        %v3095 = vunpack.c.l.b16 %v3079
        %v3096 = vunpack.c.l.b16 %v3080
        %v3097 = vunpack.c.l.b16 %v3081
        %v3098 = vunpack.c.l.b16 %v3082
        %v3099 = vpack.c.b16 %v3096, %v3095
        %v3100 = vpack.c.b16 %v3098, %v3097
        %v3104 = vsel %vm2484, %v3083, 0
        %3106 = vmatprep.subr.bf16.mxu0 0
        %3107 = vmatpush1.bf16.msra.mxu0 %v3099
        %3108 = vmatprep.subr.bf16.mxu0 0
        %3109 = vmatpush1.bf16.msra.mxu0 %v3100
        %3110 = vmatprep.subr.bf16.mxu0 0
        %3111 = vmatpush1.bf16.msra.mxu0 0
        %3112 = vmatprep.subr.bf16.mxu0 0
        %3113 = vmatpush1.bf16.msra.mxu0 0
        %3114 = vmatprep.subr.bf16.mxu0 0
        %3115 = vmatpush1.bf16.msra.mxu0 0
        %3116 = vmatprep.subr.bf16.mxu0 0
        %3117 = vmatpush1.bf16.msra.mxu0 0
        %3118 = vmatprep.subr.bf16.mxu0 0
        %3119 = vmatpush1.bf16.msra.mxu0 0
        %3120 = vmatprep.subr.bf16.mxu0 0
        %3121 = vmatpush1.bf16.msra.mxu0 0
        %3122 = vmatprep.subr.bf16.mxu0 0
        %3123 = vmatpush1.bf16.msra.mxu0 0
        %3124 = vmatprep.subr.bf16.mxu0 0
        %3125 = vmatpush1.bf16.msra.mxu0 0
        %3126 = vmatprep.subr.bf16.mxu0 0
        %3127 = vmatpush1.bf16.msra.mxu0 0
        %3128 = vmatprep.subr.bf16.mxu0 0
        %3129 = vmatpush1.bf16.msra.mxu0 0
        %3130 = vmatprep.subr.bf16.mxu0 0
        %3131 = vmatpush1.bf16.msra.mxu0 0
        %3132 = vmatprep.subr.bf16.mxu0 0
        %3133 = vmatpush1.bf16.msra.mxu0 0
        %3134 = vmatprep.subr.bf16.mxu0 0
        %3135 = vmatpush1.bf16.msra.mxu0 0
        %3136 = vmatprep.subr.bf16.mxu0 0
        %3137 = vmatpush1.bf16.msra.mxu0 0
        %3138 = vmatprep.mubr.bf16.mxu0 0
        %3139 = vmatmul.mubr.bf16.gmra.mrb[0].mxu0 %v3104
        %v3140 = vpop.f32.mrb[0].mxu0
        %v3141 = vadd.f32 %v3089, %v3140
        %v3142 = vpop.f32.mrb[0].mxu0
        %v3143 = vpop.f32.mrb[0].mxu0
        %v3144 = vpop.f32.mrb[0].mxu0
        %3145 = vdwg.mxu0
        %v3146 = vmax.f32 %v3141, 0.0
        %vm3147 = vcmp.ne.f32.partialorder %v3141, %v3141
        %v3148 = vadd.f32 %v3141, 0.0
        %v3149 = vand.u32 2147483647, %v3141
        %v3150 = vsub.f32 0.0, %v3149
        %v3151 = vmul.f32 %v3150, 1.442695
        %v3152 = vpow.pop %v3151
        %v3153 = vadd.f32 %v3152, 1.0
        %v3154 = vlog2.pop %v3153
        %v3155 = vmul.f32 %v3154, 0.6931472
        %v3156 = vmul.f32 -0.5, %v3152
        %v3157 = vadd.f32 %v3156, 1.0
        %v3158 = vmul.f32 %v3157, %v3152
        %v3159 = vand.u32 2147483647, %v3152
        %vm3160 = vcmp.lt.f32.partialorder %v3159, 0.0004427343
        %v3161 = vsel %vm3160, %v3158, %v3155
        %v3162 = vadd.f32 %v3146, %v3161
        %v3163 = vsel %vm3147, %v3148, %v3162
        %3165 = vrot.lane.b32.xlu0 %v2768, 112
        %v3166 = vpop.permute.xlu0 %3165
        %v3168 = vmul.f32 %v2398, %v3166
        %v3169 = vadd.f32 %v3168, %v2746
        %3171 = vrot.lane.b32.xlu0 %v3014, 112
        %v3172 = vpop.permute.xlu0 %3171
        %v3174 = vmul.f32 %v2399, %v3172
        %v3175 = vadd.f32 %v3174, %v2992
        %v3176 = vld [vmem:[#allocation30] sm:$0xf]
        %v3177 = vld [vmem:[#allocation30 + $0x4] sm:$0xf]
        %v3178 = vpack.c.bf16 %v3169, %v3169
        %v3179 = vld [vmem:[#allocation31] sm:$0x1]
        %v3181 = vlaneseq
        %v3182 = vshrl.u32 %v3181, 7
        %v3183 = vsub.s32 0, %v3182
        %v3184 = vrot.slane %v3179, %v3183
        %v3188 = vunpack.c.l.b16 %v3176
        %v3189 = vunpack.c.l.b16 %v3177
        %v3190 = vpack.c.b16 %v3189, %v3188
        %vm3192 = vcmask 130048
        %v3194 = vsel %vm3192, %v3178, 0
        %3196 = vmatprep.subr.bf16.mxu0 0
        %3197 = vmatpush1.bf16.msra.mxu0 %v3190
        %3198 = vmatprep.subr.bf16.mxu0 0
        %3199 = vmatpush1.bf16.msra.mxu0 0
        %3200 = vmatprep.subr.bf16.mxu0 0
        %3201 = vmatpush1.bf16.msra.mxu0 0
        %3202 = vmatprep.subr.bf16.mxu0 0
        %3203 = vmatpush1.bf16.msra.mxu0 0
        %3204 = vmatprep.subr.bf16.mxu0 0
        %3205 = vmatpush1.bf16.msra.mxu0 0
        %3206 = vmatprep.subr.bf16.mxu0 0
        %3207 = vmatpush1.bf16.msra.mxu0 0
        %3208 = vmatprep.subr.bf16.mxu0 0
        %3209 = vmatpush1.bf16.msra.mxu0 0
        %3210 = vmatprep.subr.bf16.mxu0 0
        %3211 = vmatpush1.bf16.msra.mxu0 0
        %3212 = vmatprep.subr.bf16.mxu0 0
        %3213 = vmatpush1.bf16.msra.mxu0 0
        %3214 = vmatprep.subr.bf16.mxu0 0
        %3215 = vmatpush1.bf16.msra.mxu0 0
        %3216 = vmatprep.subr.bf16.mxu0 0
        %3217 = vmatpush1.bf16.msra.mxu0 0
        %3218 = vmatprep.subr.bf16.mxu0 0
        %3219 = vmatpush1.bf16.msra.mxu0 0
        %3220 = vmatprep.subr.bf16.mxu0 0
        %3221 = vmatpush1.bf16.msra.mxu0 0
        %3222 = vmatprep.subr.bf16.mxu0 0
        %3223 = vmatpush1.bf16.msra.mxu0 0
        %3224 = vmatprep.subr.bf16.mxu0 0
        %3225 = vmatpush1.bf16.msra.mxu0 0
        %3226 = vmatprep.subr.bf16.mxu0 0
        %3227 = vmatpush1.bf16.msra.mxu0 0
        %3228 = vmatprep.mubr.bf16.mxu0 0
        %3229 = vmatmul.mubr.bf16.gmra.mrb[0].mxu0 %v3194
        %v3230 = vpop.f32.mrb[0].mxu0
        %v3231 = vadd.f32 %v3184, %v3230
        %v3232 = vpop.f32.mrb[0].mxu0
        %v3233 = vpop.f32.mrb[0].mxu0
        %v3234 = vpop.f32.mrb[0].mxu0
        %3235 = vdwg.mxu0
        %v3236 = vmax.f32 %v3231, 0.0
        %v3237 = vld [vmem:[#allocation33] sm:$0xff]
        %v3238 = vld [vmem:[#allocation33 + $0x8] sm:$0xff]
        %v3239 = vld [vmem:[#allocation34] sm:$0xff]
        %v3240 = vld [vmem:[#allocation34 + $0x8] sm:$0xff]
        %v3241 = vpack.c.bf16 %v3175, %v3175
        %v3244 = vunpack.c.l.b16 %v3239
        %v3245 = vunpack.c.h.b16 %v3239
        %v3246 = vunpack.c.l.b16 %v3240
        %v3247 = vunpack.c.h.b16 %v3240
        %v3248 = vpack.c.b16 %v3246, %v3244
        %v3249 = vpack.c.b16 %v3247, %v3245
        %v3253 = vsel %vm3192, %v3241, 0
        %3255 = vmatprep.subr.bf16.mxu0 %v3249
        %3256 = vmatpush1.bf16.msra.mxu0 %v3248
        %3257 = vmatprep.subr.bf16.mxu0 0
        %3258 = vmatpush1.bf16.msra.mxu0 0
        %3259 = vmatprep.subr.bf16.mxu0 0
        %3260 = vmatpush1.bf16.msra.mxu0 0
        %3261 = vmatprep.subr.bf16.mxu0 0
        %3262 = vmatpush1.bf16.msra.mxu0 0
        %3263 = vmatprep.subr.bf16.mxu0 0
        %3264 = vmatpush1.bf16.msra.mxu0 0
        %3265 = vmatprep.subr.bf16.mxu0 0
        %3266 = vmatpush1.bf16.msra.mxu0 0
        %3267 = vmatprep.subr.bf16.mxu0 0
        %3268 = vmatpush1.bf16.msra.mxu0 0
        %3269 = vmatprep.subr.bf16.mxu0 0
        %3270 = vmatpush1.bf16.msra.mxu0 0
        %3271 = vmatprep.subr.bf16.mxu0 0
        %3272 = vmatpush1.bf16.msra.mxu0 0
        %3273 = vmatprep.subr.bf16.mxu0 0
        %3274 = vmatpush1.bf16.msra.mxu0 0
        %3275 = vmatprep.subr.bf16.mxu0 0
        %3276 = vmatpush1.bf16.msra.mxu0 0
        %3277 = vmatprep.subr.bf16.mxu0 0
        %3278 = vmatpush1.bf16.msra.mxu0 0
        %3279 = vmatprep.subr.bf16.mxu0 0
        %3280 = vmatpush1.bf16.msra.mxu0 0
        %3281 = vmatprep.subr.bf16.mxu0 0
        %3282 = vmatpush1.bf16.msra.mxu0 0
        %3283 = vmatprep.subr.bf16.mxu0 0
        %3284 = vmatpush1.bf16.msra.mxu0 0
        %3285 = vmatprep.subr.bf16.mxu0 0
        %3286 = vmatpush1.bf16.msra.mxu0 0
        %3287 = vmatprep.mubr.bf16.mxu0 0
        %3288 = vmatmul.mubr.bf16.gmra.mrb[0].mxu0 %v3253
        %v3289 = vpop.f32.mrb[0].mxu0
        %v3290 = vadd.f32 0.0, %v3289
        %v3291 = vpop.f32.mrb[0].mxu0
        %v3292 = vadd.f32 0.0, %v3291
        %v3293 = vpop.f32.mrb[0].mxu0
        %v3294 = vpop.f32.mrb[0].mxu0
        %3295 = vdwg.mxu0
        %v3298 = vunpack.c.l.b16 %v3237
        %v3299 = vunpack.c.h.b16 %v3237
        %v3300 = vunpack.c.l.b16 %v3238
        %v3301 = vunpack.c.h.b16 %v3238
        %v3302 = vpack.c.b16 %v3300, %v3298
        %v3303 = vpack.c.b16 %v3301, %v3299
        %3306 = vmatprep.subr.bf16.mxu0 %v3303
        %3307 = vmatpush1.bf16.msra.mxu0 %v3302
        %3308 = vmatprep.subr.bf16.mxu0 0
        %3309 = vmatpush1.bf16.msra.mxu0 0
        %3310 = vmatprep.subr.bf16.mxu0 0
        %3311 = vmatpush1.bf16.msra.mxu0 0
        %3312 = vmatprep.subr.bf16.mxu0 0
        %3313 = vmatpush1.bf16.msra.mxu0 0
        %3314 = vmatprep.subr.bf16.mxu0 0
        %3315 = vmatpush1.bf16.msra.mxu0 0
        %3316 = vmatprep.subr.bf16.mxu0 0
        %3317 = vmatpush1.bf16.msra.mxu0 0
        %3318 = vmatprep.subr.bf16.mxu0 0
        %3319 = vmatpush1.bf16.msra.mxu0 0
        %3320 = vmatprep.subr.bf16.mxu0 0
        %3321 = vmatpush1.bf16.msra.mxu0 0
        %3322 = vmatprep.subr.bf16.mxu0 0
        %3323 = vmatpush1.bf16.msra.mxu0 0
        %3324 = vmatprep.subr.bf16.mxu0 0
        %3325 = vmatpush1.bf16.msra.mxu0 0
        %3326 = vmatprep.subr.bf16.mxu0 0
        %3327 = vmatpush1.bf16.msra.mxu0 0
        %3328 = vmatprep.subr.bf16.mxu0 0
        %3329 = vmatpush1.bf16.msra.mxu0 0
        %3330 = vmatprep.subr.bf16.mxu0 0
        %3331 = vmatpush1.bf16.msra.mxu0 0
        %3332 = vmatprep.subr.bf16.mxu0 0
        %3333 = vmatpush1.bf16.msra.mxu0 0
        %3334 = vmatprep.subr.bf16.mxu0 0
        %3335 = vmatpush1.bf16.msra.mxu0 0
        %3336 = vmatprep.subr.bf16.mxu0 0
        %3337 = vmatpush1.bf16.msra.mxu0 0
        %3338 = vmatprep.mubr.bf16.mxu0 0
        %3339 = vmatmul.mubr.bf16.gmra.mrb[0].mxu0 %v3194
        %v3340 = vpop.f32.mrb[0].mxu0
        %v3341 = vadd.f32 %v3290, %v3340
        %v3342 = vpop.f32.mrb[0].mxu0
        %v3343 = vadd.f32 %v3292, %v3342
        %v3344 = vpop.f32.mrb[0].mxu0
        %v3345 = vpop.f32.mrb[0].mxu0
        %3346 = vdwg.mxu0
        %v3347 = vld [vmem:[#allocation36] sm:$0x3]
        %v3349 = vlaneseq
        %v3350 = vshrl.u32 %v3349, 7
        %v3351 = vsub.s32 0, %v3350
        %v3352 = vrot.slane %v3347, %v3351
        %v3353 = vlaneseq
        %v3354 = vshrl.u32 %v3353, 7
        %v3355 = vsub.s32 1, %v3354
        %v3356 = vrot.slane %v3347, %v3355
        %v3359 = vadd.f32 %v3341, %v3352
        %v3360 = vadd.f32 %v3343, %v3356
        %vm3361 = vcmp.gt.f32.partialorder %v3359, 0.0
        %vm3362 = vcmp.gt.f32.partialorder %v3360, 0.0
        %v3363 = vmul.f32 %v3359, 0.25
        %v3364 = vmul.f32 %v3360, 0.25
        %v3365 = vsel %vm3361, %v3359, %v3363
        %v3366 = vsel %vm3362, %v3360, %v3364
        %v3367 = vld [vmem:[%s55] sm:$0xf]
        %v3368 = vld [vmem:[%s55 + $0x4] sm:$0xf]
        %v3369 = vld [vmem:[%s55 + $0x8] sm:$0xf]
        %v3370 = vld [vmem:[%s55 + $0xc] sm:$0xf]
        %v3371 = vld [vmem:[%s55 + $0x10] sm:$0xf]
        %v3372 = vld [vmem:[%s55 + $0x14] sm:$0xf]
        %v3373 = vld [vmem:[%s55 + $0x18] sm:$0xf]
        %v3374 = vld [vmem:[%s55 + $0x1c] sm:$0xf]
        %v3375 = vld [vmem:[%s55 + $0x20] sm:$0xf]
        %v3376 = vld [vmem:[%s55 + $0x24] sm:$0xf]
        %v3377 = vld [vmem:[%s55 + $0x28] sm:$0xf]
        %v3378 = vld [vmem:[%s55 + $0x2c] sm:$0xf]
        %v3379 = vld [vmem:[%s55 + $0x30] sm:$0xf]
        %v3380 = vld [vmem:[%s55 + $0x34] sm:$0xf]
        %v3381 = vld [vmem:[%s55 + $0x38] sm:$0xf]
        %v3382 = vld [vmem:[%s55 + $0x3c] sm:$0xf]
        %v3383 = vld [vmem:[%s55 + $0x40] sm:$0xf]
        %v3384 = vld [vmem:[%s55 + $0x44] sm:$0xf]
        %v3385 = vld [vmem:[%s55 + $0x48] sm:$0xf]
        %v3386 = vld [vmem:[%s55 + $0x4c] sm:$0xf]
        %v3387 = vld [vmem:[%s55 + $0x50] sm:$0xf]
        %v3388 = vld [vmem:[%s55 + $0x54] sm:$0xf]
        %v3389 = vld [vmem:[%s55 + $0x58] sm:$0xf]
        %v3390 = vld [vmem:[%s55 + $0x5c] sm:$0xf]
        %v3391 = vld [vmem:[%s55 + $0x60] sm:$0xf]
        %v3392 = vld [vmem:[%s55 + $0x64] sm:$0xf]
        %v3393 = vld [vmem:[%s55 + $0x68] sm:$0xf]
        %v3394 = vld [vmem:[%s55 + $0x6c] sm:$0xf]
        %v3395 = vld [vmem:[%s55 + $0x70] sm:$0xf]
        %v3396 = vld [vmem:[%s55 + $0x74] sm:$0xf]
        %v3397 = vld [vmem:[%s55 + $0x78] sm:$0xf]
        %v3398 = vld [vmem:[%s55 + $0x7c] sm:$0xf]
        %v3399 = vpack.c.bf16 %v3365, %v3365
        %v3400 = vpack.c.bf16 %v3366, %v3366
        %v3401 = vld [vmem:[#allocation37] sm:$0x1]
        %v3403 = vlaneseq
        %v3404 = vshrl.u32 %v3403, 7
        %v3405 = vsub.s32 0, %v3404
        %v3406 = vrot.slane %v3401, %v3405
        %v3440 = vunpack.c.l.b16 %v3367
        %v3441 = vunpack.c.l.b16 %v3368
        %v3442 = vunpack.c.l.b16 %v3369
        %v3443 = vunpack.c.l.b16 %v3370
        %v3444 = vunpack.c.l.b16 %v3371
        %v3445 = vunpack.c.l.b16 %v3372
        %v3446 = vunpack.c.l.b16 %v3373
        %v3447 = vunpack.c.l.b16 %v3374
        %v3448 = vunpack.c.l.b16 %v3375
        %v3449 = vunpack.c.l.b16 %v3376
        %v3450 = vunpack.c.l.b16 %v3377
        %v3451 = vunpack.c.l.b16 %v3378
        %v3452 = vunpack.c.l.b16 %v3379
        %v3453 = vunpack.c.l.b16 %v3380
        %v3454 = vunpack.c.l.b16 %v3381
        %v3455 = vunpack.c.l.b16 %v3382
        %v3456 = vunpack.c.l.b16 %v3383
        %v3457 = vunpack.c.l.b16 %v3384
        %v3458 = vunpack.c.l.b16 %v3385
        %v3459 = vunpack.c.l.b16 %v3386
        %v3460 = vunpack.c.l.b16 %v3387
        %v3461 = vunpack.c.l.b16 %v3388
        %v3462 = vunpack.c.l.b16 %v3389
        %v3463 = vunpack.c.l.b16 %v3390
        %v3464 = vunpack.c.l.b16 %v3391
        %v3465 = vunpack.c.l.b16 %v3392
        %v3466 = vunpack.c.l.b16 %v3393
        %v3467 = vunpack.c.l.b16 %v3394
        %v3468 = vunpack.c.l.b16 %v3395
        %v3469 = vunpack.c.l.b16 %v3396
        %v3470 = vunpack.c.l.b16 %v3397
        %v3471 = vunpack.c.l.b16 %v3398
        %v3472 = vpack.c.b16 %v3441, %v3440
        %v3473 = vpack.c.b16 %v3443, %v3442
        %v3474 = vpack.c.b16 %v3445, %v3444
        %v3475 = vpack.c.b16 %v3447, %v3446
        %v3476 = vpack.c.b16 %v3449, %v3448
        %v3477 = vpack.c.b16 %v3451, %v3450
        %v3478 = vpack.c.b16 %v3453, %v3452
        %v3479 = vpack.c.b16 %v3455, %v3454
        %v3480 = vpack.c.b16 %v3457, %v3456
        %v3481 = vpack.c.b16 %v3459, %v3458
        %v3482 = vpack.c.b16 %v3461, %v3460
        %v3483 = vpack.c.b16 %v3463, %v3462
        %v3484 = vpack.c.b16 %v3465, %v3464
        %v3485 = vpack.c.b16 %v3467, %v3466
        %v3486 = vpack.c.b16 %v3469, %v3468
        %v3487 = vpack.c.b16 %v3471, %v3470
        %3504 = vmatprep.subr.bf16.mxu0 0
        %3505 = vmatpush1.bf16.msra.mxu0 %v3472
        %3506 = vmatprep.subr.bf16.mxu0 0
        %3507 = vmatpush1.bf16.msra.mxu0 %v3473
        %3508 = vmatprep.subr.bf16.mxu0 0
        %3509 = vmatpush1.bf16.msra.mxu0 %v3474
        %3510 = vmatprep.subr.bf16.mxu0 0
        %3511 = vmatpush1.bf16.msra.mxu0 %v3475
        %3512 = vmatprep.subr.bf16.mxu0 0
        %3513 = vmatpush1.bf16.msra.mxu0 %v3476
        %3514 = vmatprep.subr.bf16.mxu0 0
        %3515 = vmatpush1.bf16.msra.mxu0 %v3477
        %3516 = vmatprep.subr.bf16.mxu0 0
        %3517 = vmatpush1.bf16.msra.mxu0 %v3478
        %3518 = vmatprep.subr.bf16.mxu0 0
        %3519 = vmatpush1.bf16.msra.mxu0 %v3479
        %3520 = vmatprep.subr.bf16.mxu0 0
        %3521 = vmatpush1.bf16.msra.mxu0 %v3480
        %3522 = vmatprep.subr.bf16.mxu0 0
        %3523 = vmatpush1.bf16.msra.mxu0 %v3481
        %3524 = vmatprep.subr.bf16.mxu0 0
        %3525 = vmatpush1.bf16.msra.mxu0 %v3482
        %3526 = vmatprep.subr.bf16.mxu0 0
        %3527 = vmatpush1.bf16.msra.mxu0 %v3483
        %3528 = vmatprep.subr.bf16.mxu0 0
        %3529 = vmatpush1.bf16.msra.mxu0 %v3484
        %3530 = vmatprep.subr.bf16.mxu0 0
        %3531 = vmatpush1.bf16.msra.mxu0 %v3485
        %3532 = vmatprep.subr.bf16.mxu0 0
        %3533 = vmatpush1.bf16.msra.mxu0 %v3486
        %3534 = vmatprep.subr.bf16.mxu0 0
        %3535 = vmatpush1.bf16.msra.mxu0 %v3487
        %3536 = vmatprep.mubr.bf16.mxu0 %v3400
        %3537 = vmatmul.mubr.bf16.gmra.mrb[0].mxu0 %v3399
        %v3538 = vpop.f32.mrb[0].mxu0
        %v3539 = vadd.f32 %v3406, %v3538
        %v3540 = vpop.f32.mrb[0].mxu0
        %v3541 = vpop.f32.mrb[0].mxu0
        %v3542 = vpop.f32.mrb[0].mxu0
        %3543 = vdwg.mxu0
        %vm3544 = vcmp.gt.f32.partialorder %v3539, 0.0
        %v3545 = vmul.f32 %v3539, 0.25
        %v3546 = vsel %vm3544, %v3539, %v3545
        %v3547 = vld [vmem:[#allocation67] sm:$0x1]
        %v3548 = vadd.f32 %v2768, 1e-10
        %v3549 = vadd.f32 %v3163, 1e-10
        %v3550 = vsub.f32 %v2746, %v3141
        %v3551 = vrcp.pop %v3548
        %v3552 = vmul.f32 %v3549, %v3551
        %v3553 = vlog2.pop %v3552
        %v3554 = vmul.f32 %v3553, 0.6931472
        %v3555 = vmul.f32 %v3554, 2.0
        %v3556 = vmul.f32 %v3548, %v3548
        %v3557 = vmul.f32 %v3550, %v3550
        %3559 = vrot.lane.b32.xlu0 %v3557, 16
        %v3560 = vpop.permute.xlu0 %3559
        %v3562 = vadd.f32 %v3556, %v3560
        %v3563 = vmul.f32 %v3549, %v3549
        %v3564 = vrcp.pop %v3563
        %v3565 = vmul.f32 %v3562, %v3564
        %v3566 = vadd.f32 %v3555, %v3565
        %v3567 = vsub.f32 %v3566, 1.0
        %3569 = vrot.lane.b32.xlu0 %v3567, 112
        %v3570 = vpop.permute.xlu0 %3569
        %v3572 = vsel %vm3192, %v3570, 0.0
        %3573 = vadd.xlane.f32.xlu0 %v3572
        %v3574 = vpop.xlane.xlu0 %3573
        %v3575 = vrot.slane %v3574, 4
        %v3576 = vadd.f32 %v3574, %v3575
        %v3577 = vrot.slane %v3576, 2
        %v3578 = vadd.f32 %v3576, %v3577
        %v3579 = vrot.slane %v3578, 1
        %v3580 = vadd.f32 %v3578, %v3579
        %s3581 = vtos %v3580
        %v3582 = vstv %s3581
        %v3583 = vmul.f32 %v3582, 0.0078125
        %v3584 = vadd.f32 %v3547, %v3583
        %vm3585 = vcmask 0
        %3586 = vst.msk [vmem:[#allocation67] sm:$0x1] %vm3585, %v3584
        %v3587 = vld [vmem:[#allocation68] sm:$0x1]
        %v3588 = vadd.f32 %v3014, 1e-10
        %v3589 = vsub.f32 %v2992, %v3141
        %v3590 = vrcp.pop %v3588
        %v3591 = vmul.f32 %v3549, %v3590
        %v3592 = vlog2.pop %v3591
        %v3593 = vmul.f32 %v3592, 0.6931472
        %v3594 = vmul.f32 %v3593, 2.0
        %v3595 = vmul.f32 %v3588, %v3588
        %v3596 = vmul.f32 %v3589, %v3589
        %3598 = vrot.lane.b32.xlu0 %v3596, 16
        %v3599 = vpop.permute.xlu0 %3598
        %v3601 = vadd.f32 %v3595, %v3599
        %v3602 = vmul.f32 %v3601, %v3564
        %v3603 = vadd.f32 %v3594, %v3602
        %v3604 = vsub.f32 %v3603, 1.0
        %3606 = vrot.lane.b32.xlu0 %v3604, 112
        %v3607 = vpop.permute.xlu0 %3606
        %v3609 = vsel %vm3192, %v3607, 0.0
        %3610 = vadd.xlane.f32.xlu0 %v3609
        %v3611 = vpop.xlane.xlu0 %3610
        %v3612 = vrot.slane %v3611, 4
        %v3613 = vadd.f32 %v3611, %v3612
        %v3614 = vrot.slane %v3613, 2
        %v3615 = vadd.f32 %v3613, %v3614
        %v3616 = vrot.slane %v3615, 1
        %v3617 = vadd.f32 %v3615, %v3616
        %s3618 = vtos %v3617
        %v3619 = vstv %s3618
        %v3620 = vmul.f32 %v3619, 0.0078125
        %v3621 = vmul.f32 %v3620, 0.2
        %v3622 = vadd.f32 %v3587, %v3621
        %3623 = vst.msk [vmem:[#allocation68] sm:$0x1] %vm3585, %v3622
        %v3624 = vld [vmem:[%s59] sm:$0xff]
        %v3625 = vld [vmem:[%s59 + $0x8] sm:$0xff]
        %v3626 = vld [vmem:[%s59 + $0x10] sm:$0xff]
        %v3627 = vld [vmem:[%s59 + $0x18] sm:$0xff]
        %v3628 = vld [vmem:[%s59 + $0x20] sm:$0xff]
        %v3629 = vld [vmem:[%s59 + $0x28] sm:$0xff]
        %v3630 = vld [vmem:[%s59 + $0x30] sm:$0xff]
        %v3631 = vld [vmem:[%s59 + $0x38] sm:$0xff]
        %v3632 = vpack.c.bf16 %v3546, %v3546
        %3634 = vrot.lane.b32.xlu0 %v3632, 64
        %v3635 = vpop.permute.xlu0 %3634
        %v3644 = vunpack.c.l.b16 %v3624
        %v3645 = vunpack.c.h.b16 %v3624
        %v3646 = vunpack.c.l.b16 %v3625
        %v3647 = vunpack.c.h.b16 %v3625
        %v3648 = vunpack.c.l.b16 %v3626
        %v3649 = vunpack.c.h.b16 %v3626
        %v3650 = vunpack.c.l.b16 %v3627
        %v3651 = vunpack.c.h.b16 %v3627
        %v3652 = vunpack.c.l.b16 %v3628
        %v3653 = vunpack.c.h.b16 %v3628
        %v3654 = vunpack.c.l.b16 %v3629
        %v3655 = vunpack.c.h.b16 %v3629
        %v3656 = vunpack.c.l.b16 %v3630
        %v3657 = vunpack.c.h.b16 %v3630
        %v3658 = vunpack.c.l.b16 %v3631
        %v3659 = vunpack.c.h.b16 %v3631
        %v3660 = vpack.c.b16 %v3646, %v3644
        %v3661 = vpack.c.b16 %v3647, %v3645
        %v3662 = vpack.c.b16 %v3650, %v3648
        %v3663 = vpack.c.b16 %v3651, %v3649
        %v3664 = vpack.c.b16 %v3654, %v3652
        %v3665 = vpack.c.b16 %v3655, %v3653
        %v3666 = vpack.c.b16 %v3658, %v3656
        %v3667 = vpack.c.b16 %v3659, %v3657
        %vm3676 = vcmask 523264
        %v3678 = vsel %vm3676, %v3635, 0
        %3680 = vmatprep.subr.bf16.mxu0 %v3661
        %3681 = vmatpush1.bf16.msra.mxu0 %v3660
        %3682 = vmatprep.subr.bf16.mxu0 %v3663
        %3683 = vmatpush1.bf16.msra.mxu0 %v3662
        %3684 = vmatprep.subr.bf16.mxu0 %v3665
        %3685 = vmatpush1.bf16.msra.mxu0 %v3664
        %3686 = vmatprep.subr.bf16.mxu0 %v3667
        %3687 = vmatpush1.bf16.msra.mxu0 %v3666
        %3688 = vmatprep.subr.bf16.mxu0 0
        %3689 = vmatpush1.bf16.msra.mxu0 0
        %3690 = vmatprep.subr.bf16.mxu0 0
        %3691 = vmatpush1.bf16.msra.mxu0 0
        %3692 = vmatprep.subr.bf16.mxu0 0
        %3693 = vmatpush1.bf16.msra.mxu0 0
        %3694 = vmatprep.subr.bf16.mxu0 0
        %3695 = vmatpush1.bf16.msra.mxu0 0
        %3696 = vmatprep.subr.bf16.mxu0 0
        %3697 = vmatpush1.bf16.msra.mxu0 0
        %3698 = vmatprep.subr.bf16.mxu0 0
        %3699 = vmatpush1.bf16.msra.mxu0 0
        %3700 = vmatprep.subr.bf16.mxu0 0
        %3701 = vmatpush1.bf16.msra.mxu0 0
        %3702 = vmatprep.subr.bf16.mxu0 0
        %3703 = vmatpush1.bf16.msra.mxu0 0
        %3704 = vmatprep.subr.bf16.mxu0 0
        %3705 = vmatpush1.bf16.msra.mxu0 0
        %3706 = vmatprep.subr.bf16.mxu0 0
        %3707 = vmatpush1.bf16.msra.mxu0 0
        %3708 = vmatprep.subr.bf16.mxu0 0
        %3709 = vmatpush1.bf16.msra.mxu0 0
        %3710 = vmatprep.subr.bf16.mxu0 0
        %3711 = vmatpush1.bf16.msra.mxu0 0
        %3712 = vmatprep.mubr.bf16.mxu0 0
        %3713 = vmatmul.mubr.bf16.gmra.mrb[0].mxu0 %v3678
        %v3714 = vpop.f32.mrb[0].mxu0
        %v3715 = vadd.f32 0.0, %v3714
        %v3716 = vpop.f32.mrb[0].mxu0
        %v3717 = vadd.f32 0.0, %v3716
        %v3718 = vpop.f32.mrb[0].mxu0
        %v3719 = vpop.f32.mrb[0].mxu0
        %3720 = vdwg.mxu0
        %v3721 = vld [vmem:[#allocation39] sm:$0xff]
        %v3722 = vld [vmem:[#allocation39 + $0x8] sm:$0xff]
        %v3723 = vld [vmem:[#allocation39 + $0x10] sm:$0xff]
        %v3724 = vld [vmem:[#allocation39 + $0x18] sm:$0xff]
        %v3725 = vld [vmem:[#allocation39 + $0x20] sm:$0xff]
        %v3726 = vld [vmem:[#allocation39 + $0x28] sm:$0xff]
        %v3727 = vld [vmem:[#allocation39 + $0x30] sm:$0xff]
        %v3728 = vld [vmem:[#allocation39 + $0x38] sm:$0xff]
        %v3729 = vld [vmem:[#allocation40] sm:$0x3]
        %v3731 = vlaneseq
        %v3732 = vshrl.u32 %v3731, 7
        %v3733 = vsub.s32 0, %v3732
        %v3734 = vrot.slane %v3729, %v3733
        %v3735 = vlaneseq
        %v3736 = vshrl.u32 %v3735, 7
        %v3737 = vsub.s32 1, %v3736
        %v3738 = vrot.slane %v3729, %v3737
        %v3749 = vunpack.c.l.b16 %v3721
        %v3750 = vunpack.c.h.b16 %v3721
        %v3751 = vunpack.c.l.b16 %v3722
        %v3752 = vunpack.c.h.b16 %v3722
        %v3753 = vunpack.c.l.b16 %v3723
        %v3754 = vunpack.c.h.b16 %v3723
        %v3755 = vunpack.c.l.b16 %v3724
        %v3756 = vunpack.c.h.b16 %v3724
        %v3757 = vunpack.c.l.b16 %v3725
        %v3758 = vunpack.c.h.b16 %v3725
        %v3759 = vunpack.c.l.b16 %v3726
        %v3760 = vunpack.c.h.b16 %v3726
        %v3761 = vunpack.c.l.b16 %v3727
        %v3762 = vunpack.c.h.b16 %v3727
        %v3763 = vunpack.c.l.b16 %v3728
        %v3764 = vunpack.c.h.b16 %v3728
        %v3765 = vpack.c.b16 %v3751, %v3749
        %v3766 = vpack.c.b16 %v3752, %v3750
        %v3767 = vpack.c.b16 %v3755, %v3753
        %v3768 = vpack.c.b16 %v3756, %v3754
        %v3769 = vpack.c.b16 %v3759, %v3757
        %v3770 = vpack.c.b16 %v3760, %v3758
        %v3771 = vpack.c.b16 %v3763, %v3761
        %v3772 = vpack.c.b16 %v3764, %v3762
        %v3782 = vsel %vm3676, %v3632, 0
        %3784 = vmatprep.subr.bf16.mxu0 %v3766
        %3785 = vmatpush1.bf16.msra.mxu0 %v3765
        %3786 = vmatprep.subr.bf16.mxu0 %v3768
        %3787 = vmatpush1.bf16.msra.mxu0 %v3767
        %3788 = vmatprep.subr.bf16.mxu0 %v3770
        %3789 = vmatpush1.bf16.msra.mxu0 %v3769
        %3790 = vmatprep.subr.bf16.mxu0 %v3772
        %3791 = vmatpush1.bf16.msra.mxu0 %v3771
        %3792 = vmatprep.subr.bf16.mxu0 0
        %3793 = vmatpush1.bf16.msra.mxu0 0
        %3794 = vmatprep.subr.bf16.mxu0 0
        %3795 = vmatpush1.bf16.msra.mxu0 0
        %3796 = vmatprep.subr.bf16.mxu0 0
        %3797 = vmatpush1.bf16.msra.mxu0 0
        %3798 = vmatprep.subr.bf16.mxu0 0
        %3799 = vmatpush1.bf16.msra.mxu0 0
        %3800 = vmatprep.subr.bf16.mxu0 0
        %3801 = vmatpush1.bf16.msra.mxu0 0
        %3802 = vmatprep.subr.bf16.mxu0 0
        %3803 = vmatpush1.bf16.msra.mxu0 0
        %3804 = vmatprep.subr.bf16.mxu0 0
        %3805 = vmatpush1.bf16.msra.mxu0 0
        %3806 = vmatprep.subr.bf16.mxu0 0
        %3807 = vmatpush1.bf16.msra.mxu0 0
        %3808 = vmatprep.subr.bf16.mxu0 0
        %3809 = vmatpush1.bf16.msra.mxu0 0
        %3810 = vmatprep.subr.bf16.mxu0 0
        %3811 = vmatpush1.bf16.msra.mxu0 0
        %3812 = vmatprep.subr.bf16.mxu0 0
        %3813 = vmatpush1.bf16.msra.mxu0 0
        %3814 = vmatprep.subr.bf16.mxu0 0
        %3815 = vmatpush1.bf16.msra.mxu0 0
        %3816 = vmatprep.mubr.bf16.mxu0 0
        %3817 = vmatmul.mubr.bf16.gmra.mrb[0].mxu0 %v3782
        %v3818 = vpop.f32.mrb[0].mxu0
        %v3819 = vadd.f32 %v3734, %v3818
        %v3820 = vpop.f32.mrb[0].mxu0
        %v3821 = vadd.f32 %v3738, %v3820
        %v3822 = vpop.f32.mrb[0].mxu0
        %v3823 = vpop.f32.mrb[0].mxu0
        %3824 = vdwg.mxu0
        %v3827 = vcombine.low %v3715, %v3717
        %v3828 = vcombine.high %v3715, %v3717
        %v3830 = vunpack.c.l.s4 1966171168
        %v3831 = vunpack.c.0.s8 %v3830
        %v3832 = vlaneseq
        %v3833 = vshrl.u32 %v3832, 7
        %v3834 = vsub.s32 %v3831, %v3833
        %v3835 = vrot.slane %v3827, %v3834
        %v3837 = vunpack.c.l.s4 1966171168
        %v3838 = vunpack.c.0.s8 %v3837
        %v3839 = vlaneseq
        %v3840 = vshrl.u32 %v3839, 7
        %v3841 = vsub.s32 %v3838, %v3840
        %v3842 = vrot.slane %v3828, %v3841
        %v3843 = vcombine.high %v3835, %v3835
        %v3844 = vcombine.high %v3842, %v3842
        %v3846 = vunpack.c.l.s4 1966171168
        %v3847 = vunpack.c.0.s8 %v3846
        %v3848 = vlaneseq
        %v3849 = vshrl.u32 %v3848, 7
        %v3850 = vsub.s32 %v3847, %v3849
        %v3851 = vrot.slane %v3835, %v3850
        %v3853 = vunpack.c.l.s4 1966171168
        %v3854 = vunpack.c.0.s8 %v3853
        %v3855 = vlaneseq
        %v3856 = vshrl.u32 %v3855, 7
        %v3857 = vsub.s32 %v3854, %v3856
        %v3858 = vrot.slane %v3842, %v3857
        %v3860 = vunpack.c.l.s4 1966171168
        %v3861 = vunpack.c.0.s8 %v3860
        %v3862 = vlaneseq
        %v3863 = vshrl.u32 %v3862, 7
        %v3864 = vsub.s32 %v3861, %v3863
        %v3865 = vrot.slane %v3843, %v3864
        %v3867 = vunpack.c.l.s4 1966171168
        %v3868 = vunpack.c.0.s8 %v3867
        %v3869 = vlaneseq
        %v3870 = vshrl.u32 %v3869, 7
        %v3871 = vsub.s32 %v3868, %v3870
        %v3872 = vrot.slane %v3844, %v3871
        %v3873 = vcombine.high %v3851, %v3851
        %v3874 = vcombine.high %v3858, %v3858
        %v3875 = vcombine.high %v3865, %v3865
        %v3876 = vcombine.high %v3872, %v3872
        %v3877 = vlaneseq
        %v3878 = vshrl.u32 %v3877, 7
        %v3879 = vsub.s32 0, %v3878
        %v3880 = vrot.slane %v3851, %v3879
        %v3881 = vlaneseq
        %v3882 = vshrl.u32 %v3881, 7
        %v3883 = vsub.s32 1, %v3882
        %v3884 = vrot.slane %v3851, %v3883
        %v3885 = vlaneseq
        %v3886 = vshrl.u32 %v3885, 7
        %v3887 = vsub.s32 0, %v3886
        %v3888 = vrot.slane %v3865, %v3887
        %v3889 = vlaneseq
        %v3890 = vshrl.u32 %v3889, 7
        %v3891 = vsub.s32 1, %v3890
        %v3892 = vrot.slane %v3865, %v3891
        %v3893 = vlaneseq
        %v3894 = vshrl.u32 %v3893, 7
        %v3895 = vsub.s32 0, %v3894
        %v3896 = vrot.slane %v3873, %v3895
        %v3897 = vlaneseq
        %v3898 = vshrl.u32 %v3897, 7
        %v3899 = vsub.s32 1, %v3898
        %v3900 = vrot.slane %v3873, %v3899
        %v3901 = vlaneseq
        %v3902 = vshrl.u32 %v3901, 7
        %v3903 = vsub.s32 0, %v3902
        %v3904 = vrot.slane %v3875, %v3903
        %v3905 = vlaneseq
        %v3906 = vshrl.u32 %v3905, 7
        %v3907 = vsub.s32 1, %v3906
        %v3908 = vrot.slane %v3875, %v3907
        %v3909 = vlaneseq
        %v3910 = vshrl.u32 %v3909, 7
        %v3911 = vsub.s32 0, %v3910
        %v3912 = vrot.slane %v3858, %v3911
        %v3913 = vlaneseq
        %v3914 = vshrl.u32 %v3913, 7
        %v3915 = vsub.s32 1, %v3914
        %v3916 = vrot.slane %v3858, %v3915
        %v3917 = vlaneseq
        %v3918 = vshrl.u32 %v3917, 7
        %v3919 = vsub.s32 0, %v3918
        %v3920 = vrot.slane %v3872, %v3919
        %v3921 = vlaneseq
        %v3922 = vshrl.u32 %v3921, 7
        %v3923 = vsub.s32 1, %v3922
        %v3924 = vrot.slane %v3872, %v3923
        %v3925 = vlaneseq
        %v3926 = vshrl.u32 %v3925, 7
        %v3927 = vsub.s32 0, %v3926
        %v3928 = vrot.slane %v3874, %v3927
        %v3929 = vlaneseq
        %v3930 = vshrl.u32 %v3929, 7
        %v3931 = vsub.s32 1, %v3930
        %v3932 = vrot.slane %v3874, %v3931
        %v3933 = vlaneseq
        %v3934 = vshrl.u32 %v3933, 7
        %v3935 = vsub.s32 0, %v3934
        %v3936 = vrot.slane %v3876, %v3935
        %v3937 = vlaneseq
        %v3938 = vshrl.u32 %v3937, 7
        %v3939 = vsub.s32 1, %v3938
        %v3940 = vrot.slane %v3876, %v3939
        %v3957 = vadd.f32 %v3880, %v3819
        %v3958 = vadd.f32 %v3884, %v3821
        %v3959 = vadd.f32 %v3888, %v3819
        %v3960 = vadd.f32 %v3892, %v3821
        %v3961 = vadd.f32 %v3896, %v3819
        %v3962 = vadd.f32 %v3900, %v3821
        %v3963 = vadd.f32 %v3904, %v3819
        %v3964 = vadd.f32 %v3908, %v3821
        %v3965 = vadd.f32 %v3912, %v3819
        %v3966 = vadd.f32 %v3916, %v3821
        %v3967 = vadd.f32 %v3920, %v3819
        %v3968 = vadd.f32 %v3924, %v3821
        %v3969 = vadd.f32 %v3928, %v3819
        %v3970 = vadd.f32 %v3932, %v3821
        %v3971 = vadd.f32 %v3936, %v3819
        %v3972 = vadd.f32 %v3940, %v3821
        %vm3973 = vcmp.gt.f32.partialorder %v3957, 0.0
        %vm3974 = vcmp.gt.f32.partialorder %v3958, 0.0
        %vm3975 = vcmp.gt.f32.partialorder %v3959, 0.0
        %vm3976 = vcmp.gt.f32.partialorder %v3960, 0.0
        %vm3977 = vcmp.gt.f32.partialorder %v3961, 0.0
        %vm3978 = vcmp.gt.f32.partialorder %v3962, 0.0
        %vm3979 = vcmp.gt.f32.partialorder %v3963, 0.0
        %vm3980 = vcmp.gt.f32.partialorder %v3964, 0.0
        %vm3981 = vcmp.gt.f32.partialorder %v3965, 0.0
        %vm3982 = vcmp.gt.f32.partialorder %v3966, 0.0
        %vm3983 = vcmp.gt.f32.partialorder %v3967, 0.0
        %vm3984 = vcmp.gt.f32.partialorder %v3968, 0.0
        %vm3985 = vcmp.gt.f32.partialorder %v3969, 0.0
        %vm3986 = vcmp.gt.f32.partialorder %v3970, 0.0
        %vm3987 = vcmp.gt.f32.partialorder %v3971, 0.0
        %vm3988 = vcmp.gt.f32.partialorder %v3972, 0.0
        %v3989 = vmul.f32 %v3957, 0.25
        %v3990 = vmul.f32 %v3958, 0.25
        %v3991 = vmul.f32 %v3959, 0.25
        %v3992 = vmul.f32 %v3960, 0.25
        %v3993 = vmul.f32 %v3961, 0.25
        %v3994 = vmul.f32 %v3962, 0.25
        %v3995 = vmul.f32 %v3963, 0.25
        %v3996 = vmul.f32 %v3964, 0.25
        %v3997 = vmul.f32 %v3965, 0.25
        %v3998 = vmul.f32 %v3966, 0.25
        %v3999 = vmul.f32 %v3967, 0.25
        %v4000 = vmul.f32 %v3968, 0.25
        %v4001 = vmul.f32 %v3969, 0.25
        %v4002 = vmul.f32 %v3970, 0.25
        %v4003 = vmul.f32 %v3971, 0.25
        %v4004 = vmul.f32 %v3972, 0.25
        %v4005 = vsel %vm3973, %v3957, %v3989
        %v4006 = vsel %vm3974, %v3958, %v3990
        %v4007 = vsel %vm3975, %v3959, %v3991
        %v4008 = vsel %vm3976, %v3960, %v3992
        %v4009 = vsel %vm3977, %v3961, %v3993
        %v4010 = vsel %vm3978, %v3962, %v3994
        %v4011 = vsel %vm3979, %v3963, %v3995
        %v4012 = vsel %vm3980, %v3964, %v3996
        %v4013 = vsel %vm3981, %v3965, %v3997
        %v4014 = vsel %vm3982, %v3966, %v3998
        %v4015 = vsel %vm3983, %v3967, %v3999
        %v4016 = vsel %vm3984, %v3968, %v4000
        %v4017 = vsel %vm3985, %v3969, %v4001
        %v4018 = vsel %vm3986, %v3970, %v4002
        %v4019 = vsel %vm3987, %v3971, %v4003
        %v4020 = vsel %vm3988, %v3972, %v4004
        %v4021 = vld [vmem:[%s65] sm:$0xff]
        %v4022 = vld [vmem:[%s65 + $0x8] sm:$0xff]
        %v4023 = vld [vmem:[%s65 + $0x10] sm:$0xff]
        %v4024 = vld [vmem:[%s65 + $0x18] sm:$0xff]
        %v4025 = vld [vmem:[%s65 + $0x20] sm:$0xff]
        %v4026 = vld [vmem:[%s65 + $0x28] sm:$0xff]
        %v4027 = vld [vmem:[%s65 + $0x30] sm:$0xff]
        %v4028 = vld [vmem:[%s65 + $0x38] sm:$0xff]
        %v4029 = vld [vmem:[%s65 + $0x40] sm:$0xff]
        %v4030 = vld [vmem:[%s65 + $0x48] sm:$0xff]
        %v4031 = vld [vmem:[%s65 + $0x50] sm:$0xff]
        %v4032 = vld [vmem:[%s65 + $0x58] sm:$0xff]
        %v4033 = vld [vmem:[%s65 + $0x60] sm:$0xff]
        %v4034 = vld [vmem:[%s65 + $0x68] sm:$0xff]
        %v4035 = vld [vmem:[%s65 + $0x70] sm:$0xff]
        %v4036 = vld [vmem:[%s65 + $0x78] sm:$0xff]
        %v4037 = vld [vmem:[%s65 + $0x80] sm:$0xff]
        %v4038 = vld [vmem:[%s65 + $0x88] sm:$0xff]
        %v4039 = vld [vmem:[%s65 + $0x90] sm:$0xff]
        %v4040 = vld [vmem:[%s65 + $0x98] sm:$0xff]
        %v4041 = vld [vmem:[%s65 + $0xa0] sm:$0xff]
        %v4042 = vld [vmem:[%s65 + $0xa8] sm:$0xff]
        %v4043 = vld [vmem:[%s65 + $0xb0] sm:$0xff]
        %v4044 = vld [vmem:[%s65 + $0xb8] sm:$0xff]
        %v4045 = vld [vmem:[%s65 + $0xc0] sm:$0xff]
        %v4046 = vld [vmem:[%s65 + $0xc8] sm:$0xff]
        %v4047 = vld [vmem:[%s65 + $0xd0] sm:$0xff]
        %v4048 = vld [vmem:[%s65 + $0xd8] sm:$0xff]
        %v4049 = vld [vmem:[%s65 + $0xe0] sm:$0xff]
        %v4050 = vld [vmem:[%s65 + $0xe8] sm:$0xff]
        %v4051 = vld [vmem:[%s65 + $0xf0] sm:$0xff]
        %v4052 = vld [vmem:[%s65 + $0xf8] sm:$0xff]
        %v4053 = vpack.c.bf16 %v4007, %v4005
        %v4054 = vpack.c.bf16 %v4008, %v4006
        %v4055 = vpack.c.bf16 %v4011, %v4009
        %v4056 = vpack.c.bf16 %v4012, %v4010
        %v4057 = vpack.c.bf16 %v4015, %v4013
        %v4058 = vpack.c.bf16 %v4016, %v4014
        %v4059 = vpack.c.bf16 %v4019, %v4017
        %v4060 = vpack.c.bf16 %v4020, %v4018
        %v4061 = vld [vmem:[#allocation42] sm:$0x3]
        %v4063 = vlaneseq
        %v4064 = vshrl.u32 %v4063, 7
        %v4065 = vsub.s32 0, %v4064
        %v4066 = vrot.slane %v4061, %v4065
        %v4067 = vlaneseq
        %v4068 = vshrl.u32 %v4067, 7
        %v4069 = vsub.s32 1, %v4068
        %v4070 = vrot.slane %v4061, %v4069
        %v4105 = vunpack.c.l.b16 %v4021
        %v4106 = vunpack.c.h.b16 %v4021
        %v4107 = vunpack.c.l.b16 %v4022
        %v4108 = vunpack.c.h.b16 %v4022
        %v4109 = vunpack.c.l.b16 %v4023
        %v4110 = vunpack.c.h.b16 %v4023
        %v4111 = vunpack.c.l.b16 %v4024
        %v4112 = vunpack.c.h.b16 %v4024
        %v4113 = vunpack.c.l.b16 %v4025
        %v4114 = vunpack.c.h.b16 %v4025
        %v4115 = vunpack.c.l.b16 %v4026
        %v4116 = vunpack.c.h.b16 %v4026
        %v4117 = vunpack.c.l.b16 %v4027
        %v4118 = vunpack.c.h.b16 %v4027
        %v4119 = vunpack.c.l.b16 %v4028
        %v4120 = vunpack.c.h.b16 %v4028
        %v4121 = vunpack.c.l.b16 %v4029
        %v4122 = vunpack.c.h.b16 %v4029
        %v4123 = vunpack.c.l.b16 %v4030
        %v4124 = vunpack.c.h.b16 %v4030
        %v4125 = vunpack.c.l.b16 %v4031
        %v4126 = vunpack.c.h.b16 %v4031
        %v4127 = vunpack.c.l.b16 %v4032
        %v4128 = vunpack.c.h.b16 %v4032
        %v4129 = vunpack.c.l.b16 %v4033
        %v4130 = vunpack.c.h.b16 %v4033
        %v4131 = vunpack.c.l.b16 %v4034
        %v4132 = vunpack.c.h.b16 %v4034
        %v4133 = vunpack.c.l.b16 %v4035
        %v4134 = vunpack.c.h.b16 %v4035
        %v4135 = vunpack.c.l.b16 %v4036
        %v4136 = vunpack.c.h.b16 %v4036
        %v4137 = vunpack.c.l.b16 %v4037
        %v4138 = vunpack.c.h.b16 %v4037
        %v4139 = vunpack.c.l.b16 %v4038
        %v4140 = vunpack.c.h.b16 %v4038
        %v4141 = vunpack.c.l.b16 %v4039
        %v4142 = vunpack.c.h.b16 %v4039
        %v4143 = vunpack.c.l.b16 %v4040
        %v4144 = vunpack.c.h.b16 %v4040
        %v4145 = vunpack.c.l.b16 %v4041
        %v4146 = vunpack.c.h.b16 %v4041
        %v4147 = vunpack.c.l.b16 %v4042
        %v4148 = vunpack.c.h.b16 %v4042
        %v4149 = vunpack.c.l.b16 %v4043
        %v4150 = vunpack.c.h.b16 %v4043
        %v4151 = vunpack.c.l.b16 %v4044
        %v4152 = vunpack.c.h.b16 %v4044
        %v4153 = vunpack.c.l.b16 %v4045
        %v4154 = vunpack.c.h.b16 %v4045
        %v4155 = vunpack.c.l.b16 %v4046
        %v4156 = vunpack.c.h.b16 %v4046
        %v4157 = vunpack.c.l.b16 %v4047
        %v4158 = vunpack.c.h.b16 %v4047
        %v4159 = vunpack.c.l.b16 %v4048
        %v4160 = vunpack.c.h.b16 %v4048
        %v4161 = vunpack.c.l.b16 %v4049
        %v4162 = vunpack.c.h.b16 %v4049
        %v4163 = vunpack.c.l.b16 %v4050
        %v4164 = vunpack.c.h.b16 %v4050
        %v4165 = vunpack.c.l.b16 %v4051
        %v4166 = vunpack.c.h.b16 %v4051
        %v4167 = vunpack.c.l.b16 %v4052
        %v4168 = vunpack.c.h.b16 %v4052
        %v4169 = vpack.c.b16 %v4107, %v4105
        %v4170 = vpack.c.b16 %v4108, %v4106
        %v4171 = vpack.c.b16 %v4111, %v4109
        %v4172 = vpack.c.b16 %v4112, %v4110
        %v4173 = vpack.c.b16 %v4115, %v4113
        %v4174 = vpack.c.b16 %v4116, %v4114
        %v4175 = vpack.c.b16 %v4119, %v4117
        %v4176 = vpack.c.b16 %v4120, %v4118
        %v4177 = vpack.c.b16 %v4123, %v4121
        %v4178 = vpack.c.b16 %v4124, %v4122
        %v4179 = vpack.c.b16 %v4127, %v4125
        %v4180 = vpack.c.b16 %v4128, %v4126
        %v4181 = vpack.c.b16 %v4131, %v4129
        %v4182 = vpack.c.b16 %v4132, %v4130
        %v4183 = vpack.c.b16 %v4135, %v4133
        %v4184 = vpack.c.b16 %v4136, %v4134
        %v4185 = vpack.c.b16 %v4139, %v4137
        %v4186 = vpack.c.b16 %v4140, %v4138
        %v4187 = vpack.c.b16 %v4143, %v4141
        %v4188 = vpack.c.b16 %v4144, %v4142
        %v4189 = vpack.c.b16 %v4147, %v4145
        %v4190 = vpack.c.b16 %v4148, %v4146
        %v4191 = vpack.c.b16 %v4151, %v4149
        %v4192 = vpack.c.b16 %v4152, %v4150
        %v4193 = vpack.c.b16 %v4155, %v4153
        %v4194 = vpack.c.b16 %v4156, %v4154
        %v4195 = vpack.c.b16 %v4159, %v4157
        %v4196 = vpack.c.b16 %v4160, %v4158
        %v4197 = vpack.c.b16 %v4163, %v4161
        %v4198 = vpack.c.b16 %v4164, %v4162
        %v4199 = vpack.c.b16 %v4167, %v4165
        %v4200 = vpack.c.b16 %v4168, %v4166
        %4233 = vmatprep.subr.bf16.mxu0 %v4170
        %4234 = vmatpush1.bf16.msra.mxu0 %v4169
        %4235 = vmatprep.subr.bf16.mxu0 %v4172
        %4236 = vmatpush1.bf16.msra.mxu0 %v4171
        %4237 = vmatprep.subr.bf16.mxu0 %v4174
        %4238 = vmatpush1.bf16.msra.mxu0 %v4173
        %4239 = vmatprep.subr.bf16.mxu0 %v4176
        %4240 = vmatpush1.bf16.msra.mxu0 %v4175
        %4241 = vmatprep.subr.bf16.mxu0 %v4178
        %4242 = vmatpush1.bf16.msra.mxu0 %v4177
        %4243 = vmatprep.subr.bf16.mxu0 %v4180
        %4244 = vmatpush1.bf16.msra.mxu0 %v4179
        %4245 = vmatprep.subr.bf16.mxu0 %v4182
        %4246 = vmatpush1.bf16.msra.mxu0 %v4181
        %4247 = vmatprep.subr.bf16.mxu0 %v4184
        %4248 = vmatpush1.bf16.msra.mxu0 %v4183
        %4249 = vmatprep.subr.bf16.mxu0 %v4186
        %4250 = vmatpush1.bf16.msra.mxu0 %v4185
        %4251 = vmatprep.subr.bf16.mxu0 %v4188
        %4252 = vmatpush1.bf16.msra.mxu0 %v4187
        %4253 = vmatprep.subr.bf16.mxu0 %v4190
        %4254 = vmatpush1.bf16.msra.mxu0 %v4189
        %4255 = vmatprep.subr.bf16.mxu0 %v4192
        %4256 = vmatpush1.bf16.msra.mxu0 %v4191
        %4257 = vmatprep.subr.bf16.mxu0 %v4194
        %4258 = vmatpush1.bf16.msra.mxu0 %v4193
        %4259 = vmatprep.subr.bf16.mxu0 %v4196
        %4260 = vmatpush1.bf16.msra.mxu0 %v4195
        %4261 = vmatprep.subr.bf16.mxu0 %v4198
        %4262 = vmatpush1.bf16.msra.mxu0 %v4197
        %4263 = vmatprep.subr.bf16.mxu0 %v4200
        %4264 = vmatpush1.bf16.msra.mxu0 %v4199
        %4265 = vmatprep.mubr.bf16.mxu0 %v4054
        %4266 = vmatmul.mubr.bf16.gmra.mrb[0].mxu0 %v4053
        %v4267 = vpop.f32.mrb[0].mxu0
        %v4268 = vadd.f32 %v4066, %v4267
        %v4269 = vpop.f32.mrb[0].mxu0
        %v4270 = vadd.f32 %v4070, %v4269
        %v4271 = vpop.f32.mrb[0].mxu0
        %v4272 = vadd.f32 %v4066, %v4271
        %v4273 = vpop.f32.mrb[0].mxu0
        %v4274 = vadd.f32 %v4070, %v4273
        %4275 = vmatprep.mubr.bf16.mxu0 %v4056
        %4276 = vmatmul.mubr.bf16.gmra.mrb[0].mxu0 %v4055
        %v4277 = vpop.f32.mrb[0].mxu0
        %v4278 = vadd.f32 %v4066, %v4277
        %v4279 = vpop.f32.mrb[0].mxu0
        %v4280 = vadd.f32 %v4070, %v4279
        %v4281 = vpop.f32.mrb[0].mxu0
        %v4282 = vadd.f32 %v4066, %v4281
        %v4283 = vpop.f32.mrb[0].mxu0
        %v4284 = vadd.f32 %v4070, %v4283
        %4285 = vmatprep.mubr.bf16.mxu0 %v4058
        %4286 = vmatmul.mubr.bf16.gmra.mrb[0].mxu0 %v4057
        %v4287 = vpop.f32.mrb[0].mxu0
        %v4288 = vadd.f32 %v4066, %v4287
        %v4289 = vpop.f32.mrb[0].mxu0
        %v4290 = vadd.f32 %v4070, %v4289
        %v4291 = vpop.f32.mrb[0].mxu0
        %v4292 = vadd.f32 %v4066, %v4291
        %v4293 = vpop.f32.mrb[0].mxu0
        %v4294 = vadd.f32 %v4070, %v4293
        %4295 = vmatprep.mubr.bf16.mxu0 %v4060
        %4296 = vmatmul.mubr.bf16.gmra.mrb[0].mxu0 %v4059
        %v4297 = vpop.f32.mrb[0].mxu0
        %v4298 = vadd.f32 %v4066, %v4297
        %v4299 = vpop.f32.mrb[0].mxu0
        %v4300 = vadd.f32 %v4070, %v4299
        %v4301 = vpop.f32.mrb[0].mxu0
        %v4302 = vadd.f32 %v4066, %v4301
        %v4303 = vpop.f32.mrb[0].mxu0
        %v4304 = vadd.f32 %v4070, %v4303
        %4305 = vdwg.mxu0
        %vm4306 = vcmp.gt.f32.partialorder %v4268, 0.0
        %vm4307 = vcmp.gt.f32.partialorder %v4270, 0.0
        %vm4308 = vcmp.gt.f32.partialorder %v4272, 0.0
        %vm4309 = vcmp.gt.f32.partialorder %v4274, 0.0
        %vm4310 = vcmp.gt.f32.partialorder %v4278, 0.0
        %vm4311 = vcmp.gt.f32.partialorder %v4280, 0.0
        %vm4312 = vcmp.gt.f32.partialorder %v4282, 0.0
        %vm4313 = vcmp.gt.f32.partialorder %v4284, 0.0
        %vm4314 = vcmp.gt.f32.partialorder %v4288, 0.0
        %vm4315 = vcmp.gt.f32.partialorder %v4290, 0.0
        %vm4316 = vcmp.gt.f32.partialorder %v4292, 0.0
        %vm4317 = vcmp.gt.f32.partialorder %v4294, 0.0
        %vm4318 = vcmp.gt.f32.partialorder %v4298, 0.0
        %vm4319 = vcmp.gt.f32.partialorder %v4300, 0.0
        %vm4320 = vcmp.gt.f32.partialorder %v4302, 0.0
        %vm4321 = vcmp.gt.f32.partialorder %v4304, 0.0
        %v4322 = vmul.f32 %v4268, 0.25
        %v4323 = vmul.f32 %v4270, 0.25
        %v4324 = vmul.f32 %v4272, 0.25
        %v4325 = vmul.f32 %v4274, 0.25
        %v4326 = vmul.f32 %v4278, 0.25
        %v4327 = vmul.f32 %v4280, 0.25
        %v4328 = vmul.f32 %v4282, 0.25
        %v4329 = vmul.f32 %v4284, 0.25
        %v4330 = vmul.f32 %v4288, 0.25
        %v4331 = vmul.f32 %v4290, 0.25
        %v4332 = vmul.f32 %v4292, 0.25
        %v4333 = vmul.f32 %v4294, 0.25
        %v4334 = vmul.f32 %v4298, 0.25
        %v4335 = vmul.f32 %v4300, 0.25
        %v4336 = vmul.f32 %v4302, 0.25
        %v4337 = vmul.f32 %v4304, 0.25
        %v4338 = vsel %vm4306, %v4268, %v4322
        %v4339 = vsel %vm4307, %v4270, %v4323
        %v4340 = vsel %vm4308, %v4272, %v4324
        %v4341 = vsel %vm4309, %v4274, %v4325
        %v4342 = vsel %vm4310, %v4278, %v4326
        %v4343 = vsel %vm4311, %v4280, %v4327
        %v4344 = vsel %vm4312, %v4282, %v4328
        %v4345 = vsel %vm4313, %v4284, %v4329
        %v4346 = vsel %vm4314, %v4288, %v4330
        %v4347 = vsel %vm4315, %v4290, %v4331
        %v4348 = vsel %vm4316, %v4292, %v4332
        %v4349 = vsel %vm4317, %v4294, %v4333
        %v4350 = vsel %vm4318, %v4298, %v4334
        %v4351 = vsel %vm4319, %v4300, %v4335
        %v4352 = vsel %vm4320, %v4302, %v4336
        %v4353 = vsel %vm4321, %v4304, %v4337
        %v4354 = vld [vmem:[#allocation43] sm:$0x3]
        %v4356 = vlaneseq
        %v4357 = vshrl.u32 %v4356, 7
        %v4358 = vsub.s32 0, %v4357
        %v4359 = vrot.slane %v4354, %v4358
        %v4360 = vlaneseq
        %v4361 = vshrl.u32 %v4360, 7
        %v4362 = vsub.s32 1, %v4361
        %v4363 = vrot.slane %v4354, %v4362
        %v4366 = vmul.f32 %v4338, %v4359
        %v4367 = vmul.f32 %v4339, %v4363
        %v4368 = vmul.f32 %v4340, %v4359
        %v4369 = vmul.f32 %v4341, %v4363
        %v4370 = vmul.f32 %v4342, %v4359
        %v4371 = vmul.f32 %v4343, %v4363
        %v4372 = vmul.f32 %v4344, %v4359
        %v4373 = vmul.f32 %v4345, %v4363
        %v4374 = vmul.f32 %v4346, %v4359
        %v4375 = vmul.f32 %v4347, %v4363
        %v4376 = vmul.f32 %v4348, %v4359
        %v4377 = vmul.f32 %v4349, %v4363
        %v4378 = vmul.f32 %v4350, %v4359
        %v4379 = vmul.f32 %v4351, %v4363
        %v4380 = vmul.f32 %v4352, %v4359
        %v4381 = vmul.f32 %v4353, %v4363
        %v4382 = vadd.f32 %v4366, %v4367
        %4383 = vadd.xlane.f32.xlu0 %v4382
        %v4384 = vpop.xlane.xlu0 %4383
        %v4385 = vadd.f32 %v4368, %v4369
        %4386 = vadd.xlane.f32.xlu0 %v4385
        %v4387 = vpop.xlane.xlu0 %4386
        %v4388 = vadd.f32 %v4370, %v4371
        %4389 = vadd.xlane.f32.xlu0 %v4388
        %v4390 = vpop.xlane.xlu0 %4389
        %v4391 = vadd.f32 %v4372, %v4373
        %4392 = vadd.xlane.f32.xlu0 %v4391
        %v4393 = vpop.xlane.xlu0 %4392
        %v4394 = vadd.f32 %v4374, %v4375
        %4395 = vadd.xlane.f32.xlu0 %v4394
        %v4396 = vpop.xlane.xlu0 %4395
        %v4397 = vadd.f32 %v4376, %v4377
        %4398 = vadd.xlane.f32.xlu0 %v4397
        %v4399 = vpop.xlane.xlu0 %4398
        %v4400 = vadd.f32 %v4378, %v4379
        %4401 = vadd.xlane.f32.xlu0 %v4400
        %v4402 = vpop.xlane.xlu0 %4401
        %v4403 = vadd.f32 %v4380, %v4381
        %4404 = vadd.xlane.f32.xlu0 %v4403
        %v4405 = vpop.xlane.xlu0 %4404
        %v4406 = vld [vmem:[#allocation3] sm:$0x1]
        %v4408 = vlaneseq
        %v4409 = vshrl.u32 %v4408, 7
        %v4410 = vsub.s32 0, %v4409
        %v4411 = vrot.slane %v4406, %v4410
        %4412 = vset.pattern.permute.xlu0 0
        %4413 = vperm.xlu0 %4412, %v4411
        %v4414 = vpop.permute.xlu0 %4413
        %v4416 = vadd.f32 %v4384, %v4414
        %v4417 = vadd.f32 %v4387, %v4414
        %v4418 = vadd.f32 %v4390, %v4414
        %v4419 = vadd.f32 %v4393, %v4414
        %v4420 = vadd.f32 %v4396, %v4414
        %v4421 = vadd.f32 %v4399, %v4414
        %v4422 = vadd.f32 %v4402, %v4414
        %v4423 = vadd.f32 %v4405, %v4414
        %v4424 = vxor.u32 %v4416, 2147483648
        %v4425 = vxor.u32 %v4417, 2147483648
        %v4426 = vxor.u32 %v4418, 2147483648
        %v4427 = vxor.u32 %v4419, 2147483648
        %v4428 = vxor.u32 %v4420, 2147483648
        %v4429 = vxor.u32 %v4421, 2147483648
        %v4430 = vxor.u32 %v4422, 2147483648
        %v4431 = vxor.u32 %v4423, 2147483648
        %v4432 = vmul.f32 %v4424, 1.442695
        %v4433 = vpow.pop %v4432
        %v4434 = vmul.f32 %v4425, 1.442695
        %v4435 = vpow.pop %v4434
        %v4436 = vmul.f32 %v4426, 1.442695
        %v4437 = vpow.pop %v4436
        %v4438 = vmul.f32 %v4427, 1.442695
        %v4439 = vpow.pop %v4438
        %v4440 = vmul.f32 %v4428, 1.442695
        %v4441 = vpow.pop %v4440
        %v4442 = vmul.f32 %v4429, 1.442695
        %v4443 = vpow.pop %v4442
        %v4444 = vmul.f32 %v4430, 1.442695
        %v4445 = vpow.pop %v4444
        %v4446 = vmul.f32 %v4431, 1.442695
        %v4447 = vpow.pop %v4446
        %v4448 = vadd.f32 %v4433, 1.0
        %v4449 = vadd.f32 %v4435, 1.0
        %v4450 = vadd.f32 %v4437, 1.0
        %v4451 = vadd.f32 %v4439, 1.0
        %v4452 = vadd.f32 %v4441, 1.0
        %v4453 = vadd.f32 %v4443, 1.0
        %v4454 = vadd.f32 %v4445, 1.0
        %v4455 = vadd.f32 %v4447, 1.0
        %v4456 = vrcp.pop %v4448
        %v4457 = vmul.f32 1.0, %v4456
        %v4458 = vrcp.pop %v4449
        %v4459 = vmul.f32 1.0, %v4458
        %v4460 = vrcp.pop %v4450
        %v4461 = vmul.f32 1.0, %v4460
        %v4462 = vrcp.pop %v4451
        %v4463 = vmul.f32 1.0, %v4462
        %v4464 = vrcp.pop %v4452
        %v4465 = vmul.f32 1.0, %v4464
        %v4466 = vrcp.pop %v4453
        %v4467 = vmul.f32 1.0, %v4466
        %v4468 = vrcp.pop %v4454
        %v4469 = vmul.f32 1.0, %v4468
        %v4470 = vrcp.pop %v4455
        %v4471 = vmul.f32 1.0, %v4470
        %v4480 = vlaneseq
        %v4481 = vand.u32 %v4480, 127
        %v4482 = vlaneseq
        %v4483 = vshrl.u32 %v4482, 7
        %v4484 = vsub.s32 %v4481, %v4483
        %v4485 = vrot.slane %v4457, %v4484
        %v4486 = vlaneseq
        %v4487 = vshrl.u32 %v4486, 7
        %v4488 = vsub.s32 %v4481, %v4487
        %v4489 = vrot.slane %v4459, %v4488
        %v4490 = vlaneseq
        %v4491 = vshrl.u32 %v4490, 7
        %v4492 = vsub.s32 %v4481, %v4491
        %v4493 = vrot.slane %v4461, %v4492
        %v4494 = vlaneseq
        %v4495 = vshrl.u32 %v4494, 7
        %v4496 = vsub.s32 %v4481, %v4495
        %v4497 = vrot.slane %v4463, %v4496
        %v4498 = vlaneseq
        %v4499 = vshrl.u32 %v4498, 7
        %v4500 = vsub.s32 %v4481, %v4499
        %v4501 = vrot.slane %v4465, %v4500
        %v4502 = vlaneseq
        %v4503 = vshrl.u32 %v4502, 7
        %v4504 = vsub.s32 %v4481, %v4503
        %v4505 = vrot.slane %v4467, %v4504
        %v4506 = vlaneseq
        %v4507 = vshrl.u32 %v4506, 7
        %v4508 = vsub.s32 %v4481, %v4507
        %v4509 = vrot.slane %v4469, %v4508
        %v4510 = vlaneseq
        %v4511 = vshrl.u32 %v4510, 7
        %v4512 = vsub.s32 %v4481, %v4511
        %v4513 = vrot.slane %v4471, %v4512
        %vm4514 = vcmask 1041409
        %v4515 = vsel %vm4514, %v4489, %v4485
        %vm4516 = vcmask 1042434
        %v4517 = vsel %vm4516, %v4493, %v4515
        %vm4518 = vcmask 1043459
        %v4519 = vsel %vm4518, %v4497, %v4517
        %vm4520 = vcmask 1044484
        %v4521 = vsel %vm4520, %v4501, %v4519
        %vm4522 = vcmask 1045509
        %v4523 = vsel %vm4522, %v4505, %v4521
        %vm4524 = vcmask 1046534
        %v4525 = vsel %vm4524, %v4509, %v4523
        %vm4526 = vcmask 1047559
        %v4527 = vsel %vm4526, %v4513, %v4525
        %4529 = vst.msk [vmem:[%s2377] sm:$0xff] %vm2591, %v4527
        %v4530 = vmul.f32 %v4457, 10.0
        %v4531 = vmul.f32 %v4459, 10.0
        %v4532 = vmul.f32 %v4461, 10.0
        %v4533 = vmul.f32 %v4463, 10.0
        %v4534 = vmul.f32 %v4465, 10.0
        %v4535 = vmul.f32 %v4467, 10.0
        %v4536 = vmul.f32 %v4469, 10.0
        %v4537 = vmul.f32 %v4471, 10.0
        %v4538 = vadd.f32 %v4530, 1.0
        %v4539 = vadd.f32 %v4531, 1.0
        %v4540 = vadd.f32 %v4532, 1.0
        %v4541 = vadd.f32 %v4533, 1.0
        %v4542 = vadd.f32 %v4534, 1.0
        %v4543 = vadd.f32 %v4535, 1.0
        %v4544 = vadd.f32 %v4536, 1.0
        %v4545 = vadd.f32 %v4537, 1.0
        %v4546 = vadd.f32 %v4538, 1e-08
        %v4547 = vadd.f32 %v4539, 1e-08
        %v4548 = vadd.f32 %v4540, 1e-08
        %v4549 = vadd.f32 %v4541, 1e-08
        %v4550 = vadd.f32 %v4542, 1e-08
        %v4551 = vadd.f32 %v4543, 1e-08
        %v4552 = vadd.f32 %v4544, 1e-08
        %v4553 = vadd.f32 %v4545, 1e-08
        %v4554 = vlog2.pop %v4546
        %v4555 = vmul.f32 %v4554, 0.6931472
        %v4556 = vlog2.pop %v4547
        %v4557 = vmul.f32 %v4556, 0.6931472
        %v4558 = vlog2.pop %v4548
        %v4559 = vmul.f32 %v4558, 0.6931472
        %v4560 = vlog2.pop %v4549
        %v4561 = vmul.f32 %v4560, 0.6931472
        %v4562 = vlog2.pop %v4550
        %v4563 = vmul.f32 %v4562, 0.6931472
        %v4564 = vlog2.pop %v4551
        %v4565 = vmul.f32 %v4564, 0.6931472
        %v4566 = vlog2.pop %v4552
        %v4567 = vmul.f32 %v4566, 0.6931472
        %v4568 = vlog2.pop %v4553
        %v4569 = vmul.f32 %v4568, 0.6931472
        %v4578 = vlaneseq
        %v4579 = vshrl.u32 %v4578, 7
        %v4580 = vsub.s32 %v4481, %v4579
        %v4581 = vrot.slane %v4555, %v4580
        %v4582 = vlaneseq
        %v4583 = vshrl.u32 %v4582, 7
        %v4584 = vsub.s32 %v4481, %v4583
        %v4585 = vrot.slane %v4557, %v4584
        %v4586 = vlaneseq
        %v4587 = vshrl.u32 %v4586, 7
        %v4588 = vsub.s32 %v4481, %v4587
        %v4589 = vrot.slane %v4559, %v4588
        %v4590 = vlaneseq
        %v4591 = vshrl.u32 %v4590, 7
        %v4592 = vsub.s32 %v4481, %v4591
        %v4593 = vrot.slane %v4561, %v4592
        %v4594 = vlaneseq
        %v4595 = vshrl.u32 %v4594, 7
        %v4596 = vsub.s32 %v4481, %v4595
        %v4597 = vrot.slane %v4563, %v4596
        %v4598 = vlaneseq
        %v4599 = vshrl.u32 %v4598, 7
        %v4600 = vsub.s32 %v4481, %v4599
        %v4601 = vrot.slane %v4565, %v4600
        %v4602 = vlaneseq
        %v4603 = vshrl.u32 %v4602, 7
        %v4604 = vsub.s32 %v4481, %v4603
        %v4605 = vrot.slane %v4567, %v4604
        %v4606 = vlaneseq
        %v4607 = vshrl.u32 %v4606, 7
        %v4608 = vsub.s32 %v4481, %v4607
        %v4609 = vrot.slane %v4569, %v4608
        %v4610 = vsel %vm4514, %v4585, %v4581
        %v4611 = vsel %vm4516, %v4589, %v4610
        %v4612 = vsel %vm4518, %v4593, %v4611
        %v4613 = vsel %vm4520, %v4597, %v4612
        %v4614 = vsel %vm4522, %v4601, %v4613
        %v4615 = vsel %vm4524, %v4605, %v4614
        %v4616 = vsel %vm4526, %v4609, %v4615
        %v4618 = vmul.f32 %v2400, %v4616
        %v4620 = vlaneseq
        %v4621 = vshrl.u32 %v4620, 7
        %v4622 = vsub.s32 0, %v4621
        %v4623 = vrot.slane %v4618, %v4622
        %4625 = vbcast.lane.b32.xlu0 %v4623, 256
        %v4626 = vpop.permute.xlu0 %4625
        %v4627 = vlaneseq
        %v4628 = vshrl.u32 %v4627, 7
        %v4629 = vsub.s32 1, %v4628
        %v4630 = vrot.slane %v4618, %v4629
        %4632 = vbcast.lane.b32.xlu0 %v4630, 256
        %v4633 = vpop.permute.xlu0 %4632
        %v4634 = vlaneseq
        %v4635 = vshrl.u32 %v4634, 7
        %v4636 = vsub.s32 2, %v4635
        %v4637 = vrot.slane %v4618, %v4636
        %4639 = vbcast.lane.b32.xlu0 %v4637, 256
        %v4640 = vpop.permute.xlu0 %4639
        %v4641 = vlaneseq
        %v4642 = vshrl.u32 %v4641, 7
        %v4643 = vsub.s32 3, %v4642
        %v4644 = vrot.slane %v4618, %v4643
        %4646 = vbcast.lane.b32.xlu0 %v4644, 256
        %v4647 = vpop.permute.xlu0 %4646
        %v4648 = vlaneseq
        %v4649 = vshrl.u32 %v4648, 7
        %v4650 = vsub.s32 4, %v4649
        %v4651 = vrot.slane %v4618, %v4650
        %4653 = vbcast.lane.b32.xlu0 %v4651, 256
        %v4654 = vpop.permute.xlu0 %4653
        %v4655 = vlaneseq
        %v4656 = vshrl.u32 %v4655, 7
        %v4657 = vsub.s32 5, %v4656
        %v4658 = vrot.slane %v4618, %v4657
        %4660 = vbcast.lane.b32.xlu0 %v4658, 256
        %v4661 = vpop.permute.xlu0 %4660
        %v4662 = vlaneseq
        %v4663 = vshrl.u32 %v4662, 7
        %v4664 = vsub.s32 6, %v4663
        %v4665 = vrot.slane %v4618, %v4664
        %4667 = vbcast.lane.b32.xlu0 %v4665, 256
        %v4668 = vpop.permute.xlu0 %4667
        %v4669 = vlaneseq
        %v4670 = vshrl.u32 %v4669, 7
        %v4671 = vsub.s32 7, %v4670
        %v4672 = vrot.slane %v4618, %v4671
        %4674 = vbcast.lane.b32.xlu0 %v4672, 256
        %v4675 = vpop.permute.xlu0 %4674
        %v4684 = vsub.f32 %v4538, %v4626
        %v4685 = vsub.f32 %v4539, %v4633
        %v4686 = vsub.f32 %v4540, %v4640
        %v4687 = vsub.f32 %v4541, %v4647
        %v4688 = vsub.f32 %v4542, %v4654
        %v4689 = vsub.f32 %v4543, %v4661
        %v4690 = vsub.f32 %v4544, %v4668
        %v4691 = vsub.f32 %v4545, %v4675
        %v4692 = vmax.f32 %v2400, 1.0
        %v4693 = vlog2.pop %v4692
        %v4694 = vmul.f32 %v4693, 0.6931472
        %v4695 = vmul.f32 %v4692, %v4694
        %v4696 = vsub.f32 %v4695, %v4692
        %v4697 = vadd.f32 %v4694, 1.837877
        %v4698 = vmul.f32 %v4697, 0.5
        %v4699 = vadd.f32 %v4696, %v4698
        %vm4700 = vcmp.gt.f32.partialorder %v2400, 1.0
        %v4701 = vsel %vm4700, %v4699, 0.0
        %v4703 = vlaneseq
        %v4704 = vshrl.u32 %v4703, 7
        %v4705 = vsub.s32 0, %v4704
        %v4706 = vrot.slane %v4701, %v4705
        %4708 = vbcast.lane.b32.xlu0 %v4706, 256
        %v4709 = vpop.permute.xlu0 %4708
        %v4710 = vlaneseq
        %v4711 = vshrl.u32 %v4710, 7
        %v4712 = vsub.s32 1, %v4711
        %v4713 = vrot.slane %v4701, %v4712
        %4715 = vbcast.lane.b32.xlu0 %v4713, 256
        %v4716 = vpop.permute.xlu0 %4715
        %v4717 = vlaneseq
        %v4718 = vshrl.u32 %v4717, 7
        %v4719 = vsub.s32 2, %v4718
        %v4720 = vrot.slane %v4701, %v4719
        %4722 = vbcast.lane.b32.xlu0 %v4720, 256
        %v4723 = vpop.permute.xlu0 %4722
        %v4724 = vlaneseq
        %v4725 = vshrl.u32 %v4724, 7
        %v4726 = vsub.s32 3, %v4725
        %v4727 = vrot.slane %v4701, %v4726
        %4729 = vbcast.lane.b32.xlu0 %v4727, 256
        %v4730 = vpop.permute.xlu0 %4729
        %v4731 = vlaneseq
        %v4732 = vshrl.u32 %v4731, 7
        %v4733 = vsub.s32 4, %v4732
        %v4734 = vrot.slane %v4701, %v4733
        %4736 = vbcast.lane.b32.xlu0 %v4734, 256
        %v4737 = vpop.permute.xlu0 %4736
        %v4738 = vlaneseq
        %v4739 = vshrl.u32 %v4738, 7
        %v4740 = vsub.s32 5, %v4739
        %v4741 = vrot.slane %v4701, %v4740
        %4743 = vbcast.lane.b32.xlu0 %v4741, 256
        %v4744 = vpop.permute.xlu0 %4743
        %v4745 = vlaneseq
        %v4746 = vshrl.u32 %v4745, 7
        %v4747 = vsub.s32 6, %v4746
        %v4748 = vrot.slane %v4701, %v4747
        %4750 = vbcast.lane.b32.xlu0 %v4748, 256
        %v4751 = vpop.permute.xlu0 %4750
        %v4752 = vlaneseq
        %v4753 = vshrl.u32 %v4752, 7
        %v4754 = vsub.s32 7, %v4753
        %v4755 = vrot.slane %v4701, %v4754
        %4757 = vbcast.lane.b32.xlu0 %v4755, 256
        %v4758 = vpop.permute.xlu0 %4757
        %v4767 = vadd.f32 %v4684, %v4709
        %v4768 = vadd.f32 %v4685, %v4716
        %v4769 = vadd.f32 %v4686, %v4723
        %v4770 = vadd.f32 %v4687, %v4730
        %v4771 = vadd.f32 %v4688, %v4737
        %v4772 = vadd.f32 %v4689, %v4744
        %v4773 = vadd.f32 %v4690, %v4751
        %v4774 = vadd.f32 %v4691, %v4758
        %v4776 = vlaneseq
        %v4777 = vshrl.u32 %v4776, 7
        %v4778 = vsub.s32 0, %v4777
        %v4779 = vrot.slane %v2401, %v4778
        %4781 = vbcast.lane.b32.xlu0 %v4779, 256
        %v4782 = vpop.permute.xlu0 %4781
        %v4783 = vlaneseq
        %v4784 = vshrl.u32 %v4783, 7
        %v4785 = vsub.s32 1, %v4784
        %v4786 = vrot.slane %v2401, %v4785
        %4788 = vbcast.lane.b32.xlu0 %v4786, 256
        %v4789 = vpop.permute.xlu0 %4788
        %v4790 = vlaneseq
        %v4791 = vshrl.u32 %v4790, 7
        %v4792 = vsub.s32 2, %v4791
        %v4793 = vrot.slane %v2401, %v4792
        %4795 = vbcast.lane.b32.xlu0 %v4793, 256
        %v4796 = vpop.permute.xlu0 %4795
        %v4797 = vlaneseq
        %v4798 = vshrl.u32 %v4797, 7
        %v4799 = vsub.s32 3, %v4798
        %v4800 = vrot.slane %v2401, %v4799
        %4802 = vbcast.lane.b32.xlu0 %v4800, 256
        %v4803 = vpop.permute.xlu0 %4802
        %v4804 = vlaneseq
        %v4805 = vshrl.u32 %v4804, 7
        %v4806 = vsub.s32 4, %v4805
        %v4807 = vrot.slane %v2401, %v4806
        %4809 = vbcast.lane.b32.xlu0 %v4807, 256
        %v4810 = vpop.permute.xlu0 %4809
        %v4811 = vlaneseq
        %v4812 = vshrl.u32 %v4811, 7
        %v4813 = vsub.s32 5, %v4812
        %v4814 = vrot.slane %v2401, %v4813
        %4816 = vbcast.lane.b32.xlu0 %v4814, 256
        %v4817 = vpop.permute.xlu0 %4816
        %v4818 = vlaneseq
        %v4819 = vshrl.u32 %v4818, 7
        %v4820 = vsub.s32 6, %v4819
        %v4821 = vrot.slane %v2401, %v4820
        %4823 = vbcast.lane.b32.xlu0 %v4821, 256
        %v4824 = vpop.permute.xlu0 %4823
        %v4825 = vlaneseq
        %v4826 = vshrl.u32 %v4825, 7
        %v4827 = vsub.s32 7, %v4826
        %v4828 = vrot.slane %v2401, %v4827
        %4830 = vbcast.lane.b32.xlu0 %v4828, 256
        %v4831 = vpop.permute.xlu0 %4830
        %v4840 = vmul.f32 %v4767, %v4782
        %v4841 = vmul.f32 %v4768, %v4789
        %v4842 = vmul.f32 %v4769, %v4796
        %v4843 = vmul.f32 %v4770, %v4803
        %v4844 = vmul.f32 %v4771, %v4810
        %v4845 = vmul.f32 %v4772, %v4817
        %v4846 = vmul.f32 %v4773, %v4824
        %v4847 = vmul.f32 %v4774, %v4831
        %4856 = vset.pattern.permute.xlu0 0
        %4857 = vperm.xlu0 %4856, %v4840
        %v4858 = vpop.permute.xlu0 %4857
        %4859 = vset.pattern.permute.xlu0 0
        %4860 = vperm.xlu0 %4859, %v4841
        %v4861 = vpop.permute.xlu0 %4860
        %4862 = vset.pattern.permute.xlu0 0
        %4863 = vperm.xlu0 %4862, %v4842
        %v4864 = vpop.permute.xlu0 %4863
        %4865 = vset.pattern.permute.xlu0 0
        %4866 = vperm.xlu0 %4865, %v4843
        %v4867 = vpop.permute.xlu0 %4866
        %4868 = vset.pattern.permute.xlu0 0
        %4869 = vperm.xlu0 %4868, %v4844
        %v4870 = vpop.permute.xlu0 %4869
        %4871 = vset.pattern.permute.xlu0 0
        %4872 = vperm.xlu0 %4871, %v4845
        %v4873 = vpop.permute.xlu0 %4872
        %4874 = vset.pattern.permute.xlu0 0
        %4875 = vperm.xlu0 %4874, %v4846
        %v4876 = vpop.permute.xlu0 %4875
        %4877 = vset.pattern.permute.xlu0 0
        %4878 = vperm.xlu0 %4877, %v4847
        %v4879 = vpop.permute.xlu0 %4878
        %v4880 = vlaneseq
        %v4881 = vshrl.u32 %v4880, 7
        %v4882 = vsub.s32 %v4481, %v4881
        %v4883 = vrot.slane %v4858, %v4882
        %v4884 = vlaneseq
        %v4885 = vshrl.u32 %v4884, 7
        %v4886 = vsub.s32 %v4481, %v4885
        %v4887 = vrot.slane %v4861, %v4886
        %v4888 = vlaneseq
        %v4889 = vshrl.u32 %v4888, 7
        %v4890 = vsub.s32 %v4481, %v4889
        %v4891 = vrot.slane %v4864, %v4890
        %v4892 = vlaneseq
        %v4893 = vshrl.u32 %v4892, 7
        %v4894 = vsub.s32 %v4481, %v4893
        %v4895 = vrot.slane %v4867, %v4894
        %v4896 = vlaneseq
        %v4897 = vshrl.u32 %v4896, 7
        %v4898 = vsub.s32 %v4481, %v4897
        %v4899 = vrot.slane %v4870, %v4898
        %v4900 = vlaneseq
        %v4901 = vshrl.u32 %v4900, 7
        %v4902 = vsub.s32 %v4481, %v4901
        %v4903 = vrot.slane %v4873, %v4902
        %v4904 = vlaneseq
        %v4905 = vshrl.u32 %v4904, 7
        %v4906 = vsub.s32 %v4481, %v4905
        %v4907 = vrot.slane %v4876, %v4906
        %v4908 = vlaneseq
        %v4909 = vshrl.u32 %v4908, 7
        %v4910 = vsub.s32 %v4481, %v4909
        %v4911 = vrot.slane %v4879, %v4910
        %v4912 = vsel %vm4514, %v4887, %v4883
        %v4913 = vsel %vm4516, %v4891, %v4912
        %v4914 = vsel %vm4518, %v4895, %v4913
        %v4915 = vsel %vm4520, %v4899, %v4914
        %v4916 = vsel %vm4522, %v4903, %v4915
        %v4917 = vsel %vm4524, %v4907, %v4916
        %v4918 = vsel %vm4526, %v4911, %v4917
        %v4920 = vsel %vm2591, %v4918, 0.0
        %4921 = vadd.xlane.f32.xlu0 %v4920
        %v4922 = vpop.xlane.xlu0 %4921
        %v4923 = vrot.slane %v4922, 4
        %v4924 = vadd.f32 %v4922, %v4923
        %v4925 = vrot.slane %v4924, 2
        %v4926 = vadd.f32 %v4924, %v4925
        %v4927 = vrot.slane %v4926, 1
        %v4928 = vadd.f32 %v4926, %v4927
        %s4929 = vtos %v4928
        %v4930 = vstv %s4929
        %v4931 = vmul.f32 %v4930, 11.0
        %v4932 = vsel %vm2591, %v2401, 0.0
        %4933 = vadd.xlane.f32.xlu0 %v4932
        %v4934 = vpop.xlane.xlu0 %4933
        %v4935 = vrot.slane %v4934, 4
        %v4936 = vadd.f32 %v4934, %v4935
        %v4937 = vrot.slane %v4936, 2
        %v4938 = vadd.f32 %v4936, %v4937
        %v4939 = vrot.slane %v4938, 1
        %v4940 = vadd.f32 %v4938, %v4939
        %s4941 = vtos %v4940
        %v4942 = vstv %s4941
        %v4943 = vrcp.pop %v4942
        %v4944 = vmul.f32 %v4931, %v4943
        %s4945 = ssub.s32 3, %s160
        %p4946 = scmp.le.s32.totalorder %s4945, 24
        %s4947 = scalar_select %p4946, 1.0, 0.0
        %v4948 = vld [vmem:[#allocation70] sm:$0x1]
        %v4949 = vstv %s4947
        %v4950 = vmul.f32 %v4949, %v4944
        %v4951 = vadd.f32 %v4948, %v4950
        %4952 = vst.msk [vmem:[#allocation70] sm:$0x1] %vm3585, %v4951
        %v4953 = vld [vmem:[#allocation45] sm:$0xf]
        %v4954 = vld [vmem:[#allocation45 + $0x4] sm:$0xf]
        %v4955 = vld [vmem:[#allocation45 + $0x8] sm:$0xf]
        %v4956 = vld [vmem:[#allocation45 + $0xc] sm:$0xf]
        %v4957 = vld [vmem:[#allocation46] sm:$0xf]
        %v4958 = vld [vmem:[#allocation46 + $0x4] sm:$0xf]
        %v4959 = vld [vmem:[#allocation46 + $0x8] sm:$0xf]
        %v4960 = vld [vmem:[#allocation46 + $0xc] sm:$0xf]
        %v4961 = vpack.c.bf16 %v3236, %v3236
        %v4966 = vunpack.c.l.b16 %v4957
        %v4967 = vunpack.c.l.b16 %v4958
        %v4968 = vunpack.c.l.b16 %v4959
        %v4969 = vunpack.c.l.b16 %v4960
        %v4970 = vpack.c.b16 %v4967, %v4966
        %v4971 = vpack.c.b16 %v4969, %v4968
        %v4975 = vsel %vm2484, %v4961, 0
        %4977 = vmatprep.subr.bf16.mxu0 0
        %4978 = vmatpush1.bf16.msra.mxu0 %v4970
        %4979 = vmatprep.subr.bf16.mxu0 0
        %4980 = vmatpush1.bf16.msra.mxu0 %v4971
        %4981 = vmatprep.subr.bf16.mxu0 0
        %4982 = vmatpush1.bf16.msra.mxu0 0
        %4983 = vmatprep.subr.bf16.mxu0 0
        %4984 = vmatpush1.bf16.msra.mxu0 0
        %4985 = vmatprep.subr.bf16.mxu0 0
        %4986 = vmatpush1.bf16.msra.mxu0 0
        %4987 = vmatprep.subr.bf16.mxu0 0
        %4988 = vmatpush1.bf16.msra.mxu0 0
        %4989 = vmatprep.subr.bf16.mxu0 0
        %4990 = vmatpush1.bf16.msra.mxu0 0
        %4991 = vmatprep.subr.bf16.mxu0 0
        %4992 = vmatpush1.bf16.msra.mxu0 0
        %4993 = vmatprep.subr.bf16.mxu0 0
        %4994 = vmatpush1.bf16.msra.mxu0 0
        %4995 = vmatprep.subr.bf16.mxu0 0
        %4996 = vmatpush1.bf16.msra.mxu0 0
        %4997 = vmatprep.subr.bf16.mxu0 0
        %4998 = vmatpush1.bf16.msra.mxu0 0
        %4999 = vmatprep.subr.bf16.mxu0 0
        %5000 = vmatpush1.bf16.msra.mxu0 0
        %5001 = vmatprep.subr.bf16.mxu0 0
        %5002 = vmatpush1.bf16.msra.mxu0 0
        %5003 = vmatprep.subr.bf16.mxu0 0
        %5004 = vmatpush1.bf16.msra.mxu0 0
        %5005 = vmatprep.subr.bf16.mxu0 0
        %5006 = vmatpush1.bf16.msra.mxu0 0
        %5007 = vmatprep.subr.bf16.mxu0 0
        %5008 = vmatpush1.bf16.msra.mxu0 0
        %5009 = vmatprep.mubr.bf16.mxu0 0
        %5010 = vmatmul.mubr.bf16.gmra.mrb[0].mxu0 %v4975
        %v5011 = vpop.f32.mrb[0].mxu0
        %v5012 = vadd.f32 0.0, %v5011
        %v5013 = vpop.f32.mrb[0].mxu0
        %v5014 = vpop.f32.mrb[0].mxu0
        %v5015 = vpop.f32.mrb[0].mxu0
        %5016 = vdwg.mxu0
        %v5021 = vunpack.c.l.b16 %v4953
        %v5022 = vunpack.c.l.b16 %v4954
        %v5023 = vunpack.c.l.b16 %v4955
        %v5024 = vunpack.c.l.b16 %v4956
        %v5025 = vpack.c.b16 %v5022, %v5021
        %v5026 = vpack.c.b16 %v5024, %v5023
        %5029 = vmatprep.subr.bf16.mxu0 0
        %5030 = vmatpush1.bf16.msra.mxu0 %v5025
        %5031 = vmatprep.subr.bf16.mxu0 0
        %5032 = vmatpush1.bf16.msra.mxu0 %v5026
        %5033 = vmatprep.subr.bf16.mxu0 0
        %5034 = vmatpush1.bf16.msra.mxu0 0
        %5035 = vmatprep.subr.bf16.mxu0 0
        %5036 = vmatpush1.bf16.msra.mxu0 0
        %5037 = vmatprep.subr.bf16.mxu0 0
        %5038 = vmatpush1.bf16.msra.mxu0 0
        %5039 = vmatprep.subr.bf16.mxu0 0
        %5040 = vmatpush1.bf16.msra.mxu0 0
        %5041 = vmatprep.subr.bf16.mxu0 0
        %5042 = vmatpush1.bf16.msra.mxu0 0
        %5043 = vmatprep.subr.bf16.mxu0 0
        %5044 = vmatpush1.bf16.msra.mxu0 0
        %5045 = vmatprep.subr.bf16.mxu0 0
        %5046 = vmatpush1.bf16.msra.mxu0 0
        %5047 = vmatprep.subr.bf16.mxu0 0
        %5048 = vmatpush1.bf16.msra.mxu0 0
        %5049 = vmatprep.subr.bf16.mxu0 0
        %5050 = vmatpush1.bf16.msra.mxu0 0
        %5051 = vmatprep.subr.bf16.mxu0 0
        %5052 = vmatpush1.bf16.msra.mxu0 0
        %5053 = vmatprep.subr.bf16.mxu0 0
        %5054 = vmatpush1.bf16.msra.mxu0 0
        %5055 = vmatprep.subr.bf16.mxu0 0
        %5056 = vmatpush1.bf16.msra.mxu0 0
        %5057 = vmatprep.subr.bf16.mxu0 0
        %5058 = vmatpush1.bf16.msra.mxu0 0
        %5059 = vmatprep.subr.bf16.mxu0 0
        %5060 = vmatpush1.bf16.msra.mxu0 0
        %5061 = vmatprep.mubr.bf16.mxu0 0
        %5062 = vmatmul.mubr.bf16.gmra.mrb[0].mxu0 %v2541
        %v5063 = vpop.f32.mrb[0].mxu0
        %v5064 = vadd.f32 %v5012, %v5063
        %v5065 = vpop.f32.mrb[0].mxu0
        %v5066 = vpop.f32.mrb[0].mxu0
        %v5067 = vpop.f32.mrb[0].mxu0
        %5068 = vdwg.mxu0
        %v5069 = vld [vmem:[#allocation2] sm:$0xff]
        %v5070 = vld [vmem:[#allocation48] sm:$0x1]
        %v5071 = vpack.c.bf16 %v5064, %v5064
        %v5073 = vlaneseq
        %v5074 = vshrl.u32 %v5073, 7
        %v5075 = vsub.s32 0, %v5074
        %v5076 = vrot.slane %v5070, %v5075
        %v5079 = vsel %vm2595, %v5071, 0
        %5081 = vmatprep.subr.bf16.mxu0 0
        %5082 = vmatpush1.bf16.msra.mxu0 %v5079
        %5083 = vmatprep.subr.bf16.mxu0 0
        %5084 = vmatpush1.bf16.msra.mxu0 0
        %5085 = vmatprep.subr.bf16.mxu0 0
        %5086 = vmatpush1.bf16.msra.mxu0 0
        %5087 = vmatprep.subr.bf16.mxu0 0
        %5088 = vmatpush1.bf16.msra.mxu0 0
        %5089 = vmatprep.subr.bf16.mxu0 0
        %5090 = vmatpush1.bf16.msra.mxu0 0
        %5091 = vmatprep.subr.bf16.mxu0 0
        %5092 = vmatpush1.bf16.msra.mxu0 0
        %5093 = vmatprep.subr.bf16.mxu0 0
        %5094 = vmatpush1.bf16.msra.mxu0 0
        %5095 = vmatprep.subr.bf16.mxu0 0
        %5096 = vmatpush1.bf16.msra.mxu0 0
        %5097 = vmatprep.subr.bf16.mxu0 0
        %5098 = vmatpush1.bf16.msra.mxu0 0
        %5099 = vmatprep.subr.bf16.mxu0 0
        %5100 = vmatpush1.bf16.msra.mxu0 0
        %5101 = vmatprep.subr.bf16.mxu0 0
        %5102 = vmatpush1.bf16.msra.mxu0 0
        %5103 = vmatprep.subr.bf16.mxu0 0
        %5104 = vmatpush1.bf16.msra.mxu0 0
        %5105 = vmatprep.subr.bf16.mxu0 0
        %5106 = vmatpush1.bf16.msra.mxu0 0
        %5107 = vmatprep.subr.bf16.mxu0 0
        %5108 = vmatpush1.bf16.msra.mxu0 0
        %5109 = vmatprep.subr.bf16.mxu0 0
        %5110 = vmatpush1.bf16.msra.mxu0 0
        %5111 = vmatprep.subr.bf16.mxu0 0
        %5112 = vmatpush1.bf16.msra.mxu0 0
        %5113 = vmatprep.mubr.bf16.mxu0 0
        %5114 = vmatmul.mubr.bf16.gmra.mrb[0].mxu0 %v2593
        %v5115 = vpop.f32.mrb[0].mxu0
        %v5116 = vadd.f32 %v5076, %v5115
        %v5117 = vpop.f32.mrb[0].mxu0
        %v5118 = vpop.f32.mrb[0].mxu0
        %v5119 = vpop.f32.mrb[0].mxu0
        %5120 = vdwg.mxu0
        %v5121 = vld [vmem:[#allocation49] sm:$0xf]
        %v5122 = vld [vmem:[#allocation49 + $0x4] sm:$0xf]
        %v5123 = vld [vmem:[#allocation49 + $0x8] sm:$0xf]
        %v5124 = vld [vmem:[#allocation49 + $0xc] sm:$0xf]
        %v5125 = vpack.c.bf16 %v5069, %v5069
        %v5130 = vunpack.c.l.b16 %v5121
        %v5131 = vunpack.c.l.b16 %v5122
        %v5132 = vunpack.c.l.b16 %v5123
        %v5133 = vunpack.c.l.b16 %v5124
        %v5134 = vpack.c.b16 %v5131, %v5130
        %v5135 = vpack.c.b16 %v5133, %v5132
        %v5139 = vsel %vm2484, %v5125, 0
        %5141 = vmatprep.subr.bf16.mxu0 0
        %5142 = vmatpush1.bf16.msra.mxu0 %v5134
        %5143 = vmatprep.subr.bf16.mxu0 0
        %5144 = vmatpush1.bf16.msra.mxu0 %v5135
        %5145 = vmatprep.subr.bf16.mxu0 0
        %5146 = vmatpush1.bf16.msra.mxu0 0
        %5147 = vmatprep.subr.bf16.mxu0 0
        %5148 = vmatpush1.bf16.msra.mxu0 0
        %5149 = vmatprep.subr.bf16.mxu0 0
        %5150 = vmatpush1.bf16.msra.mxu0 0
        %5151 = vmatprep.subr.bf16.mxu0 0
        %5152 = vmatpush1.bf16.msra.mxu0 0
        %5153 = vmatprep.subr.bf16.mxu0 0
        %5154 = vmatpush1.bf16.msra.mxu0 0
        %5155 = vmatprep.subr.bf16.mxu0 0
        %5156 = vmatpush1.bf16.msra.mxu0 0
        %5157 = vmatprep.subr.bf16.mxu0 0
        %5158 = vmatpush1.bf16.msra.mxu0 0
        %5159 = vmatprep.subr.bf16.mxu0 0
        %5160 = vmatpush1.bf16.msra.mxu0 0
        %5161 = vmatprep.subr.bf16.mxu0 0
        %5162 = vmatpush1.bf16.msra.mxu0 0
        %5163 = vmatprep.subr.bf16.mxu0 0
        %5164 = vmatpush1.bf16.msra.mxu0 0
        %5165 = vmatprep.subr.bf16.mxu0 0
        %5166 = vmatpush1.bf16.msra.mxu0 0
        %5167 = vmatprep.subr.bf16.mxu0 0
        %5168 = vmatpush1.bf16.msra.mxu0 0
        %5169 = vmatprep.subr.bf16.mxu0 0
        %5170 = vmatpush1.bf16.msra.mxu0 0
        %5171 = vmatprep.subr.bf16.mxu0 0
        %5172 = vmatpush1.bf16.msra.mxu0 0
        %5173 = vmatprep.mubr.bf16.mxu0 0
        %5174 = vmatmul.mubr.bf16.gmra.mrb[0].mxu0 %v5139
        %v5175 = vpop.f32.mrb[0].mxu0
        %v5176 = vadd.f32 0.0, %v5175
        %v5177 = vpop.f32.mrb[0].mxu0
        %v5178 = vpop.f32.mrb[0].mxu0
        %v5179 = vpop.f32.mrb[0].mxu0
        %5180 = vdwg.mxu0
        %v5181 = vld [vmem:[#allocation51] sm:$0x1]
        %v5182 = vpack.c.bf16 %v5176, %v5176
        %v5184 = vlaneseq
        %v5185 = vshrl.u32 %v5184, 7
        %v5186 = vsub.s32 0, %v5185
        %v5187 = vrot.slane %v5181, %v5186
        %v5190 = vsel %vm2595, %v5182, 0
        %5192 = vmatprep.subr.bf16.mxu0 0
        %5193 = vmatpush1.bf16.msra.mxu0 %v5190
        %5194 = vmatprep.subr.bf16.mxu0 0
        %5195 = vmatpush1.bf16.msra.mxu0 0
        %5196 = vmatprep.subr.bf16.mxu0 0
        %5197 = vmatpush1.bf16.msra.mxu0 0
        %5198 = vmatprep.subr.bf16.mxu0 0
        %5199 = vmatpush1.bf16.msra.mxu0 0
        %5200 = vmatprep.subr.bf16.mxu0 0
        %5201 = vmatpush1.bf16.msra.mxu0 0
        %5202 = vmatprep.subr.bf16.mxu0 0
        %5203 = vmatpush1.bf16.msra.mxu0 0
        %5204 = vmatprep.subr.bf16.mxu0 0
        %5205 = vmatpush1.bf16.msra.mxu0 0
        %5206 = vmatprep.subr.bf16.mxu0 0
        %5207 = vmatpush1.bf16.msra.mxu0 0
        %5208 = vmatprep.subr.bf16.mxu0 0
        %5209 = vmatpush1.bf16.msra.mxu0 0
        %5210 = vmatprep.subr.bf16.mxu0 0
        %5211 = vmatpush1.bf16.msra.mxu0 0
        %5212 = vmatprep.subr.bf16.mxu0 0
        %5213 = vmatpush1.bf16.msra.mxu0 0
        %5214 = vmatprep.subr.bf16.mxu0 0
        %5215 = vmatpush1.bf16.msra.mxu0 0
        %5216 = vmatprep.subr.bf16.mxu0 0
        %5217 = vmatpush1.bf16.msra.mxu0 0
        %5218 = vmatprep.subr.bf16.mxu0 0
        %5219 = vmatpush1.bf16.msra.mxu0 0
        %5220 = vmatprep.subr.bf16.mxu0 0
        %5221 = vmatpush1.bf16.msra.mxu0 0
        %5222 = vmatprep.subr.bf16.mxu0 0
        %5223 = vmatpush1.bf16.msra.mxu0 0
        %5224 = vmatprep.mubr.bf16.mxu0 0
        %5225 = vmatmul.mubr.bf16.gmra.mrb[0].mxu0 %v2593
        %v5226 = vpop.f32.mrb[0].mxu0
        %v5227 = vadd.f32 %v5187, %v5226
        %v5228 = vpop.f32.mrb[0].mxu0
        %v5229 = vpop.f32.mrb[0].mxu0
        %v5230 = vpop.f32.mrb[0].mxu0
        %5231 = vdwg.mxu0
        %v5232 = vadd.f32 %v5116, %v5227
        %v5233 = vxor.u32 %v5232, 2147483648
        %v5234 = vmul.f32 %v5233, 1.442695
        %v5235 = vpow.pop %v5234
        %v5236 = vadd.f32 %v5235, 1.0
        %v5237 = vrcp.pop %v5236
        %v5238 = vmul.f32 1.0, %v5237
        %5240 = vrot.lane.b32.xlu0 %v5069, 32
        %v5241 = vpop.permute.xlu0 %5240
        %v5243 = vmul.f32 %v5238, %v5241
        %v5244 = vld [vmem:[#allocation52] sm:$0xf]
        %v5245 = vld [vmem:[#allocation52 + $0x4] sm:$0xf]
        %v5246 = vld [vmem:[#allocation52 + $0x8] sm:$0xf]
        %v5247 = vld [vmem:[#allocation52 + $0xc] sm:$0xf]
        %v5248 = vpack.c.bf16 %v5243, %v5243
        %5250 = vrot.lane.b32.xlu0 %v5248, 96
        %v5251 = vpop.permute.xlu0 %5250
        %v5256 = vunpack.c.l.b16 %v5244
        %v5257 = vunpack.c.l.b16 %v5245
        %v5258 = vunpack.c.l.b16 %v5246
        %v5259 = vunpack.c.l.b16 %v5247
        %v5260 = vpack.c.b16 %v5257, %v5256
        %v5261 = vpack.c.b16 %v5259, %v5258
        %v5265 = vsel %vm2484, %v5251, 0
        %5267 = vmatprep.subr.bf16.mxu0 0
        %5268 = vmatpush1.bf16.msra.mxu0 %v5260
        %5269 = vmatprep.subr.bf16.mxu0 0
        %5270 = vmatpush1.bf16.msra.mxu0 %v5261
        %5271 = vmatprep.subr.bf16.mxu0 0
        %5272 = vmatpush1.bf16.msra.mxu0 0
        %5273 = vmatprep.subr.bf16.mxu0 0
        %5274 = vmatpush1.bf16.msra.mxu0 0
        %5275 = vmatprep.subr.bf16.mxu0 0
        %5276 = vmatpush1.bf16.msra.mxu0 0
        %5277 = vmatprep.subr.bf16.mxu0 0
        %5278 = vmatpush1.bf16.msra.mxu0 0
        %5279 = vmatprep.subr.bf16.mxu0 0
        %5280 = vmatpush1.bf16.msra.mxu0 0
        %5281 = vmatprep.subr.bf16.mxu0 0
        %5282 = vmatpush1.bf16.msra.mxu0 0
        %5283 = vmatprep.subr.bf16.mxu0 0
        %5284 = vmatpush1.bf16.msra.mxu0 0
        %5285 = vmatprep.subr.bf16.mxu0 0
        %5286 = vmatpush1.bf16.msra.mxu0 0
        %5287 = vmatprep.subr.bf16.mxu0 0
        %5288 = vmatpush1.bf16.msra.mxu0 0
        %5289 = vmatprep.subr.bf16.mxu0 0
        %5290 = vmatpush1.bf16.msra.mxu0 0
        %5291 = vmatprep.subr.bf16.mxu0 0
        %5292 = vmatpush1.bf16.msra.mxu0 0
        %5293 = vmatprep.subr.bf16.mxu0 0
        %5294 = vmatpush1.bf16.msra.mxu0 0
        %5295 = vmatprep.subr.bf16.mxu0 0
        %5296 = vmatpush1.bf16.msra.mxu0 0
        %5297 = vmatprep.subr.bf16.mxu0 0
        %5298 = vmatpush1.bf16.msra.mxu0 0
        %5299 = vmatprep.mubr.bf16.mxu0 0
        %5300 = vmatmul.mubr.bf16.gmra.mrb[0].mxu0 %v5265
        %v5301 = vpop.f32.mrb[0].mxu0
        %v5302 = vadd.f32 0.0, %v5301
        %v5303 = vpop.f32.mrb[0].mxu0
        %v5304 = vpop.f32.mrb[0].mxu0
        %v5305 = vpop.f32.mrb[0].mxu0
        %5306 = vdwg.mxu0
        %v5307 = vld [vmem:[#allocation54] sm:$0x1]
        %v5308 = vpack.c.bf16 %v5302, %v5302
        %v5310 = vlaneseq
        %v5311 = vshrl.u32 %v5310, 7
        %v5312 = vsub.s32 0, %v5311
        %v5313 = vrot.slane %v5307, %v5312
        %v5316 = vsel %vm2595, %v5308, 0
        %5318 = vmatprep.subr.bf16.mxu0 0
        %5319 = vmatpush1.bf16.msra.mxu0 %v5316
        %5320 = vmatprep.subr.bf16.mxu0 0
        %5321 = vmatpush1.bf16.msra.mxu0 0
        %5322 = vmatprep.subr.bf16.mxu0 0
        %5323 = vmatpush1.bf16.msra.mxu0 0
        %5324 = vmatprep.subr.bf16.mxu0 0
        %5325 = vmatpush1.bf16.msra.mxu0 0
        %5326 = vmatprep.subr.bf16.mxu0 0
        %5327 = vmatpush1.bf16.msra.mxu0 0
        %5328 = vmatprep.subr.bf16.mxu0 0
        %5329 = vmatpush1.bf16.msra.mxu0 0
        %5330 = vmatprep.subr.bf16.mxu0 0
        %5331 = vmatpush1.bf16.msra.mxu0 0
        %5332 = vmatprep.subr.bf16.mxu0 0
        %5333 = vmatpush1.bf16.msra.mxu0 0
        %5334 = vmatprep.subr.bf16.mxu0 0
        %5335 = vmatpush1.bf16.msra.mxu0 0
        %5336 = vmatprep.subr.bf16.mxu0 0
        %5337 = vmatpush1.bf16.msra.mxu0 0
        %5338 = vmatprep.subr.bf16.mxu0 0
        %5339 = vmatpush1.bf16.msra.mxu0 0
        %5340 = vmatprep.subr.bf16.mxu0 0
        %5341 = vmatpush1.bf16.msra.mxu0 0
        %5342 = vmatprep.subr.bf16.mxu0 0
        %5343 = vmatpush1.bf16.msra.mxu0 0
        %5344 = vmatprep.subr.bf16.mxu0 0
        %5345 = vmatpush1.bf16.msra.mxu0 0
        %5346 = vmatprep.subr.bf16.mxu0 0
        %5347 = vmatpush1.bf16.msra.mxu0 0
        %5348 = vmatprep.subr.bf16.mxu0 0
        %5349 = vmatpush1.bf16.msra.mxu0 0
        %5350 = vmatprep.mubr.bf16.mxu0 0
        %5351 = vmatmul.mubr.bf16.gmra.mrb[0].mxu0 %v2593
        %v5352 = vpop.f32.mrb[0].mxu0
        %v5353 = vadd.f32 %v5313, %v5352
        %v5354 = vpop.f32.mrb[0].mxu0
        %v5355 = vpop.f32.mrb[0].mxu0
        %v5356 = vpop.f32.mrb[0].mxu0
        %5357 = vdwg.mxu0
        %5359 = vrot.lane.b32.xlu0 %v5353, 64
        %v5360 = vpop.permute.xlu0 %5359
        %v5362 = vadd.f32 %v5116, %v5360
        %v5363 = vtanh.pop %v5362
        %v5364 = vmul.f32 %v5238, %v5069
        %v5365 = vsub.f32 1.0, %v5238
        %5367 = vrot.lane.b32.xlu0 %v5363, 64
        %v5368 = vpop.permute.xlu0 %5367
        %v5370 = vmul.f32 %v5365, %v5368
        %v5371 = vadd.f32 %v5364, %v5370
        %5372 = vst.msk [vmem:[#allocation2] sm:$0xff] %vm2484, %v5371
        %5373 = vst.msk [vmem:[%s2382] sm:$0xff] %vm2484, %v5371
        %v5374 = vld [vmem:[#allocation55] sm:$0xf]
        %v5375 = vld [vmem:[#allocation55 + $0x4] sm:$0xf]
        %v5376 = vld [vmem:[#allocation55 + $0x8] sm:$0xf]
        %v5377 = vld [vmem:[#allocation55 + $0xc] sm:$0xf]
        %v5378 = vpack.c.bf16 %v5371, %v5371
        %v5383 = vunpack.c.l.b16 %v5374
        %v5384 = vunpack.c.l.b16 %v5375
        %v5385 = vunpack.c.l.b16 %v5376
        %v5386 = vunpack.c.l.b16 %v5377
        %v5387 = vpack.c.b16 %v5384, %v5383
        %v5388 = vpack.c.b16 %v5386, %v5385
        %v5392 = vsel %vm2484, %v5378, 0
        %5394 = vmatprep.subr.bf16.mxu0 0
        %5395 = vmatpush1.bf16.msra.mxu0 %v5387
        %5396 = vmatprep.subr.bf16.mxu0 0
        %5397 = vmatpush1.bf16.msra.mxu0 %v5388
        %5398 = vmatprep.subr.bf16.mxu0 0
        %5399 = vmatpush1.bf16.msra.mxu0 0
        %5400 = vmatprep.subr.bf16.mxu0 0
        %5401 = vmatpush1.bf16.msra.mxu0 0
        %5402 = vmatprep.subr.bf16.mxu0 0
        %5403 = vmatpush1.bf16.msra.mxu0 0
        %5404 = vmatprep.subr.bf16.mxu0 0
        %5405 = vmatpush1.bf16.msra.mxu0 0
        %5406 = vmatprep.subr.bf16.mxu0 0
        %5407 = vmatpush1.bf16.msra.mxu0 0
        %5408 = vmatprep.subr.bf16.mxu0 0
        %5409 = vmatpush1.bf16.msra.mxu0 0
        %5410 = vmatprep.subr.bf16.mxu0 0
        %5411 = vmatpush1.bf16.msra.mxu0 0
        %5412 = vmatprep.subr.bf16.mxu0 0
        %5413 = vmatpush1.bf16.msra.mxu0 0
        %5414 = vmatprep.subr.bf16.mxu0 0
        %5415 = vmatpush1.bf16.msra.mxu0 0
        %5416 = vmatprep.subr.bf16.mxu0 0
        %5417 = vmatpush1.bf16.msra.mxu0 0
        %5418 = vmatprep.subr.bf16.mxu0 0
        %5419 = vmatpush1.bf16.msra.mxu0 0
        %5420 = vmatprep.subr.bf16.mxu0 0
        %5421 = vmatpush1.bf16.msra.mxu0 0
        %5422 = vmatprep.subr.bf16.mxu0 0
        %5423 = vmatpush1.bf16.msra.mxu0 0
        %5424 = vmatprep.subr.bf16.mxu0 0
        %5425 = vmatpush1.bf16.msra.mxu0 0
        %5426 = vmatprep.mubr.bf16.mxu0 0
        %5427 = vmatmul.mubr.bf16.gmra.mrb[0].mxu0 %v5392
        %v5428 = vpop.f32.mrb[0].mxu0
        %v5429 = vadd.f32 0.0, %v5428
        %v5430 = vpop.f32.mrb[0].mxu0
        %v5431 = vpop.f32.mrb[0].mxu0
        %v5432 = vpop.f32.mrb[0].mxu0
        %5433 = vdwg.mxu0
        %v5434 = vld [vmem:[%s2402] sm:$0xff]
        %v5435 = vld [vmem:[#allocation57] sm:$0x1]
        %v5436 = vpack.c.bf16 %v5429, %v5429
        %v5438 = vlaneseq
        %v5439 = vshrl.u32 %v5438, 7
        %v5440 = vsub.s32 0, %v5439
        %v5441 = vrot.slane %v5435, %v5440
        %v5444 = vsel %vm2595, %v5436, 0
        %5446 = vmatprep.subr.bf16.mxu0 0
        %5447 = vmatpush1.bf16.msra.mxu0 %v5444
        %5448 = vmatprep.subr.bf16.mxu0 0
        %5449 = vmatpush1.bf16.msra.mxu0 0
        %5450 = vmatprep.subr.bf16.mxu0 0
        %5451 = vmatpush1.bf16.msra.mxu0 0
        %5452 = vmatprep.subr.bf16.mxu0 0
        %5453 = vmatpush1.bf16.msra.mxu0 0
        %5454 = vmatprep.subr.bf16.mxu0 0
        %5455 = vmatpush1.bf16.msra.mxu0 0
        %5456 = vmatprep.subr.bf16.mxu0 0
        %5457 = vmatpush1.bf16.msra.mxu0 0
        %5458 = vmatprep.subr.bf16.mxu0 0
        %5459 = vmatpush1.bf16.msra.mxu0 0
        %5460 = vmatprep.subr.bf16.mxu0 0
        %5461 = vmatpush1.bf16.msra.mxu0 0
        %5462 = vmatprep.subr.bf16.mxu0 0
        %5463 = vmatpush1.bf16.msra.mxu0 0
        %5464 = vmatprep.subr.bf16.mxu0 0
        %5465 = vmatpush1.bf16.msra.mxu0 0
        %5466 = vmatprep.subr.bf16.mxu0 0
        %5467 = vmatpush1.bf16.msra.mxu0 0
        %5468 = vmatprep.subr.bf16.mxu0 0
        %5469 = vmatpush1.bf16.msra.mxu0 0
        %5470 = vmatprep.subr.bf16.mxu0 0
        %5471 = vmatpush1.bf16.msra.mxu0 0
        %5472 = vmatprep.subr.bf16.mxu0 0
        %5473 = vmatpush1.bf16.msra.mxu0 0
        %5474 = vmatprep.subr.bf16.mxu0 0
        %5475 = vmatpush1.bf16.msra.mxu0 0
        %5476 = vmatprep.subr.bf16.mxu0 0
        %5477 = vmatpush1.bf16.msra.mxu0 0
        %5478 = vmatprep.mubr.bf16.mxu0 0
        %5479 = vmatmul.mubr.bf16.gmra.mrb[0].mxu0 %v2593
        %v5480 = vpop.f32.mrb[0].mxu0
        %v5481 = vadd.f32 %v5441, %v5480
        %v5482 = vpop.f32.mrb[0].mxu0
        %v5483 = vpop.f32.mrb[0].mxu0
        %v5484 = vpop.f32.mrb[0].mxu0
        %5485 = vdwg.mxu0
        %v5486 = vld [vmem:[#allocation58] sm:$0xf]
        %v5487 = vld [vmem:[#allocation58 + $0x4] sm:$0xf]
        %v5488 = vld [vmem:[#allocation58 + $0x8] sm:$0xf]
        %v5489 = vld [vmem:[#allocation58 + $0xc] sm:$0xf]
        %v5490 = vpack.c.bf16 %v5434, %v5434
        %v5495 = vunpack.c.l.b16 %v5486
        %v5496 = vunpack.c.l.b16 %v5487
        %v5497 = vunpack.c.l.b16 %v5488
        %v5498 = vunpack.c.l.b16 %v5489
        %v5499 = vpack.c.b16 %v5496, %v5495
        %v5500 = vpack.c.b16 %v5498, %v5497
        %v5504 = vsel %vm2484, %v5490, 0
        %5506 = vmatprep.subr.bf16.mxu0 0
        %5507 = vmatpush1.bf16.msra.mxu0 %v5499
        %5508 = vmatprep.subr.bf16.mxu0 0
        %5509 = vmatpush1.bf16.msra.mxu0 %v5500
        %5510 = vmatprep.subr.bf16.mxu0 0
        %5511 = vmatpush1.bf16.msra.mxu0 0
        %5512 = vmatprep.subr.bf16.mxu0 0
        %5513 = vmatpush1.bf16.msra.mxu0 0
        %5514 = vmatprep.subr.bf16.mxu0 0
        %5515 = vmatpush1.bf16.msra.mxu0 0
        %5516 = vmatprep.subr.bf16.mxu0 0
        %5517 = vmatpush1.bf16.msra.mxu0 0
        %5518 = vmatprep.subr.bf16.mxu0 0
        %5519 = vmatpush1.bf16.msra.mxu0 0
        %5520 = vmatprep.subr.bf16.mxu0 0
        %5521 = vmatpush1.bf16.msra.mxu0 0
        %5522 = vmatprep.subr.bf16.mxu0 0
        %5523 = vmatpush1.bf16.msra.mxu0 0
        %5524 = vmatprep.subr.bf16.mxu0 0
        %5525 = vmatpush1.bf16.msra.mxu0 0
        %5526 = vmatprep.subr.bf16.mxu0 0
        %5527 = vmatpush1.bf16.msra.mxu0 0
        %5528 = vmatprep.subr.bf16.mxu0 0
        %5529 = vmatpush1.bf16.msra.mxu0 0
        %5530 = vmatprep.subr.bf16.mxu0 0
        %5531 = vmatpush1.bf16.msra.mxu0 0
        %5532 = vmatprep.subr.bf16.mxu0 0
        %5533 = vmatpush1.bf16.msra.mxu0 0
        %5534 = vmatprep.subr.bf16.mxu0 0
        %5535 = vmatpush1.bf16.msra.mxu0 0
        %5536 = vmatprep.subr.bf16.mxu0 0
        %5537 = vmatpush1.bf16.msra.mxu0 0
        %5538 = vmatprep.mubr.bf16.mxu0 0
        %5539 = vmatmul.mubr.bf16.gmra.mrb[0].mxu0 %v5504
        %v5540 = vpop.f32.mrb[0].mxu0
        %v5541 = vadd.f32 0.0, %v5540
        %v5542 = vpop.f32.mrb[0].mxu0
        %v5543 = vpop.f32.mrb[0].mxu0
        %v5544 = vpop.f32.mrb[0].mxu0
        %5545 = vdwg.mxu0
        %v5546 = vld [vmem:[#allocation60] sm:$0x1]
        %v5547 = vpack.c.bf16 %v5541, %v5541
        %v5549 = vlaneseq
        %v5550 = vshrl.u32 %v5549, 7
        %v5551 = vsub.s32 0, %v5550
        %v5552 = vrot.slane %v5546, %v5551
        %v5555 = vsel %vm2595, %v5547, 0
        %5557 = vmatprep.subr.bf16.mxu0 0
        %5558 = vmatpush1.bf16.msra.mxu0 %v5555
        %5559 = vmatprep.subr.bf16.mxu0 0
        %5560 = vmatpush1.bf16.msra.mxu0 0
        %5561 = vmatprep.subr.bf16.mxu0 0
        %5562 = vmatpush1.bf16.msra.mxu0 0
        %5563 = vmatprep.subr.bf16.mxu0 0
        %5564 = vmatpush1.bf16.msra.mxu0 0
        %5565 = vmatprep.subr.bf16.mxu0 0
        %5566 = vmatpush1.bf16.msra.mxu0 0
        %5567 = vmatprep.subr.bf16.mxu0 0
        %5568 = vmatpush1.bf16.msra.mxu0 0
        %5569 = vmatprep.subr.bf16.mxu0 0
        %5570 = vmatpush1.bf16.msra.mxu0 0
        %5571 = vmatprep.subr.bf16.mxu0 0
        %5572 = vmatpush1.bf16.msra.mxu0 0
        %5573 = vmatprep.subr.bf16.mxu0 0
        %5574 = vmatpush1.bf16.msra.mxu0 0
        %5575 = vmatprep.subr.bf16.mxu0 0
        %5576 = vmatpush1.bf16.msra.mxu0 0
        %5577 = vmatprep.subr.bf16.mxu0 0
        %5578 = vmatpush1.bf16.msra.mxu0 0
        %5579 = vmatprep.subr.bf16.mxu0 0
        %5580 = vmatpush1.bf16.msra.mxu0 0
        %5581 = vmatprep.subr.bf16.mxu0 0
        %5582 = vmatpush1.bf16.msra.mxu0 0
        %5583 = vmatprep.subr.bf16.mxu0 0
        %5584 = vmatpush1.bf16.msra.mxu0 0
        %5585 = vmatprep.subr.bf16.mxu0 0
        %5586 = vmatpush1.bf16.msra.mxu0 0
        %5587 = vmatprep.subr.bf16.mxu0 0
        %5588 = vmatpush1.bf16.msra.mxu0 0
        %5589 = vmatprep.mubr.bf16.mxu0 0
        %5590 = vmatmul.mubr.bf16.gmra.mrb[0].mxu0 %v2593
        %v5591 = vpop.f32.mrb[0].mxu0
        %v5592 = vadd.f32 %v5552, %v5591
        %v5593 = vpop.f32.mrb[0].mxu0
        %v5594 = vpop.f32.mrb[0].mxu0
        %v5595 = vpop.f32.mrb[0].mxu0
        %5596 = vdwg.mxu0
        %v5597 = vadd.f32 %v5481, %v5592
        %v5598 = vxor.u32 %v5597, 2147483648
        %v5599 = vmul.f32 %v5598, 1.442695
        %v5600 = vpow.pop %v5599
        %v5601 = vadd.f32 %v5600, 1.0
        %v5602 = vrcp.pop %v5601
        %v5603 = vmul.f32 1.0, %v5602
        %5605 = vrot.lane.b32.xlu0 %v5434, 32
        %v5606 = vpop.permute.xlu0 %5605
        %v5608 = vmul.f32 %v5603, %v5606
        %v5609 = vld [vmem:[#allocation61] sm:$0xf]
        %v5610 = vld [vmem:[#allocation61 + $0x4] sm:$0xf]
        %v5611 = vld [vmem:[#allocation61 + $0x8] sm:$0xf]
        %v5612 = vld [vmem:[#allocation61 + $0xc] sm:$0xf]
        %v5613 = vpack.c.bf16 %v5608, %v5608
        %5615 = vrot.lane.b32.xlu0 %v5613, 96
        %v5616 = vpop.permute.xlu0 %5615
        %v5621 = vunpack.c.l.b16 %v5609
        %v5622 = vunpack.c.l.b16 %v5610
        %v5623 = vunpack.c.l.b16 %v5611
        %v5624 = vunpack.c.l.b16 %v5612
        %v5625 = vpack.c.b16 %v5622, %v5621
        %v5626 = vpack.c.b16 %v5624, %v5623
        %v5630 = vsel %vm2484, %v5616, 0
        %5632 = vmatprep.subr.bf16.mxu0 0
        %5633 = vmatpush1.bf16.msra.mxu0 %v5625
        %5634 = vmatprep.subr.bf16.mxu0 0
        %5635 = vmatpush1.bf16.msra.mxu0 %v5626
        %5636 = vmatprep.subr.bf16.mxu0 0
        %5637 = vmatpush1.bf16.msra.mxu0 0
        %5638 = vmatprep.subr.bf16.mxu0 0
        %5639 = vmatpush1.bf16.msra.mxu0 0
        %5640 = vmatprep.subr.bf16.mxu0 0
        %5641 = vmatpush1.bf16.msra.mxu0 0
        %5642 = vmatprep.subr.bf16.mxu0 0
        %5643 = vmatpush1.bf16.msra.mxu0 0
        %5644 = vmatprep.subr.bf16.mxu0 0
        %5645 = vmatpush1.bf16.msra.mxu0 0
        %5646 = vmatprep.subr.bf16.mxu0 0
        %5647 = vmatpush1.bf16.msra.mxu0 0
        %5648 = vmatprep.subr.bf16.mxu0 0
        %5649 = vmatpush1.bf16.msra.mxu0 0
        %5650 = vmatprep.subr.bf16.mxu0 0
        %5651 = vmatpush1.bf16.msra.mxu0 0
        %5652 = vmatprep.subr.bf16.mxu0 0
        %5653 = vmatpush1.bf16.msra.mxu0 0
        %5654 = vmatprep.subr.bf16.mxu0 0
        %5655 = vmatpush1.bf16.msra.mxu0 0
        %5656 = vmatprep.subr.bf16.mxu0 0
        %5657 = vmatpush1.bf16.msra.mxu0 0
        %5658 = vmatprep.subr.bf16.mxu0 0
        %5659 = vmatpush1.bf16.msra.mxu0 0
        %5660 = vmatprep.subr.bf16.mxu0 0
        %5661 = vmatpush1.bf16.msra.mxu0 0
        %5662 = vmatprep.subr.bf16.mxu0 0
        %5663 = vmatpush1.bf16.msra.mxu0 0
        %5664 = vmatprep.mubr.bf16.mxu0 0
        %5665 = vmatmul.mubr.bf16.gmra.mrb[0].mxu0 %v5630
        %v5666 = vpop.f32.mrb[0].mxu0
        %v5667 = vadd.f32 0.0, %v5666
        %v5668 = vpop.f32.mrb[0].mxu0
        %v5669 = vpop.f32.mrb[0].mxu0
        %v5670 = vpop.f32.mrb[0].mxu0
        %5671 = vdwg.mxu0
        %v5672 = vld [vmem:[#allocation63] sm:$0x1]
        %v5673 = vpack.c.bf16 %v5667, %v5667
        %v5675 = vlaneseq
        %v5676 = vshrl.u32 %v5675, 7
        %v5677 = vsub.s32 0, %v5676
        %v5678 = vrot.slane %v5672, %v5677
        %v5681 = vsel %vm2595, %v5673, 0
        %5683 = vmatprep.subr.bf16.mxu0 0
        %5684 = vmatpush1.bf16.msra.mxu0 %v5681
        %5685 = vmatprep.subr.bf16.mxu0 0
        %5686 = vmatpush1.bf16.msra.mxu0 0
        %5687 = vmatprep.subr.bf16.mxu0 0
        %5688 = vmatpush1.bf16.msra.mxu0 0
        %5689 = vmatprep.subr.bf16.mxu0 0
        %5690 = vmatpush1.bf16.msra.mxu0 0
        %5691 = vmatprep.subr.bf16.mxu0 0
        %5692 = vmatpush1.bf16.msra.mxu0 0
        %5693 = vmatprep.subr.bf16.mxu0 0
        %5694 = vmatpush1.bf16.msra.mxu0 0
        %5695 = vmatprep.subr.bf16.mxu0 0
        %5696 = vmatpush1.bf16.msra.mxu0 0
        %5697 = vmatprep.subr.bf16.mxu0 0
        %5698 = vmatpush1.bf16.msra.mxu0 0
        %5699 = vmatprep.subr.bf16.mxu0 0
        %5700 = vmatpush1.bf16.msra.mxu0 0
        %5701 = vmatprep.subr.bf16.mxu0 0
        %5702 = vmatpush1.bf16.msra.mxu0 0
        %5703 = vmatprep.subr.bf16.mxu0 0
        %5704 = vmatpush1.bf16.msra.mxu0 0
        %5705 = vmatprep.subr.bf16.mxu0 0
        %5706 = vmatpush1.bf16.msra.mxu0 0
        %5707 = vmatprep.subr.bf16.mxu0 0
        %5708 = vmatpush1.bf16.msra.mxu0 0
        %5709 = vmatprep.subr.bf16.mxu0 0
        %5710 = vmatpush1.bf16.msra.mxu0 0
        %5711 = vmatprep.subr.bf16.mxu0 0
        %5712 = vmatpush1.bf16.msra.mxu0 0
        %5713 = vmatprep.subr.bf16.mxu0 0
        %5714 = vmatpush1.bf16.msra.mxu0 0
        %5715 = vmatprep.mubr.bf16.mxu0 0
        %5716 = vmatmul.mubr.bf16.gmra.mrb[0].mxu0 %v2593
        %v5717 = vpop.f32.mrb[0].mxu0
        %v5718 = vadd.f32 %v5678, %v5717
        %v5719 = vpop.f32.mrb[0].mxu0
        %v5720 = vpop.f32.mrb[0].mxu0
        %v5721 = vpop.f32.mrb[0].mxu0
        %5722 = vdwg.mxu0
        %5724 = vrot.lane.b32.xlu0 %v5718, 64
        %v5725 = vpop.permute.xlu0 %5724
        %v5727 = vadd.f32 %v5481, %v5725
        %v5728 = vtanh.pop %v5727
        %v5729 = vmul.f32 %v5603, %v5434
        %v5730 = vsub.f32 1.0, %v5603
        %5732 = vrot.lane.b32.xlu0 %v5728, 64
        %v5733 = vpop.permute.xlu0 %5732
        %v5735 = vmul.f32 %v5730, %v5733
        %v5736 = vadd.f32 %v5729, %v5735
        %5737 = vst.msk [vmem:[%s2402] sm:$0xff] %vm2484, %v5736
        %s5738 = scalar_lea.vmem %s2382, 8
        %5739 = vst.msk [vmem:[%s5738] sm:$0xff] %vm2484, %v5736
        %5740 = vst.msk [vmem:[%s2365] sm:$0xff] %vm3192, %v2746
        %5741 = vst.msk [vmem:[%s2369] sm:$0xff] %vm3192, %v3141
        %5742 = vst.msk [vmem:[%s2373] sm:$0xff] %vm3192, %v2992
        %5743 = vst.msk [vmem:[%s2315] sm:$0xff] %vm3676, %v3546
        %5745 = vrot.lane.b32.xlu0 %v3546, 64
        %v5746 = vpop.permute.xlu0 %5745
        %5748 = vst.msk [vmem:[%s2322] sm:$0xff] %vm3676, %v5746
        %p5749 = scmp.lt.s32.totalorder %s160, 2
        %s5750 = scalar_select %p5749, %s160, 2
        %s5751 = smul.addr %s5750, 8
        %s5752 = scalar_lea.vmem %s99, %s5751
        %p5753 = scmp.lt.s32.totalorder %s160, 2
        %s5754 = scalar_select %p5753, %s160, 2
        %s5755 = smul.addr %s5754, 8
        %s5756 = scalar_lea.vmem %s101, %s5755
        %p5757 = scmp.lt.s32.totalorder %s160, 2
        %s5758 = scalar_select %p5757, %s160, 2
        %s5759 = smul.addr %s5758, 8
        %s5760 = scalar_lea.vmem %s103, %s5759
        %s5761 = sand.u32 %s1305, 1
        %s5762 = scalar_lea.sflag [#allocation6], %s5761
        %s5763 = sand.u32 %s1305, 1
        %s5764 = smul.addr %s5763, 8
        %s5765 = scalar_lea.vmem [#allocation64], %s5764
        %s5766 = sand.u32 %s160, 1
        %s5767 = scalar_lea.sflag [#allocation66], %s5766
        %s5768 = sand.u32 %s1331, 1
        %s5769 = smul.addr %s5768, 8
        %s5770 = scalar_lea.vmem [#allocation65], %s5769
        %p5771 = scmp.lt.s32.totalorder %s160, 2
        %s5772 = scalar_select %p5771, %s160, 2
        %s5773 = smul.addr %s5772, 8
        %s5774 = scalar_lea.vmem %s109, %s5773
        %p5775 = scmp.lt.s32.totalorder %s160, 2
        %s5776 = scalar_select %p5775, %s160, 2
        %s5777 = smul.addr %s5776, 2
        %s5778 = smul.addr %s5777, 8
        %s5779 = scalar_lea.vmem %s111, %s5778
        // Predicated region
        $region377: #{vmr_gae_forward.3} parent=215 // pred_check
          %p5780 = pneg %p1237
        $region378: #{vmr_gae_forward.3} parent=215 // pred_check_branch
          %5782 = sbr.rel (%p5780) target = $region380
        $region379: #{vmr_gae_forward.3} parent=215 // pred_region
          _
        $region380: #{vmr_gae_forward.3} parent=215 // pred_fallthru
          _
        // Predicated region
        $region381: #{vmr_gae_forward.3} parent=215 // pred_check
          %p5783 = pneg %p1263
        $region382: #{vmr_gae_forward.3} parent=215 // pred_check_branch
          %5785 = sbr.rel (%p5783) target = $region384
        $region383: #{vmr_gae_forward.3} parent=215 // pred_region
          _
        $region384: #{vmr_gae_forward.3} parent=215 // pred_fallthru
          _
        // Predicated region
        $region385: #{vmr_gae_forward.3} parent=215 // pred_check
          %p5786 = pneg %p1289
        $region386: #{vmr_gae_forward.3} parent=215 // pred_check_branch
          %5788 = sbr.rel (%p5786) target = $region388
        $region387: #{vmr_gae_forward.3} parent=215 // pred_region
          _
        $region388: #{vmr_gae_forward.3} parent=215 // pred_fallthru
          _
        // Predicated region
        $region389: #{vmr_gae_forward.3} parent=215 // pred_check
          %p5789 = pneg %p1315
        $region390: #{vmr_gae_forward.3} parent=215 // pred_check_branch
          %5791 = sbr.rel (%p5789) target = $region392
        $region391: #{vmr_gae_forward.3} parent=215 // pred_region
          %s5793 = ssub.s32 128, 128
          %5794 = vsyncadd %s5762, %s5793
          %s5795 = smul.addr %s160, 128
          %s5796 = scalar_lea.hbm %s105, %s5795
          %s5798 = sshll.u32 %s5765, 4
          %s5799 = int_to_ptr.vmem [resolvable:$true] %s5798
          %5801 = dma.vmem_to_hbm [thread:$0]  %s5799, 128, %s5796, %s5762
        $region392: #{vmr_gae_forward.3} parent=215 // pred_fallthru
          _
        // Predicated region
        $region393: #{vmr_gae_forward.3} parent=215 // pred_check
          %p5802 = pneg %p1341
        $region394: #{vmr_gae_forward.3} parent=215 // pred_check_branch
          %5804 = sbr.rel (%p5802) target = $region396
        $region395: #{vmr_gae_forward.3} parent=215 // pred_region
          %s5806 = ssub.s32 128, 128
          %5807 = vsyncadd %s5767, %s5806
          %s5808 = smul.addr %s160, 128
          %s5809 = scalar_lea.hbm %s107, %s5808
          %s5811 = sshll.u32 %s5770, 4
          %s5812 = int_to_ptr.vmem [resolvable:$true] %s5811
          %5814 = dma.vmem_to_hbm [thread:$0]  %s5812, 128, %s5809, %s5767
        $region396: #{vmr_gae_forward.3} parent=215 // pred_fallthru
          _
        // Predicated region
        $region397: #{vmr_gae_forward.3} parent=215 // pred_check
          %p5815 = pneg %p1367
        $region398: #{vmr_gae_forward.3} parent=215 // pred_check_branch
          %5817 = sbr.rel (%p5815) target = $region400
        $region399: #{vmr_gae_forward.3} parent=215 // pred_region
          _
        $region400: #{vmr_gae_forward.3} parent=215 // pred_fallthru
          _
        // Predicated region
        $region401: #{vmr_gae_forward.3} parent=215 // pred_check
          %p5818 = pneg %p1393
        $region402: #{vmr_gae_forward.3} parent=215 // pred_check_branch
          %5820 = sbr.rel (%p5818) target = $region404
        $region403: #{vmr_gae_forward.3} parent=215 // pred_region
          _
        $region404: #{vmr_gae_forward.3} parent=215 // pred_fallthru
          _
        // Predicated region
        $region405: #{vmr_gae_forward.3} parent=215 // pred_check
          %p5821 = pneg %p1414
        $region406: #{vmr_gae_forward.3} parent=215 // pred_check_branch
          %5823 = sbr.rel (%p5821) target = $region408
        $region407: #{vmr_gae_forward.3} parent=215 // pred_region
          %s5825 = ssub.s32 16, 16
          %5826 = vsyncadd [#allocation66], %s5825
          %s5828 = sshll.u32 [#allocation67], 4
          %s5829 = int_to_ptr.vmem [resolvable:$true] %s5828
          %5831 = dma.vmem_to_hbm [thread:$0]  %s5829, 16, %s113, [#allocation66]
        $region408: #{vmr_gae_forward.3} parent=215 // pred_fallthru
          _
        // Predicated region
        $region409: #{vmr_gae_forward.3} parent=215 // pred_check
          %p5832 = pneg %p1435
        $region410: #{vmr_gae_forward.3} parent=215 // pred_check_branch
          %5834 = sbr.rel (%p5832) target = $region412
        $region411: #{vmr_gae_forward.3} parent=215 // pred_region
          %s5836 = ssub.s32 16, 16
          %5837 = vsyncadd [#allocation69], %s5836
          %s5839 = sshll.u32 [#allocation68], 4
          %s5840 = int_to_ptr.vmem [resolvable:$true] %s5839
          %5842 = dma.vmem_to_hbm [thread:$0]  %s5840, 16, %s115, [#allocation69]
        $region412: #{vmr_gae_forward.3} parent=215 // pred_fallthru
          _
        // Predicated region
        $region413: #{vmr_gae_forward.3} parent=215 // pred_check
          %p5843 = pneg %p1456
        $region414: #{vmr_gae_forward.3} parent=215 // pred_check_branch
          %5845 = sbr.rel (%p5843) target = $region416
        $region415: #{vmr_gae_forward.3} parent=215 // pred_region
          %s5847 = ssub.s32 16, 16
          %5848 = vsyncadd [#allocation69], %s5847
          %s5850 = sshll.u32 [#allocation70], 4
          %s5851 = int_to_ptr.vmem [resolvable:$true] %s5850
          %5853 = dma.vmem_to_hbm [thread:$0]  %s5851, 16, %s117, [#allocation69]
        $region416: #{vmr_gae_forward.3} parent=215 // pred_fallthru
          _
        // Predicated region
        $region417: #{vmr_gae_forward.3} parent=215 // pred_check
          %p5854 = pneg %p1414
        $region418: #{vmr_gae_forward.3} parent=215 // pred_check_branch
          %5856 = sbr.rel (%p5854) target = $region420
        $region419: #{vmr_gae_forward.3} parent=215 // pred_region
          %5857 = dma.done [#allocation66], 16
        $region420: #{vmr_gae_forward.3} parent=215 // pred_fallthru
          _
        // Predicated region
        $region421: #{vmr_gae_forward.3} parent=215 // pred_check
          %p5858 = pneg %p1435
        $region422: #{vmr_gae_forward.3} parent=215 // pred_check_branch
          %5860 = sbr.rel (%p5858) target = $region424
        $region423: #{vmr_gae_forward.3} parent=215 // pred_region
          %5861 = dma.done [#allocation69], 16
        $region424: #{vmr_gae_forward.3} parent=215 // pred_fallthru
          _
        // Predicated region
        $region425: #{vmr_gae_forward.3} parent=215 // pred_check
          %p5862 = pneg %p1456
        $region426: #{vmr_gae_forward.3} parent=215 // pred_check_branch
          %5864 = sbr.rel (%p5862) target = $region428
        $region427: #{vmr_gae_forward.3} parent=215 // pred_region
          %5865 = dma.done [#allocation69], 16
        $region428: #{vmr_gae_forward.3} parent=215 // pred_fallthru
          _
      $region216: #{vmr_gae_forward.3} parent=5 // pred_fallthru
        _
      %p5866 = scmp.le.s32.totalorder 2, %s155
      // Predicated region
      $region429: #{vmr_gae_forward.3} parent=5 // pred_check
        %p5867 = pneg %p5866
      $region430: #{vmr_gae_forward.3} parent=5 // pred_check_branch
        %5869 = sbr.rel (%p5867) target = $region432
      $region431: #{vmr_gae_forward.3} parent=5 // pred_region
        %s5870 = ssub.s32 %s155, 2
        // Predicated region
        $region433: #{vmr_gae_forward.3} parent=431 // pred_check
          %p5871 = pneg %p1243
        $region434: #{vmr_gae_forward.3} parent=431 // pred_check_branch
          %5873 = sbr.rel (%p5871) target = $region436
        $region435: #{vmr_gae_forward.3} parent=431 // pred_region
          %p5874 = scmp.lt.s32.totalorder %s161, 2
          %s5875 = scalar_select %p5874, %s161, 2
          %s5876 = smul.addr %s5875, 8
          %s5877 = scalar_lea.vmem %s99, %s5876
        $region436: #{vmr_gae_forward.3} parent=431 // pred_fallthru
          _
        // Predicated region
        $region437: #{vmr_gae_forward.3} parent=431 // pred_check
          %p5878 = pneg %p1269
        $region438: #{vmr_gae_forward.3} parent=431 // pred_check_branch
          %5880 = sbr.rel (%p5878) target = $region440
        $region439: #{vmr_gae_forward.3} parent=431 // pred_region
          %p5881 = scmp.lt.s32.totalorder %s161, 2
          %s5882 = scalar_select %p5881, %s161, 2
          %s5883 = smul.addr %s5882, 8
          %s5884 = scalar_lea.vmem %s101, %s5883
        $region440: #{vmr_gae_forward.3} parent=431 // pred_fallthru
          _
        // Predicated region
        $region441: #{vmr_gae_forward.3} parent=431 // pred_check
          %p5885 = pneg %p1295
        $region442: #{vmr_gae_forward.3} parent=431 // pred_check_branch
          %5887 = sbr.rel (%p5885) target = $region444
        $region443: #{vmr_gae_forward.3} parent=431 // pred_region
          %p5888 = scmp.lt.s32.totalorder %s161, 2
          %s5889 = scalar_select %p5888, %s161, 2
          %s5890 = smul.addr %s5889, 8
          %s5891 = scalar_lea.vmem %s103, %s5890
        $region444: #{vmr_gae_forward.3} parent=431 // pred_fallthru
          _
        // Predicated region
        $region445: #{vmr_gae_forward.3} parent=431 // pred_check
          %p5892 = pneg %p1321
        $region446: #{vmr_gae_forward.3} parent=431 // pred_check_branch
          %5894 = sbr.rel (%p5892) target = $region448
        $region447: #{vmr_gae_forward.3} parent=431 // pred_region
          %s5895 = sand.u32 %s1306, 1
          %s5896 = scalar_lea.sflag [#allocation6], %s5895
          %s5897 = sand.u32 %s1306, 1
          %s5898 = smul.addr %s5897, 8
          %s5899 = scalar_lea.vmem [#allocation64], %s5898
          %5900 = dma.done %s5896, 128
        $region448: #{vmr_gae_forward.3} parent=431 // pred_fallthru
          _
        // Predicated region
        $region449: #{vmr_gae_forward.3} parent=431 // pred_check
          %p5901 = pneg %p1347
        $region450: #{vmr_gae_forward.3} parent=431 // pred_check_branch
          %5903 = sbr.rel (%p5901) target = $region452
        $region451: #{vmr_gae_forward.3} parent=431 // pred_region
          %s5904 = sand.u32 %s161, 1
          %s5905 = scalar_lea.sflag [#allocation66], %s5904
          %s5906 = sand.u32 %s1332, 1
          %s5907 = smul.addr %s5906, 8
          %s5908 = scalar_lea.vmem [#allocation65], %s5907
          %5909 = dma.done %s5905, 128
        $region452: #{vmr_gae_forward.3} parent=431 // pred_fallthru
          _
        // Predicated region
        $region453: #{vmr_gae_forward.3} parent=431 // pred_check
          %p5910 = pneg %p1373
        $region454: #{vmr_gae_forward.3} parent=431 // pred_check_branch
          %5912 = sbr.rel (%p5910) target = $region456
        $region455: #{vmr_gae_forward.3} parent=431 // pred_region
          %p5913 = scmp.lt.s32.totalorder %s161, 2
          %s5914 = scalar_select %p5913, %s161, 2
          %s5915 = smul.addr %s5914, 8
          %s5916 = scalar_lea.vmem %s109, %s5915
        $region456: #{vmr_gae_forward.3} parent=431 // pred_fallthru
          _
        // Predicated region
        $region457: #{vmr_gae_forward.3} parent=431 // pred_check
          %p5917 = pneg %p1399
        $region458: #{vmr_gae_forward.3} parent=431 // pred_check_branch
          %5919 = sbr.rel (%p5917) target = $region460
        $region459: #{vmr_gae_forward.3} parent=431 // pred_region
          %p5920 = scmp.lt.s32.totalorder %s161, 2
          %s5921 = scalar_select %p5920, %s161, 2
          %s5922 = smul.addr %s5921, 2
          %s5923 = smul.addr %s5922, 8
          %s5924 = scalar_lea.vmem %s111, %s5923
        $region460: #{vmr_gae_forward.3} parent=431 // pred_fallthru
          _
      $region432: #{vmr_gae_forward.3} parent=5 // pred_fallthru
        _
    $region6: #{vmr_gae_forward.3} parent=1 // loop_footer
      %s159 = sadd.s32 1, %s155
    $region7: #{vmr_gae_forward.3} parent=1 // loop_footer_branch
      %154 = sbr.rel target = $region3
    $region8: #{vmr_gae_forward.3} parent=1 // loop_exit
      _
    %5925 = vsyncpa [#allocation5], 1
    %s5926 = scalar_lea.sflag [#allocation5], 1
    %5927 = vsyncpa %s5926, 1
    %5928 = vsyncpa [#allocation8], 1
    %5929 = vsyncpa [#allocation11], 1
    %5930 = vsyncpa [#allocation14], 1
    %5931 = vsyncpa [#allocation17], 1
    %5932 = vsyncpa [#allocation20], 1
    %5933 = vsyncpa [#allocation23], 1
    %5934 = vsyncpa [#allocation26], 1
    %5935 = vsyncpa [#allocation29], 1
    %5936 = vsyncpa [#allocation32], 1
    %5937 = vsyncpa [#allocation35], 1
    %5938 = vsyncpa [#allocation38], 1
    %5939 = vsyncpa [#allocation41], 1
    %5940 = vsyncpa [#allocation44], 1
    %5941 = vsyncpa [#allocation47], 1
    %5942 = vsyncpa [#allocation50], 1
    %5943 = vsyncpa [#allocation53], 1
    %5944 = vsyncpa [#allocation56], 1
    %5945 = vsyncpa [#allocation59], 1
    %5946 = vsyncpa [#allocation62], 1
    %5947 = vsyncpa [#allocation6], 1
    %s5948 = scalar_lea.sflag [#allocation6], 1
    %5949 = vsyncpa %s5948, 1
    %5950 = vsyncpa [#allocation66], 1
    %s5951 = scalar_lea.sflag [#allocation66], 1
    %5952 = vsyncpa %s5951, 1
    %5953 = vsyncpa [#allocation69], 1

</llo_original>
